<compile_context>
chip_gen: v6e
topology: v6e:2x2x1
jax: 0.10.0
libtpu: 0.0.40
codegen_flags: <defaults>
</compile_context>

<pallas_src>
import jax
import jax.numpy as jnp
from jax.experimental import pallas as pl
from jax.experimental.pallas import tpu as pltpu

VMEM_LIMIT = 32 * 1024 * 1024   # v7x-safe (64 MiB physical); generous for v5e/v6e
FC1_KPAD = 3584                 # 7*7*64 = 3136 -> 3584 = 2 * 1792 (K tiling)
FC1_TK = 1792                   # coarse K tile: 2 grid steps (v7x/v6e preferred)
FC2_NPAD = 128                  # logits N padded 10 -> 128 (lane-dense stores)


# ----------------------------- Pallas kernels ------------------------------

def _conv_relu_pool_kernel(bt):
    """Fused conv-as-matmul + bias + ReLU + 2x2 max-pool for `bt` images.

    p_ref block is (bt, 4, q_rows, K): leading dims are image / pool-quadrant,
    so p_ref[i, q] is an aligned (q_rows, K) tile (no mid-tile slicing).
    ReLU(max_q(conv_q) + b) == max_q(ReLU(conv_q + b)) since ReLU is monotone
    and the bias is shared, so pooling is done on the raw accumulators.
    """
    def kernel(p_ref, w_ref, b_ref, o_ref):
        w = w_ref[...]
        b = b_ref[...]
        for i in range(bt):                      # static loop over images/step
            acc = jnp.dot(p_ref[i, 0], w, preferred_element_type=jnp.float32)
            for q in range(1, 4):                # 4-way max over pool quadrants
                acc = jnp.maximum(
                    acc,
                    jnp.dot(p_ref[i, q], w, preferred_element_type=jnp.float32))
            o_ref[i] = jnp.maximum(acc + b, 0.0).astype(o_ref.dtype)
    return kernel


def conv_relu_pool(patches, w, b, *, q_rows, cout, images_per_step=None):
    """patches: (B, 4, q_rows, K) bf16 -> pooled activation (B, q_rows, cout) bf16."""
    B, Q, R, K = patches.shape
    assert Q == 4 and R == q_rows
    if images_per_step is None:
        # Keep 1 image/step at tiny batches so v7x's 2 TCs both stay busy;
        # amortize grid-step overhead with bigger blocks at larger batches.
        images_per_step = 1 if B <= 2 else [d for d in (8, 4, 2, 1) if B % d == 0][0]
    bt = images_per_step
    assert B % bt == 0

    return pl.pallas_call(
        _conv_relu_pool_kernel(bt),
        out_shape=jax.ShapeDtypeStruct((B, q_rows, cout), jnp.bfloat16),
        grid=(B // bt,),
        in_specs=[
            pl.BlockSpec((bt, 4, q_rows, K), lambda i: (i, 0, 0, 0)),
            pl.BlockSpec((K, cout), lambda i: (0, 0)),     # weight resident
            pl.BlockSpec((1, cout), lambda i: (0, 0)),     # bias resident
        ],
        out_specs=pl.BlockSpec((bt, q_rows, cout), lambda i: (i, 0, 0)),
        compiler_params=pltpu.CompilerParams(
            dimension_semantics=("parallel",),   # batch splits across v7x's 2 TCs
            vmem_limit_bytes=VMEM_LIMIT),
    )(patches, w, b)


def fc1_relu_fc2(x, w3, b3, w4, b4, *, tk=FC1_TK):
    """logits = ReLU(x @ w3 + b3) @ w4 + b4 in ONE kernel.

    x (B, Kp) bf16, w3 (Kp, 1024) bf16, w4 (1024, 128) bf16, biases f32.
    grid = (Kp // tk,): K reduction axis ("arbitrary") with an f32 VMEM
    accumulator; FC2 runs inside the last-step finalize with w4/b4 resident,
    so h never round-trips HBM and there is no second pallas_call.
    NOTE(v5e, large B): prefer tk~512-896 and pipeline_mode=pl.Buffered(3) on
    the w3 BlockSpec once per-tile MXU time is non-trivial; at B=2 the coarse
    tk=1792 (fewer grid-step overheads) wins on all generations.
    """
    B, Kp = x.shape
    Kp2, N1 = w3.shape
    N1b, N2 = w4.shape
    assert Kp == Kp2 and N1 == N1b and Kp % tk == 0
    nk = Kp // tk

    def kernel(x_ref, w3_ref, b3_ref, w4_ref, b4_ref, o_ref, acc_ref):
        k = pl.program_id(0)

        @pl.when(k == 0)
        def _init():
            acc_ref[...] = jnp.zeros_like(acc_ref)

        acc_ref[...] += jnp.dot(x_ref[...], w3_ref[...],
                                preferred_element_type=jnp.float32)

        @pl.when(k == pl.num_programs(0) - 1)
        def _finalize():
            # Dropout(p=0.1) is identity at inference.
            h = jnp.maximum(acc_ref[...] + b3_ref[...], 0.0).astype(jnp.bfloat16)
            o_ref[...] = (jnp.dot(h, w4_ref[...],
                                  preferred_element_type=jnp.float32)
                          + b4_ref[...])

    return pl.pallas_call(
        kernel,
        out_shape=jax.ShapeDtypeStruct((B, N2), jnp.float32),
        grid=(nk,),                                       # reduction axis only
        in_specs=[
            pl.BlockSpec((B, tk), lambda k: (0, k)),
            pl.BlockSpec((tk, N1), lambda k: (k, 0)),     # pipelined weight DMA
            pl.BlockSpec((1, N1), lambda k: (0, 0)),      # b3 resident
            pl.BlockSpec((N1, N2), lambda k: (0, 0)),     # w4 resident
            pl.BlockSpec((1, N2), lambda k: (0, 0)),      # b4 resident
        ],
        out_specs=pl.BlockSpec((B, N2), lambda k: (0, 0)),
        scratch_shapes=[pltpu.VMEM((B, N1), jnp.float32)],
        compiler_params=pltpu.CompilerParams(
            dimension_semantics=("arbitrary",),
            vmem_limit_bytes=VMEM_LIMIT),
    )(x, w3, b3, w4, b4)


# ------------------------------ JAX glue ops -------------------------------

def im2col_pool_order(x_nhwc, k, pad):
    """NHWC -> im2col patch rows with the 2x2 pool-window quadrant as its OWN axis.

    Returns (B, 4, (H//2)*(W//2), C*k*k).  Quadrant q = 2*oh + ow, row h*(W//2)+w
    holds the patch of conv-output pixel (2h+oh, 2w+ow); the feature order is
    (c, kh, kw), matching torch Conv2d weight.reshape(Cout, -1).  The fused
    kernel pools by max-ing over the (aligned) quadrant axis.
    """
    B, H, W, C = x_nhwc.shape
    xp = jnp.pad(x_nhwc, ((0, 0), (pad, pad), (pad, pad), (0, 0)))
    cols = [xp[:, di:di + H, dj:dj + W, :] for di in range(k) for dj in range(k)]
    p = jnp.stack(cols, axis=-1)                               # (B, H, W, C, k*k)
    p = p.reshape(B, H // 2, 2, W // 2, 2, C * k * k)
    p = p.transpose(0, 2, 4, 1, 3, 5)                          # (B, oh, ow, h', w', CKK)
    return p.reshape(B, 4, (H // 2) * (W // 2), C * k * k)


# ------------------------------- LeNet model -------------------------------

def init_lenet_params(key):
    """Deterministic N(0, 0.1) init, torch layouts/shapes."""
    ks = jax.random.split(key, 8)
    std = 0.1
    return {
        "w1": std * jax.random.normal(ks[0], (32, 1, 5, 5), jnp.float32),
        "b1": std * jax.random.normal(ks[1], (32,), jnp.float32),
        "w2": std * jax.random.normal(ks[2], (64, 32, 5, 5), jnp.float32),
        "b2": std * jax.random.normal(ks[3], (64,), jnp.float32),
        "w3": std * jax.random.normal(ks[4], (1024, 7 * 7 * 64), jnp.float32),
        "b3": std * jax.random.normal(ks[5], (1024,), jnp.float32),
        "w4": std * jax.random.normal(ks[6], (10, 1024), jnp.float32),
        "b4": std * jax.random.normal(ks[7], (10,), jnp.float32),
    }


def pack_params(p):
    """One-time re-layout of torch-layout params into kernel layouts:
    pre-transposed, FC1-K / FC2-N zero-padded, bf16 matmul operands, f32 biases."""
    # Conv weights: (Cout, Cin, KH, KW) -> (Cin*KH*KW, Cout), rows = (c, kh, kw).
    w1 = p["w1"].reshape(32, 25).T.astype(jnp.bfloat16)                    # (25, 32)
    w2 = p["w2"].reshape(64, 800).T.astype(jnp.bfloat16)                   # (800, 64), no K pad
    # FC1 weight: torch (1024, 3136), input index (c, h, w); re-order rows to the
    # NHWC flatten (h, w, c) so the forward needs no per-call activation transpose.
    w3 = p["w3"].T.reshape(64, 7, 7, 1024).transpose(1, 2, 0, 3).reshape(3136, 1024)
    w3 = jnp.pad(w3, ((0, FC1_KPAD - 3136), (0, 0))).astype(jnp.bfloat16)  # (3584, 1024)
    # FC2 weight: pre-transpose and pad N 10 -> 128 for lane-dense stores.
    w4 = jnp.pad(p["w4"].T, ((0, 0), (0, FC2_NPAD - 10))).astype(jnp.bfloat16)
    return {
        "w1": w1, "b1": p["b1"].reshape(1, 32).astype(jnp.float32),
        "w2": w2, "b2": p["b2"].reshape(1, 64).astype(jnp.float32),
        "w3": w3, "b3": p["b3"].reshape(1, 1024).astype(jnp.float32),
        "w4": w4,
        "b4": jnp.pad(p["b4"], (0, FC2_NPAD - 10)).reshape(1, FC2_NPAD).astype(jnp.float32),
    }


def lenet_forward(packed, x):
    """x: (B, 1, 28, 28) NCHW float32 -> logits (B, 10) float32."""
    B = x.shape[0]
    xh = x.transpose(0, 2, 3, 1).astype(jnp.bfloat16)             # NHWC bf16

    # --- l1: Conv2d(1, 32, 5, pad=2) + ReLU + MaxPool(2) --- one fused kernel
    p1 = im2col_pool_order(xh, 5, 2)                              # (B, 4, 196, 25)
    y1 = conv_relu_pool(p1, packed["w1"], packed["b1"], q_rows=196, cout=32)
    y1 = y1.reshape(B, 14, 14, 32)                                # pooled NHWC

    # --- l2: Conv2d(32, 64, 5, pad=2) + ReLU + MaxPool(2) --- one fused kernel
    p2 = im2col_pool_order(y1, 5, 2)                              # (B, 4, 49, 800), no K pad
    y2 = conv_relu_pool(p2, packed["w2"], packed["b2"], q_rows=49, cout=64)  # (B, 49, 64)

    # --- flatten in NHWC (h, w, c) order; w3 rows were pre-permuted to match ---
    flat = y2.reshape(B, 49 * 64)                                 # (B, 3136) bf16
    flat = jnp.pad(flat, ((0, 0), (0, FC1_KPAD - 3136)))          # K -> 3584 (zeros)

    # --- l3 + l4 fused: Linear(3136,1024)+ReLU (+Dropout=identity) then Linear(1024,10)
    # computed lane-dense (N=128) inside the same kernel, then sliced.
    logits = fc1_relu_fc2(flat, packed["w3"], packed["b3"],
                          packed["w4"], packed["b4"])             # (B, 128) f32
    return logits[:, :10]


# --------------------------------- main ------------------------------------

if __name__ == "__main__":
    key = jax.random.PRNGKey(0)
    k_params, k_x = jax.random.split(key)

    params = pack_params(init_lenet_params(k_params))   # packed once, outside jit
    # Input: batch=2, 1 channel, 28x28 (required by the 7*7*64 flatten).
    x = jax.random.normal(k_x, (2, 1, 28, 28), jnp.float32)

    logits = jax.jit(lenet_forward)(params, x)
    logits = jax.block_until_ready(logits)

    assert logits.shape == (2, 10)
    assert logits.dtype == jnp.float32
    assert bool(jnp.all(jnp.isfinite(logits)))
    print("KERNEL_OK")
</pallas_src>

<mosaic_0001>
module attributes {stable_mosaic.version = 11 : i64} {
  func.func @kernel(%arg0: i32, %arg1: memref<1x4x196x25xbf16, #tpu.memory_space<vmem>>, %arg2: memref<25x32xbf16, #tpu.memory_space<vmem>>, %arg3: memref<1x32xf32, #tpu.memory_space<vmem>>, %arg4: memref<1x196x32xbf16, #tpu.memory_space<vmem>>) attributes {dimension_semantics = [#tpu.dimension_semantics<parallel>], iteration_bounds = array<i64: 2>, scalar_prefetch = 0 : i64, scratch_operands = 0 : i64, tpu.core_type = #tpu.core_type<tc>, window_params = [{transform_indices = @transform_0, window_bounds = array<i64: 1, 4, 196, 25>}, {pipeline_mode = #tpu.pipeline_mode<synchronous>, transform_indices = @transform_1, window_bounds = array<i64: 25, 32>}, {pipeline_mode = #tpu.pipeline_mode<synchronous>, transform_indices = @transform_2, window_bounds = array<i64: 1, 32>}, {transform_indices = @transform_3, window_bounds = array<i64: 1, 196, 32>}]} {
    %c0 = arith.constant 0 : index
    %c0_0 = arith.constant 0 : index
    %0 = vector.load %arg2[%c0, %c0_0] : memref<25x32xbf16, #tpu.memory_space<vmem>>, vector<25x32xbf16>
    %c0_1 = arith.constant 0 : index
    %c0_2 = arith.constant 0 : index
    %1 = vector.load %arg3[%c0_1, %c0_2] : memref<1x32xf32, #tpu.memory_space<vmem>>, vector<1x32xf32>
    %c0_3 = arith.constant 0 : index
    %c0_4 = arith.constant 0 : index
    %c0_5 = arith.constant 0 : index
    %c0_6 = arith.constant 0 : index
    %2 = vector.load %arg1[%c0_3, %c0_4, %c0_5, %c0_6] : memref<1x4x196x25xbf16, #tpu.memory_space<vmem>>, vector<1x1x196x25xbf16>
    %3 = vector.shape_cast %2 : vector<1x1x196x25xbf16> to vector<196x25xbf16>
    %cst = arith.constant dense<0.000000e+00> : vector<196x32xf32>
    %4 = tpu.matmul %3, %0, %cst {dimension_numbers = #tpu.dot_dimension_numbers<[1], [0], [0], [1], [0, 0, 1, 1], [], []>} : vector<196x25xbf16>, vector<25x32xbf16>, vector<196x32xf32> -> vector<196x32xf32>
    %c0_7 = arith.constant 0 : index
    %c1 = arith.constant 1 : index
    %c0_8 = arith.constant 0 : index
    %c0_9 = arith.constant 0 : index
    %5 = vector.load %arg1[%c0_7, %c1, %c0_8, %c0_9] : memref<1x4x196x25xbf16, #tpu.memory_space<vmem>>, vector<1x1x196x25xbf16>
    %6 = vector.shape_cast %5 : vector<1x1x196x25xbf16> to vector<196x25xbf16>
    %cst_10 = arith.constant dense<0.000000e+00> : vector<196x32xf32>
    %7 = tpu.matmul %6, %0, %cst_10 {dimension_numbers = #tpu.dot_dimension_numbers<[1], [0], [0], [1], [0, 0, 1, 1], [], []>} : vector<196x25xbf16>, vector<25x32xbf16>, vector<196x32xf32> -> vector<196x32xf32>
    %8 = arith.maximumf %4, %7 : vector<196x32xf32>
    %c0_11 = arith.constant 0 : index
    %c2 = arith.constant 2 : index
    %c0_12 = arith.constant 0 : index
    %c0_13 = arith.constant 0 : index
    %9 = vector.load %arg1[%c0_11, %c2, %c0_12, %c0_13] : memref<1x4x196x25xbf16, #tpu.memory_space<vmem>>, vector<1x1x196x25xbf16>
    %10 = vector.shape_cast %9 : vector<1x1x196x25xbf16> to vector<196x25xbf16>
    %cst_14 = arith.constant dense<0.000000e+00> : vector<196x32xf32>
    %11 = tpu.matmul %10, %0, %cst_14 {dimension_numbers = #tpu.dot_dimension_numbers<[1], [0], [0], [1], [0, 0, 1, 1], [], []>} : vector<196x25xbf16>, vector<25x32xbf16>, vector<196x32xf32> -> vector<196x32xf32>
    %12 = arith.maximumf %8, %11 : vector<196x32xf32>
    %c0_15 = arith.constant 0 : index
    %c3 = arith.constant 3 : index
    %c0_16 = arith.constant 0 : index
    %c0_17 = arith.constant 0 : index
    %13 = vector.load %arg1[%c0_15, %c3, %c0_16, %c0_17] : memref<1x4x196x25xbf16, #tpu.memory_space<vmem>>, vector<1x1x196x25xbf16>
    %14 = vector.shape_cast %13 : vector<1x1x196x25xbf16> to vector<196x25xbf16>
    %cst_18 = arith.constant dense<0.000000e+00> : vector<196x32xf32>
    %15 = tpu.matmul %14, %0, %cst_18 {dimension_numbers = #tpu.dot_dimension_numbers<[1], [0], [0], [1], [0, 0, 1, 1], [], []>} : vector<196x25xbf16>, vector<25x32xbf16>, vector<196x32xf32> -> vector<196x32xf32>
    %16 = arith.maximumf %12, %15 : vector<196x32xf32>
    %17 = vector.broadcast %1 : vector<1x32xf32> to vector<196x32xf32>
    %18 = arith.addf %16, %17 : vector<196x32xf32>
    %cst_19 = arith.constant 0.000000e+00 : f32
    %19 = vector.broadcast %cst_19 : f32 to vector<196x32xf32>
    %20 = arith.maximumf %18, %19 : vector<196x32xf32>
    %21 = arith.truncf %20 : vector<196x32xf32> to vector<196x32xbf16>
    %c0_20 = arith.constant 0 : index
    %c0_21 = arith.constant 0 : index
    %c0_22 = arith.constant 0 : index
    %22 = vector.load %arg4[%c0_20, %c0_21, %c0_22] : memref<1x196x32xbf16, #tpu.memory_space<vmem>>, vector<1x196x32xbf16>
    %23 = vector.shape_cast %22 : vector<1x196x32xbf16> to vector<196x32xbf16>
    %24 = vector.shape_cast %21 : vector<196x32xbf16> to vector<1x196x32xbf16>
    tpu.vector_store %arg4[%c0_20, %c0_21, %c0_22], %24 {strides = array<i32>} : memref<1x196x32xbf16, #tpu.memory_space<vmem>>, vector<1x196x32xbf16>,
    return
  }
  func.func @transform_0(%arg0: i32) -> (i32, i32, i32, i32) {
    %c0_i32 = arith.constant 0 : i32
    %c0_i32_0 = arith.constant 0 : i32
    %c0_i32_1 = arith.constant 0 : i32
    %c0_i32_2 = arith.constant 0 : i32
    return %arg0, %c0_i32, %c0_i32_0, %c0_i32_1 : i32, i32, i32, i32
  }
  func.func @transform_1(%arg0: i32) -> (i32, i32) {
    %c0_i32 = arith.constant 0 : i32
    %c0_i32_0 = arith.constant 0 : i32
    %c0_i32_1 = arith.constant 0 : i32
    return %c0_i32, %c0_i32_0 : i32, i32
  }
  func.func @transform_2(%arg0: i32) -> (i32, i32) {
    %c0_i32 = arith.constant 0 : i32
    %c0_i32_0 = arith.constant 0 : i32
    %c0_i32_1 = arith.constant 0 : i32
    return %c0_i32, %c0_i32_0 : i32, i32
  }
  func.func @transform_3(%arg0: i32) -> (i32, i32, i32) {
    %c0_i32 = arith.constant 0 : i32
    %c0_i32_0 = arith.constant 0 : i32
    %c0_i32_1 = arith.constant 0 : i32
    return %arg0, %c0_i32, %c0_i32_0 : i32, i32, i32
  }
}

module attributes {stable_mosaic.version = 11 : i64} {
  func.func @kernel(%arg0: i32, %arg1: memref<1x4x49x800xbf16, #tpu.memory_space<vmem>>, %arg2: memref<800x64xbf16, #tpu.memory_space<vmem>>, %arg3: memref<1x64xf32, #tpu.memory_space<vmem>>, %arg4: memref<1x49x64xbf16, #tpu.memory_space<vmem>>) attributes {dimension_semantics = [#tpu.dimension_semantics<parallel>], iteration_bounds = array<i64: 2>, scalar_prefetch = 0 : i64, scratch_operands = 0 : i64, tpu.core_type = #tpu.core_type<tc>, window_params = [{transform_indices = @transform_0, window_bounds = array<i64: 1, 4, 49, 800>}, {pipeline_mode = #tpu.pipeline_mode<synchronous>, transform_indices = @transform_1, window_bounds = array<i64: 800, 64>}, {pipeline_mode = #tpu.pipeline_mode<synchronous>, transform_indices = @transform_2, window_bounds = array<i64: 1, 64>}, {transform_indices = @transform_3, window_bounds = array<i64: 1, 49, 64>}]} {
    %c0 = arith.constant 0 : index
    %c0_0 = arith.constant 0 : index
    %0 = vector.load %arg2[%c0, %c0_0] : memref<800x64xbf16, #tpu.memory_space<vmem>>, vector<800x64xbf16>
    %c0_1 = arith.constant 0 : index
    %c0_2 = arith.constant 0 : index
    %1 = vector.load %arg3[%c0_1, %c0_2] : memref<1x64xf32, #tpu.memory_space<vmem>>, vector<1x64xf32>
    %c0_3 = arith.constant 0 : index
    %c0_4 = arith.constant 0 : index
    %c0_5 = arith.constant 0 : index
    %c0_6 = arith.constant 0 : index
    %2 = vector.load %arg1[%c0_3, %c0_4, %c0_5, %c0_6] : memref<1x4x49x800xbf16, #tpu.memory_space<vmem>>, vector<1x1x49x800xbf16>
    %3 = vector.shape_cast %2 : vector<1x1x49x800xbf16> to vector<49x800xbf16>
    %cst = arith.constant dense<0.000000e+00> : vector<49x64xf32>
    %4 = tpu.matmul %3, %0, %cst {dimension_numbers = #tpu.dot_dimension_numbers<[1], [0], [0], [1], [0, 0, 1, 1], [], []>} : vector<49x800xbf16>, vector<800x64xbf16>, vector<49x64xf32> -> vector<49x64xf32>
    %c0_7 = arith.constant 0 : index
    %c1 = arith.constant 1 : index
    %c0_8 = arith.constant 0 : index
    %c0_9 = arith.constant 0 : index
    %5 = vector.load %arg1[%c0_7, %c1, %c0_8, %c0_9] : memref<1x4x49x800xbf16, #tpu.memory_space<vmem>>, vector<1x1x49x800xbf16>
    %6 = vector.shape_cast %5 : vector<1x1x49x800xbf16> to vector<49x800xbf16>
    %cst_10 = arith.constant dense<0.000000e+00> : vector<49x64xf32>
    %7 = tpu.matmul %6, %0, %cst_10 {dimension_numbers = #tpu.dot_dimension_numbers<[1], [0], [0], [1], [0, 0, 1, 1], [], []>} : vector<49x800xbf16>, vector<800x64xbf16>, vector<49x64xf32> -> vector<49x64xf32>
    %8 = arith.maximumf %4, %7 : vector<49x64xf32>
    %c0_11 = arith.constant 0 : index
    %c2 = arith.constant 2 : index
    %c0_12 = arith.constant 0 : index
    %c0_13 = arith.constant 0 : index
    %9 = vector.load %arg1[%c0_11, %c2, %c0_12, %c0_13] : memref<1x4x49x800xbf16, #tpu.memory_space<vmem>>, vector<1x1x49x800xbf16>
    %10 = vector.shape_cast %9 : vector<1x1x49x800xbf16> to vector<49x800xbf16>
    %cst_14 = arith.constant dense<0.000000e+00> : vector<49x64xf32>
    %11 = tpu.matmul %10, %0, %cst_14 {dimension_numbers = #tpu.dot_dimension_numbers<[1], [0], [0], [1], [0, 0, 1, 1], [], []>} : vector<49x800xbf16>, vector<800x64xbf16>, vector<49x64xf32> -> vector<49x64xf32>
    %12 = arith.maximumf %8, %11 : vector<49x64xf32>
    %c0_15 = arith.constant 0 : index
    %c3 = arith.constant 3 : index
    %c0_16 = arith.constant 0 : index
    %c0_17 = arith.constant 0 : index
    %13 = vector.load %arg1[%c0_15, %c3, %c0_16, %c0_17] : memref<1x4x49x800xbf16, #tpu.memory_space<vmem>>, vector<1x1x49x800xbf16>
    %14 = vector.shape_cast %13 : vector<1x1x49x800xbf16> to vector<49x800xbf16>
    %cst_18 = arith.constant dense<0.000000e+00> : vector<49x64xf32>
    %15 = tpu.matmul %14, %0, %cst_18 {dimension_numbers = #tpu.dot_dimension_numbers<[1], [0], [0], [1], [0, 0, 1, 1], [], []>} : vector<49x800xbf16>, vector<800x64xbf16>, vector<49x64xf32> -> vector<49x64xf32>
    %16 = arith.maximumf %12, %15 : vector<49x64xf32>
    %17 = vector.broadcast %1 : vector<1x64xf32> to vector<49x64xf32>
    %18 = arith.addf %16, %17 : vector<49x64xf32>
    %cst_19 = arith.constant 0.000000e+00 : f32
    %19 = vector.broadcast %cst_19 : f32 to vector<49x64xf32>
    %20 = arith.maximumf %18, %19 : vector<49x64xf32>
    %21 = arith.truncf %20 : vector<49x64xf32> to vector<49x64xbf16>
    %c0_20 = arith.constant 0 : index
    %c0_21 = arith.constant 0 : index
    %c0_22 = arith.constant 0 : index
    %22 = vector.load %arg4[%c0_20, %c0_21, %c0_22] : memref<1x49x64xbf16, #tpu.memory_space<vmem>>, vector<1x49x64xbf16>
    %23 = vector.shape_cast %22 : vector<1x49x64xbf16> to vector<49x64xbf16>
    %24 = vector.shape_cast %21 : vector<49x64xbf16> to vector<1x49x64xbf16>
    tpu.vector_store %arg4[%c0_20, %c0_21, %c0_22], %24 {strides = array<i32>} : memref<1x49x64xbf16, #tpu.memory_space<vmem>>, vector<1x49x64xbf16>,
    return
  }
  func.func @transform_0(%arg0: i32) -> (i32, i32, i32, i32) {
    %c0_i32 = arith.constant 0 : i32
    %c0_i32_0 = arith.constant 0 : i32
    %c0_i32_1 = arith.constant 0 : i32
    %c0_i32_2 = arith.constant 0 : i32
    return %arg0, %c0_i32, %c0_i32_0, %c0_i32_1 : i32, i32, i32, i32
  }
  func.func @transform_1(%arg0: i32) -> (i32, i32) {
    %c0_i32 = arith.constant 0 : i32
    %c0_i32_0 = arith.constant 0 : i32
    %c0_i32_1 = arith.constant 0 : i32
    return %c0_i32, %c0_i32_0 : i32, i32
  }
  func.func @transform_2(%arg0: i32) -> (i32, i32) {
    %c0_i32 = arith.constant 0 : i32
    %c0_i32_0 = arith.constant 0 : i32
    %c0_i32_1 = arith.constant 0 : i32
    return %c0_i32, %c0_i32_0 : i32, i32
  }
  func.func @transform_3(%arg0: i32) -> (i32, i32, i32) {
    %c0_i32 = arith.constant 0 : i32
    %c0_i32_0 = arith.constant 0 : i32
    %c0_i32_1 = arith.constant 0 : i32
    return %arg0, %c0_i32, %c0_i32_0 : i32, i32, i32
  }
}

module attributes {stable_mosaic.version = 11 : i64} {
  func.func @kernel(%arg0: i32, %arg1: memref<2x1792xbf16, #tpu.memory_space<vmem>>, %arg2: memref<1792x1024xbf16, #tpu.memory_space<vmem>>, %arg3: memref<1x1024xf32, #tpu.memory_space<vmem>>, %arg4: memref<1024x128xbf16, #tpu.memory_space<vmem>>, %arg5: memref<1x128xf32, #tpu.memory_space<vmem>>, %arg6: memref<2x128xf32, #tpu.memory_space<vmem>>, %arg7: memref<2x1024xf32, #tpu.memory_space<vmem>>) attributes {dimension_semantics = [#tpu.dimension_semantics<arbitrary>], iteration_bounds = array<i64: 2>, scalar_prefetch = 0 : i64, scratch_operands = 1 : i64, tpu.core_type = #tpu.core_type<tc>, window_params = [{transform_indices = @transform_0, window_bounds = array<i64: 2, 1792>}, {transform_indices = @transform_1, window_bounds = array<i64: 1792, 1024>}, {pipeline_mode = #tpu.pipeline_mode<synchronous>, transform_indices = @transform_2, window_bounds = array<i64: 1, 1024>}, {pipeline_mode = #tpu.pipeline_mode<synchronous>, transform_indices = @transform_3, window_bounds = array<i64: 1024, 128>}, {pipeline_mode = #tpu.pipeline_mode<synchronous>, transform_indices = @transform_4, window_bounds = array<i64: 1, 128>}, {pipeline_mode = #tpu.pipeline_mode<synchronous>, transform_indices = @transform_5, window_bounds = array<i64: 2, 128>}]} {
    %c0_i32 = arith.constant 0 : i32
    %0 = arith.cmpi eq, %arg0, %c0_i32 : i32
    %1 = arith.extui %0 : i1 to i32
    %c0_i32_0 = arith.constant 0 : i32
    %2 = arith.cmpi ne, %1, %c0_i32_0 : i32
    scf.if %2 {
      %cst_9 = arith.constant 0.000000e+00 : f32
      %12 = vector.broadcast %cst_9 : f32 to vector<2x1024xf32>
      %c0_10 = arith.constant 0 : index
      %c0_11 = arith.constant 0 : index
      %13 = vector.load %arg7[%c0_10, %c0_11] : memref<2x1024xf32, #tpu.memory_space<vmem>>, vector<2x1024xf32>
      tpu.vector_store %arg7[%c0_10, %c0_11], %12 {strides = array<i32>} : memref<2x1024xf32, #tpu.memory_space<vmem>>, vector<2x1024xf32>,
    } else {
    }
    %c0 = arith.constant 0 : index
    %c0_1 = arith.constant 0 : index
    %3 = vector.load %arg7[%c0, %c0_1] : memref<2x1024xf32, #tpu.memory_space<vmem>>, vector<2x1024xf32>
    %c0_2 = arith.constant 0 : index
    %c0_3 = arith.constant 0 : index
    %4 = vector.load %arg1[%c0_2, %c0_3] : memref<2x1792xbf16, #tpu.memory_space<vmem>>, vector<2x1792xbf16>
    %c0_4 = arith.constant 0 : index
    %c0_5 = arith.constant 0 : index
    %5 = vector.load %arg2[%c0_4, %c0_5] : memref<1792x1024xbf16, #tpu.memory_space<vmem>>, vector<1792x1024xbf16>
    %cst = arith.constant dense<0.000000e+00> : vector<2x1024xf32>
    %6 = tpu.matmul %4, %5, %cst {dimension_numbers = #tpu.dot_dimension_numbers<[1], [0], [0], [1], [0, 0, 1, 1], [], []>} : vector<2x1792xbf16>, vector<1792x1024xbf16>, vector<2x1024xf32> -> vector<2x1024xf32>
    %7 = arith.addf %3, %6 : vector<2x1024xf32>
    %c0_6 = arith.constant 0 : index
    %c0_7 = arith.constant 0 : index
    %8 = vector.load %arg7[%c0_6, %c0_7] : memref<2x1024xf32, #tpu.memory_space<vmem>>, vector<2x1024xf32>
    tpu.vector_store %arg7[%c0_6, %c0_7], %7 {strides = array<i32>} : memref<2x1024xf32, #tpu.memory_space<vmem>>, vector<2x1024xf32>,
    %c1_i32 = arith.constant 1 : i32
    %9 = arith.cmpi eq, %arg0, %c1_i32 : i32
    %10 = arith.extui %9 : i1 to i32
    %c0_i32_8 = arith.constant 0 : i32
    %11 = arith.cmpi ne, %10, %c0_i32_8 : i32
    scf.if %11 {
      %c0_9 = arith.constant 0 : index
      %c0_10 = arith.constant 0 : index
      %12 = vector.load %arg7[%c0_9, %c0_10] : memref<2x1024xf32, #tpu.memory_space<vmem>>, vector<2x1024xf32>
      %c0_11 = arith.constant 0 : index
      %c0_12 = arith.constant 0 : index
      %13 = vector.load %arg3[%c0_11, %c0_12] : memref<1x1024xf32, #tpu.memory_space<vmem>>, vector<1x1024xf32>
      %14 = vector.broadcast %13 : vector<1x1024xf32> to vector<2x1024xf32>
      %15 = arith.addf %12, %14 : vector<2x1024xf32>
      %cst_13 = arith.constant 0.000000e+00 : f32
      %16 = vector.broadcast %cst_13 : f32 to vector<2x1024xf32>
      %17 = arith.maximumf %15, %16 : vector<2x1024xf32>
      %18 = arith.truncf %17 : vector<2x1024xf32> to vector<2x1024xbf16>
      %c0_14 = arith.constant 0 : index
      %c0_15 = arith.constant 0 : index
      %19 = vector.load %arg4[%c0_14, %c0_15] : memref<1024x128xbf16, #tpu.memory_space<vmem>>, vector<1024x128xbf16>
      %cst_16 = arith.constant dense<0.000000e+00> : vector<2x128xf32>
      %20 = tpu.matmul %18, %19, %cst_16 {dimension_numbers = #tpu.dot_dimension_numbers<[1], [0], [0], [1], [0, 0, 1, 1], [], []>} : vector<2x1024xbf16>, vector<1024x128xbf16>, vector<2x128xf32> -> vector<2x128xf32>
      %c0_17 = arith.constant 0 : index
      %c0_18 = arith.constant 0 : index
      %21 = vector.load %arg5[%c0_17, %c0_18] : memref<1x128xf32, #tpu.memory_space<vmem>>, vector<1x128xf32>
      %22 = vector.broadcast %21 : vector<1x128xf32> to vector<2x128xf32>
      %23 = arith.addf %20, %22 : vector<2x128xf32>
      %c0_19 = arith.constant 0 : index
      %c0_20 = arith.constant 0 : index
      %24 = vector.load %arg6[%c0_19, %c0_20] : memref<2x128xf32, #tpu.memory_space<vmem>>, vector<2x128xf32>
      tpu.vector_store %arg6[%c0_19, %c0_20], %23 {strides = array<i32>} : memref<2x128xf32, #tpu.memory_space<vmem>>, vector<2x128xf32>,
    } else {
    }
    return
  }
  func.func @transform_0(%arg0: i32) -> (i32, i32) {
    %c0_i32 = arith.constant 0 : i32
    %c0_i32_0 = arith.constant 0 : i32
    return %c0_i32, %arg0 : i32, i32
  }
  func.func @transform_1(%arg0: i32) -> (i32, i32) {
    %c0_i32 = arith.constant 0 : i32
    %c0_i32_0 = arith.constant 0 : i32
    return %arg0, %c0_i32 : i32, i32
  }
  func.func @transform_2(%arg0: i32) -> (i32, i32) {
    %c0_i32 = arith.constant 0 : i32
    %c0_i32_0 = arith.constant 0 : i32
    %c0_i32_1 = arith.constant 0 : i32
    return %c0_i32, %c0_i32_0 : i32, i32
  }
  func.func @transform_3(%arg0: i32) -> (i32, i32) {
    %c0_i32 = arith.constant 0 : i32
    %c0_i32_0 = arith.constant 0 : i32
    %c0_i32_1 = arith.constant 0 : i32
    return %c0_i32, %c0_i32_0 : i32, i32
  }
  func.func @transform_4(%arg0: i32) -> (i32, i32) {
    %c0_i32 = arith.constant 0 : i32
    %c0_i32_0 = arith.constant 0 : i32
    %c0_i32_1 = arith.constant 0 : i32
    return %c0_i32, %c0_i32_0 : i32, i32
  }
  func.func @transform_5(%arg0: i32) -> (i32, i32) {
    %c0_i32 = arith.constant 0 : i32
    %c0_i32_0 = arith.constant 0 : i32
    %c0_i32_1 = arith.constant 0 : i32
    return %c0_i32, %c0_i32_0 : i32, i32
  }
}

</mosaic_0001>

<llo_original>
// kernel: lenet_forward.3
$region0: #{lenet_forward.3}
  #allocation0 [shape = 'u32[]', space=smem, size = 0x4, offset = 0x4, fixed_abs, tag = 'smem constant byte address 0x4 - core index']
  #allocation1 [shape = 'u32[144,128]{1,0:T(1,128)}', space=vmem, size = 0x12000, scoped, tag = 'internal scratch']
  %s0 = inlined_call_operand.vmem [shape: bf16[2,4,196,25], index: 0, kind: input, shape index: {}]
  %s1 = inlined_call_operand.vmem [shape: bf16[25,32], index: 1, kind: input, shape index: {}]
  %s2 = inlined_call_operand.vmem [shape: f32[1,32], index: 2, kind: input, shape index: {}]
  %s3 = inlined_call_operand.vmem [shape: bf16[2,196,32], index: 3, kind: output, shape index: {}]
  %s4 = sld [smem:[#allocation0]]
  $region45: #{lenet_forward.3} parent=0
    _
  %s6 = ssub.s32 1, %s4
  %s7 = scalar_select 0, %s6, %s4
  loop: start=0, step=1, limit=4
  $region2: #{lenet_forward.3} parent=0 // loop_pre_header
    _
  $region3: #{lenet_forward.3} parent=0 // loop_header
    %s9 = sphi 0, %s13
    %p10 = scmp.ge.s32.totalorder %s9, 4
    %s19 = sphi 0, %s21
    %s22 = sphi 0, %s19
    %s23 = sphi 0, %s22
    %s39 = sphi 0, %s23
    %s43 = sphi 0, %s43
    %s45 = sphi 0, %s43
    %s46 = sphi 0, %s45
    %s60 = sphi 0, %s46
    %s64 = sphi 0, %s64
    %s66 = sphi 0, %s64
    %s67 = sphi 0, %s66
    %s81 = sphi 0, %s67
    %s87 = sphi 0, %s89
    %s90 = sphi 0, %s87
    %s91 = sphi 0, %s90
    %s107 = sphi 0, %s91
  $region4: #{lenet_forward.3} parent=0 // loop_header_branch
    %12 = sbr.rel (%p10) target = $region8
  $region5: #{lenet_forward.3} parent=0 // loop_body
    %s14 = ssub.s32 %s9, 1
    %s15 = ssub.s32 %s9, 2
    %s16 = sadd.s32 %s9, 1
    %s17 = ssub.s32 %s9, %s16
    %p18 = scmp.eq.s32.totalorder %s17, 0
    %s20 = sadd.s32 %s19, 1
    %s21 = scalar_select %p18, %s19, %s20
    %p24 = pneg %p18
    %p25 = scmp.eq.s32.totalorder %s9, 1
    %p26 = por %p24, %p25
    %p27 = scmp.ne.s32.totalorder %s19, %s22
    %p28 = scmp.eq.s32.totalorder %s9, 0
    %p29 = por %p27, %p28
    %p30 = scmp.ne.s32.totalorder %s19, %s22
    %p31 = scmp.eq.s32.totalorder %s14, 1
    %p32 = por %p30, %p31
    %p33 = scmp.ne.s32.totalorder %s22, %s23
    %p34 = scmp.eq.s32.totalorder %s14, 0
    %p35 = por %p33, %p34
    %p36 = scmp.ne.s32.totalorder %s22, %s23
    %p37 = scmp.eq.s32.totalorder %s15, 1
    %p38 = por %p36, %p37
    %p40 = scmp.ne.s32.totalorder %s23, %s39
    %p41 = scmp.eq.s32.totalorder %s15, 0
    %p42 = por %p40, %p41
    %s44 = sadd.s32 %s43, 1
    %p47 = scmp.eq.s32.totalorder %s9, 1
    %p48 = scmp.ne.s32.totalorder %s43, %s45
    %p49 = scmp.eq.s32.totalorder %s9, 0
    %p50 = por %p48, %p49
    %p51 = scmp.ne.s32.totalorder %s43, %s45
    %p52 = scmp.eq.s32.totalorder %s14, 1
    %p53 = por %p51, %p52
    %p54 = scmp.ne.s32.totalorder %s45, %s46
    %p55 = scmp.eq.s32.totalorder %s14, 0
    %p56 = por %p54, %p55
    %p57 = scmp.ne.s32.totalorder %s45, %s46
    %p58 = scmp.eq.s32.totalorder %s15, 1
    %p59 = por %p57, %p58
    %p61 = scmp.ne.s32.totalorder %s46, %s60
    %p62 = scmp.eq.s32.totalorder %s15, 0
    %p63 = por %p61, %p62
    %s65 = sadd.s32 %s64, 1
    %p68 = scmp.eq.s32.totalorder %s9, 1
    %p69 = scmp.ne.s32.totalorder %s64, %s66
    %p70 = scmp.eq.s32.totalorder %s9, 0
    %p71 = por %p69, %p70
    %p72 = scmp.ne.s32.totalorder %s64, %s66
    %p73 = scmp.eq.s32.totalorder %s14, 1
    %p74 = por %p72, %p73
    %p75 = scmp.ne.s32.totalorder %s66, %s67
    %p76 = scmp.eq.s32.totalorder %s14, 0
    %p77 = por %p75, %p76
    %p78 = scmp.ne.s32.totalorder %s66, %s67
    %p79 = scmp.eq.s32.totalorder %s15, 1
    %p80 = por %p78, %p79
    %p82 = scmp.ne.s32.totalorder %s67, %s81
    %p83 = scmp.eq.s32.totalorder %s15, 0
    %p84 = por %p82, %p83
    %s85 = ssub.s32 %s9, %s16
    %p86 = scmp.eq.s32.totalorder %s85, 0
    %s88 = sadd.s32 %s87, 1
    %s89 = scalar_select %p86, %s87, %s88
    %p92 = pneg %p86
    %p93 = scmp.eq.s32.totalorder %s9, 1
    %p94 = por %p92, %p93
    %p95 = scmp.ne.s32.totalorder %s87, %s90
    %p96 = scmp.eq.s32.totalorder %s9, 0
    %p97 = por %p95, %p96
    %p98 = scmp.ne.s32.totalorder %s87, %s90
    %p99 = scmp.eq.s32.totalorder %s14, 1
    %p100 = por %p98, %p99
    %p101 = scmp.ne.s32.totalorder %s90, %s91
    %p102 = scmp.eq.s32.totalorder %s14, 0
    %p103 = por %p101, %p102
    %p104 = scmp.ne.s32.totalorder %s90, %s91
    %p105 = scmp.eq.s32.totalorder %s15, 1
    %p106 = por %p104, %p105
    %p108 = scmp.ne.s32.totalorder %s91, %s107
    %p109 = scmp.eq.s32.totalorder %s15, 0
    %p110 = por %p108, %p109
    %p111 = scmp.le.s32.totalorder 1, %s9
    %p112 = scmp.lt.s32.totalorder %s9, 3
    %p113 = pnand %p111, %p112
    %p114 = pneg %p113
    // Predicated region
    $region9: #{lenet_forward.3} parent=5 // pred_check
      _
    $region10: #{lenet_forward.3} parent=5 // pred_check_branch
      %116 = sbr.rel (%p113) target = $region12
    $region11: #{lenet_forward.3} parent=5 // pred_region
      %s117 = ssub.s32 %s9, 1
      // Predicated region
      $region13: #{lenet_forward.3} parent=11 // pred_check
        %p118 = pneg %p56
      $region14: #{lenet_forward.3} parent=11 // pred_check_branch
        %120 = sbr.rel (%p118) target = $region16
      $region15: #{lenet_forward.3} parent=11 // pred_region
        _
      $region16: #{lenet_forward.3} parent=11 // pred_fallthru
        _
      // Predicated region
      $region17: #{lenet_forward.3} parent=11 // pred_check
        %p121 = pneg %p77
      $region18: #{lenet_forward.3} parent=11 // pred_check_branch
        %123 = sbr.rel (%p121) target = $region20
      $region19: #{lenet_forward.3} parent=11 // pred_region
        _
      $region20: #{lenet_forward.3} parent=11 // pred_fallthru
        _
    $region12: #{lenet_forward.3} parent=5 // pred_fallthru
      _
    %p124 = scmp.lt.s32.totalorder %s9, 2
    // Predicated region
    $region21: #{lenet_forward.3} parent=5 // pred_check
      %p125 = pneg %p124
    $region22: #{lenet_forward.3} parent=5 // pred_check_branch
      %127 = sbr.rel (%p125) target = $region24
    $region23: #{lenet_forward.3} parent=5 // pred_region
      // Predicated region
      $region25: #{lenet_forward.3} parent=23 // pred_check
        %p128 = pneg %p29
      $region26: #{lenet_forward.3} parent=23 // pred_check_branch
        %130 = sbr.rel (%p128) target = $region28
      $region27: #{lenet_forward.3} parent=23 // pred_region
        %p131 = scmp.lt.s32.totalorder %s9, 1
        %s132 = scalar_select %p131, %s9, 1
        %s133 = smul.addr %s132, 100
        %s134 = smul.addr %s133, 4
        %s135 = scalar_lea.vmem %s0, %s134
      $region28: #{lenet_forward.3} parent=23 // pred_fallthru
        _
    $region24: #{lenet_forward.3} parent=5 // pred_fallthru
      _
    %p136 = scmp.le.s32.totalorder 1, %s9
    %p137 = scmp.lt.s32.totalorder %s9, 3
    %p138 = pnand %p136, %p137
    %p139 = pneg %p138
    // Predicated region
    $region29: #{lenet_forward.3} parent=5 // pred_check
      _
    $region30: #{lenet_forward.3} parent=5 // pred_check_branch
      %141 = sbr.rel (%p138) target = $region32
    $region31: #{lenet_forward.3} parent=5 // pred_region
      %s142 = ssub.s32 %s9, 1
      %p143 = scmp.lt.s32.totalorder %s14, 1
      %s144 = scalar_select %p143, %s14, 1
      %s145 = smul.addr %s144, 100
      %s146 = smul.addr %s145, 4
      %s147 = scalar_lea.vmem %s0, %s146
      %p148 = pneg %p35
      %p149 = pneg %p32
      %p150 = pneg %p56
      %p151 = pneg %p53
      %p152 = pneg %p77
      %p153 = pneg %p74
      %p154 = pneg %p103
      %p155 = pneg %p100
      %p156 = scmp.lt.s32.totalorder %s14, 1
      %s157 = scalar_select %p156, %s14, 1
      %s158 = smul.addr %s157, 25
      %s159 = smul.addr %s158, 4
      %s160 = scalar_lea.vmem %s3, %s159
      %p161 = scmp.lt.s32.totalorder %s14, 1
      %s162 = scalar_select %p161, %s14, 1
      %s163 = smul.addr %s162, 100
      %s164 = smul.addr %s163, 4
      %s165 = scalar_lea.vmem %s0, %s164
      %p166 = scmp.lt.s32.totalorder %s14, 1
      %s167 = scalar_select %p166, %s14, 1
      %s168 = smul.addr %s167, 25
      %s169 = smul.addr %s168, 4
      %s170 = scalar_lea.vmem %s3, %s169
      %v172 = vld [vmem:[%s1] sm:$0xf]
      %v173 = vld [vmem:[%s1 + $0x4] sm:$0xf]
      %v174 = vld [vmem:[%s1 + $0x8] sm:$0xf]
      %v175 = vld [vmem:[%s1 + $0xc] sm:$0x1]
      %v176 = vld [vmem:[%s2] sm:$0x1]
      %v177 = vld [vmem:[%s165] sm:$0xf]
      %v178 = vld [vmem:[%s165 + $0x4] sm:$0xf]
      %v179 = vld [vmem:[%s165 + $0x8] sm:$0xf]
      %v180 = vld [vmem:[%s165 + $0xc] sm:$0xf]
      %v181 = vld [vmem:[%s165 + $0x10] sm:$0xf]
      %v182 = vld [vmem:[%s165 + $0x14] sm:$0xf]
      %v183 = vld [vmem:[%s165 + $0x18] sm:$0xf]
      %v184 = vld [vmem:[%s165 + $0x1c] sm:$0xf]
      %v185 = vld [vmem:[%s165 + $0x20] sm:$0xf]
      %v186 = vld [vmem:[%s165 + $0x24] sm:$0xf]
      %v187 = vld [vmem:[%s165 + $0x28] sm:$0xf]
      %v188 = vld [vmem:[%s165 + $0x2c] sm:$0xf]
      %v189 = vld [vmem:[%s165 + $0x30] sm:$0xf]
      %v190 = vld [vmem:[%s165 + $0x34] sm:$0xf]
      %v191 = vld [vmem:[%s165 + $0x38] sm:$0xf]
      %v192 = vld [vmem:[%s165 + $0x3c] sm:$0xf]
      %v193 = vld [vmem:[%s165 + $0x40] sm:$0xf]
      %v194 = vld [vmem:[%s165 + $0x44] sm:$0xf]
      %v195 = vld [vmem:[%s165 + $0x48] sm:$0xf]
      %v196 = vld [vmem:[%s165 + $0x4c] sm:$0xf]
      %v197 = vld [vmem:[%s165 + $0x50] sm:$0xf]
      %v198 = vld [vmem:[%s165 + $0x54] sm:$0xf]
      %v199 = vld [vmem:[%s165 + $0x58] sm:$0xf]
      %v200 = vld [vmem:[%s165 + $0x5c] sm:$0xf]
      %v201 = vld [vmem:[%s165 + $0x60] sm:$0x3]
      %v227 = vunpack.c.l.b16 %v177
      %v228 = vunpack.c.l.b16 %v178
      %v229 = vunpack.c.l.b16 %v179
      %v230 = vunpack.c.l.b16 %v180
      %v231 = vunpack.c.l.b16 %v181
      %v232 = vunpack.c.l.b16 %v182
      %v233 = vunpack.c.l.b16 %v183
      %v234 = vunpack.c.l.b16 %v184
      %v235 = vunpack.c.l.b16 %v185
      %v236 = vunpack.c.l.b16 %v186
      %v237 = vunpack.c.l.b16 %v187
      %v238 = vunpack.c.l.b16 %v188
      %v239 = vunpack.c.l.b16 %v189
      %v240 = vunpack.c.l.b16 %v190
      %v241 = vunpack.c.l.b16 %v191
      %v242 = vunpack.c.l.b16 %v192
      %v243 = vunpack.c.l.b16 %v193
      %v244 = vunpack.c.l.b16 %v194
      %v245 = vunpack.c.l.b16 %v195
      %v246 = vunpack.c.l.b16 %v196
      %v247 = vunpack.c.l.b16 %v197
      %v248 = vunpack.c.l.b16 %v198
      %v249 = vunpack.c.l.b16 %v199
      %v250 = vunpack.c.l.b16 %v200
      %v251 = vunpack.c.l.b16 %v201
      %v252 = vpack.c.b16 %v228, %v227
      %v253 = vpack.c.b16 %v230, %v229
      %v254 = vpack.c.b16 %v232, %v231
      %v255 = vpack.c.b16 %v234, %v233
      %v256 = vpack.c.b16 %v236, %v235
      %v257 = vpack.c.b16 %v238, %v237
      %v258 = vpack.c.b16 %v240, %v239
      %v259 = vpack.c.b16 %v242, %v241
      %v260 = vpack.c.b16 %v244, %v243
      %v261 = vpack.c.b16 %v246, %v245
      %v262 = vpack.c.b16 %v248, %v247
      %v263 = vpack.c.b16 %v250, %v249
      %v264 = vpack.c.b16 %v251, %v251
      %v269 = vunpack.c.l.b16 %v172
      %v270 = vunpack.c.l.b16 %v173
      %v271 = vunpack.c.l.b16 %v174
      %v272 = vunpack.c.l.b16 %v175
      %v273 = vpack.c.b16 %v270, %v269
      %v274 = vpack.c.b16 %v272, %v271
      %vm276 = vcmask 203776
      %v278 = vsel %vm276, %v252, 0
      %v281 = vsel %vm276, %v253, 0
      %v284 = vsel %vm276, %v254, 0
      %v287 = vsel %vm276, %v255, 0
      %v290 = vsel %vm276, %v256, 0
      %v293 = vsel %vm276, %v257, 0
      %v296 = vsel %vm276, %v258, 0
      %v299 = vsel %vm276, %v259, 0
      %v302 = vsel %vm276, %v260, 0
      %v305 = vsel %vm276, %v261, 0
      %v308 = vsel %vm276, %v262, 0
      %v311 = vsel %vm276, %v263, 0
      %v314 = vsel %vm276, %v264, 0
      %vm316 = vcmask 1043456
      %vm317 = vcmask 1044480
      %v318 = vsel %vm316, 4294967295, 65535
      %v319 = vsel %vm317, %v318, 0
      %v321 = vand.u32 %v274, %v319
      %323 = vmatprep.subr.bf16.mxu0 0
      %324 = vmatpush1.bf16.msra.mxu0 0
      %325 = vmatprep.subr.bf16.mxu0 0
      %326 = vmatpush1.bf16.msra.mxu0 0
      %327 = vmatprep.subr.bf16.mxu0 0
      %328 = vmatpush1.bf16.msra.mxu0 0
      %329 = vmatprep.subr.bf16.mxu0 0
      %330 = vmatpush1.bf16.msra.mxu0 0
      %331 = vmatprep.subr.bf16.mxu0 0
      %332 = vmatpush1.bf16.msra.mxu0 0
      %333 = vmatprep.subr.bf16.mxu0 0
      %334 = vmatpush1.bf16.msra.mxu0 0
      %335 = vmatprep.subr.bf16.mxu0 0
      %336 = vmatpush1.bf16.msra.mxu0 %v321
      %337 = vmatprep.subr.bf16.mxu0 0
      %338 = vmatpush1.bf16.msra.mxu0 %v273
      %339 = vmatprep.subr.bf16.mxu0 0
      %340 = vmatpush2.bf16.msra.mxu0 0
      %341 = vmatprep.subr.bf16.mxu0 0
      %342 = vmatpush2.bf16.msra.mxu0 0
      %343 = vmatprep.subr.bf16.mxu0 0
      %344 = vmatpush2.bf16.msra.mxu0 0
      %345 = vmatprep.subr.bf16.mxu0 0
      %346 = vmatpush2.bf16.msra.mxu0 0
      %347 = vmatprep.subr.bf16.mxu0 0
      %348 = vmatpush2.bf16.msra.mxu0 0
      %349 = vmatprep.subr.bf16.mxu0 0
      %350 = vmatpush2.bf16.msra.mxu0 0
      %351 = vmatprep.subr.bf16.mxu0 0
      %352 = vmatpush2.bf16.msra.mxu0 0
      %353 = vmatprep.subr.bf16.mxu0 0
      %354 = vmatpush2.bf16.msra.mxu0 0
      %355 = vmatprep.mubr.bf16.mxu0 0
      %356 = vmatmul.mubr.bf16.gmra.mxu0 %v278
      %v357 = vpop.f32.mrf.mxu0
      %v358 = vadd.f32 0.0, %v357
      %v359 = vpop.f32.mrf.mxu0
      %v360 = vpop.f32.mrf.mxu0
      %v361 = vadd.f32 0.0, %v360
      %v362 = vpop.f32.mrf.mxu0
      %363 = vmatprep.mubr.bf16.mxu0 0
      %364 = vmatmul.mubr.bf16.gmra.mxu0 %v281
      %v365 = vpop.f32.mrf.mxu0
      %v366 = vadd.f32 0.0, %v365
      %v367 = vpop.f32.mrf.mxu0
      %v368 = vpop.f32.mrf.mxu0
      %v369 = vadd.f32 0.0, %v368
      %v370 = vpop.f32.mrf.mxu0
      %371 = vmatprep.mubr.bf16.mxu0 0
      %372 = vmatmul.mubr.bf16.gmra.mxu0 %v284
      %v373 = vpop.f32.mrf.mxu0
      %v374 = vadd.f32 0.0, %v373
      %v375 = vpop.f32.mrf.mxu0
      %v376 = vpop.f32.mrf.mxu0
      %v377 = vadd.f32 0.0, %v376
      %v378 = vpop.f32.mrf.mxu0
      %379 = vmatprep.mubr.bf16.mxu0 0
      %380 = vmatmul.mubr.bf16.gmra.mxu0 %v287
      %v381 = vpop.f32.mrf.mxu0
      %v382 = vadd.f32 0.0, %v381
      %v383 = vpop.f32.mrf.mxu0
      %v384 = vpop.f32.mrf.mxu0
      %v385 = vadd.f32 0.0, %v384
      %v386 = vpop.f32.mrf.mxu0
      %387 = vmatprep.mubr.bf16.mxu0 0
      %388 = vmatmul.mubr.bf16.gmra.mxu0 %v290
      %v389 = vpop.f32.mrf.mxu0
      %v390 = vadd.f32 0.0, %v389
      %v391 = vpop.f32.mrf.mxu0
      %v392 = vpop.f32.mrf.mxu0
      %v393 = vadd.f32 0.0, %v392
      %v394 = vpop.f32.mrf.mxu0
      %395 = vmatprep.mubr.bf16.mxu0 0
      %396 = vmatmul.mubr.bf16.gmra.mxu0 %v293
      %v397 = vpop.f32.mrf.mxu0
      %v398 = vadd.f32 0.0, %v397
      %v399 = vpop.f32.mrf.mxu0
      %v400 = vpop.f32.mrf.mxu0
      %v401 = vadd.f32 0.0, %v400
      %v402 = vpop.f32.mrf.mxu0
      %403 = vmatprep.mubr.bf16.mxu0 0
      %404 = vmatmul.mubr.bf16.gmra.mxu0 %v296
      %v405 = vpop.f32.mrf.mxu0
      %v406 = vadd.f32 0.0, %v405
      %v407 = vpop.f32.mrf.mxu0
      %v408 = vpop.f32.mrf.mxu0
      %v409 = vadd.f32 0.0, %v408
      %v410 = vpop.f32.mrf.mxu0
      %411 = vmatprep.mubr.bf16.mxu0 0
      %412 = vmatmul.mubr.bf16.gmra.mxu0 %v299
      %v413 = vpop.f32.mrf.mxu0
      %v414 = vadd.f32 0.0, %v413
      %v415 = vpop.f32.mrf.mxu0
      %v416 = vpop.f32.mrf.mxu0
      %v417 = vadd.f32 0.0, %v416
      %v418 = vpop.f32.mrf.mxu0
      %419 = vmatprep.mubr.bf16.mxu0 0
      %420 = vmatmul.mubr.bf16.gmra.mxu0 %v302
      %v421 = vpop.f32.mrf.mxu0
      %v422 = vadd.f32 0.0, %v421
      %v423 = vpop.f32.mrf.mxu0
      %v424 = vpop.f32.mrf.mxu0
      %v425 = vadd.f32 0.0, %v424
      %v426 = vpop.f32.mrf.mxu0
      %427 = vmatprep.mubr.bf16.mxu0 0
      %428 = vmatmul.mubr.bf16.gmra.mxu0 %v305
      %v429 = vpop.f32.mrf.mxu0
      %v430 = vadd.f32 0.0, %v429
      %v431 = vpop.f32.mrf.mxu0
      %v432 = vpop.f32.mrf.mxu0
      %v433 = vadd.f32 0.0, %v432
      %v434 = vpop.f32.mrf.mxu0
      %435 = vmatprep.mubr.bf16.mxu0 0
      %436 = vmatmul.mubr.bf16.gmra.mxu0 %v308
      %v437 = vpop.f32.mrf.mxu0
      %v438 = vadd.f32 0.0, %v437
      %v439 = vpop.f32.mrf.mxu0
      %v440 = vpop.f32.mrf.mxu0
      %v441 = vadd.f32 0.0, %v440
      %v442 = vpop.f32.mrf.mxu0
      %443 = vmatprep.mubr.bf16.mxu0 0
      %444 = vmatmul.mubr.bf16.gmra.mxu0 %v311
      %v445 = vpop.f32.mrf.mxu0
      %v446 = vadd.f32 0.0, %v445
      %v447 = vpop.f32.mrf.mxu0
      %v448 = vpop.f32.mrf.mxu0
      %v449 = vadd.f32 0.0, %v448
      %v450 = vpop.f32.mrf.mxu0
      %451 = vmatprep.mubr.bf16.mxu0 0
      %452 = vmatmul.mubr.bf16.gmra.mxu0 %v314
      %v453 = vpop.f32.mrf.mxu0
      %v454 = vadd.f32 0.0, %v453
      %v455 = vpop.f32.mrf.mxu0
      %v456 = vpop.f32.mrf.mxu0
      %v457 = vpop.f32.mrf.mxu0
      %458 = vdwg.mxu0
      %s459 = scalar_lea.vmem %s165, 100
      %v460 = vld [vmem:[%s459] sm:$0xf]
      %v461 = vld [vmem:[%s459 + $0x4] sm:$0xf]
      %v462 = vld [vmem:[%s459 + $0x8] sm:$0xf]
      %v463 = vld [vmem:[%s459 + $0xc] sm:$0xf]
      %v464 = vld [vmem:[%s459 + $0x10] sm:$0xf]
      %v465 = vld [vmem:[%s459 + $0x14] sm:$0xf]
      %v466 = vld [vmem:[%s459 + $0x18] sm:$0xf]
      %v467 = vld [vmem:[%s459 + $0x1c] sm:$0xf]
      %v468 = vld [vmem:[%s459 + $0x20] sm:$0xf]
      %v469 = vld [vmem:[%s459 + $0x24] sm:$0xf]
      %v470 = vld [vmem:[%s459 + $0x28] sm:$0xf]
      %v471 = vld [vmem:[%s459 + $0x2c] sm:$0xf]
      %v472 = vld [vmem:[%s459 + $0x30] sm:$0xf]
      %v473 = vld [vmem:[%s459 + $0x34] sm:$0xf]
      %v474 = vld [vmem:[%s459 + $0x38] sm:$0xf]
      %v475 = vld [vmem:[%s459 + $0x3c] sm:$0xf]
      %v476 = vld [vmem:[%s459 + $0x40] sm:$0xf]
      %v477 = vld [vmem:[%s459 + $0x44] sm:$0xf]
      %v478 = vld [vmem:[%s459 + $0x48] sm:$0xf]
      %v479 = vld [vmem:[%s459 + $0x4c] sm:$0xf]
      %v480 = vld [vmem:[%s459 + $0x50] sm:$0xf]
      %v481 = vld [vmem:[%s459 + $0x54] sm:$0xf]
      %v482 = vld [vmem:[%s459 + $0x58] sm:$0xf]
      %v483 = vld [vmem:[%s459 + $0x5c] sm:$0xf]
      %v484 = vld [vmem:[%s459 + $0x60] sm:$0x3]
      %v510 = vunpack.c.l.b16 %v460
      %v511 = vunpack.c.l.b16 %v461
      %v512 = vunpack.c.l.b16 %v462
      %v513 = vunpack.c.l.b16 %v463
      %v514 = vunpack.c.l.b16 %v464
      %v515 = vunpack.c.l.b16 %v465
      %v516 = vunpack.c.l.b16 %v466
      %v517 = vunpack.c.l.b16 %v467
      %v518 = vunpack.c.l.b16 %v468
      %v519 = vunpack.c.l.b16 %v469
      %v520 = vunpack.c.l.b16 %v470
      %v521 = vunpack.c.l.b16 %v471
      %v522 = vunpack.c.l.b16 %v472
      %v523 = vunpack.c.l.b16 %v473
      %v524 = vunpack.c.l.b16 %v474
      %v525 = vunpack.c.l.b16 %v475
      %v526 = vunpack.c.l.b16 %v476
      %v527 = vunpack.c.l.b16 %v477
      %v528 = vunpack.c.l.b16 %v478
      %v529 = vunpack.c.l.b16 %v479
      %v530 = vunpack.c.l.b16 %v480
      %v531 = vunpack.c.l.b16 %v481
      %v532 = vunpack.c.l.b16 %v482
      %v533 = vunpack.c.l.b16 %v483
      %v534 = vunpack.c.l.b16 %v484
      %v535 = vpack.c.b16 %v511, %v510
      %v536 = vpack.c.b16 %v513, %v512
      %v537 = vpack.c.b16 %v515, %v514
      %v538 = vpack.c.b16 %v517, %v516
      %v539 = vpack.c.b16 %v519, %v518
      %v540 = vpack.c.b16 %v521, %v520
      %v541 = vpack.c.b16 %v523, %v522
      %v542 = vpack.c.b16 %v525, %v524
      %v543 = vpack.c.b16 %v527, %v526
      %v544 = vpack.c.b16 %v529, %v528
      %v545 = vpack.c.b16 %v531, %v530
      %v546 = vpack.c.b16 %v533, %v532
      %v547 = vpack.c.b16 %v534, %v534
      %v549 = vsel %vm276, %v535, 0
      %v552 = vsel %vm276, %v536, 0
      %v555 = vsel %vm276, %v537, 0
      %v558 = vsel %vm276, %v538, 0
      %v561 = vsel %vm276, %v539, 0
      %v564 = vsel %vm276, %v540, 0
      %v567 = vsel %vm276, %v541, 0
      %v570 = vsel %vm276, %v542, 0
      %v573 = vsel %vm276, %v543, 0
      %v576 = vsel %vm276, %v544, 0
      %v579 = vsel %vm276, %v545, 0
      %v582 = vsel %vm276, %v546, 0
      %v585 = vsel %vm276, %v547, 0
      %587 = vmatprep.subr.bf16.mxu0 0
      %588 = vmatpush1.bf16.msra.mxu0 0
      %589 = vmatprep.subr.bf16.mxu0 0
      %590 = vmatpush1.bf16.msra.mxu0 0
      %591 = vmatprep.subr.bf16.mxu0 0
      %592 = vmatpush1.bf16.msra.mxu0 0
      %593 = vmatprep.subr.bf16.mxu0 0
      %594 = vmatpush1.bf16.msra.mxu0 0
      %595 = vmatprep.subr.bf16.mxu0 0
      %596 = vmatpush1.bf16.msra.mxu0 0
      %597 = vmatprep.subr.bf16.mxu0 0
      %598 = vmatpush1.bf16.msra.mxu0 0
      %599 = vmatprep.subr.bf16.mxu0 0
      %600 = vmatpush1.bf16.msra.mxu0 %v321
      %601 = vmatprep.subr.bf16.mxu0 0
      %602 = vmatpush1.bf16.msra.mxu0 %v273
      %603 = vmatprep.subr.bf16.mxu0 0
      %604 = vmatpush2.bf16.msra.mxu0 0
      %605 = vmatprep.subr.bf16.mxu0 0
      %606 = vmatpush2.bf16.msra.mxu0 0
      %607 = vmatprep.subr.bf16.mxu0 0
      %608 = vmatpush2.bf16.msra.mxu0 0
      %609 = vmatprep.subr.bf16.mxu0 0
      %610 = vmatpush2.bf16.msra.mxu0 0
      %611 = vmatprep.subr.bf16.mxu0 0
      %612 = vmatpush2.bf16.msra.mxu0 0
      %613 = vmatprep.subr.bf16.mxu0 0
      %614 = vmatpush2.bf16.msra.mxu0 0
      %615 = vmatprep.subr.bf16.mxu0 0
      %616 = vmatpush2.bf16.msra.mxu0 0
      %617 = vmatprep.subr.bf16.mxu0 0
      %618 = vmatpush2.bf16.msra.mxu0 0
      %619 = vmatprep.mubr.bf16.mxu0 0
      %620 = vmatmul.mubr.bf16.gmra.mxu0 %v549
      %v621 = vpop.f32.mrf.mxu0
      %v622 = vadd.f32 0.0, %v621
      %v623 = vpop.f32.mrf.mxu0
      %v624 = vpop.f32.mrf.mxu0
      %v625 = vadd.f32 0.0, %v624
      %v626 = vpop.f32.mrf.mxu0
      %627 = vmatprep.mubr.bf16.mxu0 0
      %628 = vmatmul.mubr.bf16.gmra.mxu0 %v552
      %v629 = vpop.f32.mrf.mxu0
      %v630 = vadd.f32 0.0, %v629
      %v631 = vpop.f32.mrf.mxu0
      %v632 = vpop.f32.mrf.mxu0
      %v633 = vadd.f32 0.0, %v632
      %v634 = vpop.f32.mrf.mxu0
      %635 = vmatprep.mubr.bf16.mxu0 0
      %636 = vmatmul.mubr.bf16.gmra.mxu0 %v555
      %v637 = vpop.f32.mrf.mxu0
      %v638 = vadd.f32 0.0, %v637
      %v639 = vpop.f32.mrf.mxu0
      %v640 = vpop.f32.mrf.mxu0
      %v641 = vadd.f32 0.0, %v640
      %v642 = vpop.f32.mrf.mxu0
      %643 = vmatprep.mubr.bf16.mxu0 0
      %644 = vmatmul.mubr.bf16.gmra.mxu0 %v558
      %v645 = vpop.f32.mrf.mxu0
      %v646 = vadd.f32 0.0, %v645
      %v647 = vpop.f32.mrf.mxu0
      %v648 = vpop.f32.mrf.mxu0
      %v649 = vadd.f32 0.0, %v648
      %v650 = vpop.f32.mrf.mxu0
      %651 = vmatprep.mubr.bf16.mxu0 0
      %652 = vmatmul.mubr.bf16.gmra.mxu0 %v561
      %v653 = vpop.f32.mrf.mxu0
      %v654 = vadd.f32 0.0, %v653
      %v655 = vpop.f32.mrf.mxu0
      %v656 = vpop.f32.mrf.mxu0
      %v657 = vadd.f32 0.0, %v656
      %v658 = vpop.f32.mrf.mxu0
      %659 = vmatprep.mubr.bf16.mxu0 0
      %660 = vmatmul.mubr.bf16.gmra.mxu0 %v564
      %v661 = vpop.f32.mrf.mxu0
      %v662 = vadd.f32 0.0, %v661
      %v663 = vpop.f32.mrf.mxu0
      %v664 = vpop.f32.mrf.mxu0
      %v665 = vadd.f32 0.0, %v664
      %v666 = vpop.f32.mrf.mxu0
      %667 = vmatprep.mubr.bf16.mxu0 0
      %668 = vmatmul.mubr.bf16.gmra.mxu0 %v567
      %v669 = vpop.f32.mrf.mxu0
      %v670 = vadd.f32 0.0, %v669
      %v671 = vpop.f32.mrf.mxu0
      %v672 = vpop.f32.mrf.mxu0
      %v673 = vadd.f32 0.0, %v672
      %v674 = vpop.f32.mrf.mxu0
      %675 = vmatprep.mubr.bf16.mxu0 0
      %676 = vmatmul.mubr.bf16.gmra.mxu0 %v570
      %v677 = vpop.f32.mrf.mxu0
      %v678 = vadd.f32 0.0, %v677
      %v679 = vpop.f32.mrf.mxu0
      %v680 = vpop.f32.mrf.mxu0
      %v681 = vadd.f32 0.0, %v680
      %v682 = vpop.f32.mrf.mxu0
      %683 = vmatprep.mubr.bf16.mxu0 0
      %684 = vmatmul.mubr.bf16.gmra.mxu0 %v573
      %v685 = vpop.f32.mrf.mxu0
      %v686 = vadd.f32 0.0, %v685
      %v687 = vpop.f32.mrf.mxu0
      %v688 = vpop.f32.mrf.mxu0
      %v689 = vadd.f32 0.0, %v688
      %v690 = vpop.f32.mrf.mxu0
      %691 = vmatprep.mubr.bf16.mxu0 0
      %692 = vmatmul.mubr.bf16.gmra.mxu0 %v576
      %v693 = vpop.f32.mrf.mxu0
      %v694 = vadd.f32 0.0, %v693
      %v695 = vpop.f32.mrf.mxu0
      %v696 = vpop.f32.mrf.mxu0
      %v697 = vadd.f32 0.0, %v696
      %v698 = vpop.f32.mrf.mxu0
      %699 = vmatprep.mubr.bf16.mxu0 0
      %700 = vmatmul.mubr.bf16.gmra.mxu0 %v579
      %v701 = vpop.f32.mrf.mxu0
      %v702 = vadd.f32 0.0, %v701
      %v703 = vpop.f32.mrf.mxu0
      %v704 = vpop.f32.mrf.mxu0
      %v705 = vadd.f32 0.0, %v704
      %v706 = vpop.f32.mrf.mxu0
      %707 = vmatprep.mubr.bf16.mxu0 0
      %708 = vmatmul.mubr.bf16.gmra.mxu0 %v582
      %v709 = vpop.f32.mrf.mxu0
      %v710 = vadd.f32 0.0, %v709
      %v711 = vpop.f32.mrf.mxu0
      %v712 = vpop.f32.mrf.mxu0
      %v713 = vadd.f32 0.0, %v712
      %v714 = vpop.f32.mrf.mxu0
      %715 = vmatprep.mubr.bf16.mxu0 0
      %716 = vmatmul.mubr.bf16.gmra.mxu0 %v585
      %v717 = vpop.f32.mrf.mxu0
      %v718 = vadd.f32 0.0, %v717
      %v719 = vpop.f32.mrf.mxu0
      %v720 = vpop.f32.mrf.mxu0
      %v721 = vpop.f32.mrf.mxu0
      %722 = vdwg.mxu0
      %v723 = vmax.f32 %v358, %v622
      %v724 = vmax.f32 %v361, %v625
      %v725 = vmax.f32 %v366, %v630
      %v726 = vmax.f32 %v369, %v633
      %v727 = vmax.f32 %v374, %v638
      %v728 = vmax.f32 %v377, %v641
      %v729 = vmax.f32 %v382, %v646
      %v730 = vmax.f32 %v385, %v649
      %v731 = vmax.f32 %v390, %v654
      %v732 = vmax.f32 %v393, %v657
      %v733 = vmax.f32 %v398, %v662
      %v734 = vmax.f32 %v401, %v665
      %v735 = vmax.f32 %v406, %v670
      %v736 = vmax.f32 %v409, %v673
      %v737 = vmax.f32 %v414, %v678
      %v738 = vmax.f32 %v417, %v681
      %v739 = vmax.f32 %v422, %v686
      %v740 = vmax.f32 %v425, %v689
      %v741 = vmax.f32 %v430, %v694
      %v742 = vmax.f32 %v433, %v697
      %v743 = vmax.f32 %v438, %v702
      %v744 = vmax.f32 %v441, %v705
      %v745 = vmax.f32 %v446, %v710
      %v746 = vmax.f32 %v449, %v713
      %v747 = vmax.f32 %v454, %v718
      %s748 = scalar_lea.vmem %s165, 200
      %v749 = vld [vmem:[%s748] sm:$0xf]
      %v750 = vld [vmem:[%s748 + $0x4] sm:$0xf]
      %v751 = vld [vmem:[%s748 + $0x8] sm:$0xf]
      %v752 = vld [vmem:[%s748 + $0xc] sm:$0xf]
      %v753 = vld [vmem:[%s748 + $0x10] sm:$0xf]
      %v754 = vld [vmem:[%s748 + $0x14] sm:$0xf]
      %v755 = vld [vmem:[%s748 + $0x18] sm:$0xf]
      %v756 = vld [vmem:[%s748 + $0x1c] sm:$0xf]
      %v757 = vld [vmem:[%s748 + $0x20] sm:$0xf]
      %v758 = vld [vmem:[%s748 + $0x24] sm:$0xf]
      %v759 = vld [vmem:[%s748 + $0x28] sm:$0xf]
      %v760 = vld [vmem:[%s748 + $0x2c] sm:$0xf]
      %v761 = vld [vmem:[%s748 + $0x30] sm:$0xf]
      %v762 = vld [vmem:[%s748 + $0x34] sm:$0xf]
      %v763 = vld [vmem:[%s748 + $0x38] sm:$0xf]
      %v764 = vld [vmem:[%s748 + $0x3c] sm:$0xf]
      %v765 = vld [vmem:[%s748 + $0x40] sm:$0xf]
      %v766 = vld [vmem:[%s748 + $0x44] sm:$0xf]
      %v767 = vld [vmem:[%s748 + $0x48] sm:$0xf]
      %v768 = vld [vmem:[%s748 + $0x4c] sm:$0xf]
      %v769 = vld [vmem:[%s748 + $0x50] sm:$0xf]
      %v770 = vld [vmem:[%s748 + $0x54] sm:$0xf]
      %v771 = vld [vmem:[%s748 + $0x58] sm:$0xf]
      %v772 = vld [vmem:[%s748 + $0x5c] sm:$0xf]
      %v773 = vld [vmem:[%s748 + $0x60] sm:$0x3]
      %v799 = vunpack.c.l.b16 %v749
      %v800 = vunpack.c.l.b16 %v750
      %v801 = vunpack.c.l.b16 %v751
      %v802 = vunpack.c.l.b16 %v752
      %v803 = vunpack.c.l.b16 %v753
      %v804 = vunpack.c.l.b16 %v754
      %v805 = vunpack.c.l.b16 %v755
      %v806 = vunpack.c.l.b16 %v756
      %v807 = vunpack.c.l.b16 %v757
      %v808 = vunpack.c.l.b16 %v758
      %v809 = vunpack.c.l.b16 %v759
      %v810 = vunpack.c.l.b16 %v760
      %v811 = vunpack.c.l.b16 %v761
      %v812 = vunpack.c.l.b16 %v762
      %v813 = vunpack.c.l.b16 %v763
      %v814 = vunpack.c.l.b16 %v764
      %v815 = vunpack.c.l.b16 %v765
      %v816 = vunpack.c.l.b16 %v766
      %v817 = vunpack.c.l.b16 %v767
      %v818 = vunpack.c.l.b16 %v768
      %v819 = vunpack.c.l.b16 %v769
      %v820 = vunpack.c.l.b16 %v770
      %v821 = vunpack.c.l.b16 %v771
      %v822 = vunpack.c.l.b16 %v772
      %v823 = vunpack.c.l.b16 %v773
      %v824 = vpack.c.b16 %v800, %v799
      %v825 = vpack.c.b16 %v802, %v801
      %v826 = vpack.c.b16 %v804, %v803
      %v827 = vpack.c.b16 %v806, %v805
      %v828 = vpack.c.b16 %v808, %v807
      %v829 = vpack.c.b16 %v810, %v809
      %v830 = vpack.c.b16 %v812, %v811
      %v831 = vpack.c.b16 %v814, %v813
      %v832 = vpack.c.b16 %v816, %v815
      %v833 = vpack.c.b16 %v818, %v817
      %v834 = vpack.c.b16 %v820, %v819
      %v835 = vpack.c.b16 %v822, %v821
      %v836 = vpack.c.b16 %v823, %v823
      %v838 = vsel %vm276, %v824, 0
      %v841 = vsel %vm276, %v825, 0
      %v844 = vsel %vm276, %v826, 0
      %v847 = vsel %vm276, %v827, 0
      %v850 = vsel %vm276, %v828, 0
      %v853 = vsel %vm276, %v829, 0
      %v856 = vsel %vm276, %v830, 0
      %v859 = vsel %vm276, %v831, 0
      %v862 = vsel %vm276, %v832, 0
      %v865 = vsel %vm276, %v833, 0
      %v868 = vsel %vm276, %v834, 0
      %v871 = vsel %vm276, %v835, 0
      %v874 = vsel %vm276, %v836, 0
      %876 = vmatprep.subr.bf16.mxu0 0
      %877 = vmatpush1.bf16.msra.mxu0 0
      %878 = vmatprep.subr.bf16.mxu0 0
      %879 = vmatpush1.bf16.msra.mxu0 0
      %880 = vmatprep.subr.bf16.mxu0 0
      %881 = vmatpush1.bf16.msra.mxu0 0
      %882 = vmatprep.subr.bf16.mxu0 0
      %883 = vmatpush1.bf16.msra.mxu0 0
      %884 = vmatprep.subr.bf16.mxu0 0
      %885 = vmatpush1.bf16.msra.mxu0 0
      %886 = vmatprep.subr.bf16.mxu0 0
      %887 = vmatpush1.bf16.msra.mxu0 0
      %888 = vmatprep.subr.bf16.mxu0 0
      %889 = vmatpush1.bf16.msra.mxu0 %v321
      %890 = vmatprep.subr.bf16.mxu0 0
      %891 = vmatpush1.bf16.msra.mxu0 %v273
      %892 = vmatprep.subr.bf16.mxu0 0
      %893 = vmatpush2.bf16.msra.mxu0 0
      %894 = vmatprep.subr.bf16.mxu0 0
      %895 = vmatpush2.bf16.msra.mxu0 0
      %896 = vmatprep.subr.bf16.mxu0 0
      %897 = vmatpush2.bf16.msra.mxu0 0
      %898 = vmatprep.subr.bf16.mxu0 0
      %899 = vmatpush2.bf16.msra.mxu0 0
      %900 = vmatprep.subr.bf16.mxu0 0
      %901 = vmatpush2.bf16.msra.mxu0 0
      %902 = vmatprep.subr.bf16.mxu0 0
      %903 = vmatpush2.bf16.msra.mxu0 0
      %904 = vmatprep.subr.bf16.mxu0 0
      %905 = vmatpush2.bf16.msra.mxu0 0
      %906 = vmatprep.subr.bf16.mxu0 0
      %907 = vmatpush2.bf16.msra.mxu0 0
      %908 = vmatprep.mubr.bf16.mxu0 0
      %909 = vmatmul.mubr.bf16.gmra.mxu0 %v838
      %v910 = vpop.f32.mrf.mxu0
      %v911 = vadd.f32 0.0, %v910
      %v912 = vpop.f32.mrf.mxu0
      %v913 = vpop.f32.mrf.mxu0
      %v914 = vadd.f32 0.0, %v913
      %v915 = vpop.f32.mrf.mxu0
      %916 = vmatprep.mubr.bf16.mxu0 0
      %917 = vmatmul.mubr.bf16.gmra.mxu0 %v841
      %v918 = vpop.f32.mrf.mxu0
      %v919 = vadd.f32 0.0, %v918
      %v920 = vpop.f32.mrf.mxu0
      %v921 = vpop.f32.mrf.mxu0
      %v922 = vadd.f32 0.0, %v921
      %v923 = vpop.f32.mrf.mxu0
      %924 = vmatprep.mubr.bf16.mxu0 0
      %925 = vmatmul.mubr.bf16.gmra.mxu0 %v844
      %v926 = vpop.f32.mrf.mxu0
      %v927 = vadd.f32 0.0, %v926
      %v928 = vpop.f32.mrf.mxu0
      %v929 = vpop.f32.mrf.mxu0
      %v930 = vadd.f32 0.0, %v929
      %v931 = vpop.f32.mrf.mxu0
      %932 = vmatprep.mubr.bf16.mxu0 0
      %933 = vmatmul.mubr.bf16.gmra.mxu0 %v847
      %v934 = vpop.f32.mrf.mxu0
      %v935 = vadd.f32 0.0, %v934
      %v936 = vpop.f32.mrf.mxu0
      %v937 = vpop.f32.mrf.mxu0
      %v938 = vadd.f32 0.0, %v937
      %v939 = vpop.f32.mrf.mxu0
      %940 = vmatprep.mubr.bf16.mxu0 0
      %941 = vmatmul.mubr.bf16.gmra.mxu0 %v850
      %v942 = vpop.f32.mrf.mxu0
      %v943 = vadd.f32 0.0, %v942
      %v944 = vpop.f32.mrf.mxu0
      %v945 = vpop.f32.mrf.mxu0
      %v946 = vadd.f32 0.0, %v945
      %v947 = vpop.f32.mrf.mxu0
      %948 = vmatprep.mubr.bf16.mxu0 0
      %949 = vmatmul.mubr.bf16.gmra.mxu0 %v853
      %v950 = vpop.f32.mrf.mxu0
      %v951 = vadd.f32 0.0, %v950
      %v952 = vpop.f32.mrf.mxu0
      %v953 = vpop.f32.mrf.mxu0
      %v954 = vadd.f32 0.0, %v953
      %v955 = vpop.f32.mrf.mxu0
      %956 = vmatprep.mubr.bf16.mxu0 0
      %957 = vmatmul.mubr.bf16.gmra.mxu0 %v856
      %v958 = vpop.f32.mrf.mxu0
      %v959 = vadd.f32 0.0, %v958
      %v960 = vpop.f32.mrf.mxu0
      %v961 = vpop.f32.mrf.mxu0
      %v962 = vadd.f32 0.0, %v961
      %v963 = vpop.f32.mrf.mxu0
      %964 = vmatprep.mubr.bf16.mxu0 0
      %965 = vmatmul.mubr.bf16.gmra.mxu0 %v859
      %v966 = vpop.f32.mrf.mxu0
      %v967 = vadd.f32 0.0, %v966
      %v968 = vpop.f32.mrf.mxu0
      %v969 = vpop.f32.mrf.mxu0
      %v970 = vadd.f32 0.0, %v969
      %v971 = vpop.f32.mrf.mxu0
      %972 = vmatprep.mubr.bf16.mxu0 0
      %973 = vmatmul.mubr.bf16.gmra.mxu0 %v862
      %v974 = vpop.f32.mrf.mxu0
      %v975 = vadd.f32 0.0, %v974
      %v976 = vpop.f32.mrf.mxu0
      %v977 = vpop.f32.mrf.mxu0
      %v978 = vadd.f32 0.0, %v977
      %v979 = vpop.f32.mrf.mxu0
      %980 = vmatprep.mubr.bf16.mxu0 0
      %981 = vmatmul.mubr.bf16.gmra.mxu0 %v865
      %v982 = vpop.f32.mrf.mxu0
      %v983 = vadd.f32 0.0, %v982
      %v984 = vpop.f32.mrf.mxu0
      %v985 = vpop.f32.mrf.mxu0
      %v986 = vadd.f32 0.0, %v985
      %v987 = vpop.f32.mrf.mxu0
      %988 = vmatprep.mubr.bf16.mxu0 0
      %989 = vmatmul.mubr.bf16.gmra.mxu0 %v868
      %v990 = vpop.f32.mrf.mxu0
      %v991 = vadd.f32 0.0, %v990
      %v992 = vpop.f32.mrf.mxu0
      %v993 = vpop.f32.mrf.mxu0
      %v994 = vadd.f32 0.0, %v993
      %v995 = vpop.f32.mrf.mxu0
      %996 = vmatprep.mubr.bf16.mxu0 0
      %997 = vmatmul.mubr.bf16.gmra.mxu0 %v871
      %v998 = vpop.f32.mrf.mxu0
      %v999 = vadd.f32 0.0, %v998
      %v1000 = vpop.f32.mrf.mxu0
      %v1001 = vpop.f32.mrf.mxu0
      %v1002 = vadd.f32 0.0, %v1001
      %v1003 = vpop.f32.mrf.mxu0
      %1004 = vmatprep.mubr.bf16.mxu0 0
      %1005 = vmatmul.mubr.bf16.gmra.mxu0 %v874
      %v1006 = vpop.f32.mrf.mxu0
      %v1007 = vadd.f32 0.0, %v1006
      %v1008 = vpop.f32.mrf.mxu0
      %v1009 = vpop.f32.mrf.mxu0
      %v1010 = vpop.f32.mrf.mxu0
      %1011 = vdwg.mxu0
      %v1012 = vmax.f32 %v723, %v911
      %v1013 = vmax.f32 %v724, %v914
      %v1014 = vmax.f32 %v725, %v919
      %v1015 = vmax.f32 %v726, %v922
      %v1016 = vmax.f32 %v727, %v927
      %v1017 = vmax.f32 %v728, %v930
      %v1018 = vmax.f32 %v729, %v935
      %v1019 = vmax.f32 %v730, %v938
      %v1020 = vmax.f32 %v731, %v943
      %v1021 = vmax.f32 %v732, %v946
      %v1022 = vmax.f32 %v733, %v951
      %v1023 = vmax.f32 %v734, %v954
      %v1024 = vmax.f32 %v735, %v959
      %v1025 = vmax.f32 %v736, %v962
      %v1026 = vmax.f32 %v737, %v967
      %v1027 = vmax.f32 %v738, %v970
      %v1028 = vmax.f32 %v739, %v975
      %v1029 = vmax.f32 %v740, %v978
      %v1030 = vmax.f32 %v741, %v983
      %v1031 = vmax.f32 %v742, %v986
      %v1032 = vmax.f32 %v743, %v991
      %v1033 = vmax.f32 %v744, %v994
      %v1034 = vmax.f32 %v745, %v999
      %v1035 = vmax.f32 %v746, %v1002
      %v1036 = vmax.f32 %v747, %v1007
      %s1037 = scalar_lea.vmem %s165, 300
      %v1038 = vld [vmem:[%s1037] sm:$0xf]
      %v1039 = vld [vmem:[%s1037 + $0x4] sm:$0xf]
      %v1040 = vld [vmem:[%s1037 + $0x8] sm:$0xf]
      %v1041 = vld [vmem:[%s1037 + $0xc] sm:$0xf]
      %v1042 = vld [vmem:[%s1037 + $0x10] sm:$0xf]
      %v1043 = vld [vmem:[%s1037 + $0x14] sm:$0xf]
      %v1044 = vld [vmem:[%s1037 + $0x18] sm:$0xf]
      %v1045 = vld [vmem:[%s1037 + $0x1c] sm:$0xf]
      %v1046 = vld [vmem:[%s1037 + $0x20] sm:$0xf]
      %v1047 = vld [vmem:[%s1037 + $0x24] sm:$0xf]
      %v1048 = vld [vmem:[%s1037 + $0x28] sm:$0xf]
      %v1049 = vld [vmem:[%s1037 + $0x2c] sm:$0xf]
      %v1050 = vld [vmem:[%s1037 + $0x30] sm:$0xf]
      %v1051 = vld [vmem:[%s1037 + $0x34] sm:$0xf]
      %v1052 = vld [vmem:[%s1037 + $0x38] sm:$0xf]
      %v1053 = vld [vmem:[%s1037 + $0x3c] sm:$0xf]
      %v1054 = vld [vmem:[%s1037 + $0x40] sm:$0xf]
      %v1055 = vld [vmem:[%s1037 + $0x44] sm:$0xf]
      %v1056 = vld [vmem:[%s1037 + $0x48] sm:$0xf]
      %v1057 = vld [vmem:[%s1037 + $0x4c] sm:$0xf]
      %v1058 = vld [vmem:[%s1037 + $0x50] sm:$0xf]
      %v1059 = vld [vmem:[%s1037 + $0x54] sm:$0xf]
      %v1060 = vld [vmem:[%s1037 + $0x58] sm:$0xf]
      %v1061 = vld [vmem:[%s1037 + $0x5c] sm:$0xf]
      %v1062 = vld [vmem:[%s1037 + $0x60] sm:$0x3]
      %v1088 = vunpack.c.l.b16 %v1038
      %v1089 = vunpack.c.l.b16 %v1039
      %v1090 = vunpack.c.l.b16 %v1040
      %v1091 = vunpack.c.l.b16 %v1041
      %v1092 = vunpack.c.l.b16 %v1042
      %v1093 = vunpack.c.l.b16 %v1043
      %v1094 = vunpack.c.l.b16 %v1044
      %v1095 = vunpack.c.l.b16 %v1045
      %v1096 = vunpack.c.l.b16 %v1046
      %v1097 = vunpack.c.l.b16 %v1047
      %v1098 = vunpack.c.l.b16 %v1048
      %v1099 = vunpack.c.l.b16 %v1049
      %v1100 = vunpack.c.l.b16 %v1050
      %v1101 = vunpack.c.l.b16 %v1051
      %v1102 = vunpack.c.l.b16 %v1052
      %v1103 = vunpack.c.l.b16 %v1053
      %v1104 = vunpack.c.l.b16 %v1054
      %v1105 = vunpack.c.l.b16 %v1055
      %v1106 = vunpack.c.l.b16 %v1056
      %v1107 = vunpack.c.l.b16 %v1057
      %v1108 = vunpack.c.l.b16 %v1058
      %v1109 = vunpack.c.l.b16 %v1059
      %v1110 = vunpack.c.l.b16 %v1060
      %v1111 = vunpack.c.l.b16 %v1061
      %v1112 = vunpack.c.l.b16 %v1062
      %v1113 = vpack.c.b16 %v1089, %v1088
      %v1114 = vpack.c.b16 %v1091, %v1090
      %v1115 = vpack.c.b16 %v1093, %v1092
      %v1116 = vpack.c.b16 %v1095, %v1094
      %v1117 = vpack.c.b16 %v1097, %v1096
      %v1118 = vpack.c.b16 %v1099, %v1098
      %v1119 = vpack.c.b16 %v1101, %v1100
      %v1120 = vpack.c.b16 %v1103, %v1102
      %v1121 = vpack.c.b16 %v1105, %v1104
      %v1122 = vpack.c.b16 %v1107, %v1106
      %v1123 = vpack.c.b16 %v1109, %v1108
      %v1124 = vpack.c.b16 %v1111, %v1110
      %v1125 = vpack.c.b16 %v1112, %v1112
      %v1127 = vsel %vm276, %v1113, 0
      %v1130 = vsel %vm276, %v1114, 0
      %v1133 = vsel %vm276, %v1115, 0
      %v1136 = vsel %vm276, %v1116, 0
      %v1139 = vsel %vm276, %v1117, 0
      %v1142 = vsel %vm276, %v1118, 0
      %v1145 = vsel %vm276, %v1119, 0
      %v1148 = vsel %vm276, %v1120, 0
      %v1151 = vsel %vm276, %v1121, 0
      %v1154 = vsel %vm276, %v1122, 0
      %v1157 = vsel %vm276, %v1123, 0
      %v1160 = vsel %vm276, %v1124, 0
      %v1163 = vsel %vm276, %v1125, 0
      %1165 = vmatprep.subr.bf16.mxu0 0
      %1166 = vmatpush1.bf16.msra.mxu0 0
      %1167 = vmatprep.subr.bf16.mxu0 0
      %1168 = vmatpush1.bf16.msra.mxu0 0
      %1169 = vmatprep.subr.bf16.mxu0 0
      %1170 = vmatpush1.bf16.msra.mxu0 0
      %1171 = vmatprep.subr.bf16.mxu0 0
      %1172 = vmatpush1.bf16.msra.mxu0 0
      %1173 = vmatprep.subr.bf16.mxu0 0
      %1174 = vmatpush1.bf16.msra.mxu0 0
      %1175 = vmatprep.subr.bf16.mxu0 0
      %1176 = vmatpush1.bf16.msra.mxu0 0
      %1177 = vmatprep.subr.bf16.mxu0 0
      %1178 = vmatpush1.bf16.msra.mxu0 %v321
      %1179 = vmatprep.subr.bf16.mxu0 0
      %1180 = vmatpush1.bf16.msra.mxu0 %v273
      %1181 = vmatprep.subr.bf16.mxu0 0
      %1182 = vmatpush2.bf16.msra.mxu0 0
      %1183 = vmatprep.subr.bf16.mxu0 0
      %1184 = vmatpush2.bf16.msra.mxu0 0
      %1185 = vmatprep.subr.bf16.mxu0 0
      %1186 = vmatpush2.bf16.msra.mxu0 0
      %1187 = vmatprep.subr.bf16.mxu0 0
      %1188 = vmatpush2.bf16.msra.mxu0 0
      %1189 = vmatprep.subr.bf16.mxu0 0
      %1190 = vmatpush2.bf16.msra.mxu0 0
      %1191 = vmatprep.subr.bf16.mxu0 0
      %1192 = vmatpush2.bf16.msra.mxu0 0
      %1193 = vmatprep.subr.bf16.mxu0 0
      %1194 = vmatpush2.bf16.msra.mxu0 0
      %1195 = vmatprep.subr.bf16.mxu0 0
      %1196 = vmatpush2.bf16.msra.mxu0 0
      %1197 = vmatprep.mubr.bf16.mxu0 0
      %1198 = vmatmul.mubr.bf16.gmra.mxu0 %v1127
      %v1199 = vpop.f32.mrf.mxu0
      %v1200 = vadd.f32 0.0, %v1199
      %v1201 = vpop.f32.mrf.mxu0
      %v1202 = vpop.f32.mrf.mxu0
      %v1203 = vadd.f32 0.0, %v1202
      %v1204 = vpop.f32.mrf.mxu0
      %1205 = vmatprep.mubr.bf16.mxu0 0
      %1206 = vmatmul.mubr.bf16.gmra.mxu0 %v1130
      %v1207 = vpop.f32.mrf.mxu0
      %v1208 = vadd.f32 0.0, %v1207
      %v1209 = vpop.f32.mrf.mxu0
      %v1210 = vpop.f32.mrf.mxu0
      %v1211 = vadd.f32 0.0, %v1210
      %v1212 = vpop.f32.mrf.mxu0
      %1213 = vmatprep.mubr.bf16.mxu0 0
      %1214 = vmatmul.mubr.bf16.gmra.mxu0 %v1133
      %v1215 = vpop.f32.mrf.mxu0
      %v1216 = vadd.f32 0.0, %v1215
      %v1217 = vpop.f32.mrf.mxu0
      %v1218 = vpop.f32.mrf.mxu0
      %v1219 = vadd.f32 0.0, %v1218
      %v1220 = vpop.f32.mrf.mxu0
      %1221 = vmatprep.mubr.bf16.mxu0 0
      %1222 = vmatmul.mubr.bf16.gmra.mxu0 %v1136
      %v1223 = vpop.f32.mrf.mxu0
      %v1224 = vadd.f32 0.0, %v1223
      %v1225 = vpop.f32.mrf.mxu0
      %v1226 = vpop.f32.mrf.mxu0
      %v1227 = vadd.f32 0.0, %v1226
      %v1228 = vpop.f32.mrf.mxu0
      %1229 = vmatprep.mubr.bf16.mxu0 0
      %1230 = vmatmul.mubr.bf16.gmra.mxu0 %v1139
      %v1231 = vpop.f32.mrf.mxu0
      %v1232 = vadd.f32 0.0, %v1231
      %v1233 = vpop.f32.mrf.mxu0
      %v1234 = vpop.f32.mrf.mxu0
      %v1235 = vadd.f32 0.0, %v1234
      %v1236 = vpop.f32.mrf.mxu0
      %1237 = vmatprep.mubr.bf16.mxu0 0
      %1238 = vmatmul.mubr.bf16.gmra.mxu0 %v1142
      %v1239 = vpop.f32.mrf.mxu0
      %v1240 = vadd.f32 0.0, %v1239
      %v1241 = vpop.f32.mrf.mxu0
      %v1242 = vpop.f32.mrf.mxu0
      %v1243 = vadd.f32 0.0, %v1242
      %v1244 = vpop.f32.mrf.mxu0
      %1245 = vmatprep.mubr.bf16.mxu0 0
      %1246 = vmatmul.mubr.bf16.gmra.mxu0 %v1145
      %v1247 = vpop.f32.mrf.mxu0
      %v1248 = vadd.f32 0.0, %v1247
      %v1249 = vpop.f32.mrf.mxu0
      %v1250 = vpop.f32.mrf.mxu0
      %v1251 = vadd.f32 0.0, %v1250
      %v1252 = vpop.f32.mrf.mxu0
      %1253 = vmatprep.mubr.bf16.mxu0 0
      %1254 = vmatmul.mubr.bf16.gmra.mxu0 %v1148
      %v1255 = vpop.f32.mrf.mxu0
      %v1256 = vadd.f32 0.0, %v1255
      %v1257 = vpop.f32.mrf.mxu0
      %v1258 = vpop.f32.mrf.mxu0
      %v1259 = vadd.f32 0.0, %v1258
      %v1260 = vpop.f32.mrf.mxu0
      %1261 = vmatprep.mubr.bf16.mxu0 0
      %1262 = vmatmul.mubr.bf16.gmra.mxu0 %v1151
      %v1263 = vpop.f32.mrf.mxu0
      %v1264 = vadd.f32 0.0, %v1263
      %v1265 = vpop.f32.mrf.mxu0
      %v1266 = vpop.f32.mrf.mxu0
      %v1267 = vadd.f32 0.0, %v1266
      %v1268 = vpop.f32.mrf.mxu0
      %1269 = vmatprep.mubr.bf16.mxu0 0
      %1270 = vmatmul.mubr.bf16.gmra.mxu0 %v1154
      %v1271 = vpop.f32.mrf.mxu0
      %v1272 = vadd.f32 0.0, %v1271
      %v1273 = vpop.f32.mrf.mxu0
      %v1274 = vpop.f32.mrf.mxu0
      %v1275 = vadd.f32 0.0, %v1274
      %v1276 = vpop.f32.mrf.mxu0
      %1277 = vmatprep.mubr.bf16.mxu0 0
      %1278 = vmatmul.mubr.bf16.gmra.mxu0 %v1157
      %v1279 = vpop.f32.mrf.mxu0
      %v1280 = vadd.f32 0.0, %v1279
      %v1281 = vpop.f32.mrf.mxu0
      %v1282 = vpop.f32.mrf.mxu0
      %v1283 = vadd.f32 0.0, %v1282
      %v1284 = vpop.f32.mrf.mxu0
      %1285 = vmatprep.mubr.bf16.mxu0 0
      %1286 = vmatmul.mubr.bf16.gmra.mxu0 %v1160
      %v1287 = vpop.f32.mrf.mxu0
      %v1288 = vadd.f32 0.0, %v1287
      %v1289 = vpop.f32.mrf.mxu0
      %v1290 = vpop.f32.mrf.mxu0
      %v1291 = vadd.f32 0.0, %v1290
      %v1292 = vpop.f32.mrf.mxu0
      %1293 = vmatprep.mubr.bf16.mxu0 0
      %1294 = vmatmul.mubr.bf16.gmra.mxu0 %v1163
      %v1295 = vpop.f32.mrf.mxu0
      %v1296 = vadd.f32 0.0, %v1295
      %v1297 = vpop.f32.mrf.mxu0
      %v1298 = vpop.f32.mrf.mxu0
      %v1299 = vpop.f32.mrf.mxu0
      %1300 = vdwg.mxu0
      %v1301 = vmax.f32 %v1012, %v1200
      %v1302 = vmax.f32 %v1013, %v1203
      %v1303 = vmax.f32 %v1014, %v1208
      %v1304 = vmax.f32 %v1015, %v1211
      %v1305 = vmax.f32 %v1016, %v1216
      %v1306 = vmax.f32 %v1017, %v1219
      %v1307 = vmax.f32 %v1018, %v1224
      %v1308 = vmax.f32 %v1019, %v1227
      %v1309 = vmax.f32 %v1020, %v1232
      %v1310 = vmax.f32 %v1021, %v1235
      %v1311 = vmax.f32 %v1022, %v1240
      %v1312 = vmax.f32 %v1023, %v1243
      %v1313 = vmax.f32 %v1024, %v1248
      %v1314 = vmax.f32 %v1025, %v1251
      %v1315 = vmax.f32 %v1026, %v1256
      %v1316 = vmax.f32 %v1027, %v1259
      %v1317 = vmax.f32 %v1028, %v1264
      %v1318 = vmax.f32 %v1029, %v1267
      %v1319 = vmax.f32 %v1030, %v1272
      %v1320 = vmax.f32 %v1031, %v1275
      %v1321 = vmax.f32 %v1032, %v1280
      %v1322 = vmax.f32 %v1033, %v1283
      %v1323 = vmax.f32 %v1034, %v1288
      %v1324 = vmax.f32 %v1035, %v1291
      %v1325 = vmax.f32 %v1036, %v1296
      %v1327 = vlaneseq
      %v1328 = vshrl.u32 %v1327, 7
      %v1329 = vsub.s32 0, %v1328
      %v1330 = vrot.slane %v176, %v1329
      %v1332 = vadd.f32 %v1301, %v1330
      %v1333 = vadd.f32 %v1302, %v1330
      %v1334 = vadd.f32 %v1303, %v1330
      %v1335 = vadd.f32 %v1304, %v1330
      %v1336 = vadd.f32 %v1305, %v1330
      %v1337 = vadd.f32 %v1306, %v1330
      %v1338 = vadd.f32 %v1307, %v1330
      %v1339 = vadd.f32 %v1308, %v1330
      %v1340 = vadd.f32 %v1309, %v1330
      %v1341 = vadd.f32 %v1310, %v1330
      %v1342 = vadd.f32 %v1311, %v1330
      %v1343 = vadd.f32 %v1312, %v1330
      %v1344 = vadd.f32 %v1313, %v1330
      %v1345 = vadd.f32 %v1314, %v1330
      %v1346 = vadd.f32 %v1315, %v1330
      %v1347 = vadd.f32 %v1316, %v1330
      %v1348 = vadd.f32 %v1317, %v1330
      %v1349 = vadd.f32 %v1318, %v1330
      %v1350 = vadd.f32 %v1319, %v1330
      %v1351 = vadd.f32 %v1320, %v1330
      %v1352 = vadd.f32 %v1321, %v1330
      %v1353 = vadd.f32 %v1322, %v1330
      %v1354 = vadd.f32 %v1323, %v1330
      %v1355 = vadd.f32 %v1324, %v1330
      %v1356 = vadd.f32 %v1325, %v1330
      %v1357 = vmax.f32 %v1332, 0.0
      %v1358 = vmax.f32 %v1333, 0.0
      %v1359 = vmax.f32 %v1334, 0.0
      %v1360 = vmax.f32 %v1335, 0.0
      %v1361 = vmax.f32 %v1336, 0.0
      %v1362 = vmax.f32 %v1337, 0.0
      %v1363 = vmax.f32 %v1338, 0.0
      %v1364 = vmax.f32 %v1339, 0.0
      %v1365 = vmax.f32 %v1340, 0.0
      %v1366 = vmax.f32 %v1341, 0.0
      %v1367 = vmax.f32 %v1342, 0.0
      %v1368 = vmax.f32 %v1343, 0.0
      %v1369 = vmax.f32 %v1344, 0.0
      %v1370 = vmax.f32 %v1345, 0.0
      %v1371 = vmax.f32 %v1346, 0.0
      %v1372 = vmax.f32 %v1347, 0.0
      %v1373 = vmax.f32 %v1348, 0.0
      %v1374 = vmax.f32 %v1349, 0.0
      %v1375 = vmax.f32 %v1350, 0.0
      %v1376 = vmax.f32 %v1351, 0.0
      %v1377 = vmax.f32 %v1352, 0.0
      %v1378 = vmax.f32 %v1353, 0.0
      %v1379 = vmax.f32 %v1354, 0.0
      %v1380 = vmax.f32 %v1355, 0.0
      %v1381 = vmax.f32 %v1356, 0.0
      %v1382 = vpack.c.bf16 %v1358, %v1357
      %v1383 = vpack.c.bf16 %v1360, %v1359
      %v1384 = vpack.c.bf16 %v1362, %v1361
      %v1385 = vpack.c.bf16 %v1364, %v1363
      %v1386 = vpack.c.bf16 %v1366, %v1365
      %v1387 = vpack.c.bf16 %v1368, %v1367
      %v1388 = vpack.c.bf16 %v1370, %v1369
      %v1389 = vpack.c.bf16 %v1372, %v1371
      %v1390 = vpack.c.bf16 %v1374, %v1373
      %v1391 = vpack.c.bf16 %v1376, %v1375
      %v1392 = vpack.c.bf16 %v1378, %v1377
      %v1393 = vpack.c.bf16 %v1380, %v1379
      %v1394 = vpack.c.bf16 %v1381, %v1381
      %v1408 = vunpack.c.l.b16 %v1382
      %v1409 = vunpack.c.h.b16 %v1382
      %v1410 = vunpack.c.l.b16 %v1383
      %v1411 = vunpack.c.h.b16 %v1383
      %v1412 = vunpack.c.l.b16 %v1384
      %v1413 = vunpack.c.h.b16 %v1384
      %v1414 = vunpack.c.l.b16 %v1385
      %v1415 = vunpack.c.h.b16 %v1385
      %v1416 = vunpack.c.l.b16 %v1386
      %v1417 = vunpack.c.h.b16 %v1386
      %v1418 = vunpack.c.l.b16 %v1387
      %v1419 = vunpack.c.h.b16 %v1387
      %v1420 = vunpack.c.l.b16 %v1388
      %v1421 = vunpack.c.h.b16 %v1388
      %v1422 = vunpack.c.l.b16 %v1389
      %v1423 = vunpack.c.h.b16 %v1389
      %v1424 = vunpack.c.l.b16 %v1390
      %v1425 = vunpack.c.h.b16 %v1390
      %v1426 = vunpack.c.l.b16 %v1391
      %v1427 = vunpack.c.h.b16 %v1391
      %v1428 = vunpack.c.l.b16 %v1392
      %v1429 = vunpack.c.h.b16 %v1392
      %v1430 = vunpack.c.l.b16 %v1393
      %v1431 = vunpack.c.h.b16 %v1393
      %v1432 = vunpack.c.l.b16 %v1394
      %v1433 = vpack.c.b16 %v1408, %v1408
      %v1434 = vpack.c.b16 %v1409, %v1409
      %v1435 = vpack.c.b16 %v1410, %v1410
      %v1436 = vpack.c.b16 %v1411, %v1411
      %v1437 = vpack.c.b16 %v1412, %v1412
      %v1438 = vpack.c.b16 %v1413, %v1413
      %v1439 = vpack.c.b16 %v1414, %v1414
      %v1440 = vpack.c.b16 %v1415, %v1415
      %v1441 = vpack.c.b16 %v1416, %v1416
      %v1442 = vpack.c.b16 %v1417, %v1417
      %v1443 = vpack.c.b16 %v1418, %v1418
      %v1444 = vpack.c.b16 %v1419, %v1419
      %v1445 = vpack.c.b16 %v1420, %v1420
      %v1446 = vpack.c.b16 %v1421, %v1421
      %v1447 = vpack.c.b16 %v1422, %v1422
      %v1448 = vpack.c.b16 %v1423, %v1423
      %v1449 = vpack.c.b16 %v1424, %v1424
      %v1450 = vpack.c.b16 %v1425, %v1425
      %v1451 = vpack.c.b16 %v1426, %v1426
      %v1452 = vpack.c.b16 %v1427, %v1427
      %v1453 = vpack.c.b16 %v1428, %v1428
      %v1454 = vpack.c.b16 %v1429, %v1429
      %v1455 = vpack.c.b16 %v1430, %v1430
      %v1456 = vpack.c.b16 %v1431, %v1431
      %v1457 = vpack.c.b16 %v1432, %v1432
      %vm1483 = vcmask 257024
      %1484 = vst.msk [vmem:[%s170] sm:$0xf] %vm1483, %v1433
      %1485 = vst.msk [vmem:[%s170 + $0x4] sm:$0xf] %vm1483, %v1434
      %1486 = vst.msk [vmem:[%s170 + $0x8] sm:$0xf] %vm1483, %v1435
      %1487 = vst.msk [vmem:[%s170 + $0xc] sm:$0xf] %vm1483, %v1436
      %1488 = vst.msk [vmem:[%s170 + $0x10] sm:$0xf] %vm1483, %v1437
      %1489 = vst.msk [vmem:[%s170 + $0x14] sm:$0xf] %vm1483, %v1438
      %1490 = vst.msk [vmem:[%s170 + $0x18] sm:$0xf] %vm1483, %v1439
      %1491 = vst.msk [vmem:[%s170 + $0x1c] sm:$0xf] %vm1483, %v1440
      %1492 = vst.msk [vmem:[%s170 + $0x20] sm:$0xf] %vm1483, %v1441
      %1493 = vst.msk [vmem:[%s170 + $0x24] sm:$0xf] %vm1483, %v1442
      %1494 = vst.msk [vmem:[%s170 + $0x28] sm:$0xf] %vm1483, %v1443
      %1495 = vst.msk [vmem:[%s170 + $0x2c] sm:$0xf] %vm1483, %v1444
      %1496 = vst.msk [vmem:[%s170 + $0x30] sm:$0xf] %vm1483, %v1445
      %1497 = vst.msk [vmem:[%s170 + $0x34] sm:$0xf] %vm1483, %v1446
      %1498 = vst.msk [vmem:[%s170 + $0x38] sm:$0xf] %vm1483, %v1447
      %1499 = vst.msk [vmem:[%s170 + $0x3c] sm:$0xf] %vm1483, %v1448
      %1500 = vst.msk [vmem:[%s170 + $0x40] sm:$0xf] %vm1483, %v1449
      %1501 = vst.msk [vmem:[%s170 + $0x44] sm:$0xf] %vm1483, %v1450
      %1502 = vst.msk [vmem:[%s170 + $0x48] sm:$0xf] %vm1483, %v1451
      %1503 = vst.msk [vmem:[%s170 + $0x4c] sm:$0xf] %vm1483, %v1452
      %1504 = vst.msk [vmem:[%s170 + $0x50] sm:$0xf] %vm1483, %v1453
      %1505 = vst.msk [vmem:[%s170 + $0x54] sm:$0xf] %vm1483, %v1454
      %1506 = vst.msk [vmem:[%s170 + $0x58] sm:$0xf] %vm1483, %v1455
      %1507 = vst.msk [vmem:[%s170 + $0x5c] sm:$0xf] %vm1483, %v1456
      %vm1508 = vcmask 254976
      %1509 = vst.msk [vmem:[%s170 + $0x60] sm:$0x3] %vm1508, %v1457
      %p1510 = scmp.lt.s32.totalorder %s14, 1
      %s1511 = scalar_select %p1510, %s14, 1
      %s1512 = smul.addr %s1511, 25
      %s1513 = smul.addr %s1512, 4
      %s1514 = scalar_lea.vmem %s3, %s1513
      // Predicated region
      $region33: #{lenet_forward.3} parent=31 // pred_check
        %p1515 = pneg %p100
      $region34: #{lenet_forward.3} parent=31 // pred_check_branch
        %1517 = sbr.rel (%p1515) target = $region36
      $region35: #{lenet_forward.3} parent=31 // pred_region
        _
      $region36: #{lenet_forward.3} parent=31 // pred_fallthru
        _
    $region32: #{lenet_forward.3} parent=5 // pred_fallthru
      _
    %p1518 = scmp.le.s32.totalorder 2, %s9
    // Predicated region
    $region37: #{lenet_forward.3} parent=5 // pred_check
      %p1519 = pneg %p1518
    $region38: #{lenet_forward.3} parent=5 // pred_check_branch
      %1521 = sbr.rel (%p1519) target = $region40
    $region39: #{lenet_forward.3} parent=5 // pred_region
      %s1522 = ssub.s32 %s9, 2
      // Predicated region
      $region41: #{lenet_forward.3} parent=39 // pred_check
        %p1523 = pneg %p106
      $region42: #{lenet_forward.3} parent=39 // pred_check_branch
        %1525 = sbr.rel (%p1523) target = $region44
      $region43: #{lenet_forward.3} parent=39 // pred_region
        %p1526 = scmp.lt.s32.totalorder %s15, 1
        %s1527 = scalar_select %p1526, %s15, 1
        %s1528 = smul.addr %s1527, 25
        %s1529 = smul.addr %s1528, 4
        %s1530 = scalar_lea.vmem %s3, %s1529
      $region44: #{lenet_forward.3} parent=39 // pred_fallthru
        _
    $region40: #{lenet_forward.3} parent=5 // pred_fallthru
      _
  $region6: #{lenet_forward.3} parent=0 // loop_footer
    %s13 = sadd.s32 1, %s9
  $region7: #{lenet_forward.3} parent=0 // loop_footer_branch
    %8 = sbr.rel target = $region3
  $region8: #{lenet_forward.3} parent=0 // loop_exit
    _

// kernel: lenet_forward.4
$region0: #{lenet_forward.4}
  #allocation0 [shape = 'u32[]', space=smem, size = 0x4, offset = 0x4, fixed_abs, tag = 'smem constant byte address 0x4 - core index']
  #allocation1 [shape = 'u32[144,128]{1,0:T(1,128)}', space=vmem, size = 0x12000, scoped, tag = 'internal scratch']
  %s0 = inlined_call_operand.vmem [shape: bf16[2,4,49,800], index: 0, kind: input, shape index: {}]
  %s1 = inlined_call_operand.vmem [shape: bf16[800,64], index: 1, kind: input, shape index: {}]
  %s2 = inlined_call_operand.vmem [shape: f32[1,64], index: 2, kind: input, shape index: {}]
  %s3 = inlined_call_operand.vmem [shape: bf16[2,49,64], index: 3, kind: output, shape index: {}]
  %s4 = sld [smem:[#allocation0]]
  $region45: #{lenet_forward.4} parent=0
    _
  %s6 = ssub.s32 1, %s4
  %s7 = scalar_select 0, %s6, %s4
  loop: start=0, step=1, limit=4
  $region2: #{lenet_forward.4} parent=0 // loop_pre_header
    _
  $region3: #{lenet_forward.4} parent=0 // loop_header
    %s9 = sphi 0, %s13
    %p10 = scmp.ge.s32.totalorder %s9, 4
    %s19 = sphi 0, %s21
    %s22 = sphi 0, %s19
    %s23 = sphi 0, %s22
    %s39 = sphi 0, %s23
    %s43 = sphi 0, %s43
    %s45 = sphi 0, %s43
    %s46 = sphi 0, %s45
    %s60 = sphi 0, %s46
    %s64 = sphi 0, %s64
    %s66 = sphi 0, %s64
    %s67 = sphi 0, %s66
    %s81 = sphi 0, %s67
    %s87 = sphi 0, %s89
    %s90 = sphi 0, %s87
    %s91 = sphi 0, %s90
    %s107 = sphi 0, %s91
  $region4: #{lenet_forward.4} parent=0 // loop_header_branch
    %12 = sbr.rel (%p10) target = $region8
  $region5: #{lenet_forward.4} parent=0 // loop_body
    %s14 = ssub.s32 %s9, 1
    %s15 = ssub.s32 %s9, 2
    %s16 = sadd.s32 %s9, 1
    %s17 = ssub.s32 %s9, %s16
    %p18 = scmp.eq.s32.totalorder %s17, 0
    %s20 = sadd.s32 %s19, 1
    %s21 = scalar_select %p18, %s19, %s20
    %p24 = pneg %p18
    %p25 = scmp.eq.s32.totalorder %s9, 1
    %p26 = por %p24, %p25
    %p27 = scmp.ne.s32.totalorder %s19, %s22
    %p28 = scmp.eq.s32.totalorder %s9, 0
    %p29 = por %p27, %p28
    %p30 = scmp.ne.s32.totalorder %s19, %s22
    %p31 = scmp.eq.s32.totalorder %s14, 1
    %p32 = por %p30, %p31
    %p33 = scmp.ne.s32.totalorder %s22, %s23
    %p34 = scmp.eq.s32.totalorder %s14, 0
    %p35 = por %p33, %p34
    %p36 = scmp.ne.s32.totalorder %s22, %s23
    %p37 = scmp.eq.s32.totalorder %s15, 1
    %p38 = por %p36, %p37
    %p40 = scmp.ne.s32.totalorder %s23, %s39
    %p41 = scmp.eq.s32.totalorder %s15, 0
    %p42 = por %p40, %p41
    %s44 = sadd.s32 %s43, 1
    %p47 = scmp.eq.s32.totalorder %s9, 1
    %p48 = scmp.ne.s32.totalorder %s43, %s45
    %p49 = scmp.eq.s32.totalorder %s9, 0
    %p50 = por %p48, %p49
    %p51 = scmp.ne.s32.totalorder %s43, %s45
    %p52 = scmp.eq.s32.totalorder %s14, 1
    %p53 = por %p51, %p52
    %p54 = scmp.ne.s32.totalorder %s45, %s46
    %p55 = scmp.eq.s32.totalorder %s14, 0
    %p56 = por %p54, %p55
    %p57 = scmp.ne.s32.totalorder %s45, %s46
    %p58 = scmp.eq.s32.totalorder %s15, 1
    %p59 = por %p57, %p58
    %p61 = scmp.ne.s32.totalorder %s46, %s60
    %p62 = scmp.eq.s32.totalorder %s15, 0
    %p63 = por %p61, %p62
    %s65 = sadd.s32 %s64, 1
    %p68 = scmp.eq.s32.totalorder %s9, 1
    %p69 = scmp.ne.s32.totalorder %s64, %s66
    %p70 = scmp.eq.s32.totalorder %s9, 0
    %p71 = por %p69, %p70
    %p72 = scmp.ne.s32.totalorder %s64, %s66
    %p73 = scmp.eq.s32.totalorder %s14, 1
    %p74 = por %p72, %p73
    %p75 = scmp.ne.s32.totalorder %s66, %s67
    %p76 = scmp.eq.s32.totalorder %s14, 0
    %p77 = por %p75, %p76
    %p78 = scmp.ne.s32.totalorder %s66, %s67
    %p79 = scmp.eq.s32.totalorder %s15, 1
    %p80 = por %p78, %p79
    %p82 = scmp.ne.s32.totalorder %s67, %s81
    %p83 = scmp.eq.s32.totalorder %s15, 0
    %p84 = por %p82, %p83
    %s85 = ssub.s32 %s9, %s16
    %p86 = scmp.eq.s32.totalorder %s85, 0
    %s88 = sadd.s32 %s87, 1
    %s89 = scalar_select %p86, %s87, %s88
    %p92 = pneg %p86
    %p93 = scmp.eq.s32.totalorder %s9, 1
    %p94 = por %p92, %p93
    %p95 = scmp.ne.s32.totalorder %s87, %s90
    %p96 = scmp.eq.s32.totalorder %s9, 0
    %p97 = por %p95, %p96
    %p98 = scmp.ne.s32.totalorder %s87, %s90
    %p99 = scmp.eq.s32.totalorder %s14, 1
    %p100 = por %p98, %p99
    %p101 = scmp.ne.s32.totalorder %s90, %s91
    %p102 = scmp.eq.s32.totalorder %s14, 0
    %p103 = por %p101, %p102
    %p104 = scmp.ne.s32.totalorder %s90, %s91
    %p105 = scmp.eq.s32.totalorder %s15, 1
    %p106 = por %p104, %p105
    %p108 = scmp.ne.s32.totalorder %s91, %s107
    %p109 = scmp.eq.s32.totalorder %s15, 0
    %p110 = por %p108, %p109
    %p111 = scmp.le.s32.totalorder 1, %s9
    %p112 = scmp.lt.s32.totalorder %s9, 3
    %p113 = pnand %p111, %p112
    %p114 = pneg %p113
    // Predicated region
    $region9: #{lenet_forward.4} parent=5 // pred_check
      _
    $region10: #{lenet_forward.4} parent=5 // pred_check_branch
      %116 = sbr.rel (%p113) target = $region12
    $region11: #{lenet_forward.4} parent=5 // pred_region
      %s117 = ssub.s32 %s9, 1
      // Predicated region
      $region13: #{lenet_forward.4} parent=11 // pred_check
        %p118 = pneg %p56
      $region14: #{lenet_forward.4} parent=11 // pred_check_branch
        %120 = sbr.rel (%p118) target = $region16
      $region15: #{lenet_forward.4} parent=11 // pred_region
        _
      $region16: #{lenet_forward.4} parent=11 // pred_fallthru
        _
      // Predicated region
      $region17: #{lenet_forward.4} parent=11 // pred_check
        %p121 = pneg %p77
      $region18: #{lenet_forward.4} parent=11 // pred_check_branch
        %123 = sbr.rel (%p121) target = $region20
      $region19: #{lenet_forward.4} parent=11 // pred_region
        _
      $region20: #{lenet_forward.4} parent=11 // pred_fallthru
        _
    $region12: #{lenet_forward.4} parent=5 // pred_fallthru
      _
    %p124 = scmp.lt.s32.totalorder %s9, 2
    // Predicated region
    $region21: #{lenet_forward.4} parent=5 // pred_check
      %p125 = pneg %p124
    $region22: #{lenet_forward.4} parent=5 // pred_check_branch
      %127 = sbr.rel (%p125) target = $region24
    $region23: #{lenet_forward.4} parent=5 // pred_region
      // Predicated region
      $region25: #{lenet_forward.4} parent=23 // pred_check
        %p128 = pneg %p29
      $region26: #{lenet_forward.4} parent=23 // pred_check_branch
        %130 = sbr.rel (%p128) target = $region28
      $region27: #{lenet_forward.4} parent=23 // pred_region
        %p131 = scmp.lt.s32.totalorder %s9, 1
        %s132 = scalar_select %p131, %s9, 1
        %s133 = smul.addr %s132, 196
        %s134 = smul.addr %s133, 4
        %s135 = scalar_lea.vmem %s0, %s134
      $region28: #{lenet_forward.4} parent=23 // pred_fallthru
        _
    $region24: #{lenet_forward.4} parent=5 // pred_fallthru
      _
    %p136 = scmp.le.s32.totalorder 1, %s9
    %p137 = scmp.lt.s32.totalorder %s9, 3
    %p138 = pnand %p136, %p137
    %p139 = pneg %p138
    // Predicated region
    $region29: #{lenet_forward.4} parent=5 // pred_check
      _
    $region30: #{lenet_forward.4} parent=5 // pred_check_branch
      %141 = sbr.rel (%p138) target = $region32
    $region31: #{lenet_forward.4} parent=5 // pred_region
      %s142 = ssub.s32 %s9, 1
      %p143 = scmp.lt.s32.totalorder %s14, 1
      %s144 = scalar_select %p143, %s14, 1
      %s145 = smul.addr %s144, 196
      %s146 = smul.addr %s145, 4
      %s147 = scalar_lea.vmem %s0, %s146
      %p148 = pneg %p35
      %p149 = pneg %p32
      %p150 = pneg %p56
      %p151 = pneg %p53
      %p152 = pneg %p77
      %p153 = pneg %p74
      %p154 = pneg %p103
      %p155 = pneg %p100
      %p156 = scmp.lt.s32.totalorder %s14, 1
      %s157 = scalar_select %p156, %s14, 1
      %s158 = smul.addr %s157, 7
      %s159 = smul.addr %s158, 4
      %s160 = scalar_lea.vmem %s3, %s159
      %p161 = scmp.lt.s32.totalorder %s14, 1
      %s162 = scalar_select %p161, %s14, 1
      %s163 = smul.addr %s162, 196
      %s164 = smul.addr %s163, 4
      %s165 = scalar_lea.vmem %s0, %s164
      %p166 = scmp.lt.s32.totalorder %s14, 1
      %s167 = scalar_select %p166, %s14, 1
      %s168 = smul.addr %s167, 7
      %s169 = smul.addr %s168, 4
      %s170 = scalar_lea.vmem %s3, %s169
      %v172 = vld [vmem:[%s1] sm:$0xf]
      %v173 = vld [vmem:[%s1 + $0x4] sm:$0xf]
      %v174 = vld [vmem:[%s1 + $0x8] sm:$0xf]
      %v175 = vld [vmem:[%s1 + $0xc] sm:$0xf]
      %v176 = vld [vmem:[%s1 + $0x10] sm:$0xf]
      %v177 = vld [vmem:[%s1 + $0x14] sm:$0xf]
      %v178 = vld [vmem:[%s1 + $0x18] sm:$0xf]
      %v179 = vld [vmem:[%s1 + $0x1c] sm:$0xf]
      %v180 = vld [vmem:[%s1 + $0x20] sm:$0xf]
      %v181 = vld [vmem:[%s1 + $0x24] sm:$0xf]
      %v182 = vld [vmem:[%s1 + $0x28] sm:$0xf]
      %v183 = vld [vmem:[%s1 + $0x2c] sm:$0xf]
      %v184 = vld [vmem:[%s1 + $0x30] sm:$0xf]
      %v185 = vld [vmem:[%s1 + $0x34] sm:$0xf]
      %v186 = vld [vmem:[%s1 + $0x38] sm:$0xf]
      %v187 = vld [vmem:[%s1 + $0x3c] sm:$0xf]
      %v188 = vld [vmem:[%s1 + $0x40] sm:$0xf]
      %v189 = vld [vmem:[%s1 + $0x44] sm:$0xf]
      %v190 = vld [vmem:[%s1 + $0x48] sm:$0xf]
      %v191 = vld [vmem:[%s1 + $0x4c] sm:$0xf]
      %v192 = vld [vmem:[%s1 + $0x50] sm:$0xf]
      %v193 = vld [vmem:[%s1 + $0x54] sm:$0xf]
      %v194 = vld [vmem:[%s1 + $0x58] sm:$0xf]
      %v195 = vld [vmem:[%s1 + $0x5c] sm:$0xf]
      %v196 = vld [vmem:[%s1 + $0x60] sm:$0xf]
      %v197 = vld [vmem:[%s1 + $0x64] sm:$0xf]
      %v198 = vld [vmem:[%s1 + $0x68] sm:$0xf]
      %v199 = vld [vmem:[%s1 + $0x6c] sm:$0xf]
      %v200 = vld [vmem:[%s1 + $0x70] sm:$0xf]
      %v201 = vld [vmem:[%s1 + $0x74] sm:$0xf]
      %v202 = vld [vmem:[%s1 + $0x78] sm:$0xf]
      %v203 = vld [vmem:[%s1 + $0x7c] sm:$0xf]
      %v204 = vld [vmem:[%s1 + $0x80] sm:$0xf]
      %v205 = vld [vmem:[%s1 + $0x84] sm:$0xf]
      %v206 = vld [vmem:[%s1 + $0x88] sm:$0xf]
      %v207 = vld [vmem:[%s1 + $0x8c] sm:$0xf]
      %v208 = vld [vmem:[%s1 + $0x90] sm:$0xf]
      %v209 = vld [vmem:[%s1 + $0x94] sm:$0xf]
      %v210 = vld [vmem:[%s1 + $0x98] sm:$0xf]
      %v211 = vld [vmem:[%s1 + $0x9c] sm:$0xf]
      %v212 = vld [vmem:[%s1 + $0xa0] sm:$0xf]
      %v213 = vld [vmem:[%s1 + $0xa4] sm:$0xf]
      %v214 = vld [vmem:[%s1 + $0xa8] sm:$0xf]
      %v215 = vld [vmem:[%s1 + $0xac] sm:$0xf]
      %v216 = vld [vmem:[%s1 + $0xb0] sm:$0xf]
      %v217 = vld [vmem:[%s1 + $0xb4] sm:$0xf]
      %v218 = vld [vmem:[%s1 + $0xb8] sm:$0xf]
      %v219 = vld [vmem:[%s1 + $0xbc] sm:$0xf]
      %v220 = vld [vmem:[%s1 + $0xc0] sm:$0xf]
      %v221 = vld [vmem:[%s1 + $0xc4] sm:$0xf]
      %v222 = vld [vmem:[%s1 + $0xc8] sm:$0xf]
      %v223 = vld [vmem:[%s1 + $0xcc] sm:$0xf]
      %v224 = vld [vmem:[%s1 + $0xd0] sm:$0xf]
      %v225 = vld [vmem:[%s1 + $0xd4] sm:$0xf]
      %v226 = vld [vmem:[%s1 + $0xd8] sm:$0xf]
      %v227 = vld [vmem:[%s1 + $0xdc] sm:$0xf]
      %v228 = vld [vmem:[%s1 + $0xe0] sm:$0xf]
      %v229 = vld [vmem:[%s1 + $0xe4] sm:$0xf]
      %v230 = vld [vmem:[%s1 + $0xe8] sm:$0xf]
      %v231 = vld [vmem:[%s1 + $0xec] sm:$0xf]
      %v232 = vld [vmem:[%s1 + $0xf0] sm:$0xf]
      %v233 = vld [vmem:[%s1 + $0xf4] sm:$0xf]
      %v234 = vld [vmem:[%s1 + $0xf8] sm:$0xf]
      %v235 = vld [vmem:[%s1 + $0xfc] sm:$0xf]
      %v236 = vld [vmem:[%s1 + $0x100] sm:$0xf]
      %v237 = vld [vmem:[%s1 + $0x104] sm:$0xf]
      %v238 = vld [vmem:[%s1 + $0x108] sm:$0xf]
      %v239 = vld [vmem:[%s1 + $0x10c] sm:$0xf]
      %v240 = vld [vmem:[%s1 + $0x110] sm:$0xf]
      %v241 = vld [vmem:[%s1 + $0x114] sm:$0xf]
      %v242 = vld [vmem:[%s1 + $0x118] sm:$0xf]
      %v243 = vld [vmem:[%s1 + $0x11c] sm:$0xf]
      %v244 = vld [vmem:[%s1 + $0x120] sm:$0xf]
      %v245 = vld [vmem:[%s1 + $0x124] sm:$0xf]
      %v246 = vld [vmem:[%s1 + $0x128] sm:$0xf]
      %v247 = vld [vmem:[%s1 + $0x12c] sm:$0xf]
      %v248 = vld [vmem:[%s1 + $0x130] sm:$0xf]
      %v249 = vld [vmem:[%s1 + $0x134] sm:$0xf]
      %v250 = vld [vmem:[%s1 + $0x138] sm:$0xf]
      %v251 = vld [vmem:[%s1 + $0x13c] sm:$0xf]
      %v252 = vld [vmem:[%s1 + $0x140] sm:$0xf]
      %v253 = vld [vmem:[%s1 + $0x144] sm:$0xf]
      %v254 = vld [vmem:[%s1 + $0x148] sm:$0xf]
      %v255 = vld [vmem:[%s1 + $0x14c] sm:$0xf]
      %v256 = vld [vmem:[%s1 + $0x150] sm:$0xf]
      %v257 = vld [vmem:[%s1 + $0x154] sm:$0xf]
      %v258 = vld [vmem:[%s1 + $0x158] sm:$0xf]
      %v259 = vld [vmem:[%s1 + $0x15c] sm:$0xf]
      %v260 = vld [vmem:[%s1 + $0x160] sm:$0xf]
      %v261 = vld [vmem:[%s1 + $0x164] sm:$0xf]
      %v262 = vld [vmem:[%s1 + $0x168] sm:$0xf]
      %v263 = vld [vmem:[%s1 + $0x16c] sm:$0xf]
      %v264 = vld [vmem:[%s1 + $0x170] sm:$0xf]
      %v265 = vld [vmem:[%s1 + $0x174] sm:$0xf]
      %v266 = vld [vmem:[%s1 + $0x178] sm:$0xf]
      %v267 = vld [vmem:[%s1 + $0x17c] sm:$0xf]
      %v268 = vld [vmem:[%s1 + $0x180] sm:$0xf]
      %v269 = vld [vmem:[%s1 + $0x184] sm:$0xf]
      %v270 = vld [vmem:[%s1 + $0x188] sm:$0xf]
      %v271 = vld [vmem:[%s1 + $0x18c] sm:$0xf]
      %v272 = vld [vmem:[%s2] sm:$0x1]
      %v273 = vld [vmem:[%s165] sm:$0xff]
      %v274 = vld [vmem:[%s165 + $0x8] sm:$0xff]
      %v275 = vld [vmem:[%s165 + $0x10] sm:$0xff]
      %v276 = vld [vmem:[%s165 + $0x18] sm:$0xf]
      %v277 = vld [vmem:[%s165 + $0x1c] sm:$0xff]
      %v278 = vld [vmem:[%s165 + $0x24] sm:$0xff]
      %v279 = vld [vmem:[%s165 + $0x2c] sm:$0xff]
      %v280 = vld [vmem:[%s165 + $0x34] sm:$0xf]
      %v281 = vld [vmem:[%s165 + $0x38] sm:$0xff]
      %v282 = vld [vmem:[%s165 + $0x40] sm:$0xff]
      %v283 = vld [vmem:[%s165 + $0x48] sm:$0xff]
      %v284 = vld [vmem:[%s165 + $0x50] sm:$0xf]
      %v285 = vld [vmem:[%s165 + $0x54] sm:$0xff]
      %v286 = vld [vmem:[%s165 + $0x5c] sm:$0xff]
      %v287 = vld [vmem:[%s165 + $0x64] sm:$0xff]
      %v288 = vld [vmem:[%s165 + $0x6c] sm:$0xf]
      %v289 = vld [vmem:[%s165 + $0x70] sm:$0xff]
      %v290 = vld [vmem:[%s165 + $0x78] sm:$0xff]
      %v291 = vld [vmem:[%s165 + $0x80] sm:$0xff]
      %v292 = vld [vmem:[%s165 + $0x88] sm:$0xf]
      %v293 = vld [vmem:[%s165 + $0x8c] sm:$0xff]
      %v294 = vld [vmem:[%s165 + $0x94] sm:$0xff]
      %v295 = vld [vmem:[%s165 + $0x9c] sm:$0xff]
      %v296 = vld [vmem:[%s165 + $0xa4] sm:$0xf]
      %v297 = vld [vmem:[%s165 + $0xa8] sm:$0x11]
      %v298 = vld [vmem:[%s165 + $0xb0] sm:$0x11]
      %v299 = vld [vmem:[%s165 + $0xb8] sm:$0x11]
      %v300 = vld [vmem:[%s165 + $0xc0] sm:$0x1]
      %v329 = vunpack.c.l.b16 %v273
      %v330 = vunpack.c.h.b16 %v273
      %v331 = vunpack.c.l.b16 %v274
      %v332 = vunpack.c.h.b16 %v274
      %v333 = vunpack.c.l.b16 %v275
      %v334 = vunpack.c.h.b16 %v275
      %v335 = vunpack.c.l.b16 %v276
      %v336 = vunpack.c.l.b16 %v277
      %v337 = vunpack.c.h.b16 %v277
      %v338 = vunpack.c.l.b16 %v278
      %v339 = vunpack.c.h.b16 %v278
      %v340 = vunpack.c.l.b16 %v279
      %v341 = vunpack.c.h.b16 %v279
      %v342 = vunpack.c.l.b16 %v280
      %v343 = vunpack.c.l.b16 %v281
      %v344 = vunpack.c.h.b16 %v281
      %v345 = vunpack.c.l.b16 %v282
      %v346 = vunpack.c.h.b16 %v282
      %v347 = vunpack.c.l.b16 %v283
      %v348 = vunpack.c.h.b16 %v283
      %v349 = vunpack.c.l.b16 %v284
      %v350 = vunpack.c.l.b16 %v285
      %v351 = vunpack.c.h.b16 %v285
      %v352 = vunpack.c.l.b16 %v286
      %v353 = vunpack.c.h.b16 %v286
      %v354 = vunpack.c.l.b16 %v287
      %v355 = vunpack.c.h.b16 %v287
      %v356 = vunpack.c.l.b16 %v288
      %v357 = vunpack.c.l.b16 %v289
      %v358 = vunpack.c.h.b16 %v289
      %v359 = vunpack.c.l.b16 %v290
      %v360 = vunpack.c.h.b16 %v290
      %v361 = vunpack.c.l.b16 %v291
      %v362 = vunpack.c.h.b16 %v291
      %v363 = vunpack.c.l.b16 %v292
      %v364 = vunpack.c.l.b16 %v293
      %v365 = vunpack.c.h.b16 %v293
      %v366 = vunpack.c.l.b16 %v294
      %v367 = vunpack.c.h.b16 %v294
      %v368 = vunpack.c.l.b16 %v295
      %v369 = vunpack.c.h.b16 %v295
      %v370 = vunpack.c.l.b16 %v296
      %v371 = vunpack.c.l.b16 %v297
      %v372 = vunpack.c.h.b16 %v297
      %v373 = vunpack.c.l.b16 %v298
      %v374 = vunpack.c.h.b16 %v298
      %v375 = vunpack.c.l.b16 %v299
      %v376 = vunpack.c.h.b16 %v299
      %v377 = vunpack.c.l.b16 %v300
      %v378 = vpack.c.b16 %v336, %v329
      %v379 = vpack.c.b16 %v337, %v330
      %v380 = vpack.c.b16 %v338, %v331
      %v381 = vpack.c.b16 %v339, %v332
      %v382 = vpack.c.b16 %v340, %v333
      %v383 = vpack.c.b16 %v341, %v334
      %v384 = vpack.c.b16 %v342, %v335
      %v385 = vpack.c.b16 %v350, %v343
      %v386 = vpack.c.b16 %v351, %v344
      %v387 = vpack.c.b16 %v352, %v345
      %v388 = vpack.c.b16 %v353, %v346
      %v389 = vpack.c.b16 %v354, %v347
      %v390 = vpack.c.b16 %v355, %v348
      %v391 = vpack.c.b16 %v356, %v349
      %v392 = vpack.c.b16 %v364, %v357
      %v393 = vpack.c.b16 %v365, %v358
      %v394 = vpack.c.b16 %v366, %v359
      %v395 = vpack.c.b16 %v367, %v360
      %v396 = vpack.c.b16 %v368, %v361
      %v397 = vpack.c.b16 %v369, %v362
      %v398 = vpack.c.b16 %v370, %v363
      %v399 = vpack.c.b16 %v371, %v371
      %v400 = vpack.c.b16 %v372, %v372
      %v401 = vpack.c.b16 %v373, %v373
      %v402 = vpack.c.b16 %v374, %v374
      %v403 = vpack.c.b16 %v375, %v375
      %v404 = vpack.c.b16 %v376, %v376
      %v405 = vpack.c.b16 %v377, %v377
      %v530 = vunpack.c.l.b16 %v172
      %v531 = vunpack.c.l.b16 %v173
      %v532 = vunpack.c.l.b16 %v174
      %v533 = vunpack.c.l.b16 %v175
      %v534 = vunpack.c.l.b16 %v176
      %v535 = vunpack.c.l.b16 %v177
      %v536 = vunpack.c.l.b16 %v178
      %v537 = vunpack.c.l.b16 %v179
      %v538 = vunpack.c.l.b16 %v180
      %v539 = vunpack.c.l.b16 %v181
      %v540 = vunpack.c.l.b16 %v182
      %v541 = vunpack.c.l.b16 %v183
      %v542 = vunpack.c.l.b16 %v184
      %v543 = vunpack.c.l.b16 %v185
      %v544 = vunpack.c.l.b16 %v186
      %v545 = vunpack.c.l.b16 %v187
      %v546 = vunpack.c.l.b16 %v188
      %v547 = vunpack.c.l.b16 %v189
      %v548 = vunpack.c.l.b16 %v190
      %v549 = vunpack.c.l.b16 %v191
      %v550 = vunpack.c.l.b16 %v192
      %v551 = vunpack.c.l.b16 %v193
      %v552 = vunpack.c.l.b16 %v194
      %v553 = vunpack.c.l.b16 %v195
      %v554 = vunpack.c.l.b16 %v196
      %v555 = vunpack.c.l.b16 %v197
      %v556 = vunpack.c.l.b16 %v198
      %v557 = vunpack.c.l.b16 %v199
      %v558 = vunpack.c.l.b16 %v200
      %v559 = vunpack.c.l.b16 %v201
      %v560 = vunpack.c.l.b16 %v202
      %v561 = vunpack.c.l.b16 %v203
      %v562 = vunpack.c.l.b16 %v204
      %v563 = vunpack.c.l.b16 %v205
      %v564 = vunpack.c.l.b16 %v206
      %v565 = vunpack.c.l.b16 %v207
      %v566 = vunpack.c.l.b16 %v208
      %v567 = vunpack.c.l.b16 %v209
      %v568 = vunpack.c.l.b16 %v210
      %v569 = vunpack.c.l.b16 %v211
      %v570 = vunpack.c.l.b16 %v212
      %v571 = vunpack.c.l.b16 %v213
      %v572 = vunpack.c.l.b16 %v214
      %v573 = vunpack.c.l.b16 %v215
      %v574 = vunpack.c.l.b16 %v216
      %v575 = vunpack.c.l.b16 %v217
      %v576 = vunpack.c.l.b16 %v218
      %v577 = vunpack.c.l.b16 %v219
      %v578 = vunpack.c.l.b16 %v220
      %v579 = vunpack.c.l.b16 %v221
      %v580 = vunpack.c.l.b16 %v222
      %v581 = vunpack.c.l.b16 %v223
      %v582 = vunpack.c.l.b16 %v224
      %v583 = vunpack.c.l.b16 %v225
      %v584 = vunpack.c.l.b16 %v226
      %v585 = vunpack.c.l.b16 %v227
      %v586 = vunpack.c.l.b16 %v228
      %v587 = vunpack.c.l.b16 %v229
      %v588 = vunpack.c.l.b16 %v230
      %v589 = vunpack.c.l.b16 %v231
      %v590 = vunpack.c.l.b16 %v232
      %v591 = vunpack.c.l.b16 %v233
      %v592 = vunpack.c.l.b16 %v234
      %v593 = vunpack.c.l.b16 %v235
      %v594 = vunpack.c.l.b16 %v236
      %v595 = vunpack.c.l.b16 %v237
      %v596 = vunpack.c.l.b16 %v238
      %v597 = vunpack.c.l.b16 %v239
      %v598 = vunpack.c.l.b16 %v240
      %v599 = vunpack.c.l.b16 %v241
      %v600 = vunpack.c.l.b16 %v242
      %v601 = vunpack.c.l.b16 %v243
      %v602 = vunpack.c.l.b16 %v244
      %v603 = vunpack.c.l.b16 %v245
      %v604 = vunpack.c.l.b16 %v246
      %v605 = vunpack.c.l.b16 %v247
      %v606 = vunpack.c.l.b16 %v248
      %v607 = vunpack.c.l.b16 %v249
      %v608 = vunpack.c.l.b16 %v250
      %v609 = vunpack.c.l.b16 %v251
      %v610 = vunpack.c.l.b16 %v252
      %v611 = vunpack.c.l.b16 %v253
      %v612 = vunpack.c.l.b16 %v254
      %v613 = vunpack.c.l.b16 %v255
      %v614 = vunpack.c.l.b16 %v256
      %v615 = vunpack.c.l.b16 %v257
      %v616 = vunpack.c.l.b16 %v258
      %v617 = vunpack.c.l.b16 %v259
      %v618 = vunpack.c.l.b16 %v260
      %v619 = vunpack.c.l.b16 %v261
      %v620 = vunpack.c.l.b16 %v262
      %v621 = vunpack.c.l.b16 %v263
      %v622 = vunpack.c.l.b16 %v264
      %v623 = vunpack.c.l.b16 %v265
      %v624 = vunpack.c.l.b16 %v266
      %v625 = vunpack.c.l.b16 %v267
      %v626 = vunpack.c.l.b16 %v268
      %v627 = vunpack.c.l.b16 %v269
      %v628 = vunpack.c.l.b16 %v270
      %v629 = vunpack.c.l.b16 %v271
      %v630 = vpack.c.b16 %v531, %v530
      %v631 = vpack.c.b16 %v533, %v532
      %v632 = vpack.c.b16 %v535, %v534
      %v633 = vpack.c.b16 %v537, %v536
      %v634 = vpack.c.b16 %v539, %v538
      %v635 = vpack.c.b16 %v541, %v540
      %v636 = vpack.c.b16 %v543, %v542
      %v637 = vpack.c.b16 %v545, %v544
      %v638 = vpack.c.b16 %v547, %v546
      %v639 = vpack.c.b16 %v549, %v548
      %v640 = vpack.c.b16 %v551, %v550
      %v641 = vpack.c.b16 %v553, %v552
      %v642 = vpack.c.b16 %v555, %v554
      %v643 = vpack.c.b16 %v557, %v556
      %v644 = vpack.c.b16 %v559, %v558
      %v645 = vpack.c.b16 %v561, %v560
      %v646 = vpack.c.b16 %v563, %v562
      %v647 = vpack.c.b16 %v565, %v564
      %v648 = vpack.c.b16 %v567, %v566
      %v649 = vpack.c.b16 %v569, %v568
      %v650 = vpack.c.b16 %v571, %v570
      %v651 = vpack.c.b16 %v573, %v572
      %v652 = vpack.c.b16 %v575, %v574
      %v653 = vpack.c.b16 %v577, %v576
      %v654 = vpack.c.b16 %v579, %v578
      %v655 = vpack.c.b16 %v581, %v580
      %v656 = vpack.c.b16 %v583, %v582
      %v657 = vpack.c.b16 %v585, %v584
      %v658 = vpack.c.b16 %v587, %v586
      %v659 = vpack.c.b16 %v589, %v588
      %v660 = vpack.c.b16 %v591, %v590
      %v661 = vpack.c.b16 %v593, %v592
      %v662 = vpack.c.b16 %v595, %v594
      %v663 = vpack.c.b16 %v597, %v596
      %v664 = vpack.c.b16 %v599, %v598
      %v665 = vpack.c.b16 %v601, %v600
      %v666 = vpack.c.b16 %v603, %v602
      %v667 = vpack.c.b16 %v605, %v604
      %v668 = vpack.c.b16 %v607, %v606
      %v669 = vpack.c.b16 %v609, %v608
      %v670 = vpack.c.b16 %v611, %v610
      %v671 = vpack.c.b16 %v613, %v612
      %v672 = vpack.c.b16 %v615, %v614
      %v673 = vpack.c.b16 %v617, %v616
      %v674 = vpack.c.b16 %v619, %v618
      %v675 = vpack.c.b16 %v621, %v620
      %v676 = vpack.c.b16 %v623, %v622
      %v677 = vpack.c.b16 %v625, %v624
      %v678 = vpack.c.b16 %v627, %v626
      %v679 = vpack.c.b16 %v629, %v628
      %vm730 = vcmask 261120
      %v732 = vsel %vm730, %v384, 0
      %v735 = vsel %vm730, %v391, 0
      %v738 = vsel %vm730, %v398, 0
      %v741 = vsel %vm730, %v405, 0
      %743 = vmatprep.subr.bf16.mxu0 0
      %744 = vmatpush1.bf16.msra.mxu0 %v637
      %745 = vmatprep.subr.bf16.mxu0 0
      %746 = vmatpush1.bf16.msra.mxu0 %v636
      %747 = vmatprep.subr.bf16.mxu0 0
      %748 = vmatpush1.bf16.msra.mxu0 %v635
      %749 = vmatprep.subr.bf16.mxu0 0
      %750 = vmatpush1.bf16.msra.mxu0 %v634
      %751 = vmatprep.subr.bf16.mxu0 0
      %752 = vmatpush1.bf16.msra.mxu0 %v633
      %753 = vmatprep.subr.bf16.mxu0 0
      %754 = vmatpush1.bf16.msra.mxu0 %v632
      %755 = vmatprep.subr.bf16.mxu0 0
      %756 = vmatpush1.bf16.msra.mxu0 %v631
      %757 = vmatprep.subr.bf16.mxu0 0
      %758 = vmatpush1.bf16.msra.mxu0 %v630
      %759 = vmatprep.subr.bf16.mxu0 0
      %760 = vmatpush2.bf16.msra.mxu0 %v645
      %761 = vmatprep.subr.bf16.mxu0 0
      %762 = vmatpush2.bf16.msra.mxu0 %v644
      %763 = vmatprep.subr.bf16.mxu0 0
      %764 = vmatpush2.bf16.msra.mxu0 %v643
      %765 = vmatprep.subr.bf16.mxu0 0
      %766 = vmatpush2.bf16.msra.mxu0 %v642
      %767 = vmatprep.subr.bf16.mxu0 0
      %768 = vmatpush2.bf16.msra.mxu0 %v641
      %769 = vmatprep.subr.bf16.mxu0 0
      %770 = vmatpush2.bf16.msra.mxu0 %v640
      %771 = vmatprep.subr.bf16.mxu0 0
      %772 = vmatpush2.bf16.msra.mxu0 %v639
      %773 = vmatprep.subr.bf16.mxu0 0
      %774 = vmatpush2.bf16.msra.mxu0 %v638
      %775 = vmatprep.mubr.bf16.mxu0 %v379
      %776 = vmatmul.mubr.bf16.gmra.mxu0 %v378
      %v777 = vpop.f32.mrf.mxu0
      %v778 = vadd.f32 0.0, %v777
      %v779 = vpop.f32.mrf.mxu0
      %v780 = vpop.f32.mrf.mxu0
      %v781 = vadd.f32 0.0, %v780
      %v782 = vpop.f32.mrf.mxu0
      %783 = vmatprep.mubr.bf16.mxu0 %v386
      %784 = vmatmul.mubr.bf16.gmra.mxu0 %v385
      %v785 = vpop.f32.mrf.mxu0
      %v786 = vadd.f32 0.0, %v785
      %v787 = vpop.f32.mrf.mxu0
      %v788 = vpop.f32.mrf.mxu0
      %v789 = vadd.f32 0.0, %v788
      %v790 = vpop.f32.mrf.mxu0
      %791 = vmatprep.mubr.bf16.mxu0 %v393
      %792 = vmatmul.mubr.bf16.gmra.mxu0 %v392
      %v793 = vpop.f32.mrf.mxu0
      %v794 = vadd.f32 0.0, %v793
      %v795 = vpop.f32.mrf.mxu0
      %v796 = vpop.f32.mrf.mxu0
      %v797 = vadd.f32 0.0, %v796
      %v798 = vpop.f32.mrf.mxu0
      %799 = vmatprep.mubr.bf16.mxu0 %v400
      %800 = vmatmul.mubr.bf16.gmra.mxu0 %v399
      %v801 = vpop.f32.mrf.mxu0
      %v802 = vadd.f32 0.0, %v801
      %v803 = vpop.f32.mrf.mxu0
      %v804 = vpop.f32.mrf.mxu0
      %v805 = vpop.f32.mrf.mxu0
      %806 = vdwg.mxu0
      %807 = vmatprep.subr.bf16.mxu0 0
      %808 = vmatpush1.bf16.msra.mxu0 %v653
      %809 = vmatprep.subr.bf16.mxu0 0
      %810 = vmatpush1.bf16.msra.mxu0 %v652
      %811 = vmatprep.subr.bf16.mxu0 0
      %812 = vmatpush1.bf16.msra.mxu0 %v651
      %813 = vmatprep.subr.bf16.mxu0 0
      %814 = vmatpush1.bf16.msra.mxu0 %v650
      %815 = vmatprep.subr.bf16.mxu0 0
      %816 = vmatpush1.bf16.msra.mxu0 %v649
      %817 = vmatprep.subr.bf16.mxu0 0
      %818 = vmatpush1.bf16.msra.mxu0 %v648
      %819 = vmatprep.subr.bf16.mxu0 0
      %820 = vmatpush1.bf16.msra.mxu0 %v647
      %821 = vmatprep.subr.bf16.mxu0 0
      %822 = vmatpush1.bf16.msra.mxu0 %v646
      %823 = vmatprep.subr.bf16.mxu0 0
      %824 = vmatpush2.bf16.msra.mxu0 %v661
      %825 = vmatprep.subr.bf16.mxu0 0
      %826 = vmatpush2.bf16.msra.mxu0 %v660
      %827 = vmatprep.subr.bf16.mxu0 0
      %828 = vmatpush2.bf16.msra.mxu0 %v659
      %829 = vmatprep.subr.bf16.mxu0 0
      %830 = vmatpush2.bf16.msra.mxu0 %v658
      %831 = vmatprep.subr.bf16.mxu0 0
      %832 = vmatpush2.bf16.msra.mxu0 %v657
      %833 = vmatprep.subr.bf16.mxu0 0
      %834 = vmatpush2.bf16.msra.mxu0 %v656
      %835 = vmatprep.subr.bf16.mxu0 0
      %836 = vmatpush2.bf16.msra.mxu0 %v655
      %837 = vmatprep.subr.bf16.mxu0 0
      %838 = vmatpush2.bf16.msra.mxu0 %v654
      %839 = vmatprep.mubr.bf16.mxu0 %v381
      %840 = vmatmul.mubr.bf16.gmra.mxu0 %v380
      %v841 = vpop.f32.mrf.mxu0
      %v842 = vadd.f32 %v778, %v841
      %v843 = vpop.f32.mrf.mxu0
      %v844 = vpop.f32.mrf.mxu0
      %v845 = vadd.f32 %v781, %v844
      %v846 = vpop.f32.mrf.mxu0
      %847 = vmatprep.mubr.bf16.mxu0 %v388
      %848 = vmatmul.mubr.bf16.gmra.mxu0 %v387
      %v849 = vpop.f32.mrf.mxu0
      %v850 = vadd.f32 %v786, %v849
      %v851 = vpop.f32.mrf.mxu0
      %v852 = vpop.f32.mrf.mxu0
      %v853 = vadd.f32 %v789, %v852
      %v854 = vpop.f32.mrf.mxu0
      %855 = vmatprep.mubr.bf16.mxu0 %v395
      %856 = vmatmul.mubr.bf16.gmra.mxu0 %v394
      %v857 = vpop.f32.mrf.mxu0
      %v858 = vadd.f32 %v794, %v857
      %v859 = vpop.f32.mrf.mxu0
      %v860 = vpop.f32.mrf.mxu0
      %v861 = vadd.f32 %v797, %v860
      %v862 = vpop.f32.mrf.mxu0
      %863 = vmatprep.mubr.bf16.mxu0 %v402
      %864 = vmatmul.mubr.bf16.gmra.mxu0 %v401
      %v865 = vpop.f32.mrf.mxu0
      %v866 = vadd.f32 %v802, %v865
      %v867 = vpop.f32.mrf.mxu0
      %v868 = vpop.f32.mrf.mxu0
      %v869 = vpop.f32.mrf.mxu0
      %870 = vdwg.mxu0
      %871 = vmatprep.subr.bf16.mxu0 0
      %872 = vmatpush1.bf16.msra.mxu0 %v669
      %873 = vmatprep.subr.bf16.mxu0 0
      %874 = vmatpush1.bf16.msra.mxu0 %v668
      %875 = vmatprep.subr.bf16.mxu0 0
      %876 = vmatpush1.bf16.msra.mxu0 %v667
      %877 = vmatprep.subr.bf16.mxu0 0
      %878 = vmatpush1.bf16.msra.mxu0 %v666
      %879 = vmatprep.subr.bf16.mxu0 0
      %880 = vmatpush1.bf16.msra.mxu0 %v665
      %881 = vmatprep.subr.bf16.mxu0 0
      %882 = vmatpush1.bf16.msra.mxu0 %v664
      %883 = vmatprep.subr.bf16.mxu0 0
      %884 = vmatpush1.bf16.msra.mxu0 %v663
      %885 = vmatprep.subr.bf16.mxu0 0
      %886 = vmatpush1.bf16.msra.mxu0 %v662
      %887 = vmatprep.subr.bf16.mxu0 0
      %888 = vmatpush2.bf16.msra.mxu0 %v677
      %889 = vmatprep.subr.bf16.mxu0 0
      %890 = vmatpush2.bf16.msra.mxu0 %v676
      %891 = vmatprep.subr.bf16.mxu0 0
      %892 = vmatpush2.bf16.msra.mxu0 %v675
      %893 = vmatprep.subr.bf16.mxu0 0
      %894 = vmatpush2.bf16.msra.mxu0 %v674
      %895 = vmatprep.subr.bf16.mxu0 0
      %896 = vmatpush2.bf16.msra.mxu0 %v673
      %897 = vmatprep.subr.bf16.mxu0 0
      %898 = vmatpush2.bf16.msra.mxu0 %v672
      %899 = vmatprep.subr.bf16.mxu0 0
      %900 = vmatpush2.bf16.msra.mxu0 %v671
      %901 = vmatprep.subr.bf16.mxu0 0
      %902 = vmatpush2.bf16.msra.mxu0 %v670
      %903 = vmatprep.mubr.bf16.mxu0 %v383
      %904 = vmatmul.mubr.bf16.gmra.mxu0 %v382
      %v905 = vpop.f32.mrf.mxu0
      %v906 = vadd.f32 %v842, %v905
      %v907 = vpop.f32.mrf.mxu0
      %v908 = vpop.f32.mrf.mxu0
      %v909 = vadd.f32 %v845, %v908
      %v910 = vpop.f32.mrf.mxu0
      %911 = vmatprep.mubr.bf16.mxu0 %v390
      %912 = vmatmul.mubr.bf16.gmra.mxu0 %v389
      %v913 = vpop.f32.mrf.mxu0
      %v914 = vadd.f32 %v850, %v913
      %v915 = vpop.f32.mrf.mxu0
      %v916 = vpop.f32.mrf.mxu0
      %v917 = vadd.f32 %v853, %v916
      %v918 = vpop.f32.mrf.mxu0
      %919 = vmatprep.mubr.bf16.mxu0 %v397
      %920 = vmatmul.mubr.bf16.gmra.mxu0 %v396
      %v921 = vpop.f32.mrf.mxu0
      %v922 = vadd.f32 %v858, %v921
      %v923 = vpop.f32.mrf.mxu0
      %v924 = vpop.f32.mrf.mxu0
      %v925 = vadd.f32 %v861, %v924
      %v926 = vpop.f32.mrf.mxu0
      %927 = vmatprep.mubr.bf16.mxu0 %v404
      %928 = vmatmul.mubr.bf16.gmra.mxu0 %v403
      %v929 = vpop.f32.mrf.mxu0
      %v930 = vadd.f32 %v866, %v929
      %v931 = vpop.f32.mrf.mxu0
      %v932 = vpop.f32.mrf.mxu0
      %v933 = vpop.f32.mrf.mxu0
      %934 = vdwg.mxu0
      %935 = vmatprep.subr.bf16.mxu0 0
      %936 = vmatpush1.bf16.msra.mxu0 0
      %937 = vmatprep.subr.bf16.mxu0 0
      %938 = vmatpush1.bf16.msra.mxu0 0
      %939 = vmatprep.subr.bf16.mxu0 0
      %940 = vmatpush1.bf16.msra.mxu0 0
      %941 = vmatprep.subr.bf16.mxu0 0
      %942 = vmatpush1.bf16.msra.mxu0 0
      %943 = vmatprep.subr.bf16.mxu0 0
      %944 = vmatpush1.bf16.msra.mxu0 0
      %945 = vmatprep.subr.bf16.mxu0 0
      %946 = vmatpush1.bf16.msra.mxu0 0
      %947 = vmatprep.subr.bf16.mxu0 0
      %948 = vmatpush1.bf16.msra.mxu0 %v679
      %949 = vmatprep.subr.bf16.mxu0 0
      %950 = vmatpush1.bf16.msra.mxu0 %v678
      %951 = vmatprep.subr.bf16.mxu0 0
      %952 = vmatpush2.bf16.msra.mxu0 0
      %953 = vmatprep.subr.bf16.mxu0 0
      %954 = vmatpush2.bf16.msra.mxu0 0
      %955 = vmatprep.subr.bf16.mxu0 0
      %956 = vmatpush2.bf16.msra.mxu0 0
      %957 = vmatprep.subr.bf16.mxu0 0
      %958 = vmatpush2.bf16.msra.mxu0 0
      %959 = vmatprep.subr.bf16.mxu0 0
      %960 = vmatpush2.bf16.msra.mxu0 0
      %961 = vmatprep.subr.bf16.mxu0 0
      %962 = vmatpush2.bf16.msra.mxu0 0
      %963 = vmatprep.subr.bf16.mxu0 0
      %964 = vmatpush2.bf16.msra.mxu0 0
      %965 = vmatprep.subr.bf16.mxu0 0
      %966 = vmatpush2.bf16.msra.mxu0 0
      %967 = vmatprep.mubr.bf16.mxu0 0
      %968 = vmatmul.mubr.bf16.gmra.mxu0 %v732
      %v969 = vpop.f32.mrf.mxu0
      %v970 = vadd.f32 %v906, %v969
      %v971 = vpop.f32.mrf.mxu0
      %v972 = vpop.f32.mrf.mxu0
      %v973 = vadd.f32 %v909, %v972
      %v974 = vpop.f32.mrf.mxu0
      %975 = vmatprep.mubr.bf16.mxu0 0
      %976 = vmatmul.mubr.bf16.gmra.mxu0 %v735
      %v977 = vpop.f32.mrf.mxu0
      %v978 = vadd.f32 %v914, %v977
      %v979 = vpop.f32.mrf.mxu0
      %v980 = vpop.f32.mrf.mxu0
      %v981 = vadd.f32 %v917, %v980
      %v982 = vpop.f32.mrf.mxu0
      %983 = vmatprep.mubr.bf16.mxu0 0
      %984 = vmatmul.mubr.bf16.gmra.mxu0 %v738
      %v985 = vpop.f32.mrf.mxu0
      %v986 = vadd.f32 %v922, %v985
      %v987 = vpop.f32.mrf.mxu0
      %v988 = vpop.f32.mrf.mxu0
      %v989 = vadd.f32 %v925, %v988
      %v990 = vpop.f32.mrf.mxu0
      %991 = vmatprep.mubr.bf16.mxu0 0
      %992 = vmatmul.mubr.bf16.gmra.mxu0 %v741
      %v993 = vpop.f32.mrf.mxu0
      %v994 = vadd.f32 %v930, %v993
      %v995 = vpop.f32.mrf.mxu0
      %v996 = vpop.f32.mrf.mxu0
      %v997 = vpop.f32.mrf.mxu0
      %998 = vdwg.mxu0
      %s999 = scalar_lea.vmem %s165, 196
      %v1000 = vld [vmem:[%s999] sm:$0xff]
      %v1001 = vld [vmem:[%s999 + $0x8] sm:$0xff]
      %v1002 = vld [vmem:[%s999 + $0x10] sm:$0xff]
      %v1003 = vld [vmem:[%s999 + $0x18] sm:$0xf]
      %v1004 = vld [vmem:[%s999 + $0x1c] sm:$0xff]
      %v1005 = vld [vmem:[%s999 + $0x24] sm:$0xff]
      %v1006 = vld [vmem:[%s999 + $0x2c] sm:$0xff]
      %v1007 = vld [vmem:[%s999 + $0x34] sm:$0xf]
      %v1008 = vld [vmem:[%s999 + $0x38] sm:$0xff]
      %v1009 = vld [vmem:[%s999 + $0x40] sm:$0xff]
      %v1010 = vld [vmem:[%s999 + $0x48] sm:$0xff]
      %v1011 = vld [vmem:[%s999 + $0x50] sm:$0xf]
      %v1012 = vld [vmem:[%s999 + $0x54] sm:$0xff]
      %v1013 = vld [vmem:[%s999 + $0x5c] sm:$0xff]
      %v1014 = vld [vmem:[%s999 + $0x64] sm:$0xff]
      %v1015 = vld [vmem:[%s999 + $0x6c] sm:$0xf]
      %v1016 = vld [vmem:[%s999 + $0x70] sm:$0xff]
      %v1017 = vld [vmem:[%s999 + $0x78] sm:$0xff]
      %v1018 = vld [vmem:[%s999 + $0x80] sm:$0xff]
      %v1019 = vld [vmem:[%s999 + $0x88] sm:$0xf]
      %v1020 = vld [vmem:[%s999 + $0x8c] sm:$0xff]
      %v1021 = vld [vmem:[%s999 + $0x94] sm:$0xff]
      %v1022 = vld [vmem:[%s999 + $0x9c] sm:$0xff]
      %v1023 = vld [vmem:[%s999 + $0xa4] sm:$0xf]
      %v1024 = vld [vmem:[%s999 + $0xa8] sm:$0x11]
      %v1025 = vld [vmem:[%s999 + $0xb0] sm:$0x11]
      %v1026 = vld [vmem:[%s999 + $0xb8] sm:$0x11]
      %v1027 = vld [vmem:[%s999 + $0xc0] sm:$0x1]
      %v1056 = vunpack.c.l.b16 %v1000
      %v1057 = vunpack.c.h.b16 %v1000
      %v1058 = vunpack.c.l.b16 %v1001
      %v1059 = vunpack.c.h.b16 %v1001
      %v1060 = vunpack.c.l.b16 %v1002
      %v1061 = vunpack.c.h.b16 %v1002
      %v1062 = vunpack.c.l.b16 %v1003
      %v1063 = vunpack.c.l.b16 %v1004
      %v1064 = vunpack.c.h.b16 %v1004
      %v1065 = vunpack.c.l.b16 %v1005
      %v1066 = vunpack.c.h.b16 %v1005
      %v1067 = vunpack.c.l.b16 %v1006
      %v1068 = vunpack.c.h.b16 %v1006
      %v1069 = vunpack.c.l.b16 %v1007
      %v1070 = vunpack.c.l.b16 %v1008
      %v1071 = vunpack.c.h.b16 %v1008
      %v1072 = vunpack.c.l.b16 %v1009
      %v1073 = vunpack.c.h.b16 %v1009
      %v1074 = vunpack.c.l.b16 %v1010
      %v1075 = vunpack.c.h.b16 %v1010
      %v1076 = vunpack.c.l.b16 %v1011
      %v1077 = vunpack.c.l.b16 %v1012
      %v1078 = vunpack.c.h.b16 %v1012
      %v1079 = vunpack.c.l.b16 %v1013
      %v1080 = vunpack.c.h.b16 %v1013
      %v1081 = vunpack.c.l.b16 %v1014
      %v1082 = vunpack.c.h.b16 %v1014
      %v1083 = vunpack.c.l.b16 %v1015
      %v1084 = vunpack.c.l.b16 %v1016
      %v1085 = vunpack.c.h.b16 %v1016
      %v1086 = vunpack.c.l.b16 %v1017
      %v1087 = vunpack.c.h.b16 %v1017
      %v1088 = vunpack.c.l.b16 %v1018
      %v1089 = vunpack.c.h.b16 %v1018
      %v1090 = vunpack.c.l.b16 %v1019
      %v1091 = vunpack.c.l.b16 %v1020
      %v1092 = vunpack.c.h.b16 %v1020
      %v1093 = vunpack.c.l.b16 %v1021
      %v1094 = vunpack.c.h.b16 %v1021
      %v1095 = vunpack.c.l.b16 %v1022
      %v1096 = vunpack.c.h.b16 %v1022
      %v1097 = vunpack.c.l.b16 %v1023
      %v1098 = vunpack.c.l.b16 %v1024
      %v1099 = vunpack.c.h.b16 %v1024
      %v1100 = vunpack.c.l.b16 %v1025
      %v1101 = vunpack.c.h.b16 %v1025
      %v1102 = vunpack.c.l.b16 %v1026
      %v1103 = vunpack.c.h.b16 %v1026
      %v1104 = vunpack.c.l.b16 %v1027
      %v1105 = vpack.c.b16 %v1063, %v1056
      %v1106 = vpack.c.b16 %v1064, %v1057
      %v1107 = vpack.c.b16 %v1065, %v1058
      %v1108 = vpack.c.b16 %v1066, %v1059
      %v1109 = vpack.c.b16 %v1067, %v1060
      %v1110 = vpack.c.b16 %v1068, %v1061
      %v1111 = vpack.c.b16 %v1069, %v1062
      %v1112 = vpack.c.b16 %v1077, %v1070
      %v1113 = vpack.c.b16 %v1078, %v1071
      %v1114 = vpack.c.b16 %v1079, %v1072
      %v1115 = vpack.c.b16 %v1080, %v1073
      %v1116 = vpack.c.b16 %v1081, %v1074
      %v1117 = vpack.c.b16 %v1082, %v1075
      %v1118 = vpack.c.b16 %v1083, %v1076
      %v1119 = vpack.c.b16 %v1091, %v1084
      %v1120 = vpack.c.b16 %v1092, %v1085
      %v1121 = vpack.c.b16 %v1093, %v1086
      %v1122 = vpack.c.b16 %v1094, %v1087
      %v1123 = vpack.c.b16 %v1095, %v1088
      %v1124 = vpack.c.b16 %v1096, %v1089
      %v1125 = vpack.c.b16 %v1097, %v1090
      %v1126 = vpack.c.b16 %v1098, %v1098
      %v1127 = vpack.c.b16 %v1099, %v1099
      %v1128 = vpack.c.b16 %v1100, %v1100
      %v1129 = vpack.c.b16 %v1101, %v1101
      %v1130 = vpack.c.b16 %v1102, %v1102
      %v1131 = vpack.c.b16 %v1103, %v1103
      %v1132 = vpack.c.b16 %v1104, %v1104
      %v1158 = vsel %vm730, %v1111, 0
      %v1161 = vsel %vm730, %v1118, 0
      %v1164 = vsel %vm730, %v1125, 0
      %v1167 = vsel %vm730, %v1132, 0
      %1169 = vmatprep.subr.bf16.mxu0 0
      %1170 = vmatpush1.bf16.msra.mxu0 %v637
      %1171 = vmatprep.subr.bf16.mxu0 0
      %1172 = vmatpush1.bf16.msra.mxu0 %v636
      %1173 = vmatprep.subr.bf16.mxu0 0
      %1174 = vmatpush1.bf16.msra.mxu0 %v635
      %1175 = vmatprep.subr.bf16.mxu0 0
      %1176 = vmatpush1.bf16.msra.mxu0 %v634
      %1177 = vmatprep.subr.bf16.mxu0 0
      %1178 = vmatpush1.bf16.msra.mxu0 %v633
      %1179 = vmatprep.subr.bf16.mxu0 0
      %1180 = vmatpush1.bf16.msra.mxu0 %v632
      %1181 = vmatprep.subr.bf16.mxu0 0
      %1182 = vmatpush1.bf16.msra.mxu0 %v631
      %1183 = vmatprep.subr.bf16.mxu0 0
      %1184 = vmatpush1.bf16.msra.mxu0 %v630
      %1185 = vmatprep.subr.bf16.mxu0 0
      %1186 = vmatpush2.bf16.msra.mxu0 %v645
      %1187 = vmatprep.subr.bf16.mxu0 0
      %1188 = vmatpush2.bf16.msra.mxu0 %v644
      %1189 = vmatprep.subr.bf16.mxu0 0
      %1190 = vmatpush2.bf16.msra.mxu0 %v643
      %1191 = vmatprep.subr.bf16.mxu0 0
      %1192 = vmatpush2.bf16.msra.mxu0 %v642
      %1193 = vmatprep.subr.bf16.mxu0 0
      %1194 = vmatpush2.bf16.msra.mxu0 %v641
      %1195 = vmatprep.subr.bf16.mxu0 0
      %1196 = vmatpush2.bf16.msra.mxu0 %v640
      %1197 = vmatprep.subr.bf16.mxu0 0
      %1198 = vmatpush2.bf16.msra.mxu0 %v639
      %1199 = vmatprep.subr.bf16.mxu0 0
      %1200 = vmatpush2.bf16.msra.mxu0 %v638
      %1201 = vmatprep.mubr.bf16.mxu0 %v1106
      %1202 = vmatmul.mubr.bf16.gmra.mxu0 %v1105
      %v1203 = vpop.f32.mrf.mxu0
      %v1204 = vadd.f32 0.0, %v1203
      %v1205 = vpop.f32.mrf.mxu0
      %v1206 = vpop.f32.mrf.mxu0
      %v1207 = vadd.f32 0.0, %v1206
      %v1208 = vpop.f32.mrf.mxu0
      %1209 = vmatprep.mubr.bf16.mxu0 %v1113
      %1210 = vmatmul.mubr.bf16.gmra.mxu0 %v1112
      %v1211 = vpop.f32.mrf.mxu0
      %v1212 = vadd.f32 0.0, %v1211
      %v1213 = vpop.f32.mrf.mxu0
      %v1214 = vpop.f32.mrf.mxu0
      %v1215 = vadd.f32 0.0, %v1214
      %v1216 = vpop.f32.mrf.mxu0
      %1217 = vmatprep.mubr.bf16.mxu0 %v1120
      %1218 = vmatmul.mubr.bf16.gmra.mxu0 %v1119
      %v1219 = vpop.f32.mrf.mxu0
      %v1220 = vadd.f32 0.0, %v1219
      %v1221 = vpop.f32.mrf.mxu0
      %v1222 = vpop.f32.mrf.mxu0
      %v1223 = vadd.f32 0.0, %v1222
      %v1224 = vpop.f32.mrf.mxu0
      %1225 = vmatprep.mubr.bf16.mxu0 %v1127
      %1226 = vmatmul.mubr.bf16.gmra.mxu0 %v1126
      %v1227 = vpop.f32.mrf.mxu0
      %v1228 = vadd.f32 0.0, %v1227
      %v1229 = vpop.f32.mrf.mxu0
      %v1230 = vpop.f32.mrf.mxu0
      %v1231 = vpop.f32.mrf.mxu0
      %1232 = vdwg.mxu0
      %1233 = vmatprep.subr.bf16.mxu0 0
      %1234 = vmatpush1.bf16.msra.mxu0 %v653
      %1235 = vmatprep.subr.bf16.mxu0 0
      %1236 = vmatpush1.bf16.msra.mxu0 %v652
      %1237 = vmatprep.subr.bf16.mxu0 0
      %1238 = vmatpush1.bf16.msra.mxu0 %v651
      %1239 = vmatprep.subr.bf16.mxu0 0
      %1240 = vmatpush1.bf16.msra.mxu0 %v650
      %1241 = vmatprep.subr.bf16.mxu0 0
      %1242 = vmatpush1.bf16.msra.mxu0 %v649
      %1243 = vmatprep.subr.bf16.mxu0 0
      %1244 = vmatpush1.bf16.msra.mxu0 %v648
      %1245 = vmatprep.subr.bf16.mxu0 0
      %1246 = vmatpush1.bf16.msra.mxu0 %v647
      %1247 = vmatprep.subr.bf16.mxu0 0
      %1248 = vmatpush1.bf16.msra.mxu0 %v646
      %1249 = vmatprep.subr.bf16.mxu0 0
      %1250 = vmatpush2.bf16.msra.mxu0 %v661
      %1251 = vmatprep.subr.bf16.mxu0 0
      %1252 = vmatpush2.bf16.msra.mxu0 %v660
      %1253 = vmatprep.subr.bf16.mxu0 0
      %1254 = vmatpush2.bf16.msra.mxu0 %v659
      %1255 = vmatprep.subr.bf16.mxu0 0
      %1256 = vmatpush2.bf16.msra.mxu0 %v658
      %1257 = vmatprep.subr.bf16.mxu0 0
      %1258 = vmatpush2.bf16.msra.mxu0 %v657
      %1259 = vmatprep.subr.bf16.mxu0 0
      %1260 = vmatpush2.bf16.msra.mxu0 %v656
      %1261 = vmatprep.subr.bf16.mxu0 0
      %1262 = vmatpush2.bf16.msra.mxu0 %v655
      %1263 = vmatprep.subr.bf16.mxu0 0
      %1264 = vmatpush2.bf16.msra.mxu0 %v654
      %1265 = vmatprep.mubr.bf16.mxu0 %v1108
      %1266 = vmatmul.mubr.bf16.gmra.mxu0 %v1107
      %v1267 = vpop.f32.mrf.mxu0
      %v1268 = vadd.f32 %v1204, %v1267
      %v1269 = vpop.f32.mrf.mxu0
      %v1270 = vpop.f32.mrf.mxu0
      %v1271 = vadd.f32 %v1207, %v1270
      %v1272 = vpop.f32.mrf.mxu0
      %1273 = vmatprep.mubr.bf16.mxu0 %v1115
      %1274 = vmatmul.mubr.bf16.gmra.mxu0 %v1114
      %v1275 = vpop.f32.mrf.mxu0
      %v1276 = vadd.f32 %v1212, %v1275
      %v1277 = vpop.f32.mrf.mxu0
      %v1278 = vpop.f32.mrf.mxu0
      %v1279 = vadd.f32 %v1215, %v1278
      %v1280 = vpop.f32.mrf.mxu0
      %1281 = vmatprep.mubr.bf16.mxu0 %v1122
      %1282 = vmatmul.mubr.bf16.gmra.mxu0 %v1121
      %v1283 = vpop.f32.mrf.mxu0
      %v1284 = vadd.f32 %v1220, %v1283
      %v1285 = vpop.f32.mrf.mxu0
      %v1286 = vpop.f32.mrf.mxu0
      %v1287 = vadd.f32 %v1223, %v1286
      %v1288 = vpop.f32.mrf.mxu0
      %1289 = vmatprep.mubr.bf16.mxu0 %v1129
      %1290 = vmatmul.mubr.bf16.gmra.mxu0 %v1128
      %v1291 = vpop.f32.mrf.mxu0
      %v1292 = vadd.f32 %v1228, %v1291
      %v1293 = vpop.f32.mrf.mxu0
      %v1294 = vpop.f32.mrf.mxu0
      %v1295 = vpop.f32.mrf.mxu0
      %1296 = vdwg.mxu0
      %1297 = vmatprep.subr.bf16.mxu0 0
      %1298 = vmatpush1.bf16.msra.mxu0 %v669
      %1299 = vmatprep.subr.bf16.mxu0 0
      %1300 = vmatpush1.bf16.msra.mxu0 %v668
      %1301 = vmatprep.subr.bf16.mxu0 0
      %1302 = vmatpush1.bf16.msra.mxu0 %v667
      %1303 = vmatprep.subr.bf16.mxu0 0
      %1304 = vmatpush1.bf16.msra.mxu0 %v666
      %1305 = vmatprep.subr.bf16.mxu0 0
      %1306 = vmatpush1.bf16.msra.mxu0 %v665
      %1307 = vmatprep.subr.bf16.mxu0 0
      %1308 = vmatpush1.bf16.msra.mxu0 %v664
      %1309 = vmatprep.subr.bf16.mxu0 0
      %1310 = vmatpush1.bf16.msra.mxu0 %v663
      %1311 = vmatprep.subr.bf16.mxu0 0
      %1312 = vmatpush1.bf16.msra.mxu0 %v662
      %1313 = vmatprep.subr.bf16.mxu0 0
      %1314 = vmatpush2.bf16.msra.mxu0 %v677
      %1315 = vmatprep.subr.bf16.mxu0 0
      %1316 = vmatpush2.bf16.msra.mxu0 %v676
      %1317 = vmatprep.subr.bf16.mxu0 0
      %1318 = vmatpush2.bf16.msra.mxu0 %v675
      %1319 = vmatprep.subr.bf16.mxu0 0
      %1320 = vmatpush2.bf16.msra.mxu0 %v674
      %1321 = vmatprep.subr.bf16.mxu0 0
      %1322 = vmatpush2.bf16.msra.mxu0 %v673
      %1323 = vmatprep.subr.bf16.mxu0 0
      %1324 = vmatpush2.bf16.msra.mxu0 %v672
      %1325 = vmatprep.subr.bf16.mxu0 0
      %1326 = vmatpush2.bf16.msra.mxu0 %v671
      %1327 = vmatprep.subr.bf16.mxu0 0
      %1328 = vmatpush2.bf16.msra.mxu0 %v670
      %1329 = vmatprep.mubr.bf16.mxu0 %v1110
      %1330 = vmatmul.mubr.bf16.gmra.mxu0 %v1109
      %v1331 = vpop.f32.mrf.mxu0
      %v1332 = vadd.f32 %v1268, %v1331
      %v1333 = vpop.f32.mrf.mxu0
      %v1334 = vpop.f32.mrf.mxu0
      %v1335 = vadd.f32 %v1271, %v1334
      %v1336 = vpop.f32.mrf.mxu0
      %1337 = vmatprep.mubr.bf16.mxu0 %v1117
      %1338 = vmatmul.mubr.bf16.gmra.mxu0 %v1116
      %v1339 = vpop.f32.mrf.mxu0
      %v1340 = vadd.f32 %v1276, %v1339
      %v1341 = vpop.f32.mrf.mxu0
      %v1342 = vpop.f32.mrf.mxu0
      %v1343 = vadd.f32 %v1279, %v1342
      %v1344 = vpop.f32.mrf.mxu0
      %1345 = vmatprep.mubr.bf16.mxu0 %v1124
      %1346 = vmatmul.mubr.bf16.gmra.mxu0 %v1123
      %v1347 = vpop.f32.mrf.mxu0
      %v1348 = vadd.f32 %v1284, %v1347
      %v1349 = vpop.f32.mrf.mxu0
      %v1350 = vpop.f32.mrf.mxu0
      %v1351 = vadd.f32 %v1287, %v1350
      %v1352 = vpop.f32.mrf.mxu0
      %1353 = vmatprep.mubr.bf16.mxu0 %v1131
      %1354 = vmatmul.mubr.bf16.gmra.mxu0 %v1130
      %v1355 = vpop.f32.mrf.mxu0
      %v1356 = vadd.f32 %v1292, %v1355
      %v1357 = vpop.f32.mrf.mxu0
      %v1358 = vpop.f32.mrf.mxu0
      %v1359 = vpop.f32.mrf.mxu0
      %1360 = vdwg.mxu0
      %1361 = vmatprep.subr.bf16.mxu0 0
      %1362 = vmatpush1.bf16.msra.mxu0 0
      %1363 = vmatprep.subr.bf16.mxu0 0
      %1364 = vmatpush1.bf16.msra.mxu0 0
      %1365 = vmatprep.subr.bf16.mxu0 0
      %1366 = vmatpush1.bf16.msra.mxu0 0
      %1367 = vmatprep.subr.bf16.mxu0 0
      %1368 = vmatpush1.bf16.msra.mxu0 0
      %1369 = vmatprep.subr.bf16.mxu0 0
      %1370 = vmatpush1.bf16.msra.mxu0 0
      %1371 = vmatprep.subr.bf16.mxu0 0
      %1372 = vmatpush1.bf16.msra.mxu0 0
      %1373 = vmatprep.subr.bf16.mxu0 0
      %1374 = vmatpush1.bf16.msra.mxu0 %v679
      %1375 = vmatprep.subr.bf16.mxu0 0
      %1376 = vmatpush1.bf16.msra.mxu0 %v678
      %1377 = vmatprep.subr.bf16.mxu0 0
      %1378 = vmatpush2.bf16.msra.mxu0 0
      %1379 = vmatprep.subr.bf16.mxu0 0
      %1380 = vmatpush2.bf16.msra.mxu0 0
      %1381 = vmatprep.subr.bf16.mxu0 0
      %1382 = vmatpush2.bf16.msra.mxu0 0
      %1383 = vmatprep.subr.bf16.mxu0 0
      %1384 = vmatpush2.bf16.msra.mxu0 0
      %1385 = vmatprep.subr.bf16.mxu0 0
      %1386 = vmatpush2.bf16.msra.mxu0 0
      %1387 = vmatprep.subr.bf16.mxu0 0
      %1388 = vmatpush2.bf16.msra.mxu0 0
      %1389 = vmatprep.subr.bf16.mxu0 0
      %1390 = vmatpush2.bf16.msra.mxu0 0
      %1391 = vmatprep.subr.bf16.mxu0 0
      %1392 = vmatpush2.bf16.msra.mxu0 0
      %1393 = vmatprep.mubr.bf16.mxu0 0
      %1394 = vmatmul.mubr.bf16.gmra.mxu0 %v1158
      %v1395 = vpop.f32.mrf.mxu0
      %v1396 = vadd.f32 %v1332, %v1395
      %v1397 = vpop.f32.mrf.mxu0
      %v1398 = vpop.f32.mrf.mxu0
      %v1399 = vadd.f32 %v1335, %v1398
      %v1400 = vpop.f32.mrf.mxu0
      %1401 = vmatprep.mubr.bf16.mxu0 0
      %1402 = vmatmul.mubr.bf16.gmra.mxu0 %v1161
      %v1403 = vpop.f32.mrf.mxu0
      %v1404 = vadd.f32 %v1340, %v1403
      %v1405 = vpop.f32.mrf.mxu0
      %v1406 = vpop.f32.mrf.mxu0
      %v1407 = vadd.f32 %v1343, %v1406
      %v1408 = vpop.f32.mrf.mxu0
      %1409 = vmatprep.mubr.bf16.mxu0 0
      %1410 = vmatmul.mubr.bf16.gmra.mxu0 %v1164
      %v1411 = vpop.f32.mrf.mxu0
      %v1412 = vadd.f32 %v1348, %v1411
      %v1413 = vpop.f32.mrf.mxu0
      %v1414 = vpop.f32.mrf.mxu0
      %v1415 = vadd.f32 %v1351, %v1414
      %v1416 = vpop.f32.mrf.mxu0
      %1417 = vmatprep.mubr.bf16.mxu0 0
      %1418 = vmatmul.mubr.bf16.gmra.mxu0 %v1167
      %v1419 = vpop.f32.mrf.mxu0
      %v1420 = vadd.f32 %v1356, %v1419
      %v1421 = vpop.f32.mrf.mxu0
      %v1422 = vpop.f32.mrf.mxu0
      %v1423 = vpop.f32.mrf.mxu0
      %1424 = vdwg.mxu0
      %v1425 = vmax.f32 %v970, %v1396
      %v1426 = vmax.f32 %v973, %v1399
      %v1427 = vmax.f32 %v978, %v1404
      %v1428 = vmax.f32 %v981, %v1407
      %v1429 = vmax.f32 %v986, %v1412
      %v1430 = vmax.f32 %v989, %v1415
      %v1431 = vmax.f32 %v994, %v1420
      %s1432 = scalar_lea.vmem %s165, 392
      %v1433 = vld [vmem:[%s1432] sm:$0xff]
      %v1434 = vld [vmem:[%s1432 + $0x8] sm:$0xff]
      %v1435 = vld [vmem:[%s1432 + $0x10] sm:$0xff]
      %v1436 = vld [vmem:[%s1432 + $0x18] sm:$0xf]
      %v1437 = vld [vmem:[%s1432 + $0x1c] sm:$0xff]
      %v1438 = vld [vmem:[%s1432 + $0x24] sm:$0xff]
      %v1439 = vld [vmem:[%s1432 + $0x2c] sm:$0xff]
      %v1440 = vld [vmem:[%s1432 + $0x34] sm:$0xf]
      %v1441 = vld [vmem:[%s1432 + $0x38] sm:$0xff]
      %v1442 = vld [vmem:[%s1432 + $0x40] sm:$0xff]
      %v1443 = vld [vmem:[%s1432 + $0x48] sm:$0xff]
      %v1444 = vld [vmem:[%s1432 + $0x50] sm:$0xf]
      %v1445 = vld [vmem:[%s1432 + $0x54] sm:$0xff]
      %v1446 = vld [vmem:[%s1432 + $0x5c] sm:$0xff]
      %v1447 = vld [vmem:[%s1432 + $0x64] sm:$0xff]
      %v1448 = vld [vmem:[%s1432 + $0x6c] sm:$0xf]
      %v1449 = vld [vmem:[%s1432 + $0x70] sm:$0xff]
      %v1450 = vld [vmem:[%s1432 + $0x78] sm:$0xff]
      %v1451 = vld [vmem:[%s1432 + $0x80] sm:$0xff]
      %v1452 = vld [vmem:[%s1432 + $0x88] sm:$0xf]
      %v1453 = vld [vmem:[%s1432 + $0x8c] sm:$0xff]
      %v1454 = vld [vmem:[%s1432 + $0x94] sm:$0xff]
      %v1455 = vld [vmem:[%s1432 + $0x9c] sm:$0xff]
      %v1456 = vld [vmem:[%s1432 + $0xa4] sm:$0xf]
      %v1457 = vld [vmem:[%s1432 + $0xa8] sm:$0x11]
      %v1458 = vld [vmem:[%s1432 + $0xb0] sm:$0x11]
      %v1459 = vld [vmem:[%s1432 + $0xb8] sm:$0x11]
      %v1460 = vld [vmem:[%s1432 + $0xc0] sm:$0x1]
      %v1489 = vunpack.c.l.b16 %v1433
      %v1490 = vunpack.c.h.b16 %v1433
      %v1491 = vunpack.c.l.b16 %v1434
      %v1492 = vunpack.c.h.b16 %v1434
      %v1493 = vunpack.c.l.b16 %v1435
      %v1494 = vunpack.c.h.b16 %v1435
      %v1495 = vunpack.c.l.b16 %v1436
      %v1496 = vunpack.c.l.b16 %v1437
      %v1497 = vunpack.c.h.b16 %v1437
      %v1498 = vunpack.c.l.b16 %v1438
      %v1499 = vunpack.c.h.b16 %v1438
      %v1500 = vunpack.c.l.b16 %v1439
      %v1501 = vunpack.c.h.b16 %v1439
      %v1502 = vunpack.c.l.b16 %v1440
      %v1503 = vunpack.c.l.b16 %v1441
      %v1504 = vunpack.c.h.b16 %v1441
      %v1505 = vunpack.c.l.b16 %v1442
      %v1506 = vunpack.c.h.b16 %v1442
      %v1507 = vunpack.c.l.b16 %v1443
      %v1508 = vunpack.c.h.b16 %v1443
      %v1509 = vunpack.c.l.b16 %v1444
      %v1510 = vunpack.c.l.b16 %v1445
      %v1511 = vunpack.c.h.b16 %v1445
      %v1512 = vunpack.c.l.b16 %v1446
      %v1513 = vunpack.c.h.b16 %v1446
      %v1514 = vunpack.c.l.b16 %v1447
      %v1515 = vunpack.c.h.b16 %v1447
      %v1516 = vunpack.c.l.b16 %v1448
      %v1517 = vunpack.c.l.b16 %v1449
      %v1518 = vunpack.c.h.b16 %v1449
      %v1519 = vunpack.c.l.b16 %v1450
      %v1520 = vunpack.c.h.b16 %v1450
      %v1521 = vunpack.c.l.b16 %v1451
      %v1522 = vunpack.c.h.b16 %v1451
      %v1523 = vunpack.c.l.b16 %v1452
      %v1524 = vunpack.c.l.b16 %v1453
      %v1525 = vunpack.c.h.b16 %v1453
      %v1526 = vunpack.c.l.b16 %v1454
      %v1527 = vunpack.c.h.b16 %v1454
      %v1528 = vunpack.c.l.b16 %v1455
      %v1529 = vunpack.c.h.b16 %v1455
      %v1530 = vunpack.c.l.b16 %v1456
      %v1531 = vunpack.c.l.b16 %v1457
      %v1532 = vunpack.c.h.b16 %v1457
      %v1533 = vunpack.c.l.b16 %v1458
      %v1534 = vunpack.c.h.b16 %v1458
      %v1535 = vunpack.c.l.b16 %v1459
      %v1536 = vunpack.c.h.b16 %v1459
      %v1537 = vunpack.c.l.b16 %v1460
      %v1538 = vpack.c.b16 %v1496, %v1489
      %v1539 = vpack.c.b16 %v1497, %v1490
      %v1540 = vpack.c.b16 %v1498, %v1491
      %v1541 = vpack.c.b16 %v1499, %v1492
      %v1542 = vpack.c.b16 %v1500, %v1493
      %v1543 = vpack.c.b16 %v1501, %v1494
      %v1544 = vpack.c.b16 %v1502, %v1495
      %v1545 = vpack.c.b16 %v1510, %v1503
      %v1546 = vpack.c.b16 %v1511, %v1504
      %v1547 = vpack.c.b16 %v1512, %v1505
      %v1548 = vpack.c.b16 %v1513, %v1506
      %v1549 = vpack.c.b16 %v1514, %v1507
      %v1550 = vpack.c.b16 %v1515, %v1508
      %v1551 = vpack.c.b16 %v1516, %v1509
      %v1552 = vpack.c.b16 %v1524, %v1517
      %v1553 = vpack.c.b16 %v1525, %v1518
      %v1554 = vpack.c.b16 %v1526, %v1519
      %v1555 = vpack.c.b16 %v1527, %v1520
      %v1556 = vpack.c.b16 %v1528, %v1521
      %v1557 = vpack.c.b16 %v1529, %v1522
      %v1558 = vpack.c.b16 %v1530, %v1523
      %v1559 = vpack.c.b16 %v1531, %v1531
      %v1560 = vpack.c.b16 %v1532, %v1532
      %v1561 = vpack.c.b16 %v1533, %v1533
      %v1562 = vpack.c.b16 %v1534, %v1534
      %v1563 = vpack.c.b16 %v1535, %v1535
      %v1564 = vpack.c.b16 %v1536, %v1536
      %v1565 = vpack.c.b16 %v1537, %v1537
      %v1591 = vsel %vm730, %v1544, 0
      %v1594 = vsel %vm730, %v1551, 0
      %v1597 = vsel %vm730, %v1558, 0
      %v1600 = vsel %vm730, %v1565, 0
      %1602 = vmatprep.subr.bf16.mxu0 0
      %1603 = vmatpush1.bf16.msra.mxu0 %v637
      %1604 = vmatprep.subr.bf16.mxu0 0
      %1605 = vmatpush1.bf16.msra.mxu0 %v636
      %1606 = vmatprep.subr.bf16.mxu0 0
      %1607 = vmatpush1.bf16.msra.mxu0 %v635
      %1608 = vmatprep.subr.bf16.mxu0 0
      %1609 = vmatpush1.bf16.msra.mxu0 %v634
      %1610 = vmatprep.subr.bf16.mxu0 0
      %1611 = vmatpush1.bf16.msra.mxu0 %v633
      %1612 = vmatprep.subr.bf16.mxu0 0
      %1613 = vmatpush1.bf16.msra.mxu0 %v632
      %1614 = vmatprep.subr.bf16.mxu0 0
      %1615 = vmatpush1.bf16.msra.mxu0 %v631
      %1616 = vmatprep.subr.bf16.mxu0 0
      %1617 = vmatpush1.bf16.msra.mxu0 %v630
      %1618 = vmatprep.subr.bf16.mxu0 0
      %1619 = vmatpush2.bf16.msra.mxu0 %v645
      %1620 = vmatprep.subr.bf16.mxu0 0
      %1621 = vmatpush2.bf16.msra.mxu0 %v644
      %1622 = vmatprep.subr.bf16.mxu0 0
      %1623 = vmatpush2.bf16.msra.mxu0 %v643
      %1624 = vmatprep.subr.bf16.mxu0 0
      %1625 = vmatpush2.bf16.msra.mxu0 %v642
      %1626 = vmatprep.subr.bf16.mxu0 0
      %1627 = vmatpush2.bf16.msra.mxu0 %v641
      %1628 = vmatprep.subr.bf16.mxu0 0
      %1629 = vmatpush2.bf16.msra.mxu0 %v640
      %1630 = vmatprep.subr.bf16.mxu0 0
      %1631 = vmatpush2.bf16.msra.mxu0 %v639
      %1632 = vmatprep.subr.bf16.mxu0 0
      %1633 = vmatpush2.bf16.msra.mxu0 %v638
      %1634 = vmatprep.mubr.bf16.mxu0 %v1539
      %1635 = vmatmul.mubr.bf16.gmra.mxu0 %v1538
      %v1636 = vpop.f32.mrf.mxu0
      %v1637 = vadd.f32 0.0, %v1636
      %v1638 = vpop.f32.mrf.mxu0
      %v1639 = vpop.f32.mrf.mxu0
      %v1640 = vadd.f32 0.0, %v1639
      %v1641 = vpop.f32.mrf.mxu0
      %1642 = vmatprep.mubr.bf16.mxu0 %v1546
      %1643 = vmatmul.mubr.bf16.gmra.mxu0 %v1545
      %v1644 = vpop.f32.mrf.mxu0
      %v1645 = vadd.f32 0.0, %v1644
      %v1646 = vpop.f32.mrf.mxu0
      %v1647 = vpop.f32.mrf.mxu0
      %v1648 = vadd.f32 0.0, %v1647
      %v1649 = vpop.f32.mrf.mxu0
      %1650 = vmatprep.mubr.bf16.mxu0 %v1553
      %1651 = vmatmul.mubr.bf16.gmra.mxu0 %v1552
      %v1652 = vpop.f32.mrf.mxu0
      %v1653 = vadd.f32 0.0, %v1652
      %v1654 = vpop.f32.mrf.mxu0
      %v1655 = vpop.f32.mrf.mxu0
      %v1656 = vadd.f32 0.0, %v1655
      %v1657 = vpop.f32.mrf.mxu0
      %1658 = vmatprep.mubr.bf16.mxu0 %v1560
      %1659 = vmatmul.mubr.bf16.gmra.mxu0 %v1559
      %v1660 = vpop.f32.mrf.mxu0
      %v1661 = vadd.f32 0.0, %v1660
      %v1662 = vpop.f32.mrf.mxu0
      %v1663 = vpop.f32.mrf.mxu0
      %v1664 = vpop.f32.mrf.mxu0
      %1665 = vdwg.mxu0
      %1666 = vmatprep.subr.bf16.mxu0 0
      %1667 = vmatpush1.bf16.msra.mxu0 %v653
      %1668 = vmatprep.subr.bf16.mxu0 0
      %1669 = vmatpush1.bf16.msra.mxu0 %v652
      %1670 = vmatprep.subr.bf16.mxu0 0
      %1671 = vmatpush1.bf16.msra.mxu0 %v651
      %1672 = vmatprep.subr.bf16.mxu0 0
      %1673 = vmatpush1.bf16.msra.mxu0 %v650
      %1674 = vmatprep.subr.bf16.mxu0 0
      %1675 = vmatpush1.bf16.msra.mxu0 %v649
      %1676 = vmatprep.subr.bf16.mxu0 0
      %1677 = vmatpush1.bf16.msra.mxu0 %v648
      %1678 = vmatprep.subr.bf16.mxu0 0
      %1679 = vmatpush1.bf16.msra.mxu0 %v647
      %1680 = vmatprep.subr.bf16.mxu0 0
      %1681 = vmatpush1.bf16.msra.mxu0 %v646
      %1682 = vmatprep.subr.bf16.mxu0 0
      %1683 = vmatpush2.bf16.msra.mxu0 %v661
      %1684 = vmatprep.subr.bf16.mxu0 0
      %1685 = vmatpush2.bf16.msra.mxu0 %v660
      %1686 = vmatprep.subr.bf16.mxu0 0
      %1687 = vmatpush2.bf16.msra.mxu0 %v659
      %1688 = vmatprep.subr.bf16.mxu0 0
      %1689 = vmatpush2.bf16.msra.mxu0 %v658
      %1690 = vmatprep.subr.bf16.mxu0 0
      %1691 = vmatpush2.bf16.msra.mxu0 %v657
      %1692 = vmatprep.subr.bf16.mxu0 0
      %1693 = vmatpush2.bf16.msra.mxu0 %v656
      %1694 = vmatprep.subr.bf16.mxu0 0
      %1695 = vmatpush2.bf16.msra.mxu0 %v655
      %1696 = vmatprep.subr.bf16.mxu0 0
      %1697 = vmatpush2.bf16.msra.mxu0 %v654
      %1698 = vmatprep.mubr.bf16.mxu0 %v1541
      %1699 = vmatmul.mubr.bf16.gmra.mxu0 %v1540
      %v1700 = vpop.f32.mrf.mxu0
      %v1701 = vadd.f32 %v1637, %v1700
      %v1702 = vpop.f32.mrf.mxu0
      %v1703 = vpop.f32.mrf.mxu0
      %v1704 = vadd.f32 %v1640, %v1703
      %v1705 = vpop.f32.mrf.mxu0
      %1706 = vmatprep.mubr.bf16.mxu0 %v1548
      %1707 = vmatmul.mubr.bf16.gmra.mxu0 %v1547
      %v1708 = vpop.f32.mrf.mxu0
      %v1709 = vadd.f32 %v1645, %v1708
      %v1710 = vpop.f32.mrf.mxu0
      %v1711 = vpop.f32.mrf.mxu0
      %v1712 = vadd.f32 %v1648, %v1711
      %v1713 = vpop.f32.mrf.mxu0
      %1714 = vmatprep.mubr.bf16.mxu0 %v1555
      %1715 = vmatmul.mubr.bf16.gmra.mxu0 %v1554
      %v1716 = vpop.f32.mrf.mxu0
      %v1717 = vadd.f32 %v1653, %v1716
      %v1718 = vpop.f32.mrf.mxu0
      %v1719 = vpop.f32.mrf.mxu0
      %v1720 = vadd.f32 %v1656, %v1719
      %v1721 = vpop.f32.mrf.mxu0
      %1722 = vmatprep.mubr.bf16.mxu0 %v1562
      %1723 = vmatmul.mubr.bf16.gmra.mxu0 %v1561
      %v1724 = vpop.f32.mrf.mxu0
      %v1725 = vadd.f32 %v1661, %v1724
      %v1726 = vpop.f32.mrf.mxu0
      %v1727 = vpop.f32.mrf.mxu0
      %v1728 = vpop.f32.mrf.mxu0
      %1729 = vdwg.mxu0
      %1730 = vmatprep.subr.bf16.mxu0 0
      %1731 = vmatpush1.bf16.msra.mxu0 %v669
      %1732 = vmatprep.subr.bf16.mxu0 0
      %1733 = vmatpush1.bf16.msra.mxu0 %v668
      %1734 = vmatprep.subr.bf16.mxu0 0
      %1735 = vmatpush1.bf16.msra.mxu0 %v667
      %1736 = vmatprep.subr.bf16.mxu0 0
      %1737 = vmatpush1.bf16.msra.mxu0 %v666
      %1738 = vmatprep.subr.bf16.mxu0 0
      %1739 = vmatpush1.bf16.msra.mxu0 %v665
      %1740 = vmatprep.subr.bf16.mxu0 0
      %1741 = vmatpush1.bf16.msra.mxu0 %v664
      %1742 = vmatprep.subr.bf16.mxu0 0
      %1743 = vmatpush1.bf16.msra.mxu0 %v663
      %1744 = vmatprep.subr.bf16.mxu0 0
      %1745 = vmatpush1.bf16.msra.mxu0 %v662
      %1746 = vmatprep.subr.bf16.mxu0 0
      %1747 = vmatpush2.bf16.msra.mxu0 %v677
      %1748 = vmatprep.subr.bf16.mxu0 0
      %1749 = vmatpush2.bf16.msra.mxu0 %v676
      %1750 = vmatprep.subr.bf16.mxu0 0
      %1751 = vmatpush2.bf16.msra.mxu0 %v675
      %1752 = vmatprep.subr.bf16.mxu0 0
      %1753 = vmatpush2.bf16.msra.mxu0 %v674
      %1754 = vmatprep.subr.bf16.mxu0 0
      %1755 = vmatpush2.bf16.msra.mxu0 %v673
      %1756 = vmatprep.subr.bf16.mxu0 0
      %1757 = vmatpush2.bf16.msra.mxu0 %v672
      %1758 = vmatprep.subr.bf16.mxu0 0
      %1759 = vmatpush2.bf16.msra.mxu0 %v671
      %1760 = vmatprep.subr.bf16.mxu0 0
      %1761 = vmatpush2.bf16.msra.mxu0 %v670
      %1762 = vmatprep.mubr.bf16.mxu0 %v1543
      %1763 = vmatmul.mubr.bf16.gmra.mxu0 %v1542
      %v1764 = vpop.f32.mrf.mxu0
      %v1765 = vadd.f32 %v1701, %v1764
      %v1766 = vpop.f32.mrf.mxu0
      %v1767 = vpop.f32.mrf.mxu0
      %v1768 = vadd.f32 %v1704, %v1767
      %v1769 = vpop.f32.mrf.mxu0
      %1770 = vmatprep.mubr.bf16.mxu0 %v1550
      %1771 = vmatmul.mubr.bf16.gmra.mxu0 %v1549
      %v1772 = vpop.f32.mrf.mxu0
      %v1773 = vadd.f32 %v1709, %v1772
      %v1774 = vpop.f32.mrf.mxu0
      %v1775 = vpop.f32.mrf.mxu0
      %v1776 = vadd.f32 %v1712, %v1775
      %v1777 = vpop.f32.mrf.mxu0
      %1778 = vmatprep.mubr.bf16.mxu0 %v1557
      %1779 = vmatmul.mubr.bf16.gmra.mxu0 %v1556
      %v1780 = vpop.f32.mrf.mxu0
      %v1781 = vadd.f32 %v1717, %v1780
      %v1782 = vpop.f32.mrf.mxu0
      %v1783 = vpop.f32.mrf.mxu0
      %v1784 = vadd.f32 %v1720, %v1783
      %v1785 = vpop.f32.mrf.mxu0
      %1786 = vmatprep.mubr.bf16.mxu0 %v1564
      %1787 = vmatmul.mubr.bf16.gmra.mxu0 %v1563
      %v1788 = vpop.f32.mrf.mxu0
      %v1789 = vadd.f32 %v1725, %v1788
      %v1790 = vpop.f32.mrf.mxu0
      %v1791 = vpop.f32.mrf.mxu0
      %v1792 = vpop.f32.mrf.mxu0
      %1793 = vdwg.mxu0
      %1794 = vmatprep.subr.bf16.mxu0 0
      %1795 = vmatpush1.bf16.msra.mxu0 0
      %1796 = vmatprep.subr.bf16.mxu0 0
      %1797 = vmatpush1.bf16.msra.mxu0 0
      %1798 = vmatprep.subr.bf16.mxu0 0
      %1799 = vmatpush1.bf16.msra.mxu0 0
      %1800 = vmatprep.subr.bf16.mxu0 0
      %1801 = vmatpush1.bf16.msra.mxu0 0
      %1802 = vmatprep.subr.bf16.mxu0 0
      %1803 = vmatpush1.bf16.msra.mxu0 0
      %1804 = vmatprep.subr.bf16.mxu0 0
      %1805 = vmatpush1.bf16.msra.mxu0 0
      %1806 = vmatprep.subr.bf16.mxu0 0
      %1807 = vmatpush1.bf16.msra.mxu0 %v679
      %1808 = vmatprep.subr.bf16.mxu0 0
      %1809 = vmatpush1.bf16.msra.mxu0 %v678
      %1810 = vmatprep.subr.bf16.mxu0 0
      %1811 = vmatpush2.bf16.msra.mxu0 0
      %1812 = vmatprep.subr.bf16.mxu0 0
      %1813 = vmatpush2.bf16.msra.mxu0 0
      %1814 = vmatprep.subr.bf16.mxu0 0
      %1815 = vmatpush2.bf16.msra.mxu0 0
      %1816 = vmatprep.subr.bf16.mxu0 0
      %1817 = vmatpush2.bf16.msra.mxu0 0
      %1818 = vmatprep.subr.bf16.mxu0 0
      %1819 = vmatpush2.bf16.msra.mxu0 0
      %1820 = vmatprep.subr.bf16.mxu0 0
      %1821 = vmatpush2.bf16.msra.mxu0 0
      %1822 = vmatprep.subr.bf16.mxu0 0
      %1823 = vmatpush2.bf16.msra.mxu0 0
      %1824 = vmatprep.subr.bf16.mxu0 0
      %1825 = vmatpush2.bf16.msra.mxu0 0
      %1826 = vmatprep.mubr.bf16.mxu0 0
      %1827 = vmatmul.mubr.bf16.gmra.mxu0 %v1591
      %v1828 = vpop.f32.mrf.mxu0
      %v1829 = vadd.f32 %v1765, %v1828
      %v1830 = vpop.f32.mrf.mxu0
      %v1831 = vpop.f32.mrf.mxu0
      %v1832 = vadd.f32 %v1768, %v1831
      %v1833 = vpop.f32.mrf.mxu0
      %1834 = vmatprep.mubr.bf16.mxu0 0
      %1835 = vmatmul.mubr.bf16.gmra.mxu0 %v1594
      %v1836 = vpop.f32.mrf.mxu0
      %v1837 = vadd.f32 %v1773, %v1836
      %v1838 = vpop.f32.mrf.mxu0
      %v1839 = vpop.f32.mrf.mxu0
      %v1840 = vadd.f32 %v1776, %v1839
      %v1841 = vpop.f32.mrf.mxu0
      %1842 = vmatprep.mubr.bf16.mxu0 0
      %1843 = vmatmul.mubr.bf16.gmra.mxu0 %v1597
      %v1844 = vpop.f32.mrf.mxu0
      %v1845 = vadd.f32 %v1781, %v1844
      %v1846 = vpop.f32.mrf.mxu0
      %v1847 = vpop.f32.mrf.mxu0
      %v1848 = vadd.f32 %v1784, %v1847
      %v1849 = vpop.f32.mrf.mxu0
      %1850 = vmatprep.mubr.bf16.mxu0 0
      %1851 = vmatmul.mubr.bf16.gmra.mxu0 %v1600
      %v1852 = vpop.f32.mrf.mxu0
      %v1853 = vadd.f32 %v1789, %v1852
      %v1854 = vpop.f32.mrf.mxu0
      %v1855 = vpop.f32.mrf.mxu0
      %v1856 = vpop.f32.mrf.mxu0
      %1857 = vdwg.mxu0
      %v1858 = vmax.f32 %v1425, %v1829
      %v1859 = vmax.f32 %v1426, %v1832
      %v1860 = vmax.f32 %v1427, %v1837
      %v1861 = vmax.f32 %v1428, %v1840
      %v1862 = vmax.f32 %v1429, %v1845
      %v1863 = vmax.f32 %v1430, %v1848
      %v1864 = vmax.f32 %v1431, %v1853
      %s1865 = scalar_lea.vmem %s165, 588
      %v1866 = vld [vmem:[%s1865] sm:$0xff]
      %v1867 = vld [vmem:[%s1865 + $0x8] sm:$0xff]
      %v1868 = vld [vmem:[%s1865 + $0x10] sm:$0xff]
      %v1869 = vld [vmem:[%s1865 + $0x18] sm:$0xf]
      %v1870 = vld [vmem:[%s1865 + $0x1c] sm:$0xff]
      %v1871 = vld [vmem:[%s1865 + $0x24] sm:$0xff]
      %v1872 = vld [vmem:[%s1865 + $0x2c] sm:$0xff]
      %v1873 = vld [vmem:[%s1865 + $0x34] sm:$0xf]
      %v1874 = vld [vmem:[%s1865 + $0x38] sm:$0xff]
      %v1875 = vld [vmem:[%s1865 + $0x40] sm:$0xff]
      %v1876 = vld [vmem:[%s1865 + $0x48] sm:$0xff]
      %v1877 = vld [vmem:[%s1865 + $0x50] sm:$0xf]
      %v1878 = vld [vmem:[%s1865 + $0x54] sm:$0xff]
      %v1879 = vld [vmem:[%s1865 + $0x5c] sm:$0xff]
      %v1880 = vld [vmem:[%s1865 + $0x64] sm:$0xff]
      %v1881 = vld [vmem:[%s1865 + $0x6c] sm:$0xf]
      %v1882 = vld [vmem:[%s1865 + $0x70] sm:$0xff]
      %v1883 = vld [vmem:[%s1865 + $0x78] sm:$0xff]
      %v1884 = vld [vmem:[%s1865 + $0x80] sm:$0xff]
      %v1885 = vld [vmem:[%s1865 + $0x88] sm:$0xf]
      %v1886 = vld [vmem:[%s1865 + $0x8c] sm:$0xff]
      %v1887 = vld [vmem:[%s1865 + $0x94] sm:$0xff]
      %v1888 = vld [vmem:[%s1865 + $0x9c] sm:$0xff]
      %v1889 = vld [vmem:[%s1865 + $0xa4] sm:$0xf]
      %v1890 = vld [vmem:[%s1865 + $0xa8] sm:$0x11]
      %v1891 = vld [vmem:[%s1865 + $0xb0] sm:$0x11]
      %v1892 = vld [vmem:[%s1865 + $0xb8] sm:$0x11]
      %v1893 = vld [vmem:[%s1865 + $0xc0] sm:$0x1]
      %v1922 = vunpack.c.l.b16 %v1866
      %v1923 = vunpack.c.h.b16 %v1866
      %v1924 = vunpack.c.l.b16 %v1867
      %v1925 = vunpack.c.h.b16 %v1867
      %v1926 = vunpack.c.l.b16 %v1868
      %v1927 = vunpack.c.h.b16 %v1868
      %v1928 = vunpack.c.l.b16 %v1869
      %v1929 = vunpack.c.l.b16 %v1870
      %v1930 = vunpack.c.h.b16 %v1870
      %v1931 = vunpack.c.l.b16 %v1871
      %v1932 = vunpack.c.h.b16 %v1871
      %v1933 = vunpack.c.l.b16 %v1872
      %v1934 = vunpack.c.h.b16 %v1872
      %v1935 = vunpack.c.l.b16 %v1873
      %v1936 = vunpack.c.l.b16 %v1874
      %v1937 = vunpack.c.h.b16 %v1874
      %v1938 = vunpack.c.l.b16 %v1875
      %v1939 = vunpack.c.h.b16 %v1875
      %v1940 = vunpack.c.l.b16 %v1876
      %v1941 = vunpack.c.h.b16 %v1876
      %v1942 = vunpack.c.l.b16 %v1877
      %v1943 = vunpack.c.l.b16 %v1878
      %v1944 = vunpack.c.h.b16 %v1878
      %v1945 = vunpack.c.l.b16 %v1879
      %v1946 = vunpack.c.h.b16 %v1879
      %v1947 = vunpack.c.l.b16 %v1880
      %v1948 = vunpack.c.h.b16 %v1880
      %v1949 = vunpack.c.l.b16 %v1881
      %v1950 = vunpack.c.l.b16 %v1882
      %v1951 = vunpack.c.h.b16 %v1882
      %v1952 = vunpack.c.l.b16 %v1883
      %v1953 = vunpack.c.h.b16 %v1883
      %v1954 = vunpack.c.l.b16 %v1884
      %v1955 = vunpack.c.h.b16 %v1884
      %v1956 = vunpack.c.l.b16 %v1885
      %v1957 = vunpack.c.l.b16 %v1886
      %v1958 = vunpack.c.h.b16 %v1886
      %v1959 = vunpack.c.l.b16 %v1887
      %v1960 = vunpack.c.h.b16 %v1887
      %v1961 = vunpack.c.l.b16 %v1888
      %v1962 = vunpack.c.h.b16 %v1888
      %v1963 = vunpack.c.l.b16 %v1889
      %v1964 = vunpack.c.l.b16 %v1890
      %v1965 = vunpack.c.h.b16 %v1890
      %v1966 = vunpack.c.l.b16 %v1891
      %v1967 = vunpack.c.h.b16 %v1891
      %v1968 = vunpack.c.l.b16 %v1892
      %v1969 = vunpack.c.h.b16 %v1892
      %v1970 = vunpack.c.l.b16 %v1893
      %v1971 = vpack.c.b16 %v1929, %v1922
      %v1972 = vpack.c.b16 %v1930, %v1923
      %v1973 = vpack.c.b16 %v1931, %v1924
      %v1974 = vpack.c.b16 %v1932, %v1925
      %v1975 = vpack.c.b16 %v1933, %v1926
      %v1976 = vpack.c.b16 %v1934, %v1927
      %v1977 = vpack.c.b16 %v1935, %v1928
      %v1978 = vpack.c.b16 %v1943, %v1936
      %v1979 = vpack.c.b16 %v1944, %v1937
      %v1980 = vpack.c.b16 %v1945, %v1938
      %v1981 = vpack.c.b16 %v1946, %v1939
      %v1982 = vpack.c.b16 %v1947, %v1940
      %v1983 = vpack.c.b16 %v1948, %v1941
      %v1984 = vpack.c.b16 %v1949, %v1942
      %v1985 = vpack.c.b16 %v1957, %v1950
      %v1986 = vpack.c.b16 %v1958, %v1951
      %v1987 = vpack.c.b16 %v1959, %v1952
      %v1988 = vpack.c.b16 %v1960, %v1953
      %v1989 = vpack.c.b16 %v1961, %v1954
      %v1990 = vpack.c.b16 %v1962, %v1955
      %v1991 = vpack.c.b16 %v1963, %v1956
      %v1992 = vpack.c.b16 %v1964, %v1964
      %v1993 = vpack.c.b16 %v1965, %v1965
      %v1994 = vpack.c.b16 %v1966, %v1966
      %v1995 = vpack.c.b16 %v1967, %v1967
      %v1996 = vpack.c.b16 %v1968, %v1968
      %v1997 = vpack.c.b16 %v1969, %v1969
      %v1998 = vpack.c.b16 %v1970, %v1970
      %v2024 = vsel %vm730, %v1977, 0
      %v2027 = vsel %vm730, %v1984, 0
      %v2030 = vsel %vm730, %v1991, 0
      %v2033 = vsel %vm730, %v1998, 0
      %2035 = vmatprep.subr.bf16.mxu0 0
      %2036 = vmatpush1.bf16.msra.mxu0 %v637
      %2037 = vmatprep.subr.bf16.mxu0 0
      %2038 = vmatpush1.bf16.msra.mxu0 %v636
      %2039 = vmatprep.subr.bf16.mxu0 0
      %2040 = vmatpush1.bf16.msra.mxu0 %v635
      %2041 = vmatprep.subr.bf16.mxu0 0
      %2042 = vmatpush1.bf16.msra.mxu0 %v634
      %2043 = vmatprep.subr.bf16.mxu0 0
      %2044 = vmatpush1.bf16.msra.mxu0 %v633
      %2045 = vmatprep.subr.bf16.mxu0 0
      %2046 = vmatpush1.bf16.msra.mxu0 %v632
      %2047 = vmatprep.subr.bf16.mxu0 0
      %2048 = vmatpush1.bf16.msra.mxu0 %v631
      %2049 = vmatprep.subr.bf16.mxu0 0
      %2050 = vmatpush1.bf16.msra.mxu0 %v630
      %2051 = vmatprep.subr.bf16.mxu0 0
      %2052 = vmatpush2.bf16.msra.mxu0 %v645
      %2053 = vmatprep.subr.bf16.mxu0 0
      %2054 = vmatpush2.bf16.msra.mxu0 %v644
      %2055 = vmatprep.subr.bf16.mxu0 0
      %2056 = vmatpush2.bf16.msra.mxu0 %v643
      %2057 = vmatprep.subr.bf16.mxu0 0
      %2058 = vmatpush2.bf16.msra.mxu0 %v642
      %2059 = vmatprep.subr.bf16.mxu0 0
      %2060 = vmatpush2.bf16.msra.mxu0 %v641
      %2061 = vmatprep.subr.bf16.mxu0 0
      %2062 = vmatpush2.bf16.msra.mxu0 %v640
      %2063 = vmatprep.subr.bf16.mxu0 0
      %2064 = vmatpush2.bf16.msra.mxu0 %v639
      %2065 = vmatprep.subr.bf16.mxu0 0
      %2066 = vmatpush2.bf16.msra.mxu0 %v638
      %2067 = vmatprep.mubr.bf16.mxu0 %v1972
      %2068 = vmatmul.mubr.bf16.gmra.mxu0 %v1971
      %v2069 = vpop.f32.mrf.mxu0
      %v2070 = vadd.f32 0.0, %v2069
      %v2071 = vpop.f32.mrf.mxu0
      %v2072 = vpop.f32.mrf.mxu0
      %v2073 = vadd.f32 0.0, %v2072
      %v2074 = vpop.f32.mrf.mxu0
      %2075 = vmatprep.mubr.bf16.mxu0 %v1979
      %2076 = vmatmul.mubr.bf16.gmra.mxu0 %v1978
      %v2077 = vpop.f32.mrf.mxu0
      %v2078 = vadd.f32 0.0, %v2077
      %v2079 = vpop.f32.mrf.mxu0
      %v2080 = vpop.f32.mrf.mxu0
      %v2081 = vadd.f32 0.0, %v2080
      %v2082 = vpop.f32.mrf.mxu0
      %2083 = vmatprep.mubr.bf16.mxu0 %v1986
      %2084 = vmatmul.mubr.bf16.gmra.mxu0 %v1985
      %v2085 = vpop.f32.mrf.mxu0
      %v2086 = vadd.f32 0.0, %v2085
      %v2087 = vpop.f32.mrf.mxu0
      %v2088 = vpop.f32.mrf.mxu0
      %v2089 = vadd.f32 0.0, %v2088
      %v2090 = vpop.f32.mrf.mxu0
      %2091 = vmatprep.mubr.bf16.mxu0 %v1993
      %2092 = vmatmul.mubr.bf16.gmra.mxu0 %v1992
      %v2093 = vpop.f32.mrf.mxu0
      %v2094 = vadd.f32 0.0, %v2093
      %v2095 = vpop.f32.mrf.mxu0
      %v2096 = vpop.f32.mrf.mxu0
      %v2097 = vpop.f32.mrf.mxu0
      %2098 = vdwg.mxu0
      %2099 = vmatprep.subr.bf16.mxu0 0
      %2100 = vmatpush1.bf16.msra.mxu0 %v653
      %2101 = vmatprep.subr.bf16.mxu0 0
      %2102 = vmatpush1.bf16.msra.mxu0 %v652
      %2103 = vmatprep.subr.bf16.mxu0 0
      %2104 = vmatpush1.bf16.msra.mxu0 %v651
      %2105 = vmatprep.subr.bf16.mxu0 0
      %2106 = vmatpush1.bf16.msra.mxu0 %v650
      %2107 = vmatprep.subr.bf16.mxu0 0
      %2108 = vmatpush1.bf16.msra.mxu0 %v649
      %2109 = vmatprep.subr.bf16.mxu0 0
      %2110 = vmatpush1.bf16.msra.mxu0 %v648
      %2111 = vmatprep.subr.bf16.mxu0 0
      %2112 = vmatpush1.bf16.msra.mxu0 %v647
      %2113 = vmatprep.subr.bf16.mxu0 0
      %2114 = vmatpush1.bf16.msra.mxu0 %v646
      %2115 = vmatprep.subr.bf16.mxu0 0
      %2116 = vmatpush2.bf16.msra.mxu0 %v661
      %2117 = vmatprep.subr.bf16.mxu0 0
      %2118 = vmatpush2.bf16.msra.mxu0 %v660
      %2119 = vmatprep.subr.bf16.mxu0 0
      %2120 = vmatpush2.bf16.msra.mxu0 %v659
      %2121 = vmatprep.subr.bf16.mxu0 0
      %2122 = vmatpush2.bf16.msra.mxu0 %v658
      %2123 = vmatprep.subr.bf16.mxu0 0
      %2124 = vmatpush2.bf16.msra.mxu0 %v657
      %2125 = vmatprep.subr.bf16.mxu0 0
      %2126 = vmatpush2.bf16.msra.mxu0 %v656
      %2127 = vmatprep.subr.bf16.mxu0 0
      %2128 = vmatpush2.bf16.msra.mxu0 %v655
      %2129 = vmatprep.subr.bf16.mxu0 0
      %2130 = vmatpush2.bf16.msra.mxu0 %v654
      %2131 = vmatprep.mubr.bf16.mxu0 %v1974
      %2132 = vmatmul.mubr.bf16.gmra.mxu0 %v1973
      %v2133 = vpop.f32.mrf.mxu0
      %v2134 = vadd.f32 %v2070, %v2133
      %v2135 = vpop.f32.mrf.mxu0
      %v2136 = vpop.f32.mrf.mxu0
      %v2137 = vadd.f32 %v2073, %v2136
      %v2138 = vpop.f32.mrf.mxu0
      %2139 = vmatprep.mubr.bf16.mxu0 %v1981
      %2140 = vmatmul.mubr.bf16.gmra.mxu0 %v1980
      %v2141 = vpop.f32.mrf.mxu0
      %v2142 = vadd.f32 %v2078, %v2141
      %v2143 = vpop.f32.mrf.mxu0
      %v2144 = vpop.f32.mrf.mxu0
      %v2145 = vadd.f32 %v2081, %v2144
      %v2146 = vpop.f32.mrf.mxu0
      %2147 = vmatprep.mubr.bf16.mxu0 %v1988
      %2148 = vmatmul.mubr.bf16.gmra.mxu0 %v1987
      %v2149 = vpop.f32.mrf.mxu0
      %v2150 = vadd.f32 %v2086, %v2149
      %v2151 = vpop.f32.mrf.mxu0
      %v2152 = vpop.f32.mrf.mxu0
      %v2153 = vadd.f32 %v2089, %v2152
      %v2154 = vpop.f32.mrf.mxu0
      %2155 = vmatprep.mubr.bf16.mxu0 %v1995
      %2156 = vmatmul.mubr.bf16.gmra.mxu0 %v1994
      %v2157 = vpop.f32.mrf.mxu0
      %v2158 = vadd.f32 %v2094, %v2157
      %v2159 = vpop.f32.mrf.mxu0
      %v2160 = vpop.f32.mrf.mxu0
      %v2161 = vpop.f32.mrf.mxu0
      %2162 = vdwg.mxu0
      %2163 = vmatprep.subr.bf16.mxu0 0
      %2164 = vmatpush1.bf16.msra.mxu0 %v669
      %2165 = vmatprep.subr.bf16.mxu0 0
      %2166 = vmatpush1.bf16.msra.mxu0 %v668
      %2167 = vmatprep.subr.bf16.mxu0 0
      %2168 = vmatpush1.bf16.msra.mxu0 %v667
      %2169 = vmatprep.subr.bf16.mxu0 0
      %2170 = vmatpush1.bf16.msra.mxu0 %v666
      %2171 = vmatprep.subr.bf16.mxu0 0
      %2172 = vmatpush1.bf16.msra.mxu0 %v665
      %2173 = vmatprep.subr.bf16.mxu0 0
      %2174 = vmatpush1.bf16.msra.mxu0 %v664
      %2175 = vmatprep.subr.bf16.mxu0 0
      %2176 = vmatpush1.bf16.msra.mxu0 %v663
      %2177 = vmatprep.subr.bf16.mxu0 0
      %2178 = vmatpush1.bf16.msra.mxu0 %v662
      %2179 = vmatprep.subr.bf16.mxu0 0
      %2180 = vmatpush2.bf16.msra.mxu0 %v677
      %2181 = vmatprep.subr.bf16.mxu0 0
      %2182 = vmatpush2.bf16.msra.mxu0 %v676
      %2183 = vmatprep.subr.bf16.mxu0 0
      %2184 = vmatpush2.bf16.msra.mxu0 %v675
      %2185 = vmatprep.subr.bf16.mxu0 0
      %2186 = vmatpush2.bf16.msra.mxu0 %v674
      %2187 = vmatprep.subr.bf16.mxu0 0
      %2188 = vmatpush2.bf16.msra.mxu0 %v673
      %2189 = vmatprep.subr.bf16.mxu0 0
      %2190 = vmatpush2.bf16.msra.mxu0 %v672
      %2191 = vmatprep.subr.bf16.mxu0 0
      %2192 = vmatpush2.bf16.msra.mxu0 %v671
      %2193 = vmatprep.subr.bf16.mxu0 0
      %2194 = vmatpush2.bf16.msra.mxu0 %v670
      %2195 = vmatprep.mubr.bf16.mxu0 %v1976
      %2196 = vmatmul.mubr.bf16.gmra.mxu0 %v1975
      %v2197 = vpop.f32.mrf.mxu0
      %v2198 = vadd.f32 %v2134, %v2197
      %v2199 = vpop.f32.mrf.mxu0
      %v2200 = vpop.f32.mrf.mxu0
      %v2201 = vadd.f32 %v2137, %v2200
      %v2202 = vpop.f32.mrf.mxu0
      %2203 = vmatprep.mubr.bf16.mxu0 %v1983
      %2204 = vmatmul.mubr.bf16.gmra.mxu0 %v1982
      %v2205 = vpop.f32.mrf.mxu0
      %v2206 = vadd.f32 %v2142, %v2205
      %v2207 = vpop.f32.mrf.mxu0
      %v2208 = vpop.f32.mrf.mxu0
      %v2209 = vadd.f32 %v2145, %v2208
      %v2210 = vpop.f32.mrf.mxu0
      %2211 = vmatprep.mubr.bf16.mxu0 %v1990
      %2212 = vmatmul.mubr.bf16.gmra.mxu0 %v1989
      %v2213 = vpop.f32.mrf.mxu0
      %v2214 = vadd.f32 %v2150, %v2213
      %v2215 = vpop.f32.mrf.mxu0
      %v2216 = vpop.f32.mrf.mxu0
      %v2217 = vadd.f32 %v2153, %v2216
      %v2218 = vpop.f32.mrf.mxu0
      %2219 = vmatprep.mubr.bf16.mxu0 %v1997
      %2220 = vmatmul.mubr.bf16.gmra.mxu0 %v1996
      %v2221 = vpop.f32.mrf.mxu0
      %v2222 = vadd.f32 %v2158, %v2221
      %v2223 = vpop.f32.mrf.mxu0
      %v2224 = vpop.f32.mrf.mxu0
      %v2225 = vpop.f32.mrf.mxu0
      %2226 = vdwg.mxu0
      %2227 = vmatprep.subr.bf16.mxu0 0
      %2228 = vmatpush1.bf16.msra.mxu0 0
      %2229 = vmatprep.subr.bf16.mxu0 0
      %2230 = vmatpush1.bf16.msra.mxu0 0
      %2231 = vmatprep.subr.bf16.mxu0 0
      %2232 = vmatpush1.bf16.msra.mxu0 0
      %2233 = vmatprep.subr.bf16.mxu0 0
      %2234 = vmatpush1.bf16.msra.mxu0 0
      %2235 = vmatprep.subr.bf16.mxu0 0
      %2236 = vmatpush1.bf16.msra.mxu0 0
      %2237 = vmatprep.subr.bf16.mxu0 0
      %2238 = vmatpush1.bf16.msra.mxu0 0
      %2239 = vmatprep.subr.bf16.mxu0 0
      %2240 = vmatpush1.bf16.msra.mxu0 %v679
      %2241 = vmatprep.subr.bf16.mxu0 0
      %2242 = vmatpush1.bf16.msra.mxu0 %v678
      %2243 = vmatprep.subr.bf16.mxu0 0
      %2244 = vmatpush2.bf16.msra.mxu0 0
      %2245 = vmatprep.subr.bf16.mxu0 0
      %2246 = vmatpush2.bf16.msra.mxu0 0
      %2247 = vmatprep.subr.bf16.mxu0 0
      %2248 = vmatpush2.bf16.msra.mxu0 0
      %2249 = vmatprep.subr.bf16.mxu0 0
      %2250 = vmatpush2.bf16.msra.mxu0 0
      %2251 = vmatprep.subr.bf16.mxu0 0
      %2252 = vmatpush2.bf16.msra.mxu0 0
      %2253 = vmatprep.subr.bf16.mxu0 0
      %2254 = vmatpush2.bf16.msra.mxu0 0
      %2255 = vmatprep.subr.bf16.mxu0 0
      %2256 = vmatpush2.bf16.msra.mxu0 0
      %2257 = vmatprep.subr.bf16.mxu0 0
      %2258 = vmatpush2.bf16.msra.mxu0 0
      %2259 = vmatprep.mubr.bf16.mxu0 0
      %2260 = vmatmul.mubr.bf16.gmra.mxu0 %v2024
      %v2261 = vpop.f32.mrf.mxu0
      %v2262 = vadd.f32 %v2198, %v2261
      %v2263 = vpop.f32.mrf.mxu0
      %v2264 = vpop.f32.mrf.mxu0
      %v2265 = vadd.f32 %v2201, %v2264
      %v2266 = vpop.f32.mrf.mxu0
      %2267 = vmatprep.mubr.bf16.mxu0 0
      %2268 = vmatmul.mubr.bf16.gmra.mxu0 %v2027
      %v2269 = vpop.f32.mrf.mxu0
      %v2270 = vadd.f32 %v2206, %v2269
      %v2271 = vpop.f32.mrf.mxu0
      %v2272 = vpop.f32.mrf.mxu0
      %v2273 = vadd.f32 %v2209, %v2272
      %v2274 = vpop.f32.mrf.mxu0
      %2275 = vmatprep.mubr.bf16.mxu0 0
      %2276 = vmatmul.mubr.bf16.gmra.mxu0 %v2030
      %v2277 = vpop.f32.mrf.mxu0
      %v2278 = vadd.f32 %v2214, %v2277
      %v2279 = vpop.f32.mrf.mxu0
      %v2280 = vpop.f32.mrf.mxu0
      %v2281 = vadd.f32 %v2217, %v2280
      %v2282 = vpop.f32.mrf.mxu0
      %2283 = vmatprep.mubr.bf16.mxu0 0
      %2284 = vmatmul.mubr.bf16.gmra.mxu0 %v2033
      %v2285 = vpop.f32.mrf.mxu0
      %v2286 = vadd.f32 %v2222, %v2285
      %v2287 = vpop.f32.mrf.mxu0
      %v2288 = vpop.f32.mrf.mxu0
      %v2289 = vpop.f32.mrf.mxu0
      %2290 = vdwg.mxu0
      %v2291 = vmax.f32 %v1858, %v2262
      %v2292 = vmax.f32 %v1859, %v2265
      %v2293 = vmax.f32 %v1860, %v2270
      %v2294 = vmax.f32 %v1861, %v2273
      %v2295 = vmax.f32 %v1862, %v2278
      %v2296 = vmax.f32 %v1863, %v2281
      %v2297 = vmax.f32 %v1864, %v2286
      %v2299 = vlaneseq
      %v2300 = vshrl.u32 %v2299, 7
      %v2301 = vsub.s32 0, %v2300
      %v2302 = vrot.slane %v272, %v2301
      %v2304 = vadd.f32 %v2291, %v2302
      %v2305 = vadd.f32 %v2292, %v2302
      %v2306 = vadd.f32 %v2293, %v2302
      %v2307 = vadd.f32 %v2294, %v2302
      %v2308 = vadd.f32 %v2295, %v2302
      %v2309 = vadd.f32 %v2296, %v2302
      %v2310 = vadd.f32 %v2297, %v2302
      %v2311 = vmax.f32 %v2304, 0.0
      %v2312 = vmax.f32 %v2305, 0.0
      %v2313 = vmax.f32 %v2306, 0.0
      %v2314 = vmax.f32 %v2307, 0.0
      %v2315 = vmax.f32 %v2308, 0.0
      %v2316 = vmax.f32 %v2309, 0.0
      %v2317 = vmax.f32 %v2310, 0.0
      %v2318 = vpack.c.bf16 %v2312, %v2311
      %v2319 = vpack.c.bf16 %v2314, %v2313
      %v2320 = vpack.c.bf16 %v2316, %v2315
      %v2321 = vpack.c.bf16 %v2317, %v2317
      %v2326 = vunpack.c.l.b16 %v2318
      %v2327 = vunpack.c.h.b16 %v2318
      %v2328 = vunpack.c.l.b16 %v2319
      %v2329 = vunpack.c.h.b16 %v2319
      %v2330 = vunpack.c.l.b16 %v2320
      %v2331 = vunpack.c.h.b16 %v2320
      %v2332 = vunpack.c.l.b16 %v2321
      %v2333 = vpack.c.b16 %v2326, %v2326
      %v2334 = vpack.c.b16 %v2327, %v2327
      %v2335 = vpack.c.b16 %v2328, %v2328
      %v2336 = vpack.c.b16 %v2329, %v2329
      %v2337 = vpack.c.b16 %v2330, %v2330
      %v2338 = vpack.c.b16 %v2331, %v2331
      %v2339 = vpack.c.b16 %v2332, %v2332
      %vm2347 = vcmask 519168
      %2348 = vst.msk [vmem:[%s170] sm:$0xf] %vm2347, %v2333
      %2349 = vst.msk [vmem:[%s170 + $0x4] sm:$0xf] %vm2347, %v2334
      %2350 = vst.msk [vmem:[%s170 + $0x8] sm:$0xf] %vm2347, %v2335
      %2351 = vst.msk [vmem:[%s170 + $0xc] sm:$0xf] %vm2347, %v2336
      %2352 = vst.msk [vmem:[%s170 + $0x10] sm:$0xf] %vm2347, %v2337
      %2353 = vst.msk [vmem:[%s170 + $0x14] sm:$0xf] %vm2347, %v2338
      %vm2354 = vcmask 516096
      %vm2355 = vsmask.f32 256
      %vm2356 = vmand %vm2354, %vm2355
      %v2357 = vld [vmem:[%s170 + $0x18] sm:$0x1]
      %v2358 = vsel %vm2356, %v2339, %v2357
      %2359 = vst [vmem:[%s170 + $0x18] sm:$0x1] %v2358
      %p2360 = scmp.lt.s32.totalorder %s14, 1
      %s2361 = scalar_select %p2360, %s14, 1
      %s2362 = smul.addr %s2361, 7
      %s2363 = smul.addr %s2362, 4
      %s2364 = scalar_lea.vmem %s3, %s2363
      // Predicated region
      $region33: #{lenet_forward.4} parent=31 // pred_check
        %p2365 = pneg %p100
      $region34: #{lenet_forward.4} parent=31 // pred_check_branch
        %2367 = sbr.rel (%p2365) target = $region36
      $region35: #{lenet_forward.4} parent=31 // pred_region
        _
      $region36: #{lenet_forward.4} parent=31 // pred_fallthru
        _
    $region32: #{lenet_forward.4} parent=5 // pred_fallthru
      _
    %p2368 = scmp.le.s32.totalorder 2, %s9
    // Predicated region
    $region37: #{lenet_forward.4} parent=5 // pred_check
      %p2369 = pneg %p2368
    $region38: #{lenet_forward.4} parent=5 // pred_check_branch
      %2371 = sbr.rel (%p2369) target = $region40
    $region39: #{lenet_forward.4} parent=5 // pred_region
      %s2372 = ssub.s32 %s9, 2
      // Predicated region
      $region41: #{lenet_forward.4} parent=39 // pred_check
        %p2373 = pneg %p106
      $region42: #{lenet_forward.4} parent=39 // pred_check_branch
        %2375 = sbr.rel (%p2373) target = $region44
      $region43: #{lenet_forward.4} parent=39 // pred_region
        %p2376 = scmp.lt.s32.totalorder %s15, 1
        %s2377 = scalar_select %p2376, %s15, 1
        %s2378 = smul.addr %s2377, 7
        %s2379 = smul.addr %s2378, 4
        %s2380 = scalar_lea.vmem %s3, %s2379
      $region44: #{lenet_forward.4} parent=39 // pred_fallthru
        _
    $region40: #{lenet_forward.4} parent=5 // pred_fallthru
      _
  $region6: #{lenet_forward.4} parent=0 // loop_footer
    %s13 = sadd.s32 1, %s9
  $region7: #{lenet_forward.4} parent=0 // loop_footer_branch
    %8 = sbr.rel target = $region3
  $region8: #{lenet_forward.4} parent=0 // loop_exit
    _

// kernel: lenet_forward.5
$region0: #{lenet_forward.5}
  #allocation0 [shape = 'u32[]', space=smem, size = 0x4, offset = 0x4, fixed_abs, tag = 'smem constant byte address 0x4 - core index']
  #allocation1 [shape = 'u32[144,128]{1,0:T(1,128)}', space=vmem, size = 0x12000, scoped, tag = 'internal scratch']
  #allocation2 [shape = 'f32[2,1024]{1,0:T(2,128)}', space=vmem, size = 0x2000, scoped, tag = 'scratch operand']
  %s0 = inlined_call_operand.vmem [shape: bf16[2,3584], index: 0, kind: input, shape index: {}]
  %s1 = inlined_call_operand.vmem [shape: bf16[3584,1024], index: 1, kind: input, shape index: {}]
  %s2 = inlined_call_operand.vmem [shape: f32[1,1024], index: 2, kind: input, shape index: {}]
  %s3 = inlined_call_operand.vmem [shape: bf16[1024,128], index: 3, kind: input, shape index: {}]
  %s4 = inlined_call_operand.vmem [shape: f32[1,128], index: 4, kind: input, shape index: {}]
  %s5 = inlined_call_operand.hbm [shape: f32[2,128], index: 5, kind: output, shape index: {}]
  %s6 = sld [smem:[#allocation0]]
  $region61: #{lenet_forward.5} parent=0
    _
  %s8 = ssub.s32 1, %s6
  %s9 = scalar_select 0, %s8, %s6
  $region1: #{lenet_forward.5} parent=0
    #allocation3 [shape = 'u8[1024]{0}', space=vmem, size = 0x400, scoped, tag = 'output window, operand 0, single buffered']
    #allocation4 [shape = 's32[2]{0}', space=sflag, size = 0x8, scoped, tag = 'scoped memory for lenet_forward.5']
    %10 = vsyncpa [#allocation4], 0
    loop: start=0, step=1, limit=4
    $region2: #{lenet_forward.5} parent=1 // loop_pre_header
      _
    $region3: #{lenet_forward.5} parent=1 // loop_header
      %s12 = sphi 0, %s16
      %p13 = scmp.ge.s32.totalorder %s12, 4
      %s22 = sphi 0, %s24
      %s25 = sphi 0, %s22
      %s26 = sphi 0, %s25
      %s42 = sphi 0, %s26
      %s48 = sphi 0, %s50
      %s51 = sphi 0, %s48
      %s52 = sphi 0, %s51
      %s68 = sphi 0, %s52
      %s72 = sphi 0, %s72
      %s74 = sphi 0, %s72
      %s75 = sphi 0, %s74
      %s89 = sphi 0, %s75
      %s93 = sphi 0, %s93
      %s95 = sphi 0, %s93
      %s96 = sphi 0, %s95
      %s110 = sphi 0, %s96
      %s114 = sphi 0, %s114
      %s116 = sphi 0, %s114
      %s117 = sphi 0, %s116
      %s131 = sphi 0, %s117
      %s135 = sphi 0, %s135
      %s137 = sphi 0, %s135
      %s138 = sphi 0, %s137
      %s152 = sphi 0, %s138
    $region4: #{lenet_forward.5} parent=1 // loop_header_branch
      %15 = sbr.rel (%p13) target = $region8
    $region5: #{lenet_forward.5} parent=1 // loop_body
      %s17 = ssub.s32 %s12, 1
      %s18 = ssub.s32 %s12, 2
      %s19 = sadd.s32 %s12, 1
      %s20 = ssub.s32 %s12, %s19
      %p21 = scmp.eq.s32.totalorder %s20, 0
      %s23 = sadd.s32 %s22, 1
      %s24 = scalar_select %p21, %s22, %s23
      %p27 = pneg %p21
      %p28 = scmp.eq.s32.totalorder %s12, 1
      %p29 = por %p27, %p28
      %p30 = scmp.ne.s32.totalorder %s22, %s25
      %p31 = scmp.eq.s32.totalorder %s12, 0
      %p32 = por %p30, %p31
      %p33 = scmp.ne.s32.totalorder %s22, %s25
      %p34 = scmp.eq.s32.totalorder %s17, 1
      %p35 = por %p33, %p34
      %p36 = scmp.ne.s32.totalorder %s25, %s26
      %p37 = scmp.eq.s32.totalorder %s17, 0
      %p38 = por %p36, %p37
      %p39 = scmp.ne.s32.totalorder %s25, %s26
      %p40 = scmp.eq.s32.totalorder %s18, 1
      %p41 = por %p39, %p40
      %p43 = scmp.ne.s32.totalorder %s26, %s42
      %p44 = scmp.eq.s32.totalorder %s18, 0
      %p45 = por %p43, %p44
      %s46 = ssub.s32 %s12, %s19
      %p47 = scmp.eq.s32.totalorder %s46, 0
      %s49 = sadd.s32 %s48, 1
      %s50 = scalar_select %p47, %s48, %s49
      %p53 = pneg %p47
      %p54 = scmp.eq.s32.totalorder %s12, 1
      %p55 = por %p53, %p54
      %p56 = scmp.ne.s32.totalorder %s48, %s51
      %p57 = scmp.eq.s32.totalorder %s12, 0
      %p58 = por %p56, %p57
      %p59 = scmp.ne.s32.totalorder %s48, %s51
      %p60 = scmp.eq.s32.totalorder %s17, 1
      %p61 = por %p59, %p60
      %p62 = scmp.ne.s32.totalorder %s51, %s52
      %p63 = scmp.eq.s32.totalorder %s17, 0
      %p64 = por %p62, %p63
      %p65 = scmp.ne.s32.totalorder %s51, %s52
      %p66 = scmp.eq.s32.totalorder %s18, 1
      %p67 = por %p65, %p66
      %p69 = scmp.ne.s32.totalorder %s52, %s68
      %p70 = scmp.eq.s32.totalorder %s18, 0
      %p71 = por %p69, %p70
      %s73 = sadd.s32 %s72, 1
      %p76 = scmp.eq.s32.totalorder %s12, 1
      %p77 = scmp.ne.s32.totalorder %s72, %s74
      %p78 = scmp.eq.s32.totalorder %s12, 0
      %p79 = por %p77, %p78
      %p80 = scmp.ne.s32.totalorder %s72, %s74
      %p81 = scmp.eq.s32.totalorder %s17, 1
      %p82 = por %p80, %p81
      %p83 = scmp.ne.s32.totalorder %s74, %s75
      %p84 = scmp.eq.s32.totalorder %s17, 0
      %p85 = por %p83, %p84
      %p86 = scmp.ne.s32.totalorder %s74, %s75
      %p87 = scmp.eq.s32.totalorder %s18, 1
      %p88 = por %p86, %p87
      %p90 = scmp.ne.s32.totalorder %s75, %s89
      %p91 = scmp.eq.s32.totalorder %s18, 0
      %p92 = por %p90, %p91
      %s94 = sadd.s32 %s93, 1
      %p97 = scmp.eq.s32.totalorder %s12, 1
      %p98 = scmp.ne.s32.totalorder %s93, %s95
      %p99 = scmp.eq.s32.totalorder %s12, 0
      %p100 = por %p98, %p99
      %p101 = scmp.ne.s32.totalorder %s93, %s95
      %p102 = scmp.eq.s32.totalorder %s17, 1
      %p103 = por %p101, %p102
      %p104 = scmp.ne.s32.totalorder %s95, %s96
      %p105 = scmp.eq.s32.totalorder %s17, 0
      %p106 = por %p104, %p105
      %p107 = scmp.ne.s32.totalorder %s95, %s96
      %p108 = scmp.eq.s32.totalorder %s18, 1
      %p109 = por %p107, %p108
      %p111 = scmp.ne.s32.totalorder %s96, %s110
      %p112 = scmp.eq.s32.totalorder %s18, 0
      %p113 = por %p111, %p112
      %s115 = sadd.s32 %s114, 1
      %p118 = scmp.eq.s32.totalorder %s12, 1
      %p119 = scmp.ne.s32.totalorder %s114, %s116
      %p120 = scmp.eq.s32.totalorder %s12, 0
      %p121 = por %p119, %p120
      %p122 = scmp.ne.s32.totalorder %s114, %s116
      %p123 = scmp.eq.s32.totalorder %s17, 1
      %p124 = por %p122, %p123
      %p125 = scmp.ne.s32.totalorder %s116, %s117
      %p126 = scmp.eq.s32.totalorder %s17, 0
      %p127 = por %p125, %p126
      %p128 = scmp.ne.s32.totalorder %s116, %s117
      %p129 = scmp.eq.s32.totalorder %s18, 1
      %p130 = por %p128, %p129
      %p132 = scmp.ne.s32.totalorder %s117, %s131
      %p133 = scmp.eq.s32.totalorder %s18, 0
      %p134 = por %p132, %p133
      %s136 = sadd.s32 %s135, 1
      %p139 = scmp.eq.s32.totalorder %s12, 1
      %p140 = scmp.ne.s32.totalorder %s135, %s137
      %p141 = scmp.eq.s32.totalorder %s12, 0
      %p142 = por %p140, %p141
      %p143 = scmp.ne.s32.totalorder %s135, %s137
      %p144 = scmp.eq.s32.totalorder %s17, 1
      %p145 = por %p143, %p144
      %p146 = scmp.ne.s32.totalorder %s137, %s138
      %p147 = scmp.eq.s32.totalorder %s17, 0
      %p148 = por %p146, %p147
      %p149 = scmp.ne.s32.totalorder %s137, %s138
      %p150 = scmp.eq.s32.totalorder %s18, 1
      %p151 = por %p149, %p150
      %p153 = scmp.ne.s32.totalorder %s138, %s152
      %p154 = scmp.eq.s32.totalorder %s18, 0
      %p155 = por %p153, %p154
      %p156 = scmp.le.s32.totalorder 1, %s12
      %p157 = scmp.lt.s32.totalorder %s12, 3
      %p158 = pnand %p156, %p157
      %p159 = pneg %p158
      // Predicated region
      $region9: #{lenet_forward.5} parent=5 // pred_check
        _
      $region10: #{lenet_forward.5} parent=5 // pred_check_branch
        %161 = sbr.rel (%p158) target = $region12
      $region11: #{lenet_forward.5} parent=5 // pred_region
        %s162 = ssub.s32 %s12, 1
        // Predicated region
        $region13: #{lenet_forward.5} parent=11 // pred_check
          %p163 = pneg %p85
        $region14: #{lenet_forward.5} parent=11 // pred_check_branch
          %165 = sbr.rel (%p163) target = $region16
        $region15: #{lenet_forward.5} parent=11 // pred_region
          _
        $region16: #{lenet_forward.5} parent=11 // pred_fallthru
          _
        // Predicated region
        $region17: #{lenet_forward.5} parent=11 // pred_check
          %p166 = pneg %p106
        $region18: #{lenet_forward.5} parent=11 // pred_check_branch
          %168 = sbr.rel (%p166) target = $region20
        $region19: #{lenet_forward.5} parent=11 // pred_region
          _
        $region20: #{lenet_forward.5} parent=11 // pred_fallthru
          _
        // Predicated region
        $region21: #{lenet_forward.5} parent=11 // pred_check
          %p169 = pneg %p127
        $region22: #{lenet_forward.5} parent=11 // pred_check_branch
          %171 = sbr.rel (%p169) target = $region24
        $region23: #{lenet_forward.5} parent=11 // pred_region
          _
        $region24: #{lenet_forward.5} parent=11 // pred_fallthru
          _
      $region12: #{lenet_forward.5} parent=5 // pred_fallthru
        _
      %p172 = scmp.lt.s32.totalorder %s12, 2
      // Predicated region
      $region25: #{lenet_forward.5} parent=5 // pred_check
        %p173 = pneg %p172
      $region26: #{lenet_forward.5} parent=5 // pred_check_branch
        %175 = sbr.rel (%p173) target = $region28
      $region27: #{lenet_forward.5} parent=5 // pred_region
        // Predicated region
        $region29: #{lenet_forward.5} parent=27 // pred_check
          %p176 = pneg %p32
        $region30: #{lenet_forward.5} parent=27 // pred_check_branch
          %178 = sbr.rel (%p176) target = $region32
        $region31: #{lenet_forward.5} parent=27 // pred_region
          %s179 = smul.u32 14, %s12
          %p180 = scmp.lt.s32.totalorder %s179, 27
          %s181 = scalar_select %p180, %s179, 27
          %s182 = scalar_lea.vmem %s0, %s181
          %s183 = smul.u32 14, %s12
        $region32: #{lenet_forward.5} parent=27 // pred_fallthru
          _
        // Predicated region
        $region33: #{lenet_forward.5} parent=27 // pred_check
          %p184 = pneg %p58
        $region34: #{lenet_forward.5} parent=27 // pred_check_branch
          %186 = sbr.rel (%p184) target = $region36
        $region35: #{lenet_forward.5} parent=27 // pred_region
          %s187 = smul.u32 224, %s12
          %p188 = scmp.lt.s32.totalorder %s187, 447
          %s189 = scalar_select %p188, %s187, 447
          %s190 = smul.addr %s189, 8
          %s191 = smul.addr %s190, 4
          %s192 = scalar_lea.vmem %s1, %s191
          %s193 = smul.u32 224, %s12
        $region36: #{lenet_forward.5} parent=27 // pred_fallthru
          _
      $region28: #{lenet_forward.5} parent=5 // pred_fallthru
        _
      %p194 = scmp.le.s32.totalorder 1, %s12
      %p195 = scmp.lt.s32.totalorder %s12, 3
      %p196 = pnand %p194, %p195
      %p197 = pneg %p196
      // Predicated region
      $region37: #{lenet_forward.5} parent=5 // pred_check
        _
      $region38: #{lenet_forward.5} parent=5 // pred_check_branch
        %199 = sbr.rel (%p196) target = $region40
      $region39: #{lenet_forward.5} parent=5 // pred_region
        %s200 = ssub.s32 %s12, 1
        %s201 = smul.u32 14, %s17
        %p202 = scmp.lt.s32.totalorder %s201, 27
        %s203 = scalar_select %p202, %s201, 27
        %s204 = scalar_lea.vmem %s0, %s203
        %p205 = pneg %p38
        %p206 = pneg %p35
        %s207 = smul.u32 224, %s17
        %p208 = scmp.lt.s32.totalorder %s207, 447
        %s209 = scalar_select %p208, %s207, 447
        %s210 = smul.addr %s209, 8
        %s211 = smul.addr %s210, 4
        %s212 = scalar_lea.vmem %s1, %s211
        %p213 = pneg %p64
        %p214 = pneg %p61
        %p215 = pneg %p85
        %p216 = pneg %p82
        %p217 = pneg %p106
        %p218 = pneg %p103
        %p219 = pneg %p127
        %p220 = pneg %p124
        %p221 = pneg %p148
        %p222 = pneg %p145
        %s223 = smul.u32 14, %s17
        %p224 = scmp.lt.s32.totalorder %s223, 27
        %s225 = scalar_select %p224, %s223, 27
        %s226 = scalar_lea.vmem %s0, %s225
        %s227 = smul.u32 14, %s17
        %s228 = smul.u32 224, %s17
        %p229 = scmp.lt.s32.totalorder %s228, 447
        %s230 = scalar_select %p229, %s228, 447
        %s231 = smul.addr %s230, 8
        %s232 = smul.addr %s231, 4
        %s233 = scalar_lea.vmem %s1, %s232
        %s234 = smul.u32 224, %s17
        %p236 = scmp.eq.s32.totalorder %s17, 0
        // Predicated region
        $region41: #{lenet_forward.5} parent=39 // pred_check
          %p237 = pneg %p236
        $region42: #{lenet_forward.5} parent=39 // pred_check_branch
          %239 = sbr.rel (%p237) target = $region44
        $region43: #{lenet_forward.5} parent=39 // pred_region
          %240 = vst [vmem:[#allocation2] sm:$0xff] 0.0
          %241 = vst [vmem:[#allocation2 + $0x8] sm:$0xff] 0.0
        $region44: #{lenet_forward.5} parent=39 // pred_fallthru
          _
        %v242 = vld [vmem:[#allocation2] sm:$0xff]
        %v243 = vld [vmem:[#allocation2 + $0x8] sm:$0xff]
        %v244 = vld [vmem:[%s226] sm:$0xff]
        %v245 = vld [vmem:[%s226 + $0x8] sm:$0x3f]
        %v246 = vld [vmem:[%s233] sm:$0xff]
        %v247 = vld [vmem:[%s233 + $0x8] sm:$0xff]
        %v248 = vld [vmem:[%s233 + $0x10] sm:$0xff]
        %v249 = vld [vmem:[%s233 + $0x18] sm:$0xff]
        %v250 = vld [vmem:[%s233 + $0x20] sm:$0xff]
        %v251 = vld [vmem:[%s233 + $0x28] sm:$0xff]
        %v252 = vld [vmem:[%s233 + $0x30] sm:$0xff]
        %v253 = vld [vmem:[%s233 + $0x38] sm:$0xff]
        %v254 = vld [vmem:[%s233 + $0x40] sm:$0xff]
        %v255 = vld [vmem:[%s233 + $0x48] sm:$0xff]
        %v256 = vld [vmem:[%s233 + $0x50] sm:$0xff]
        %v257 = vld [vmem:[%s233 + $0x58] sm:$0xff]
        %v258 = vld [vmem:[%s233 + $0x60] sm:$0xff]
        %v259 = vld [vmem:[%s233 + $0x68] sm:$0xff]
        %v260 = vld [vmem:[%s233 + $0x70] sm:$0xff]
        %v261 = vld [vmem:[%s233 + $0x78] sm:$0xff]
        %v262 = vld [vmem:[%s233 + $0x80] sm:$0xff]
        %v263 = vld [vmem:[%s233 + $0x88] sm:$0xff]
        %v264 = vld [vmem:[%s233 + $0x90] sm:$0xff]
        %v265 = vld [vmem:[%s233 + $0x98] sm:$0xff]
        %v266 = vld [vmem:[%s233 + $0xa0] sm:$0xff]
        %v267 = vld [vmem:[%s233 + $0xa8] sm:$0xff]
        %v268 = vld [vmem:[%s233 + $0xb0] sm:$0xff]
        %v269 = vld [vmem:[%s233 + $0xb8] sm:$0xff]
        %v270 = vld [vmem:[%s233 + $0xc0] sm:$0xff]
        %v271 = vld [vmem:[%s233 + $0xc8] sm:$0xff]
        %v272 = vld [vmem:[%s233 + $0xd0] sm:$0xff]
        %v273 = vld [vmem:[%s233 + $0xd8] sm:$0xff]
        %v274 = vld [vmem:[%s233 + $0xe0] sm:$0xff]
        %v275 = vld [vmem:[%s233 + $0xe8] sm:$0xff]
        %v276 = vld [vmem:[%s233 + $0xf0] sm:$0xff]
        %v277 = vld [vmem:[%s233 + $0xf8] sm:$0xff]
        %v278 = vld [vmem:[%s233 + $0x100] sm:$0xff]
        %v279 = vld [vmem:[%s233 + $0x108] sm:$0xff]
        %v280 = vld [vmem:[%s233 + $0x110] sm:$0xff]
        %v281 = vld [vmem:[%s233 + $0x118] sm:$0xff]
        %v282 = vld [vmem:[%s233 + $0x120] sm:$0xff]
        %v283 = vld [vmem:[%s233 + $0x128] sm:$0xff]
        %v284 = vld [vmem:[%s233 + $0x130] sm:$0xff]
        %v285 = vld [vmem:[%s233 + $0x138] sm:$0xff]
        %v286 = vld [vmem:[%s233 + $0x140] sm:$0xff]
        %v287 = vld [vmem:[%s233 + $0x148] sm:$0xff]
        %v288 = vld [vmem:[%s233 + $0x150] sm:$0xff]
        %v289 = vld [vmem:[%s233 + $0x158] sm:$0xff]
        %v290 = vld [vmem:[%s233 + $0x160] sm:$0xff]
        %v291 = vld [vmem:[%s233 + $0x168] sm:$0xff]
        %v292 = vld [vmem:[%s233 + $0x170] sm:$0xff]
        %v293 = vld [vmem:[%s233 + $0x178] sm:$0xff]
        %v294 = vld [vmem:[%s233 + $0x180] sm:$0xff]
        %v295 = vld [vmem:[%s233 + $0x188] sm:$0xff]
        %v296 = vld [vmem:[%s233 + $0x190] sm:$0xff]
        %v297 = vld [vmem:[%s233 + $0x198] sm:$0xff]
        %v298 = vld [vmem:[%s233 + $0x1a0] sm:$0xff]
        %v299 = vld [vmem:[%s233 + $0x1a8] sm:$0xff]
        %v300 = vld [vmem:[%s233 + $0x1b0] sm:$0xff]
        %v301 = vld [vmem:[%s233 + $0x1b8] sm:$0xff]
        %v302 = vld [vmem:[%s233 + $0x1c0] sm:$0xff]
        %v303 = vld [vmem:[%s233 + $0x1c8] sm:$0xff]
        %v304 = vld [vmem:[%s233 + $0x1d0] sm:$0xff]
        %v305 = vld [vmem:[%s233 + $0x1d8] sm:$0xff]
        %v306 = vld [vmem:[%s233 + $0x1e0] sm:$0xff]
        %v307 = vld [vmem:[%s233 + $0x1e8] sm:$0xff]
        %v308 = vld [vmem:[%s233 + $0x1f0] sm:$0xff]
        %v309 = vld [vmem:[%s233 + $0x1f8] sm:$0xff]
        %v310 = vld [vmem:[%s233 + $0x200] sm:$0xff]
        %v311 = vld [vmem:[%s233 + $0x208] sm:$0xff]
        %v312 = vld [vmem:[%s233 + $0x210] sm:$0xff]
        %v313 = vld [vmem:[%s233 + $0x218] sm:$0xff]
        %v314 = vld [vmem:[%s233 + $0x220] sm:$0xff]
        %v315 = vld [vmem:[%s233 + $0x228] sm:$0xff]
        %v316 = vld [vmem:[%s233 + $0x230] sm:$0xff]
        %v317 = vld [vmem:[%s233 + $0x238] sm:$0xff]
        %v318 = vld [vmem:[%s233 + $0x240] sm:$0xff]
        %v319 = vld [vmem:[%s233 + $0x248] sm:$0xff]
        %v320 = vld [vmem:[%s233 + $0x250] sm:$0xff]
        %v321 = vld [vmem:[%s233 + $0x258] sm:$0xff]
        %v322 = vld [vmem:[%s233 + $0x260] sm:$0xff]
        %v323 = vld [vmem:[%s233 + $0x268] sm:$0xff]
        %v324 = vld [vmem:[%s233 + $0x270] sm:$0xff]
        %v325 = vld [vmem:[%s233 + $0x278] sm:$0xff]
        %v326 = vld [vmem:[%s233 + $0x280] sm:$0xff]
        %v327 = vld [vmem:[%s233 + $0x288] sm:$0xff]
        %v328 = vld [vmem:[%s233 + $0x290] sm:$0xff]
        %v329 = vld [vmem:[%s233 + $0x298] sm:$0xff]
        %v330 = vld [vmem:[%s233 + $0x2a0] sm:$0xff]
        %v331 = vld [vmem:[%s233 + $0x2a8] sm:$0xff]
        %v332 = vld [vmem:[%s233 + $0x2b0] sm:$0xff]
        %v333 = vld [vmem:[%s233 + $0x2b8] sm:$0xff]
        %v334 = vld [vmem:[%s233 + $0x2c0] sm:$0xff]
        %v335 = vld [vmem:[%s233 + $0x2c8] sm:$0xff]
        %v336 = vld [vmem:[%s233 + $0x2d0] sm:$0xff]
        %v337 = vld [vmem:[%s233 + $0x2d8] sm:$0xff]
        %v338 = vld [vmem:[%s233 + $0x2e0] sm:$0xff]
        %v339 = vld [vmem:[%s233 + $0x2e8] sm:$0xff]
        %v340 = vld [vmem:[%s233 + $0x2f0] sm:$0xff]
        %v341 = vld [vmem:[%s233 + $0x2f8] sm:$0xff]
        %v342 = vld [vmem:[%s233 + $0x300] sm:$0xff]
        %v343 = vld [vmem:[%s233 + $0x308] sm:$0xff]
        %v344 = vld [vmem:[%s233 + $0x310] sm:$0xff]
        %v345 = vld [vmem:[%s233 + $0x318] sm:$0xff]
        %v346 = vld [vmem:[%s233 + $0x320] sm:$0xff]
        %v347 = vld [vmem:[%s233 + $0x328] sm:$0xff]
        %v348 = vld [vmem:[%s233 + $0x330] sm:$0xff]
        %v349 = vld [vmem:[%s233 + $0x338] sm:$0xff]
        %v350 = vld [vmem:[%s233 + $0x340] sm:$0xff]
        %v351 = vld [vmem:[%s233 + $0x348] sm:$0xff]
        %v352 = vld [vmem:[%s233 + $0x350] sm:$0xff]
        %v353 = vld [vmem:[%s233 + $0x358] sm:$0xff]
        %v354 = vld [vmem:[%s233 + $0x360] sm:$0xff]
        %v355 = vld [vmem:[%s233 + $0x368] sm:$0xff]
        %v356 = vld [vmem:[%s233 + $0x370] sm:$0xff]
        %v357 = vld [vmem:[%s233 + $0x378] sm:$0xff]
        %v358 = vld [vmem:[%s233 + $0x380] sm:$0xff]
        %v359 = vld [vmem:[%s233 + $0x388] sm:$0xff]
        %v360 = vld [vmem:[%s233 + $0x390] sm:$0xff]
        %v361 = vld [vmem:[%s233 + $0x398] sm:$0xff]
        %v362 = vld [vmem:[%s233 + $0x3a0] sm:$0xff]
        %v363 = vld [vmem:[%s233 + $0x3a8] sm:$0xff]
        %v364 = vld [vmem:[%s233 + $0x3b0] sm:$0xff]
        %v365 = vld [vmem:[%s233 + $0x3b8] sm:$0xff]
        %v366 = vld [vmem:[%s233 + $0x3c0] sm:$0xff]
        %v367 = vld [vmem:[%s233 + $0x3c8] sm:$0xff]
        %v368 = vld [vmem:[%s233 + $0x3d0] sm:$0xff]
        %v369 = vld [vmem:[%s233 + $0x3d8] sm:$0xff]
        %v370 = vld [vmem:[%s233 + $0x3e0] sm:$0xff]
        %v371 = vld [vmem:[%s233 + $0x3e8] sm:$0xff]
        %v372 = vld [vmem:[%s233 + $0x3f0] sm:$0xff]
        %v373 = vld [vmem:[%s233 + $0x3f8] sm:$0xff]
        %v374 = vld [vmem:[%s233 + $0x400] sm:$0xff]
        %v375 = vld [vmem:[%s233 + $0x408] sm:$0xff]
        %v376 = vld [vmem:[%s233 + $0x410] sm:$0xff]
        %v377 = vld [vmem:[%s233 + $0x418] sm:$0xff]
        %v378 = vld [vmem:[%s233 + $0x420] sm:$0xff]
        %v379 = vld [vmem:[%s233 + $0x428] sm:$0xff]
        %v380 = vld [vmem:[%s233 + $0x430] sm:$0xff]
        %v381 = vld [vmem:[%s233 + $0x438] sm:$0xff]
        %v382 = vld [vmem:[%s233 + $0x440] sm:$0xff]
        %v383 = vld [vmem:[%s233 + $0x448] sm:$0xff]
        %v384 = vld [vmem:[%s233 + $0x450] sm:$0xff]
        %v385 = vld [vmem:[%s233 + $0x458] sm:$0xff]
        %v386 = vld [vmem:[%s233 + $0x460] sm:$0xff]
        %v387 = vld [vmem:[%s233 + $0x468] sm:$0xff]
        %v388 = vld [vmem:[%s233 + $0x470] sm:$0xff]
        %v389 = vld [vmem:[%s233 + $0x478] sm:$0xff]
        %v390 = vld [vmem:[%s233 + $0x480] sm:$0xff]
        %v391 = vld [vmem:[%s233 + $0x488] sm:$0xff]
        %v392 = vld [vmem:[%s233 + $0x490] sm:$0xff]
        %v393 = vld [vmem:[%s233 + $0x498] sm:$0xff]
        %v394 = vld [vmem:[%s233 + $0x4a0] sm:$0xff]
        %v395 = vld [vmem:[%s233 + $0x4a8] sm:$0xff]
        %v396 = vld [vmem:[%s233 + $0x4b0] sm:$0xff]
        %v397 = vld [vmem:[%s233 + $0x4b8] sm:$0xff]
        %v398 = vld [vmem:[%s233 + $0x4c0] sm:$0xff]
        %v399 = vld [vmem:[%s233 + $0x4c8] sm:$0xff]
        %v400 = vld [vmem:[%s233 + $0x4d0] sm:$0xff]
        %v401 = vld [vmem:[%s233 + $0x4d8] sm:$0xff]
        %v402 = vld [vmem:[%s233 + $0x4e0] sm:$0xff]
        %v403 = vld [vmem:[%s233 + $0x4e8] sm:$0xff]
        %v404 = vld [vmem:[%s233 + $0x4f0] sm:$0xff]
        %v405 = vld [vmem:[%s233 + $0x4f8] sm:$0xff]
        %v406 = vld [vmem:[%s233 + $0x500] sm:$0xff]
        %v407 = vld [vmem:[%s233 + $0x508] sm:$0xff]
        %v408 = vld [vmem:[%s233 + $0x510] sm:$0xff]
        %v409 = vld [vmem:[%s233 + $0x518] sm:$0xff]
        %v410 = vld [vmem:[%s233 + $0x520] sm:$0xff]
        %v411 = vld [vmem:[%s233 + $0x528] sm:$0xff]
        %v412 = vld [vmem:[%s233 + $0x530] sm:$0xff]
        %v413 = vld [vmem:[%s233 + $0x538] sm:$0xff]
        %v414 = vld [vmem:[%s233 + $0x540] sm:$0xff]
        %v415 = vld [vmem:[%s233 + $0x548] sm:$0xff]
        %v416 = vld [vmem:[%s233 + $0x550] sm:$0xff]
        %v417 = vld [vmem:[%s233 + $0x558] sm:$0xff]
        %v418 = vld [vmem:[%s233 + $0x560] sm:$0xff]
        %v419 = vld [vmem:[%s233 + $0x568] sm:$0xff]
        %v420 = vld [vmem:[%s233 + $0x570] sm:$0xff]
        %v421 = vld [vmem:[%s233 + $0x578] sm:$0xff]
        %v422 = vld [vmem:[%s233 + $0x580] sm:$0xff]
        %v423 = vld [vmem:[%s233 + $0x588] sm:$0xff]
        %v424 = vld [vmem:[%s233 + $0x590] sm:$0xff]
        %v425 = vld [vmem:[%s233 + $0x598] sm:$0xff]
        %v426 = vld [vmem:[%s233 + $0x5a0] sm:$0xff]
        %v427 = vld [vmem:[%s233 + $0x5a8] sm:$0xff]
        %v428 = vld [vmem:[%s233 + $0x5b0] sm:$0xff]
        %v429 = vld [vmem:[%s233 + $0x5b8] sm:$0xff]
        %v430 = vld [vmem:[%s233 + $0x5c0] sm:$0xff]
        %v431 = vld [vmem:[%s233 + $0x5c8] sm:$0xff]
        %v432 = vld [vmem:[%s233 + $0x5d0] sm:$0xff]
        %v433 = vld [vmem:[%s233 + $0x5d8] sm:$0xff]
        %v434 = vld [vmem:[%s233 + $0x5e0] sm:$0xff]
        %v435 = vld [vmem:[%s233 + $0x5e8] sm:$0xff]
        %v436 = vld [vmem:[%s233 + $0x5f0] sm:$0xff]
        %v437 = vld [vmem:[%s233 + $0x5f8] sm:$0xff]
        %v438 = vld [vmem:[%s233 + $0x600] sm:$0xff]
        %v439 = vld [vmem:[%s233 + $0x608] sm:$0xff]
        %v440 = vld [vmem:[%s233 + $0x610] sm:$0xff]
        %v441 = vld [vmem:[%s233 + $0x618] sm:$0xff]
        %v442 = vld [vmem:[%s233 + $0x620] sm:$0xff]
        %v443 = vld [vmem:[%s233 + $0x628] sm:$0xff]
        %v444 = vld [vmem:[%s233 + $0x630] sm:$0xff]
        %v445 = vld [vmem:[%s233 + $0x638] sm:$0xff]
        %v446 = vld [vmem:[%s233 + $0x640] sm:$0xff]
        %v447 = vld [vmem:[%s233 + $0x648] sm:$0xff]
        %v448 = vld [vmem:[%s233 + $0x650] sm:$0xff]
        %v449 = vld [vmem:[%s233 + $0x658] sm:$0xff]
        %v450 = vld [vmem:[%s233 + $0x660] sm:$0xff]
        %v451 = vld [vmem:[%s233 + $0x668] sm:$0xff]
        %v452 = vld [vmem:[%s233 + $0x670] sm:$0xff]
        %v453 = vld [vmem:[%s233 + $0x678] sm:$0xff]
        %v454 = vld [vmem:[%s233 + $0x680] sm:$0xff]
        %v455 = vld [vmem:[%s233 + $0x688] sm:$0xff]
        %v456 = vld [vmem:[%s233 + $0x690] sm:$0xff]
        %v457 = vld [vmem:[%s233 + $0x698] sm:$0xff]
        %v458 = vld [vmem:[%s233 + $0x6a0] sm:$0xff]
        %v459 = vld [vmem:[%s233 + $0x6a8] sm:$0xff]
        %v460 = vld [vmem:[%s233 + $0x6b0] sm:$0xff]
        %v461 = vld [vmem:[%s233 + $0x6b8] sm:$0xff]
        %v462 = vld [vmem:[%s233 + $0x6c0] sm:$0xff]
        %v463 = vld [vmem:[%s233 + $0x6c8] sm:$0xff]
        %v464 = vld [vmem:[%s233 + $0x6d0] sm:$0xff]
        %v465 = vld [vmem:[%s233 + $0x6d8] sm:$0xff]
        %v466 = vld [vmem:[%s233 + $0x6e0] sm:$0xff]
        %v467 = vld [vmem:[%s233 + $0x6e8] sm:$0xff]
        %v468 = vld [vmem:[%s233 + $0x6f0] sm:$0xff]
        %v469 = vld [vmem:[%s233 + $0x6f8] sm:$0xff]
        %v470 = vld [vmem:[%s233 + $0x700] sm:$0xff]
        %v471 = vld [vmem:[%s233 + $0x708] sm:$0xff]
        %v472 = vld [vmem:[%s233 + $0x710] sm:$0xff]
        %v473 = vld [vmem:[%s233 + $0x718] sm:$0xff]
        %v474 = vld [vmem:[%s233 + $0x720] sm:$0xff]
        %v475 = vld [vmem:[%s233 + $0x728] sm:$0xff]
        %v476 = vld [vmem:[%s233 + $0x730] sm:$0xff]
        %v477 = vld [vmem:[%s233 + $0x738] sm:$0xff]
        %v478 = vld [vmem:[%s233 + $0x740] sm:$0xff]
        %v479 = vld [vmem:[%s233 + $0x748] sm:$0xff]
        %v480 = vld [vmem:[%s233 + $0x750] sm:$0xff]
        %v481 = vld [vmem:[%s233 + $0x758] sm:$0xff]
        %v482 = vld [vmem:[%s233 + $0x760] sm:$0xff]
        %v483 = vld [vmem:[%s233 + $0x768] sm:$0xff]
        %v484 = vld [vmem:[%s233 + $0x770] sm:$0xff]
        %v485 = vld [vmem:[%s233 + $0x778] sm:$0xff]
        %v486 = vld [vmem:[%s233 + $0x780] sm:$0xff]
        %v487 = vld [vmem:[%s233 + $0x788] sm:$0xff]
        %v488 = vld [vmem:[%s233 + $0x790] sm:$0xff]
        %v489 = vld [vmem:[%s233 + $0x798] sm:$0xff]
        %v490 = vld [vmem:[%s233 + $0x7a0] sm:$0xff]
        %v491 = vld [vmem:[%s233 + $0x7a8] sm:$0xff]
        %v492 = vld [vmem:[%s233 + $0x7b0] sm:$0xff]
        %v493 = vld [vmem:[%s233 + $0x7b8] sm:$0xff]
        %v494 = vld [vmem:[%s233 + $0x7c0] sm:$0xff]
        %v495 = vld [vmem:[%s233 + $0x7c8] sm:$0xff]
        %v496 = vld [vmem:[%s233 + $0x7d0] sm:$0xff]
        %v497 = vld [vmem:[%s233 + $0x7d8] sm:$0xff]
        %v498 = vld [vmem:[%s233 + $0x7e0] sm:$0xff]
        %v499 = vld [vmem:[%s233 + $0x7e8] sm:$0xff]
        %v500 = vld [vmem:[%s233 + $0x7f0] sm:$0xff]
        %v501 = vld [vmem:[%s233 + $0x7f8] sm:$0xff]
        %v502 = vld [vmem:[%s233 + $0x800] sm:$0xff]
        %v503 = vld [vmem:[%s233 + $0x808] sm:$0xff]
        %v504 = vld [vmem:[%s233 + $0x810] sm:$0xff]
        %v505 = vld [vmem:[%s233 + $0x818] sm:$0xff]
        %v506 = vld [vmem:[%s233 + $0x820] sm:$0xff]
        %v507 = vld [vmem:[%s233 + $0x828] sm:$0xff]
        %v508 = vld [vmem:[%s233 + $0x830] sm:$0xff]
        %v509 = vld [vmem:[%s233 + $0x838] sm:$0xff]
        %v510 = vld [vmem:[%s233 + $0x840] sm:$0xff]
        %v511 = vld [vmem:[%s233 + $0x848] sm:$0xff]
        %v512 = vld [vmem:[%s233 + $0x850] sm:$0xff]
        %v513 = vld [vmem:[%s233 + $0x858] sm:$0xff]
        %v514 = vld [vmem:[%s233 + $0x860] sm:$0xff]
        %v515 = vld [vmem:[%s233 + $0x868] sm:$0xff]
        %v516 = vld [vmem:[%s233 + $0x870] sm:$0xff]
        %v517 = vld [vmem:[%s233 + $0x878] sm:$0xff]
        %v518 = vld [vmem:[%s233 + $0x880] sm:$0xff]
        %v519 = vld [vmem:[%s233 + $0x888] sm:$0xff]
        %v520 = vld [vmem:[%s233 + $0x890] sm:$0xff]
        %v521 = vld [vmem:[%s233 + $0x898] sm:$0xff]
        %v522 = vld [vmem:[%s233 + $0x8a0] sm:$0xff]
        %v523 = vld [vmem:[%s233 + $0x8a8] sm:$0xff]
        %v524 = vld [vmem:[%s233 + $0x8b0] sm:$0xff]
        %v525 = vld [vmem:[%s233 + $0x8b8] sm:$0xff]
        %v526 = vld [vmem:[%s233 + $0x8c0] sm:$0xff]
        %v527 = vld [vmem:[%s233 + $0x8c8] sm:$0xff]
        %v528 = vld [vmem:[%s233 + $0x8d0] sm:$0xff]
        %v529 = vld [vmem:[%s233 + $0x8d8] sm:$0xff]
        %v530 = vld [vmem:[%s233 + $0x8e0] sm:$0xff]
        %v531 = vld [vmem:[%s233 + $0x8e8] sm:$0xff]
        %v532 = vld [vmem:[%s233 + $0x8f0] sm:$0xff]
        %v533 = vld [vmem:[%s233 + $0x8f8] sm:$0xff]
        %v534 = vld [vmem:[%s233 + $0x900] sm:$0xff]
        %v535 = vld [vmem:[%s233 + $0x908] sm:$0xff]
        %v536 = vld [vmem:[%s233 + $0x910] sm:$0xff]
        %v537 = vld [vmem:[%s233 + $0x918] sm:$0xff]
        %v538 = vld [vmem:[%s233 + $0x920] sm:$0xff]
        %v539 = vld [vmem:[%s233 + $0x928] sm:$0xff]
        %v540 = vld [vmem:[%s233 + $0x930] sm:$0xff]
        %v541 = vld [vmem:[%s233 + $0x938] sm:$0xff]
        %v542 = vld [vmem:[%s233 + $0x940] sm:$0xff]
        %v543 = vld [vmem:[%s233 + $0x948] sm:$0xff]
        %v544 = vld [vmem:[%s233 + $0x950] sm:$0xff]
        %v545 = vld [vmem:[%s233 + $0x958] sm:$0xff]
        %v546 = vld [vmem:[%s233 + $0x960] sm:$0xff]
        %v547 = vld [vmem:[%s233 + $0x968] sm:$0xff]
        %v548 = vld [vmem:[%s233 + $0x970] sm:$0xff]
        %v549 = vld [vmem:[%s233 + $0x978] sm:$0xff]
        %v550 = vld [vmem:[%s233 + $0x980] sm:$0xff]
        %v551 = vld [vmem:[%s233 + $0x988] sm:$0xff]
        %v552 = vld [vmem:[%s233 + $0x990] sm:$0xff]
        %v553 = vld [vmem:[%s233 + $0x998] sm:$0xff]
        %v554 = vld [vmem:[%s233 + $0x9a0] sm:$0xff]
        %v555 = vld [vmem:[%s233 + $0x9a8] sm:$0xff]
        %v556 = vld [vmem:[%s233 + $0x9b0] sm:$0xff]
        %v557 = vld [vmem:[%s233 + $0x9b8] sm:$0xff]
        %v558 = vld [vmem:[%s233 + $0x9c0] sm:$0xff]
        %v559 = vld [vmem:[%s233 + $0x9c8] sm:$0xff]
        %v560 = vld [vmem:[%s233 + $0x9d0] sm:$0xff]
        %v561 = vld [vmem:[%s233 + $0x9d8] sm:$0xff]
        %v562 = vld [vmem:[%s233 + $0x9e0] sm:$0xff]
        %v563 = vld [vmem:[%s233 + $0x9e8] sm:$0xff]
        %v564 = vld [vmem:[%s233 + $0x9f0] sm:$0xff]
        %v565 = vld [vmem:[%s233 + $0x9f8] sm:$0xff]
        %v566 = vld [vmem:[%s233 + $0xa00] sm:$0xff]
        %v567 = vld [vmem:[%s233 + $0xa08] sm:$0xff]
        %v568 = vld [vmem:[%s233 + $0xa10] sm:$0xff]
        %v569 = vld [vmem:[%s233 + $0xa18] sm:$0xff]
        %v570 = vld [vmem:[%s233 + $0xa20] sm:$0xff]
        %v571 = vld [vmem:[%s233 + $0xa28] sm:$0xff]
        %v572 = vld [vmem:[%s233 + $0xa30] sm:$0xff]
        %v573 = vld [vmem:[%s233 + $0xa38] sm:$0xff]
        %v574 = vld [vmem:[%s233 + $0xa40] sm:$0xff]
        %v575 = vld [vmem:[%s233 + $0xa48] sm:$0xff]
        %v576 = vld [vmem:[%s233 + $0xa50] sm:$0xff]
        %v577 = vld [vmem:[%s233 + $0xa58] sm:$0xff]
        %v578 = vld [vmem:[%s233 + $0xa60] sm:$0xff]
        %v579 = vld [vmem:[%s233 + $0xa68] sm:$0xff]
        %v580 = vld [vmem:[%s233 + $0xa70] sm:$0xff]
        %v581 = vld [vmem:[%s233 + $0xa78] sm:$0xff]
        %v582 = vld [vmem:[%s233 + $0xa80] sm:$0xff]
        %v583 = vld [vmem:[%s233 + $0xa88] sm:$0xff]
        %v584 = vld [vmem:[%s233 + $0xa90] sm:$0xff]
        %v585 = vld [vmem:[%s233 + $0xa98] sm:$0xff]
        %v586 = vld [vmem:[%s233 + $0xaa0] sm:$0xff]
        %v587 = vld [vmem:[%s233 + $0xaa8] sm:$0xff]
        %v588 = vld [vmem:[%s233 + $0xab0] sm:$0xff]
        %v589 = vld [vmem:[%s233 + $0xab8] sm:$0xff]
        %v590 = vld [vmem:[%s233 + $0xac0] sm:$0xff]
        %v591 = vld [vmem:[%s233 + $0xac8] sm:$0xff]
        %v592 = vld [vmem:[%s233 + $0xad0] sm:$0xff]
        %v593 = vld [vmem:[%s233 + $0xad8] sm:$0xff]
        %v594 = vld [vmem:[%s233 + $0xae0] sm:$0xff]
        %v595 = vld [vmem:[%s233 + $0xae8] sm:$0xff]
        %v596 = vld [vmem:[%s233 + $0xaf0] sm:$0xff]
        %v597 = vld [vmem:[%s233 + $0xaf8] sm:$0xff]
        %v598 = vld [vmem:[%s233 + $0xb00] sm:$0xff]
        %v599 = vld [vmem:[%s233 + $0xb08] sm:$0xff]
        %v600 = vld [vmem:[%s233 + $0xb10] sm:$0xff]
        %v601 = vld [vmem:[%s233 + $0xb18] sm:$0xff]
        %v602 = vld [vmem:[%s233 + $0xb20] sm:$0xff]
        %v603 = vld [vmem:[%s233 + $0xb28] sm:$0xff]
        %v604 = vld [vmem:[%s233 + $0xb30] sm:$0xff]
        %v605 = vld [vmem:[%s233 + $0xb38] sm:$0xff]
        %v606 = vld [vmem:[%s233 + $0xb40] sm:$0xff]
        %v607 = vld [vmem:[%s233 + $0xb48] sm:$0xff]
        %v608 = vld [vmem:[%s233 + $0xb50] sm:$0xff]
        %v609 = vld [vmem:[%s233 + $0xb58] sm:$0xff]
        %v610 = vld [vmem:[%s233 + $0xb60] sm:$0xff]
        %v611 = vld [vmem:[%s233 + $0xb68] sm:$0xff]
        %v612 = vld [vmem:[%s233 + $0xb70] sm:$0xff]
        %v613 = vld [vmem:[%s233 + $0xb78] sm:$0xff]
        %v614 = vld [vmem:[%s233 + $0xb80] sm:$0xff]
        %v615 = vld [vmem:[%s233 + $0xb88] sm:$0xff]
        %v616 = vld [vmem:[%s233 + $0xb90] sm:$0xff]
        %v617 = vld [vmem:[%s233 + $0xb98] sm:$0xff]
        %v618 = vld [vmem:[%s233 + $0xba0] sm:$0xff]
        %v619 = vld [vmem:[%s233 + $0xba8] sm:$0xff]
        %v620 = vld [vmem:[%s233 + $0xbb0] sm:$0xff]
        %v621 = vld [vmem:[%s233 + $0xbb8] sm:$0xff]
        %v622 = vld [vmem:[%s233 + $0xbc0] sm:$0xff]
        %v623 = vld [vmem:[%s233 + $0xbc8] sm:$0xff]
        %v624 = vld [vmem:[%s233 + $0xbd0] sm:$0xff]
        %v625 = vld [vmem:[%s233 + $0xbd8] sm:$0xff]
        %v626 = vld [vmem:[%s233 + $0xbe0] sm:$0xff]
        %v627 = vld [vmem:[%s233 + $0xbe8] sm:$0xff]
        %v628 = vld [vmem:[%s233 + $0xbf0] sm:$0xff]
        %v629 = vld [vmem:[%s233 + $0xbf8] sm:$0xff]
        %v630 = vld [vmem:[%s233 + $0xc00] sm:$0xff]
        %v631 = vld [vmem:[%s233 + $0xc08] sm:$0xff]
        %v632 = vld [vmem:[%s233 + $0xc10] sm:$0xff]
        %v633 = vld [vmem:[%s233 + $0xc18] sm:$0xff]
        %v634 = vld [vmem:[%s233 + $0xc20] sm:$0xff]
        %v635 = vld [vmem:[%s233 + $0xc28] sm:$0xff]
        %v636 = vld [vmem:[%s233 + $0xc30] sm:$0xff]
        %v637 = vld [vmem:[%s233 + $0xc38] sm:$0xff]
        %v638 = vld [vmem:[%s233 + $0xc40] sm:$0xff]
        %v639 = vld [vmem:[%s233 + $0xc48] sm:$0xff]
        %v640 = vld [vmem:[%s233 + $0xc50] sm:$0xff]
        %v641 = vld [vmem:[%s233 + $0xc58] sm:$0xff]
        %v642 = vld [vmem:[%s233 + $0xc60] sm:$0xff]
        %v643 = vld [vmem:[%s233 + $0xc68] sm:$0xff]
        %v644 = vld [vmem:[%s233 + $0xc70] sm:$0xff]
        %v645 = vld [vmem:[%s233 + $0xc78] sm:$0xff]
        %v646 = vld [vmem:[%s233 + $0xc80] sm:$0xff]
        %v647 = vld [vmem:[%s233 + $0xc88] sm:$0xff]
        %v648 = vld [vmem:[%s233 + $0xc90] sm:$0xff]
        %v649 = vld [vmem:[%s233 + $0xc98] sm:$0xff]
        %v650 = vld [vmem:[%s233 + $0xca0] sm:$0xff]
        %v651 = vld [vmem:[%s233 + $0xca8] sm:$0xff]
        %v652 = vld [vmem:[%s233 + $0xcb0] sm:$0xff]
        %v653 = vld [vmem:[%s233 + $0xcb8] sm:$0xff]
        %v654 = vld [vmem:[%s233 + $0xcc0] sm:$0xff]
        %v655 = vld [vmem:[%s233 + $0xcc8] sm:$0xff]
        %v656 = vld [vmem:[%s233 + $0xcd0] sm:$0xff]
        %v657 = vld [vmem:[%s233 + $0xcd8] sm:$0xff]
        %v658 = vld [vmem:[%s233 + $0xce0] sm:$0xff]
        %v659 = vld [vmem:[%s233 + $0xce8] sm:$0xff]
        %v660 = vld [vmem:[%s233 + $0xcf0] sm:$0xff]
        %v661 = vld [vmem:[%s233 + $0xcf8] sm:$0xff]
        %v662 = vld [vmem:[%s233 + $0xd00] sm:$0xff]
        %v663 = vld [vmem:[%s233 + $0xd08] sm:$0xff]
        %v664 = vld [vmem:[%s233 + $0xd10] sm:$0xff]
        %v665 = vld [vmem:[%s233 + $0xd18] sm:$0xff]
        %v666 = vld [vmem:[%s233 + $0xd20] sm:$0xff]
        %v667 = vld [vmem:[%s233 + $0xd28] sm:$0xff]
        %v668 = vld [vmem:[%s233 + $0xd30] sm:$0xff]
        %v669 = vld [vmem:[%s233 + $0xd38] sm:$0xff]
        %v670 = vld [vmem:[%s233 + $0xd40] sm:$0xff]
        %v671 = vld [vmem:[%s233 + $0xd48] sm:$0xff]
        %v672 = vld [vmem:[%s233 + $0xd50] sm:$0xff]
        %v673 = vld [vmem:[%s233 + $0xd58] sm:$0xff]
        %v674 = vld [vmem:[%s233 + $0xd60] sm:$0xff]
        %v675 = vld [vmem:[%s233 + $0xd68] sm:$0xff]
        %v676 = vld [vmem:[%s233 + $0xd70] sm:$0xff]
        %v677 = vld [vmem:[%s233 + $0xd78] sm:$0xff]
        %v678 = vld [vmem:[%s233 + $0xd80] sm:$0xff]
        %v679 = vld [vmem:[%s233 + $0xd88] sm:$0xff]
        %v680 = vld [vmem:[%s233 + $0xd90] sm:$0xff]
        %v681 = vld [vmem:[%s233 + $0xd98] sm:$0xff]
        %v682 = vld [vmem:[%s233 + $0xda0] sm:$0xff]
        %v683 = vld [vmem:[%s233 + $0xda8] sm:$0xff]
        %v684 = vld [vmem:[%s233 + $0xdb0] sm:$0xff]
        %v685 = vld [vmem:[%s233 + $0xdb8] sm:$0xff]
        %v686 = vld [vmem:[%s233 + $0xdc0] sm:$0xff]
        %v687 = vld [vmem:[%s233 + $0xdc8] sm:$0xff]
        %v688 = vld [vmem:[%s233 + $0xdd0] sm:$0xff]
        %v689 = vld [vmem:[%s233 + $0xdd8] sm:$0xff]
        %v690 = vld [vmem:[%s233 + $0xde0] sm:$0xff]
        %v691 = vld [vmem:[%s233 + $0xde8] sm:$0xff]
        %v692 = vld [vmem:[%s233 + $0xdf0] sm:$0xff]
        %v693 = vld [vmem:[%s233 + $0xdf8] sm:$0xff]
        %v694 = vld [vmem:[%s233 + $0xe00] sm:$0xff]
        %v695 = vld [vmem:[%s233 + $0xe08] sm:$0xff]
        %v696 = vld [vmem:[%s233 + $0xe10] sm:$0xff]
        %v697 = vld [vmem:[%s233 + $0xe18] sm:$0xff]
        %v698 = vld [vmem:[%s233 + $0xe20] sm:$0xff]
        %v699 = vld [vmem:[%s233 + $0xe28] sm:$0xff]
        %v700 = vld [vmem:[%s233 + $0xe30] sm:$0xff]
        %v701 = vld [vmem:[%s233 + $0xe38] sm:$0xff]
        %v702 = vld [vmem:[%s233 + $0xe40] sm:$0xff]
        %v703 = vld [vmem:[%s233 + $0xe48] sm:$0xff]
        %v704 = vld [vmem:[%s233 + $0xe50] sm:$0xff]
        %v705 = vld [vmem:[%s233 + $0xe58] sm:$0xff]
        %v706 = vld [vmem:[%s233 + $0xe60] sm:$0xff]
        %v707 = vld [vmem:[%s233 + $0xe68] sm:$0xff]
        %v708 = vld [vmem:[%s233 + $0xe70] sm:$0xff]
        %v709 = vld [vmem:[%s233 + $0xe78] sm:$0xff]
        %v710 = vld [vmem:[%s233 + $0xe80] sm:$0xff]
        %v711 = vld [vmem:[%s233 + $0xe88] sm:$0xff]
        %v712 = vld [vmem:[%s233 + $0xe90] sm:$0xff]
        %v713 = vld [vmem:[%s233 + $0xe98] sm:$0xff]
        %v714 = vld [vmem:[%s233 + $0xea0] sm:$0xff]
        %v715 = vld [vmem:[%s233 + $0xea8] sm:$0xff]
        %v716 = vld [vmem:[%s233 + $0xeb0] sm:$0xff]
        %v717 = vld [vmem:[%s233 + $0xeb8] sm:$0xff]
        %v718 = vld [vmem:[%s233 + $0xec0] sm:$0xff]
        %v719 = vld [vmem:[%s233 + $0xec8] sm:$0xff]
        %v720 = vld [vmem:[%s233 + $0xed0] sm:$0xff]
        %v721 = vld [vmem:[%s233 + $0xed8] sm:$0xff]
        %v722 = vld [vmem:[%s233 + $0xee0] sm:$0xff]
        %v723 = vld [vmem:[%s233 + $0xee8] sm:$0xff]
        %v724 = vld [vmem:[%s233 + $0xef0] sm:$0xff]
        %v725 = vld [vmem:[%s233 + $0xef8] sm:$0xff]
        %v726 = vld [vmem:[%s233 + $0xf00] sm:$0xff]
        %v727 = vld [vmem:[%s233 + $0xf08] sm:$0xff]
        %v728 = vld [vmem:[%s233 + $0xf10] sm:$0xff]
        %v729 = vld [vmem:[%s233 + $0xf18] sm:$0xff]
        %v730 = vld [vmem:[%s233 + $0xf20] sm:$0xff]
        %v731 = vld [vmem:[%s233 + $0xf28] sm:$0xff]
        %v732 = vld [vmem:[%s233 + $0xf30] sm:$0xff]
        %v733 = vld [vmem:[%s233 + $0xf38] sm:$0xff]
        %v734 = vld [vmem:[%s233 + $0xf40] sm:$0xff]
        %v735 = vld [vmem:[%s233 + $0xf48] sm:$0xff]
        %v736 = vld [vmem:[%s233 + $0xf50] sm:$0xff]
        %v737 = vld [vmem:[%s233 + $0xf58] sm:$0xff]
        %v738 = vld [vmem:[%s233 + $0xf60] sm:$0xff]
        %v739 = vld [vmem:[%s233 + $0xf68] sm:$0xff]
        %v740 = vld [vmem:[%s233 + $0xf70] sm:$0xff]
        %v741 = vld [vmem:[%s233 + $0xf78] sm:$0xff]
        %v742 = vld [vmem:[%s233 + $0xf80] sm:$0xff]
        %v743 = vld [vmem:[%s233 + $0xf88] sm:$0xff]
        %v744 = vld [vmem:[%s233 + $0xf90] sm:$0xff]
        %v745 = vld [vmem:[%s233 + $0xf98] sm:$0xff]
        %v746 = vld [vmem:[%s233 + $0xfa0] sm:$0xff]
        %v747 = vld [vmem:[%s233 + $0xfa8] sm:$0xff]
        %v748 = vld [vmem:[%s233 + $0xfb0] sm:$0xff]
        %v749 = vld [vmem:[%s233 + $0xfb8] sm:$0xff]
        %v750 = vld [vmem:[%s233 + $0xfc0] sm:$0xff]
        %v751 = vld [vmem:[%s233 + $0xfc8] sm:$0xff]
        %v752 = vld [vmem:[%s233 + $0xfd0] sm:$0xff]
        %v753 = vld [vmem:[%s233 + $0xfd8] sm:$0xff]
        %v754 = vld [vmem:[%s233 + $0xfe0] sm:$0xff]
        %v755 = vld [vmem:[%s233 + $0xfe8] sm:$0xff]
        %v756 = vld [vmem:[%s233 + $0xff0] sm:$0xff]
        %v757 = vld [vmem:[%s233 + $0xff8] sm:$0xff]
        %v758 = vld [vmem:[%s233 + $0x1000] sm:$0xff]
        %v759 = vld [vmem:[%s233 + $0x1008] sm:$0xff]
        %v760 = vld [vmem:[%s233 + $0x1010] sm:$0xff]
        %v761 = vld [vmem:[%s233 + $0x1018] sm:$0xff]
        %v762 = vld [vmem:[%s233 + $0x1020] sm:$0xff]
        %v763 = vld [vmem:[%s233 + $0x1028] sm:$0xff]
        %v764 = vld [vmem:[%s233 + $0x1030] sm:$0xff]
        %v765 = vld [vmem:[%s233 + $0x1038] sm:$0xff]
        %v766 = vld [vmem:[%s233 + $0x1040] sm:$0xff]
        %v767 = vld [vmem:[%s233 + $0x1048] sm:$0xff]
        %v768 = vld [vmem:[%s233 + $0x1050] sm:$0xff]
        %v769 = vld [vmem:[%s233 + $0x1058] sm:$0xff]
        %v770 = vld [vmem:[%s233 + $0x1060] sm:$0xff]
        %v771 = vld [vmem:[%s233 + $0x1068] sm:$0xff]
        %v772 = vld [vmem:[%s233 + $0x1070] sm:$0xff]
        %v773 = vld [vmem:[%s233 + $0x1078] sm:$0xff]
        %v774 = vld [vmem:[%s233 + $0x1080] sm:$0xff]
        %v775 = vld [vmem:[%s233 + $0x1088] sm:$0xff]
        %v776 = vld [vmem:[%s233 + $0x1090] sm:$0xff]
        %v777 = vld [vmem:[%s233 + $0x1098] sm:$0xff]
        %v778 = vld [vmem:[%s233 + $0x10a0] sm:$0xff]
        %v779 = vld [vmem:[%s233 + $0x10a8] sm:$0xff]
        %v780 = vld [vmem:[%s233 + $0x10b0] sm:$0xff]
        %v781 = vld [vmem:[%s233 + $0x10b8] sm:$0xff]
        %v782 = vld [vmem:[%s233 + $0x10c0] sm:$0xff]
        %v783 = vld [vmem:[%s233 + $0x10c8] sm:$0xff]
        %v784 = vld [vmem:[%s233 + $0x10d0] sm:$0xff]
        %v785 = vld [vmem:[%s233 + $0x10d8] sm:$0xff]
        %v786 = vld [vmem:[%s233 + $0x10e0] sm:$0xff]
        %v787 = vld [vmem:[%s233 + $0x10e8] sm:$0xff]
        %v788 = vld [vmem:[%s233 + $0x10f0] sm:$0xff]
        %v789 = vld [vmem:[%s233 + $0x10f8] sm:$0xff]
        %v790 = vld [vmem:[%s233 + $0x1100] sm:$0xff]
        %v791 = vld [vmem:[%s233 + $0x1108] sm:$0xff]
        %v792 = vld [vmem:[%s233 + $0x1110] sm:$0xff]
        %v793 = vld [vmem:[%s233 + $0x1118] sm:$0xff]
        %v794 = vld [vmem:[%s233 + $0x1120] sm:$0xff]
        %v795 = vld [vmem:[%s233 + $0x1128] sm:$0xff]
        %v796 = vld [vmem:[%s233 + $0x1130] sm:$0xff]
        %v797 = vld [vmem:[%s233 + $0x1138] sm:$0xff]
        %v798 = vld [vmem:[%s233 + $0x1140] sm:$0xff]
        %v799 = vld [vmem:[%s233 + $0x1148] sm:$0xff]
        %v800 = vld [vmem:[%s233 + $0x1150] sm:$0xff]
        %v801 = vld [vmem:[%s233 + $0x1158] sm:$0xff]
        %v802 = vld [vmem:[%s233 + $0x1160] sm:$0xff]
        %v803 = vld [vmem:[%s233 + $0x1168] sm:$0xff]
        %v804 = vld [vmem:[%s233 + $0x1170] sm:$0xff]
        %v805 = vld [vmem:[%s233 + $0x1178] sm:$0xff]
        %v806 = vld [vmem:[%s233 + $0x1180] sm:$0xff]
        %v807 = vld [vmem:[%s233 + $0x1188] sm:$0xff]
        %v808 = vld [vmem:[%s233 + $0x1190] sm:$0xff]
        %v809 = vld [vmem:[%s233 + $0x1198] sm:$0xff]
        %v810 = vld [vmem:[%s233 + $0x11a0] sm:$0xff]
        %v811 = vld [vmem:[%s233 + $0x11a8] sm:$0xff]
        %v812 = vld [vmem:[%s233 + $0x11b0] sm:$0xff]
        %v813 = vld [vmem:[%s233 + $0x11b8] sm:$0xff]
        %v814 = vld [vmem:[%s233 + $0x11c0] sm:$0xff]
        %v815 = vld [vmem:[%s233 + $0x11c8] sm:$0xff]
        %v816 = vld [vmem:[%s233 + $0x11d0] sm:$0xff]
        %v817 = vld [vmem:[%s233 + $0x11d8] sm:$0xff]
        %v818 = vld [vmem:[%s233 + $0x11e0] sm:$0xff]
        %v819 = vld [vmem:[%s233 + $0x11e8] sm:$0xff]
        %v820 = vld [vmem:[%s233 + $0x11f0] sm:$0xff]
        %v821 = vld [vmem:[%s233 + $0x11f8] sm:$0xff]
        %v822 = vld [vmem:[%s233 + $0x1200] sm:$0xff]
        %v823 = vld [vmem:[%s233 + $0x1208] sm:$0xff]
        %v824 = vld [vmem:[%s233 + $0x1210] sm:$0xff]
        %v825 = vld [vmem:[%s233 + $0x1218] sm:$0xff]
        %v826 = vld [vmem:[%s233 + $0x1220] sm:$0xff]
        %v827 = vld [vmem:[%s233 + $0x1228] sm:$0xff]
        %v828 = vld [vmem:[%s233 + $0x1230] sm:$0xff]
        %v829 = vld [vmem:[%s233 + $0x1238] sm:$0xff]
        %v830 = vld [vmem:[%s233 + $0x1240] sm:$0xff]
        %v831 = vld [vmem:[%s233 + $0x1248] sm:$0xff]
        %v832 = vld [vmem:[%s233 + $0x1250] sm:$0xff]
        %v833 = vld [vmem:[%s233 + $0x1258] sm:$0xff]
        %v834 = vld [vmem:[%s233 + $0x1260] sm:$0xff]
        %v835 = vld [vmem:[%s233 + $0x1268] sm:$0xff]
        %v836 = vld [vmem:[%s233 + $0x1270] sm:$0xff]
        %v837 = vld [vmem:[%s233 + $0x1278] sm:$0xff]
        %v838 = vld [vmem:[%s233 + $0x1280] sm:$0xff]
        %v839 = vld [vmem:[%s233 + $0x1288] sm:$0xff]
        %v840 = vld [vmem:[%s233 + $0x1290] sm:$0xff]
        %v841 = vld [vmem:[%s233 + $0x1298] sm:$0xff]
        %v842 = vld [vmem:[%s233 + $0x12a0] sm:$0xff]
        %v843 = vld [vmem:[%s233 + $0x12a8] sm:$0xff]
        %v844 = vld [vmem:[%s233 + $0x12b0] sm:$0xff]
        %v845 = vld [vmem:[%s233 + $0x12b8] sm:$0xff]
        %v846 = vld [vmem:[%s233 + $0x12c0] sm:$0xff]
        %v847 = vld [vmem:[%s233 + $0x12c8] sm:$0xff]
        %v848 = vld [vmem:[%s233 + $0x12d0] sm:$0xff]
        %v849 = vld [vmem:[%s233 + $0x12d8] sm:$0xff]
        %v850 = vld [vmem:[%s233 + $0x12e0] sm:$0xff]
        %v851 = vld [vmem:[%s233 + $0x12e8] sm:$0xff]
        %v852 = vld [vmem:[%s233 + $0x12f0] sm:$0xff]
        %v853 = vld [vmem:[%s233 + $0x12f8] sm:$0xff]
        %v854 = vld [vmem:[%s233 + $0x1300] sm:$0xff]
        %v855 = vld [vmem:[%s233 + $0x1308] sm:$0xff]
        %v856 = vld [vmem:[%s233 + $0x1310] sm:$0xff]
        %v857 = vld [vmem:[%s233 + $0x1318] sm:$0xff]
        %v858 = vld [vmem:[%s233 + $0x1320] sm:$0xff]
        %v859 = vld [vmem:[%s233 + $0x1328] sm:$0xff]
        %v860 = vld [vmem:[%s233 + $0x1330] sm:$0xff]
        %v861 = vld [vmem:[%s233 + $0x1338] sm:$0xff]
        %v862 = vld [vmem:[%s233 + $0x1340] sm:$0xff]
        %v863 = vld [vmem:[%s233 + $0x1348] sm:$0xff]
        %v864 = vld [vmem:[%s233 + $0x1350] sm:$0xff]
        %v865 = vld [vmem:[%s233 + $0x1358] sm:$0xff]
        %v866 = vld [vmem:[%s233 + $0x1360] sm:$0xff]
        %v867 = vld [vmem:[%s233 + $0x1368] sm:$0xff]
        %v868 = vld [vmem:[%s233 + $0x1370] sm:$0xff]
        %v869 = vld [vmem:[%s233 + $0x1378] sm:$0xff]
        %v870 = vld [vmem:[%s233 + $0x1380] sm:$0xff]
        %v871 = vld [vmem:[%s233 + $0x1388] sm:$0xff]
        %v872 = vld [vmem:[%s233 + $0x1390] sm:$0xff]
        %v873 = vld [vmem:[%s233 + $0x1398] sm:$0xff]
        %v874 = vld [vmem:[%s233 + $0x13a0] sm:$0xff]
        %v875 = vld [vmem:[%s233 + $0x13a8] sm:$0xff]
        %v876 = vld [vmem:[%s233 + $0x13b0] sm:$0xff]
        %v877 = vld [vmem:[%s233 + $0x13b8] sm:$0xff]
        %v878 = vld [vmem:[%s233 + $0x13c0] sm:$0xff]
        %v879 = vld [vmem:[%s233 + $0x13c8] sm:$0xff]
        %v880 = vld [vmem:[%s233 + $0x13d0] sm:$0xff]
        %v881 = vld [vmem:[%s233 + $0x13d8] sm:$0xff]
        %v882 = vld [vmem:[%s233 + $0x13e0] sm:$0xff]
        %v883 = vld [vmem:[%s233 + $0x13e8] sm:$0xff]
        %v884 = vld [vmem:[%s233 + $0x13f0] sm:$0xff]
        %v885 = vld [vmem:[%s233 + $0x13f8] sm:$0xff]
        %v886 = vld [vmem:[%s233 + $0x1400] sm:$0xff]
        %v887 = vld [vmem:[%s233 + $0x1408] sm:$0xff]
        %v888 = vld [vmem:[%s233 + $0x1410] sm:$0xff]
        %v889 = vld [vmem:[%s233 + $0x1418] sm:$0xff]
        %v890 = vld [vmem:[%s233 + $0x1420] sm:$0xff]
        %v891 = vld [vmem:[%s233 + $0x1428] sm:$0xff]
        %v892 = vld [vmem:[%s233 + $0x1430] sm:$0xff]
        %v893 = vld [vmem:[%s233 + $0x1438] sm:$0xff]
        %v894 = vld [vmem:[%s233 + $0x1440] sm:$0xff]
        %v895 = vld [vmem:[%s233 + $0x1448] sm:$0xff]
        %v896 = vld [vmem:[%s233 + $0x1450] sm:$0xff]
        %v897 = vld [vmem:[%s233 + $0x1458] sm:$0xff]
        %v898 = vld [vmem:[%s233 + $0x1460] sm:$0xff]
        %v899 = vld [vmem:[%s233 + $0x1468] sm:$0xff]
        %v900 = vld [vmem:[%s233 + $0x1470] sm:$0xff]
        %v901 = vld [vmem:[%s233 + $0x1478] sm:$0xff]
        %v902 = vld [vmem:[%s233 + $0x1480] sm:$0xff]
        %v903 = vld [vmem:[%s233 + $0x1488] sm:$0xff]
        %v904 = vld [vmem:[%s233 + $0x1490] sm:$0xff]
        %v905 = vld [vmem:[%s233 + $0x1498] sm:$0xff]
        %v906 = vld [vmem:[%s233 + $0x14a0] sm:$0xff]
        %v907 = vld [vmem:[%s233 + $0x14a8] sm:$0xff]
        %v908 = vld [vmem:[%s233 + $0x14b0] sm:$0xff]
        %v909 = vld [vmem:[%s233 + $0x14b8] sm:$0xff]
        %v910 = vld [vmem:[%s233 + $0x14c0] sm:$0xff]
        %v911 = vld [vmem:[%s233 + $0x14c8] sm:$0xff]
        %v912 = vld [vmem:[%s233 + $0x14d0] sm:$0xff]
        %v913 = vld [vmem:[%s233 + $0x14d8] sm:$0xff]
        %v914 = vld [vmem:[%s233 + $0x14e0] sm:$0xff]
        %v915 = vld [vmem:[%s233 + $0x14e8] sm:$0xff]
        %v916 = vld [vmem:[%s233 + $0x14f0] sm:$0xff]
        %v917 = vld [vmem:[%s233 + $0x14f8] sm:$0xff]
        %v918 = vld [vmem:[%s233 + $0x1500] sm:$0xff]
        %v919 = vld [vmem:[%s233 + $0x1508] sm:$0xff]
        %v920 = vld [vmem:[%s233 + $0x1510] sm:$0xff]
        %v921 = vld [vmem:[%s233 + $0x1518] sm:$0xff]
        %v922 = vld [vmem:[%s233 + $0x1520] sm:$0xff]
        %v923 = vld [vmem:[%s233 + $0x1528] sm:$0xff]
        %v924 = vld [vmem:[%s233 + $0x1530] sm:$0xff]
        %v925 = vld [vmem:[%s233 + $0x1538] sm:$0xff]
        %v926 = vld [vmem:[%s233 + $0x1540] sm:$0xff]
        %v927 = vld [vmem:[%s233 + $0x1548] sm:$0xff]
        %v928 = vld [vmem:[%s233 + $0x1550] sm:$0xff]
        %v929 = vld [vmem:[%s233 + $0x1558] sm:$0xff]
        %v930 = vld [vmem:[%s233 + $0x1560] sm:$0xff]
        %v931 = vld [vmem:[%s233 + $0x1568] sm:$0xff]
        %v932 = vld [vmem:[%s233 + $0x1570] sm:$0xff]
        %v933 = vld [vmem:[%s233 + $0x1578] sm:$0xff]
        %v934 = vld [vmem:[%s233 + $0x1580] sm:$0xff]
        %v935 = vld [vmem:[%s233 + $0x1588] sm:$0xff]
        %v936 = vld [vmem:[%s233 + $0x1590] sm:$0xff]
        %v937 = vld [vmem:[%s233 + $0x1598] sm:$0xff]
        %v938 = vld [vmem:[%s233 + $0x15a0] sm:$0xff]
        %v939 = vld [vmem:[%s233 + $0x15a8] sm:$0xff]
        %v940 = vld [vmem:[%s233 + $0x15b0] sm:$0xff]
        %v941 = vld [vmem:[%s233 + $0x15b8] sm:$0xff]
        %v942 = vld [vmem:[%s233 + $0x15c0] sm:$0xff]
        %v943 = vld [vmem:[%s233 + $0x15c8] sm:$0xff]
        %v944 = vld [vmem:[%s233 + $0x15d0] sm:$0xff]
        %v945 = vld [vmem:[%s233 + $0x15d8] sm:$0xff]
        %v946 = vld [vmem:[%s233 + $0x15e0] sm:$0xff]
        %v947 = vld [vmem:[%s233 + $0x15e8] sm:$0xff]
        %v948 = vld [vmem:[%s233 + $0x15f0] sm:$0xff]
        %v949 = vld [vmem:[%s233 + $0x15f8] sm:$0xff]
        %v950 = vld [vmem:[%s233 + $0x1600] sm:$0xff]
        %v951 = vld [vmem:[%s233 + $0x1608] sm:$0xff]
        %v952 = vld [vmem:[%s233 + $0x1610] sm:$0xff]
        %v953 = vld [vmem:[%s233 + $0x1618] sm:$0xff]
        %v954 = vld [vmem:[%s233 + $0x1620] sm:$0xff]
        %v955 = vld [vmem:[%s233 + $0x1628] sm:$0xff]
        %v956 = vld [vmem:[%s233 + $0x1630] sm:$0xff]
        %v957 = vld [vmem:[%s233 + $0x1638] sm:$0xff]
        %v958 = vld [vmem:[%s233 + $0x1640] sm:$0xff]
        %v959 = vld [vmem:[%s233 + $0x1648] sm:$0xff]
        %v960 = vld [vmem:[%s233 + $0x1650] sm:$0xff]
        %v961 = vld [vmem:[%s233 + $0x1658] sm:$0xff]
        %v962 = vld [vmem:[%s233 + $0x1660] sm:$0xff]
        %v963 = vld [vmem:[%s233 + $0x1668] sm:$0xff]
        %v964 = vld [vmem:[%s233 + $0x1670] sm:$0xff]
        %v965 = vld [vmem:[%s233 + $0x1678] sm:$0xff]
        %v966 = vld [vmem:[%s233 + $0x1680] sm:$0xff]
        %v967 = vld [vmem:[%s233 + $0x1688] sm:$0xff]
        %v968 = vld [vmem:[%s233 + $0x1690] sm:$0xff]
        %v969 = vld [vmem:[%s233 + $0x1698] sm:$0xff]
        %v970 = vld [vmem:[%s233 + $0x16a0] sm:$0xff]
        %v971 = vld [vmem:[%s233 + $0x16a8] sm:$0xff]
        %v972 = vld [vmem:[%s233 + $0x16b0] sm:$0xff]
        %v973 = vld [vmem:[%s233 + $0x16b8] sm:$0xff]
        %v974 = vld [vmem:[%s233 + $0x16c0] sm:$0xff]
        %v975 = vld [vmem:[%s233 + $0x16c8] sm:$0xff]
        %v976 = vld [vmem:[%s233 + $0x16d0] sm:$0xff]
        %v977 = vld [vmem:[%s233 + $0x16d8] sm:$0xff]
        %v978 = vld [vmem:[%s233 + $0x16e0] sm:$0xff]
        %v979 = vld [vmem:[%s233 + $0x16e8] sm:$0xff]
        %v980 = vld [vmem:[%s233 + $0x16f0] sm:$0xff]
        %v981 = vld [vmem:[%s233 + $0x16f8] sm:$0xff]
        %v982 = vld [vmem:[%s233 + $0x1700] sm:$0xff]
        %v983 = vld [vmem:[%s233 + $0x1708] sm:$0xff]
        %v984 = vld [vmem:[%s233 + $0x1710] sm:$0xff]
        %v985 = vld [vmem:[%s233 + $0x1718] sm:$0xff]
        %v986 = vld [vmem:[%s233 + $0x1720] sm:$0xff]
        %v987 = vld [vmem:[%s233 + $0x1728] sm:$0xff]
        %v988 = vld [vmem:[%s233 + $0x1730] sm:$0xff]
        %v989 = vld [vmem:[%s233 + $0x1738] sm:$0xff]
        %v990 = vld [vmem:[%s233 + $0x1740] sm:$0xff]
        %v991 = vld [vmem:[%s233 + $0x1748] sm:$0xff]
        %v992 = vld [vmem:[%s233 + $0x1750] sm:$0xff]
        %v993 = vld [vmem:[%s233 + $0x1758] sm:$0xff]
        %v994 = vld [vmem:[%s233 + $0x1760] sm:$0xff]
        %v995 = vld [vmem:[%s233 + $0x1768] sm:$0xff]
        %v996 = vld [vmem:[%s233 + $0x1770] sm:$0xff]
        %v997 = vld [vmem:[%s233 + $0x1778] sm:$0xff]
        %v998 = vld [vmem:[%s233 + $0x1780] sm:$0xff]
        %v999 = vld [vmem:[%s233 + $0x1788] sm:$0xff]
        %v1000 = vld [vmem:[%s233 + $0x1790] sm:$0xff]
        %v1001 = vld [vmem:[%s233 + $0x1798] sm:$0xff]
        %v1002 = vld [vmem:[%s233 + $0x17a0] sm:$0xff]
        %v1003 = vld [vmem:[%s233 + $0x17a8] sm:$0xff]
        %v1004 = vld [vmem:[%s233 + $0x17b0] sm:$0xff]
        %v1005 = vld [vmem:[%s233 + $0x17b8] sm:$0xff]
        %v1006 = vld [vmem:[%s233 + $0x17c0] sm:$0xff]
        %v1007 = vld [vmem:[%s233 + $0x17c8] sm:$0xff]
        %v1008 = vld [vmem:[%s233 + $0x17d0] sm:$0xff]
        %v1009 = vld [vmem:[%s233 + $0x17d8] sm:$0xff]
        %v1010 = vld [vmem:[%s233 + $0x17e0] sm:$0xff]
        %v1011 = vld [vmem:[%s233 + $0x17e8] sm:$0xff]
        %v1012 = vld [vmem:[%s233 + $0x17f0] sm:$0xff]
        %v1013 = vld [vmem:[%s233 + $0x17f8] sm:$0xff]
        %v1014 = vld [vmem:[%s233 + $0x1800] sm:$0xff]
        %v1015 = vld [vmem:[%s233 + $0x1808] sm:$0xff]
        %v1016 = vld [vmem:[%s233 + $0x1810] sm:$0xff]
        %v1017 = vld [vmem:[%s233 + $0x1818] sm:$0xff]
        %v1018 = vld [vmem:[%s233 + $0x1820] sm:$0xff]
        %v1019 = vld [vmem:[%s233 + $0x1828] sm:$0xff]
        %v1020 = vld [vmem:[%s233 + $0x1830] sm:$0xff]
        %v1021 = vld [vmem:[%s233 + $0x1838] sm:$0xff]
        %v1022 = vld [vmem:[%s233 + $0x1840] sm:$0xff]
        %v1023 = vld [vmem:[%s233 + $0x1848] sm:$0xff]
        %v1024 = vld [vmem:[%s233 + $0x1850] sm:$0xff]
        %v1025 = vld [vmem:[%s233 + $0x1858] sm:$0xff]
        %v1026 = vld [vmem:[%s233 + $0x1860] sm:$0xff]
        %v1027 = vld [vmem:[%s233 + $0x1868] sm:$0xff]
        %v1028 = vld [vmem:[%s233 + $0x1870] sm:$0xff]
        %v1029 = vld [vmem:[%s233 + $0x1878] sm:$0xff]
        %v1030 = vld [vmem:[%s233 + $0x1880] sm:$0xff]
        %v1031 = vld [vmem:[%s233 + $0x1888] sm:$0xff]
        %v1032 = vld [vmem:[%s233 + $0x1890] sm:$0xff]
        %v1033 = vld [vmem:[%s233 + $0x1898] sm:$0xff]
        %v1034 = vld [vmem:[%s233 + $0x18a0] sm:$0xff]
        %v1035 = vld [vmem:[%s233 + $0x18a8] sm:$0xff]
        %v1036 = vld [vmem:[%s233 + $0x18b0] sm:$0xff]
        %v1037 = vld [vmem:[%s233 + $0x18b8] sm:$0xff]
        %v1038 = vld [vmem:[%s233 + $0x18c0] sm:$0xff]
        %v1039 = vld [vmem:[%s233 + $0x18c8] sm:$0xff]
        %v1040 = vld [vmem:[%s233 + $0x18d0] sm:$0xff]
        %v1041 = vld [vmem:[%s233 + $0x18d8] sm:$0xff]
        %v1042 = vld [vmem:[%s233 + $0x18e0] sm:$0xff]
        %v1043 = vld [vmem:[%s233 + $0x18e8] sm:$0xff]
        %v1044 = vld [vmem:[%s233 + $0x18f0] sm:$0xff]
        %v1045 = vld [vmem:[%s233 + $0x18f8] sm:$0xff]
        %v1046 = vld [vmem:[%s233 + $0x1900] sm:$0xff]
        %v1047 = vld [vmem:[%s233 + $0x1908] sm:$0xff]
        %v1048 = vld [vmem:[%s233 + $0x1910] sm:$0xff]
        %v1049 = vld [vmem:[%s233 + $0x1918] sm:$0xff]
        %v1050 = vld [vmem:[%s233 + $0x1920] sm:$0xff]
        %v1051 = vld [vmem:[%s233 + $0x1928] sm:$0xff]
        %v1052 = vld [vmem:[%s233 + $0x1930] sm:$0xff]
        %v1053 = vld [vmem:[%s233 + $0x1938] sm:$0xff]
        %v1054 = vld [vmem:[%s233 + $0x1940] sm:$0xff]
        %v1055 = vld [vmem:[%s233 + $0x1948] sm:$0xff]
        %v1056 = vld [vmem:[%s233 + $0x1950] sm:$0xff]
        %v1057 = vld [vmem:[%s233 + $0x1958] sm:$0xff]
        %v1058 = vld [vmem:[%s233 + $0x1960] sm:$0xff]
        %v1059 = vld [vmem:[%s233 + $0x1968] sm:$0xff]
        %v1060 = vld [vmem:[%s233 + $0x1970] sm:$0xff]
        %v1061 = vld [vmem:[%s233 + $0x1978] sm:$0xff]
        %v1062 = vld [vmem:[%s233 + $0x1980] sm:$0xff]
        %v1063 = vld [vmem:[%s233 + $0x1988] sm:$0xff]
        %v1064 = vld [vmem:[%s233 + $0x1990] sm:$0xff]
        %v1065 = vld [vmem:[%s233 + $0x1998] sm:$0xff]
        %v1066 = vld [vmem:[%s233 + $0x19a0] sm:$0xff]
        %v1067 = vld [vmem:[%s233 + $0x19a8] sm:$0xff]
        %v1068 = vld [vmem:[%s233 + $0x19b0] sm:$0xff]
        %v1069 = vld [vmem:[%s233 + $0x19b8] sm:$0xff]
        %v1070 = vld [vmem:[%s233 + $0x19c0] sm:$0xff]
        %v1071 = vld [vmem:[%s233 + $0x19c8] sm:$0xff]
        %v1072 = vld [vmem:[%s233 + $0x19d0] sm:$0xff]
        %v1073 = vld [vmem:[%s233 + $0x19d8] sm:$0xff]
        %v1074 = vld [vmem:[%s233 + $0x19e0] sm:$0xff]
        %v1075 = vld [vmem:[%s233 + $0x19e8] sm:$0xff]
        %v1076 = vld [vmem:[%s233 + $0x19f0] sm:$0xff]
        %v1077 = vld [vmem:[%s233 + $0x19f8] sm:$0xff]
        %v1078 = vld [vmem:[%s233 + $0x1a00] sm:$0xff]
        %v1079 = vld [vmem:[%s233 + $0x1a08] sm:$0xff]
        %v1080 = vld [vmem:[%s233 + $0x1a10] sm:$0xff]
        %v1081 = vld [vmem:[%s233 + $0x1a18] sm:$0xff]
        %v1082 = vld [vmem:[%s233 + $0x1a20] sm:$0xff]
        %v1083 = vld [vmem:[%s233 + $0x1a28] sm:$0xff]
        %v1084 = vld [vmem:[%s233 + $0x1a30] sm:$0xff]
        %v1085 = vld [vmem:[%s233 + $0x1a38] sm:$0xff]
        %v1086 = vld [vmem:[%s233 + $0x1a40] sm:$0xff]
        %v1087 = vld [vmem:[%s233 + $0x1a48] sm:$0xff]
        %v1088 = vld [vmem:[%s233 + $0x1a50] sm:$0xff]
        %v1089 = vld [vmem:[%s233 + $0x1a58] sm:$0xff]
        %v1090 = vld [vmem:[%s233 + $0x1a60] sm:$0xff]
        %v1091 = vld [vmem:[%s233 + $0x1a68] sm:$0xff]
        %v1092 = vld [vmem:[%s233 + $0x1a70] sm:$0xff]
        %v1093 = vld [vmem:[%s233 + $0x1a78] sm:$0xff]
        %v1094 = vld [vmem:[%s233 + $0x1a80] sm:$0xff]
        %v1095 = vld [vmem:[%s233 + $0x1a88] sm:$0xff]
        %v1096 = vld [vmem:[%s233 + $0x1a90] sm:$0xff]
        %v1097 = vld [vmem:[%s233 + $0x1a98] sm:$0xff]
        %v1098 = vld [vmem:[%s233 + $0x1aa0] sm:$0xff]
        %v1099 = vld [vmem:[%s233 + $0x1aa8] sm:$0xff]
        %v1100 = vld [vmem:[%s233 + $0x1ab0] sm:$0xff]
        %v1101 = vld [vmem:[%s233 + $0x1ab8] sm:$0xff]
        %v1102 = vld [vmem:[%s233 + $0x1ac0] sm:$0xff]
        %v1103 = vld [vmem:[%s233 + $0x1ac8] sm:$0xff]
        %v1104 = vld [vmem:[%s233 + $0x1ad0] sm:$0xff]
        %v1105 = vld [vmem:[%s233 + $0x1ad8] sm:$0xff]
        %v1106 = vld [vmem:[%s233 + $0x1ae0] sm:$0xff]
        %v1107 = vld [vmem:[%s233 + $0x1ae8] sm:$0xff]
        %v1108 = vld [vmem:[%s233 + $0x1af0] sm:$0xff]
        %v1109 = vld [vmem:[%s233 + $0x1af8] sm:$0xff]
        %v1110 = vld [vmem:[%s233 + $0x1b00] sm:$0xff]
        %v1111 = vld [vmem:[%s233 + $0x1b08] sm:$0xff]
        %v1112 = vld [vmem:[%s233 + $0x1b10] sm:$0xff]
        %v1113 = vld [vmem:[%s233 + $0x1b18] sm:$0xff]
        %v1114 = vld [vmem:[%s233 + $0x1b20] sm:$0xff]
        %v1115 = vld [vmem:[%s233 + $0x1b28] sm:$0xff]
        %v1116 = vld [vmem:[%s233 + $0x1b30] sm:$0xff]
        %v1117 = vld [vmem:[%s233 + $0x1b38] sm:$0xff]
        %v1118 = vld [vmem:[%s233 + $0x1b40] sm:$0xff]
        %v1119 = vld [vmem:[%s233 + $0x1b48] sm:$0xff]
        %v1120 = vld [vmem:[%s233 + $0x1b50] sm:$0xff]
        %v1121 = vld [vmem:[%s233 + $0x1b58] sm:$0xff]
        %v1122 = vld [vmem:[%s233 + $0x1b60] sm:$0xff]
        %v1123 = vld [vmem:[%s233 + $0x1b68] sm:$0xff]
        %v1124 = vld [vmem:[%s233 + $0x1b70] sm:$0xff]
        %v1125 = vld [vmem:[%s233 + $0x1b78] sm:$0xff]
        %v1126 = vld [vmem:[%s233 + $0x1b80] sm:$0xff]
        %v1127 = vld [vmem:[%s233 + $0x1b88] sm:$0xff]
        %v1128 = vld [vmem:[%s233 + $0x1b90] sm:$0xff]
        %v1129 = vld [vmem:[%s233 + $0x1b98] sm:$0xff]
        %v1130 = vld [vmem:[%s233 + $0x1ba0] sm:$0xff]
        %v1131 = vld [vmem:[%s233 + $0x1ba8] sm:$0xff]
        %v1132 = vld [vmem:[%s233 + $0x1bb0] sm:$0xff]
        %v1133 = vld [vmem:[%s233 + $0x1bb8] sm:$0xff]
        %v1134 = vld [vmem:[%s233 + $0x1bc0] sm:$0xff]
        %v1135 = vld [vmem:[%s233 + $0x1bc8] sm:$0xff]
        %v1136 = vld [vmem:[%s233 + $0x1bd0] sm:$0xff]
        %v1137 = vld [vmem:[%s233 + $0x1bd8] sm:$0xff]
        %v1138 = vld [vmem:[%s233 + $0x1be0] sm:$0xff]
        %v1139 = vld [vmem:[%s233 + $0x1be8] sm:$0xff]
        %v1140 = vld [vmem:[%s233 + $0x1bf0] sm:$0xff]
        %v1141 = vld [vmem:[%s233 + $0x1bf8] sm:$0xff]
        %v1144 = vcombine.high %v244, %v244
        %v1146 = vunpack.c.l.s4 1966171168
        %v1147 = vunpack.c.0.s8 %v1146
        %v1148 = vlaneseq
        %v1149 = vshrl.u32 %v1148, 7
        %v1150 = vsub.s32 %v1147, %v1149
        %v1151 = vrot.slane %v244, %v1150
        %v1153 = vunpack.c.l.s4 1966171168
        %v1154 = vunpack.c.0.s8 %v1153
        %v1155 = vlaneseq
        %v1156 = vshrl.u32 %v1155, 7
        %v1157 = vsub.s32 %v1154, %v1156
        %v1158 = vrot.slane %v1144, %v1157
        %v1159 = vcombine.high %v1151, %v1151
        %v1160 = vcombine.high %v1158, %v1158
        %v1162 = vunpack.c.l.s4 1966171168
        %v1163 = vunpack.c.0.s8 %v1162
        %v1164 = vlaneseq
        %v1165 = vshrl.u32 %v1164, 7
        %v1166 = vsub.s32 %v1163, %v1165
        %v1167 = vrot.slane %v1151, %v1166
        %v1169 = vunpack.c.l.s4 1966171168
        %v1170 = vunpack.c.0.s8 %v1169
        %v1171 = vlaneseq
        %v1172 = vshrl.u32 %v1171, 7
        %v1173 = vsub.s32 %v1170, %v1172
        %v1174 = vrot.slane %v1158, %v1173
        %v1176 = vunpack.c.l.s4 1966171168
        %v1177 = vunpack.c.0.s8 %v1176
        %v1178 = vlaneseq
        %v1179 = vshrl.u32 %v1178, 7
        %v1180 = vsub.s32 %v1177, %v1179
        %v1181 = vrot.slane %v1159, %v1180
        %v1183 = vunpack.c.l.s4 1966171168
        %v1184 = vunpack.c.0.s8 %v1183
        %v1185 = vlaneseq
        %v1186 = vshrl.u32 %v1185, 7
        %v1187 = vsub.s32 %v1184, %v1186
        %v1188 = vrot.slane %v1160, %v1187
        %v1189 = vcombine.high %v1167, %v1167
        %v1190 = vcombine.high %v1174, %v1174
        %v1191 = vcombine.high %v1181, %v1181
        %v1192 = vcombine.high %v1188, %v1188
        %v1193 = vcombine.high %v245, %v245
        %v1195 = vunpack.c.l.s4 1966171168
        %v1196 = vunpack.c.0.s8 %v1195
        %v1197 = vlaneseq
        %v1198 = vshrl.u32 %v1197, 7
        %v1199 = vsub.s32 %v1196, %v1198
        %v1200 = vrot.slane %v245, %v1199
        %v1202 = vunpack.c.l.s4 1966171168
        %v1203 = vunpack.c.0.s8 %v1202
        %v1204 = vlaneseq
        %v1205 = vshrl.u32 %v1204, 7
        %v1206 = vsub.s32 %v1203, %v1205
        %v1207 = vrot.slane %v1193, %v1206
        %v1208 = vcombine.high %v1200, %v1200
        %v1209 = vcombine.high %v1207, %v1207
        %v1211 = vunpack.c.l.s4 1966171168
        %v1212 = vunpack.c.0.s8 %v1211
        %v1213 = vlaneseq
        %v1214 = vshrl.u32 %v1213, 7
        %v1215 = vsub.s32 %v1212, %v1214
        %v1216 = vrot.slane %v1200, %v1215
        %v1218 = vunpack.c.l.s4 1966171168
        %v1219 = vunpack.c.0.s8 %v1218
        %v1220 = vlaneseq
        %v1221 = vshrl.u32 %v1220, 7
        %v1222 = vsub.s32 %v1219, %v1221
        %v1223 = vrot.slane %v1207, %v1222
        %v1225 = vunpack.c.l.s4 1966171168
        %v1226 = vunpack.c.0.s8 %v1225
        %v1227 = vlaneseq
        %v1228 = vshrl.u32 %v1227, 7
        %v1229 = vsub.s32 %v1226, %v1228
        %v1230 = vrot.slane %v1208, %v1229
        %v1232 = vunpack.c.l.s4 1966171168
        %v1233 = vunpack.c.0.s8 %v1232
        %v1234 = vlaneseq
        %v1235 = vshrl.u32 %v1234, 7
        %v1236 = vsub.s32 %v1233, %v1235
        %v1237 = vrot.slane %v1209, %v1236
        %v1238 = vcombine.high %v1216, %v1216
        %v1239 = vcombine.high %v1230, %v1230
        %v2150 = vunpack.c.l.b16 %v246
        %v2151 = vunpack.c.h.b16 %v246
        %v2152 = vunpack.c.l.b16 %v247
        %v2153 = vunpack.c.h.b16 %v247
        %v2154 = vunpack.c.l.b16 %v248
        %v2155 = vunpack.c.h.b16 %v248
        %v2156 = vunpack.c.l.b16 %v249
        %v2157 = vunpack.c.h.b16 %v249
        %v2158 = vunpack.c.l.b16 %v250
        %v2159 = vunpack.c.h.b16 %v250
        %v2160 = vunpack.c.l.b16 %v251
        %v2161 = vunpack.c.h.b16 %v251
        %v2162 = vunpack.c.l.b16 %v252
        %v2163 = vunpack.c.h.b16 %v252
        %v2164 = vunpack.c.l.b16 %v253
        %v2165 = vunpack.c.h.b16 %v253
        %v2166 = vunpack.c.l.b16 %v254
        %v2167 = vunpack.c.h.b16 %v254
        %v2168 = vunpack.c.l.b16 %v255
        %v2169 = vunpack.c.h.b16 %v255
        %v2170 = vunpack.c.l.b16 %v256
        %v2171 = vunpack.c.h.b16 %v256
        %v2172 = vunpack.c.l.b16 %v257
        %v2173 = vunpack.c.h.b16 %v257
        %v2174 = vunpack.c.l.b16 %v258
        %v2175 = vunpack.c.h.b16 %v258
        %v2176 = vunpack.c.l.b16 %v259
        %v2177 = vunpack.c.h.b16 %v259
        %v2178 = vunpack.c.l.b16 %v260
        %v2179 = vunpack.c.h.b16 %v260
        %v2180 = vunpack.c.l.b16 %v261
        %v2181 = vunpack.c.h.b16 %v261
        %v2182 = vunpack.c.l.b16 %v262
        %v2183 = vunpack.c.h.b16 %v262
        %v2184 = vunpack.c.l.b16 %v263
        %v2185 = vunpack.c.h.b16 %v263
        %v2186 = vunpack.c.l.b16 %v264
        %v2187 = vunpack.c.h.b16 %v264
        %v2188 = vunpack.c.l.b16 %v265
        %v2189 = vunpack.c.h.b16 %v265
        %v2190 = vunpack.c.l.b16 %v266
        %v2191 = vunpack.c.h.b16 %v266
        %v2192 = vunpack.c.l.b16 %v267
        %v2193 = vunpack.c.h.b16 %v267
        %v2194 = vunpack.c.l.b16 %v268
        %v2195 = vunpack.c.h.b16 %v268
        %v2196 = vunpack.c.l.b16 %v269
        %v2197 = vunpack.c.h.b16 %v269
        %v2198 = vunpack.c.l.b16 %v270
        %v2199 = vunpack.c.h.b16 %v270
        %v2200 = vunpack.c.l.b16 %v271
        %v2201 = vunpack.c.h.b16 %v271
        %v2202 = vunpack.c.l.b16 %v272
        %v2203 = vunpack.c.h.b16 %v272
        %v2204 = vunpack.c.l.b16 %v273
        %v2205 = vunpack.c.h.b16 %v273
        %v2206 = vunpack.c.l.b16 %v274
        %v2207 = vunpack.c.h.b16 %v274
        %v2208 = vunpack.c.l.b16 %v275
        %v2209 = vunpack.c.h.b16 %v275
        %v2210 = vunpack.c.l.b16 %v276
        %v2211 = vunpack.c.h.b16 %v276
        %v2212 = vunpack.c.l.b16 %v277
        %v2213 = vunpack.c.h.b16 %v277
        %v2214 = vunpack.c.l.b16 %v278
        %v2215 = vunpack.c.h.b16 %v278
        %v2216 = vunpack.c.l.b16 %v279
        %v2217 = vunpack.c.h.b16 %v279
        %v2218 = vunpack.c.l.b16 %v280
        %v2219 = vunpack.c.h.b16 %v280
        %v2220 = vunpack.c.l.b16 %v281
        %v2221 = vunpack.c.h.b16 %v281
        %v2222 = vunpack.c.l.b16 %v282
        %v2223 = vunpack.c.h.b16 %v282
        %v2224 = vunpack.c.l.b16 %v283
        %v2225 = vunpack.c.h.b16 %v283
        %v2226 = vunpack.c.l.b16 %v284
        %v2227 = vunpack.c.h.b16 %v284
        %v2228 = vunpack.c.l.b16 %v285
        %v2229 = vunpack.c.h.b16 %v285
        %v2230 = vunpack.c.l.b16 %v286
        %v2231 = vunpack.c.h.b16 %v286
        %v2232 = vunpack.c.l.b16 %v287
        %v2233 = vunpack.c.h.b16 %v287
        %v2234 = vunpack.c.l.b16 %v288
        %v2235 = vunpack.c.h.b16 %v288
        %v2236 = vunpack.c.l.b16 %v289
        %v2237 = vunpack.c.h.b16 %v289
        %v2238 = vunpack.c.l.b16 %v290
        %v2239 = vunpack.c.h.b16 %v290
        %v2240 = vunpack.c.l.b16 %v291
        %v2241 = vunpack.c.h.b16 %v291
        %v2242 = vunpack.c.l.b16 %v292
        %v2243 = vunpack.c.h.b16 %v292
        %v2244 = vunpack.c.l.b16 %v293
        %v2245 = vunpack.c.h.b16 %v293
        %v2246 = vunpack.c.l.b16 %v294
        %v2247 = vunpack.c.h.b16 %v294
        %v2248 = vunpack.c.l.b16 %v295
        %v2249 = vunpack.c.h.b16 %v295
        %v2250 = vunpack.c.l.b16 %v296
        %v2251 = vunpack.c.h.b16 %v296
        %v2252 = vunpack.c.l.b16 %v297
        %v2253 = vunpack.c.h.b16 %v297
        %v2254 = vunpack.c.l.b16 %v298
        %v2255 = vunpack.c.h.b16 %v298
        %v2256 = vunpack.c.l.b16 %v299
        %v2257 = vunpack.c.h.b16 %v299
        %v2258 = vunpack.c.l.b16 %v300
        %v2259 = vunpack.c.h.b16 %v300
        %v2260 = vunpack.c.l.b16 %v301
        %v2261 = vunpack.c.h.b16 %v301
        %v2262 = vunpack.c.l.b16 %v302
        %v2263 = vunpack.c.h.b16 %v302
        %v2264 = vunpack.c.l.b16 %v303
        %v2265 = vunpack.c.h.b16 %v303
        %v2266 = vunpack.c.l.b16 %v304
        %v2267 = vunpack.c.h.b16 %v304
        %v2268 = vunpack.c.l.b16 %v305
        %v2269 = vunpack.c.h.b16 %v305
        %v2270 = vunpack.c.l.b16 %v306
        %v2271 = vunpack.c.h.b16 %v306
        %v2272 = vunpack.c.l.b16 %v307
        %v2273 = vunpack.c.h.b16 %v307
        %v2274 = vunpack.c.l.b16 %v308
        %v2275 = vunpack.c.h.b16 %v308
        %v2276 = vunpack.c.l.b16 %v309
        %v2277 = vunpack.c.h.b16 %v309
        %v2278 = vunpack.c.l.b16 %v310
        %v2279 = vunpack.c.h.b16 %v310
        %v2280 = vunpack.c.l.b16 %v311
        %v2281 = vunpack.c.h.b16 %v311
        %v2282 = vunpack.c.l.b16 %v312
        %v2283 = vunpack.c.h.b16 %v312
        %v2284 = vunpack.c.l.b16 %v313
        %v2285 = vunpack.c.h.b16 %v313
        %v2286 = vunpack.c.l.b16 %v314
        %v2287 = vunpack.c.h.b16 %v314
        %v2288 = vunpack.c.l.b16 %v315
        %v2289 = vunpack.c.h.b16 %v315
        %v2290 = vunpack.c.l.b16 %v316
        %v2291 = vunpack.c.h.b16 %v316
        %v2292 = vunpack.c.l.b16 %v317
        %v2293 = vunpack.c.h.b16 %v317
        %v2294 = vunpack.c.l.b16 %v318
        %v2295 = vunpack.c.h.b16 %v318
        %v2296 = vunpack.c.l.b16 %v319
        %v2297 = vunpack.c.h.b16 %v319
        %v2298 = vunpack.c.l.b16 %v320
        %v2299 = vunpack.c.h.b16 %v320
        %v2300 = vunpack.c.l.b16 %v321
        %v2301 = vunpack.c.h.b16 %v321
        %v2302 = vunpack.c.l.b16 %v322
        %v2303 = vunpack.c.h.b16 %v322
        %v2304 = vunpack.c.l.b16 %v323
        %v2305 = vunpack.c.h.b16 %v323
        %v2306 = vunpack.c.l.b16 %v324
        %v2307 = vunpack.c.h.b16 %v324
        %v2308 = vunpack.c.l.b16 %v325
        %v2309 = vunpack.c.h.b16 %v325
        %v2310 = vunpack.c.l.b16 %v326
        %v2311 = vunpack.c.h.b16 %v326
        %v2312 = vunpack.c.l.b16 %v327
        %v2313 = vunpack.c.h.b16 %v327
        %v2314 = vunpack.c.l.b16 %v328
        %v2315 = vunpack.c.h.b16 %v328
        %v2316 = vunpack.c.l.b16 %v329
        %v2317 = vunpack.c.h.b16 %v329
        %v2318 = vunpack.c.l.b16 %v330
        %v2319 = vunpack.c.h.b16 %v330
        %v2320 = vunpack.c.l.b16 %v331
        %v2321 = vunpack.c.h.b16 %v331
        %v2322 = vunpack.c.l.b16 %v332
        %v2323 = vunpack.c.h.b16 %v332
        %v2324 = vunpack.c.l.b16 %v333
        %v2325 = vunpack.c.h.b16 %v333
        %v2326 = vunpack.c.l.b16 %v334
        %v2327 = vunpack.c.h.b16 %v334
        %v2328 = vunpack.c.l.b16 %v335
        %v2329 = vunpack.c.h.b16 %v335
        %v2330 = vunpack.c.l.b16 %v336
        %v2331 = vunpack.c.h.b16 %v336
        %v2332 = vunpack.c.l.b16 %v337
        %v2333 = vunpack.c.h.b16 %v337
        %v2334 = vunpack.c.l.b16 %v338
        %v2335 = vunpack.c.h.b16 %v338
        %v2336 = vunpack.c.l.b16 %v339
        %v2337 = vunpack.c.h.b16 %v339
        %v2338 = vunpack.c.l.b16 %v340
        %v2339 = vunpack.c.h.b16 %v340
        %v2340 = vunpack.c.l.b16 %v341
        %v2341 = vunpack.c.h.b16 %v341
        %v2342 = vunpack.c.l.b16 %v342
        %v2343 = vunpack.c.h.b16 %v342
        %v2344 = vunpack.c.l.b16 %v343
        %v2345 = vunpack.c.h.b16 %v343
        %v2346 = vunpack.c.l.b16 %v344
        %v2347 = vunpack.c.h.b16 %v344
        %v2348 = vunpack.c.l.b16 %v345
        %v2349 = vunpack.c.h.b16 %v345
        %v2350 = vunpack.c.l.b16 %v346
        %v2351 = vunpack.c.h.b16 %v346
        %v2352 = vunpack.c.l.b16 %v347
        %v2353 = vunpack.c.h.b16 %v347
        %v2354 = vunpack.c.l.b16 %v348
        %v2355 = vunpack.c.h.b16 %v348
        %v2356 = vunpack.c.l.b16 %v349
        %v2357 = vunpack.c.h.b16 %v349
        %v2358 = vunpack.c.l.b16 %v350
        %v2359 = vunpack.c.h.b16 %v350
        %v2360 = vunpack.c.l.b16 %v351
        %v2361 = vunpack.c.h.b16 %v351
        %v2362 = vunpack.c.l.b16 %v352
        %v2363 = vunpack.c.h.b16 %v352
        %v2364 = vunpack.c.l.b16 %v353
        %v2365 = vunpack.c.h.b16 %v353
        %v2366 = vunpack.c.l.b16 %v354
        %v2367 = vunpack.c.h.b16 %v354
        %v2368 = vunpack.c.l.b16 %v355
        %v2369 = vunpack.c.h.b16 %v355
        %v2370 = vunpack.c.l.b16 %v356
        %v2371 = vunpack.c.h.b16 %v356
        %v2372 = vunpack.c.l.b16 %v357
        %v2373 = vunpack.c.h.b16 %v357
        %v2374 = vunpack.c.l.b16 %v358
        %v2375 = vunpack.c.h.b16 %v358
        %v2376 = vunpack.c.l.b16 %v359
        %v2377 = vunpack.c.h.b16 %v359
        %v2378 = vunpack.c.l.b16 %v360
        %v2379 = vunpack.c.h.b16 %v360
        %v2380 = vunpack.c.l.b16 %v361
        %v2381 = vunpack.c.h.b16 %v361
        %v2382 = vunpack.c.l.b16 %v362
        %v2383 = vunpack.c.h.b16 %v362
        %v2384 = vunpack.c.l.b16 %v363
        %v2385 = vunpack.c.h.b16 %v363
        %v2386 = vunpack.c.l.b16 %v364
        %v2387 = vunpack.c.h.b16 %v364
        %v2388 = vunpack.c.l.b16 %v365
        %v2389 = vunpack.c.h.b16 %v365
        %v2390 = vunpack.c.l.b16 %v366
        %v2391 = vunpack.c.h.b16 %v366
        %v2392 = vunpack.c.l.b16 %v367
        %v2393 = vunpack.c.h.b16 %v367
        %v2394 = vunpack.c.l.b16 %v368
        %v2395 = vunpack.c.h.b16 %v368
        %v2396 = vunpack.c.l.b16 %v369
        %v2397 = vunpack.c.h.b16 %v369
        %v2398 = vunpack.c.l.b16 %v370
        %v2399 = vunpack.c.h.b16 %v370
        %v2400 = vunpack.c.l.b16 %v371
        %v2401 = vunpack.c.h.b16 %v371
        %v2402 = vunpack.c.l.b16 %v372
        %v2403 = vunpack.c.h.b16 %v372
        %v2404 = vunpack.c.l.b16 %v373
        %v2405 = vunpack.c.h.b16 %v373
        %v2406 = vunpack.c.l.b16 %v374
        %v2407 = vunpack.c.h.b16 %v374
        %v2408 = vunpack.c.l.b16 %v375
        %v2409 = vunpack.c.h.b16 %v375
        %v2410 = vunpack.c.l.b16 %v376
        %v2411 = vunpack.c.h.b16 %v376
        %v2412 = vunpack.c.l.b16 %v377
        %v2413 = vunpack.c.h.b16 %v377
        %v2414 = vunpack.c.l.b16 %v378
        %v2415 = vunpack.c.h.b16 %v378
        %v2416 = vunpack.c.l.b16 %v379
        %v2417 = vunpack.c.h.b16 %v379
        %v2418 = vunpack.c.l.b16 %v380
        %v2419 = vunpack.c.h.b16 %v380
        %v2420 = vunpack.c.l.b16 %v381
        %v2421 = vunpack.c.h.b16 %v381
        %v2422 = vunpack.c.l.b16 %v382
        %v2423 = vunpack.c.h.b16 %v382
        %v2424 = vunpack.c.l.b16 %v383
        %v2425 = vunpack.c.h.b16 %v383
        %v2426 = vunpack.c.l.b16 %v384
        %v2427 = vunpack.c.h.b16 %v384
        %v2428 = vunpack.c.l.b16 %v385
        %v2429 = vunpack.c.h.b16 %v385
        %v2430 = vunpack.c.l.b16 %v386
        %v2431 = vunpack.c.h.b16 %v386
        %v2432 = vunpack.c.l.b16 %v387
        %v2433 = vunpack.c.h.b16 %v387
        %v2434 = vunpack.c.l.b16 %v388
        %v2435 = vunpack.c.h.b16 %v388
        %v2436 = vunpack.c.l.b16 %v389
        %v2437 = vunpack.c.h.b16 %v389
        %v2438 = vunpack.c.l.b16 %v390
        %v2439 = vunpack.c.h.b16 %v390
        %v2440 = vunpack.c.l.b16 %v391
        %v2441 = vunpack.c.h.b16 %v391
        %v2442 = vunpack.c.l.b16 %v392
        %v2443 = vunpack.c.h.b16 %v392
        %v2444 = vunpack.c.l.b16 %v393
        %v2445 = vunpack.c.h.b16 %v393
        %v2446 = vunpack.c.l.b16 %v394
        %v2447 = vunpack.c.h.b16 %v394
        %v2448 = vunpack.c.l.b16 %v395
        %v2449 = vunpack.c.h.b16 %v395
        %v2450 = vunpack.c.l.b16 %v396
        %v2451 = vunpack.c.h.b16 %v396
        %v2452 = vunpack.c.l.b16 %v397
        %v2453 = vunpack.c.h.b16 %v397
        %v2454 = vunpack.c.l.b16 %v398
        %v2455 = vunpack.c.h.b16 %v398
        %v2456 = vunpack.c.l.b16 %v399
        %v2457 = vunpack.c.h.b16 %v399
        %v2458 = vunpack.c.l.b16 %v400
        %v2459 = vunpack.c.h.b16 %v400
        %v2460 = vunpack.c.l.b16 %v401
        %v2461 = vunpack.c.h.b16 %v401
        %v2462 = vunpack.c.l.b16 %v402
        %v2463 = vunpack.c.h.b16 %v402
        %v2464 = vunpack.c.l.b16 %v403
        %v2465 = vunpack.c.h.b16 %v403
        %v2466 = vunpack.c.l.b16 %v404
        %v2467 = vunpack.c.h.b16 %v404
        %v2468 = vunpack.c.l.b16 %v405
        %v2469 = vunpack.c.h.b16 %v405
        %v2470 = vunpack.c.l.b16 %v406
        %v2471 = vunpack.c.h.b16 %v406
        %v2472 = vunpack.c.l.b16 %v407
        %v2473 = vunpack.c.h.b16 %v407
        %v2474 = vunpack.c.l.b16 %v408
        %v2475 = vunpack.c.h.b16 %v408
        %v2476 = vunpack.c.l.b16 %v409
        %v2477 = vunpack.c.h.b16 %v409
        %v2478 = vunpack.c.l.b16 %v410
        %v2479 = vunpack.c.h.b16 %v410
        %v2480 = vunpack.c.l.b16 %v411
        %v2481 = vunpack.c.h.b16 %v411
        %v2482 = vunpack.c.l.b16 %v412
        %v2483 = vunpack.c.h.b16 %v412
        %v2484 = vunpack.c.l.b16 %v413
        %v2485 = vunpack.c.h.b16 %v413
        %v2486 = vunpack.c.l.b16 %v414
        %v2487 = vunpack.c.h.b16 %v414
        %v2488 = vunpack.c.l.b16 %v415
        %v2489 = vunpack.c.h.b16 %v415
        %v2490 = vunpack.c.l.b16 %v416
        %v2491 = vunpack.c.h.b16 %v416
        %v2492 = vunpack.c.l.b16 %v417
        %v2493 = vunpack.c.h.b16 %v417
        %v2494 = vunpack.c.l.b16 %v418
        %v2495 = vunpack.c.h.b16 %v418
        %v2496 = vunpack.c.l.b16 %v419
        %v2497 = vunpack.c.h.b16 %v419
        %v2498 = vunpack.c.l.b16 %v420
        %v2499 = vunpack.c.h.b16 %v420
        %v2500 = vunpack.c.l.b16 %v421
        %v2501 = vunpack.c.h.b16 %v421
        %v2502 = vunpack.c.l.b16 %v422
        %v2503 = vunpack.c.h.b16 %v422
        %v2504 = vunpack.c.l.b16 %v423
        %v2505 = vunpack.c.h.b16 %v423
        %v2506 = vunpack.c.l.b16 %v424
        %v2507 = vunpack.c.h.b16 %v424
        %v2508 = vunpack.c.l.b16 %v425
        %v2509 = vunpack.c.h.b16 %v425
        %v2510 = vunpack.c.l.b16 %v426
        %v2511 = vunpack.c.h.b16 %v426
        %v2512 = vunpack.c.l.b16 %v427
        %v2513 = vunpack.c.h.b16 %v427
        %v2514 = vunpack.c.l.b16 %v428
        %v2515 = vunpack.c.h.b16 %v428
        %v2516 = vunpack.c.l.b16 %v429
        %v2517 = vunpack.c.h.b16 %v429
        %v2518 = vunpack.c.l.b16 %v430
        %v2519 = vunpack.c.h.b16 %v430
        %v2520 = vunpack.c.l.b16 %v431
        %v2521 = vunpack.c.h.b16 %v431
        %v2522 = vunpack.c.l.b16 %v432
        %v2523 = vunpack.c.h.b16 %v432
        %v2524 = vunpack.c.l.b16 %v433
        %v2525 = vunpack.c.h.b16 %v433
        %v2526 = vunpack.c.l.b16 %v434
        %v2527 = vunpack.c.h.b16 %v434
        %v2528 = vunpack.c.l.b16 %v435
        %v2529 = vunpack.c.h.b16 %v435
        %v2530 = vunpack.c.l.b16 %v436
        %v2531 = vunpack.c.h.b16 %v436
        %v2532 = vunpack.c.l.b16 %v437
        %v2533 = vunpack.c.h.b16 %v437
        %v2534 = vunpack.c.l.b16 %v438
        %v2535 = vunpack.c.h.b16 %v438
        %v2536 = vunpack.c.l.b16 %v439
        %v2537 = vunpack.c.h.b16 %v439
        %v2538 = vunpack.c.l.b16 %v440
        %v2539 = vunpack.c.h.b16 %v440
        %v2540 = vunpack.c.l.b16 %v441
        %v2541 = vunpack.c.h.b16 %v441
        %v2542 = vunpack.c.l.b16 %v442
        %v2543 = vunpack.c.h.b16 %v442
        %v2544 = vunpack.c.l.b16 %v443
        %v2545 = vunpack.c.h.b16 %v443
        %v2546 = vunpack.c.l.b16 %v444
        %v2547 = vunpack.c.h.b16 %v444
        %v2548 = vunpack.c.l.b16 %v445
        %v2549 = vunpack.c.h.b16 %v445
        %v2550 = vunpack.c.l.b16 %v446
        %v2551 = vunpack.c.h.b16 %v446
        %v2552 = vunpack.c.l.b16 %v447
        %v2553 = vunpack.c.h.b16 %v447
        %v2554 = vunpack.c.l.b16 %v448
        %v2555 = vunpack.c.h.b16 %v448
        %v2556 = vunpack.c.l.b16 %v449
        %v2557 = vunpack.c.h.b16 %v449
        %v2558 = vunpack.c.l.b16 %v450
        %v2559 = vunpack.c.h.b16 %v450
        %v2560 = vunpack.c.l.b16 %v451
        %v2561 = vunpack.c.h.b16 %v451
        %v2562 = vunpack.c.l.b16 %v452
        %v2563 = vunpack.c.h.b16 %v452
        %v2564 = vunpack.c.l.b16 %v453
        %v2565 = vunpack.c.h.b16 %v453
        %v2566 = vunpack.c.l.b16 %v454
        %v2567 = vunpack.c.h.b16 %v454
        %v2568 = vunpack.c.l.b16 %v455
        %v2569 = vunpack.c.h.b16 %v455
        %v2570 = vunpack.c.l.b16 %v456
        %v2571 = vunpack.c.h.b16 %v456
        %v2572 = vunpack.c.l.b16 %v457
        %v2573 = vunpack.c.h.b16 %v457
        %v2574 = vunpack.c.l.b16 %v458
        %v2575 = vunpack.c.h.b16 %v458
        %v2576 = vunpack.c.l.b16 %v459
        %v2577 = vunpack.c.h.b16 %v459
        %v2578 = vunpack.c.l.b16 %v460
        %v2579 = vunpack.c.h.b16 %v460
        %v2580 = vunpack.c.l.b16 %v461
        %v2581 = vunpack.c.h.b16 %v461
        %v2582 = vunpack.c.l.b16 %v462
        %v2583 = vunpack.c.h.b16 %v462
        %v2584 = vunpack.c.l.b16 %v463
        %v2585 = vunpack.c.h.b16 %v463
        %v2586 = vunpack.c.l.b16 %v464
        %v2587 = vunpack.c.h.b16 %v464
        %v2588 = vunpack.c.l.b16 %v465
        %v2589 = vunpack.c.h.b16 %v465
        %v2590 = vunpack.c.l.b16 %v466
        %v2591 = vunpack.c.h.b16 %v466
        %v2592 = vunpack.c.l.b16 %v467
        %v2593 = vunpack.c.h.b16 %v467
        %v2594 = vunpack.c.l.b16 %v468
        %v2595 = vunpack.c.h.b16 %v468
        %v2596 = vunpack.c.l.b16 %v469
        %v2597 = vunpack.c.h.b16 %v469
        %v2598 = vunpack.c.l.b16 %v470
        %v2599 = vunpack.c.h.b16 %v470
        %v2600 = vunpack.c.l.b16 %v471
        %v2601 = vunpack.c.h.b16 %v471
        %v2602 = vunpack.c.l.b16 %v472
        %v2603 = vunpack.c.h.b16 %v472
        %v2604 = vunpack.c.l.b16 %v473
        %v2605 = vunpack.c.h.b16 %v473
        %v2606 = vunpack.c.l.b16 %v474
        %v2607 = vunpack.c.h.b16 %v474
        %v2608 = vunpack.c.l.b16 %v475
        %v2609 = vunpack.c.h.b16 %v475
        %v2610 = vunpack.c.l.b16 %v476
        %v2611 = vunpack.c.h.b16 %v476
        %v2612 = vunpack.c.l.b16 %v477
        %v2613 = vunpack.c.h.b16 %v477
        %v2614 = vunpack.c.l.b16 %v478
        %v2615 = vunpack.c.h.b16 %v478
        %v2616 = vunpack.c.l.b16 %v479
        %v2617 = vunpack.c.h.b16 %v479
        %v2618 = vunpack.c.l.b16 %v480
        %v2619 = vunpack.c.h.b16 %v480
        %v2620 = vunpack.c.l.b16 %v481
        %v2621 = vunpack.c.h.b16 %v481
        %v2622 = vunpack.c.l.b16 %v482
        %v2623 = vunpack.c.h.b16 %v482
        %v2624 = vunpack.c.l.b16 %v483
        %v2625 = vunpack.c.h.b16 %v483
        %v2626 = vunpack.c.l.b16 %v484
        %v2627 = vunpack.c.h.b16 %v484
        %v2628 = vunpack.c.l.b16 %v485
        %v2629 = vunpack.c.h.b16 %v485
        %v2630 = vunpack.c.l.b16 %v486
        %v2631 = vunpack.c.h.b16 %v486
        %v2632 = vunpack.c.l.b16 %v487
        %v2633 = vunpack.c.h.b16 %v487
        %v2634 = vunpack.c.l.b16 %v488
        %v2635 = vunpack.c.h.b16 %v488
        %v2636 = vunpack.c.l.b16 %v489
        %v2637 = vunpack.c.h.b16 %v489
        %v2638 = vunpack.c.l.b16 %v490
        %v2639 = vunpack.c.h.b16 %v490
        %v2640 = vunpack.c.l.b16 %v491
        %v2641 = vunpack.c.h.b16 %v491
        %v2642 = vunpack.c.l.b16 %v492
        %v2643 = vunpack.c.h.b16 %v492
        %v2644 = vunpack.c.l.b16 %v493
        %v2645 = vunpack.c.h.b16 %v493
        %v2646 = vunpack.c.l.b16 %v494
        %v2647 = vunpack.c.h.b16 %v494
        %v2648 = vunpack.c.l.b16 %v495
        %v2649 = vunpack.c.h.b16 %v495
        %v2650 = vunpack.c.l.b16 %v496
        %v2651 = vunpack.c.h.b16 %v496
        %v2652 = vunpack.c.l.b16 %v497
        %v2653 = vunpack.c.h.b16 %v497
        %v2654 = vunpack.c.l.b16 %v498
        %v2655 = vunpack.c.h.b16 %v498
        %v2656 = vunpack.c.l.b16 %v499
        %v2657 = vunpack.c.h.b16 %v499
        %v2658 = vunpack.c.l.b16 %v500
        %v2659 = vunpack.c.h.b16 %v500
        %v2660 = vunpack.c.l.b16 %v501
        %v2661 = vunpack.c.h.b16 %v501
        %v2662 = vunpack.c.l.b16 %v502
        %v2663 = vunpack.c.h.b16 %v502
        %v2664 = vunpack.c.l.b16 %v503
        %v2665 = vunpack.c.h.b16 %v503
        %v2666 = vunpack.c.l.b16 %v504
        %v2667 = vunpack.c.h.b16 %v504
        %v2668 = vunpack.c.l.b16 %v505
        %v2669 = vunpack.c.h.b16 %v505
        %v2670 = vunpack.c.l.b16 %v506
        %v2671 = vunpack.c.h.b16 %v506
        %v2672 = vunpack.c.l.b16 %v507
        %v2673 = vunpack.c.h.b16 %v507
        %v2674 = vunpack.c.l.b16 %v508
        %v2675 = vunpack.c.h.b16 %v508
        %v2676 = vunpack.c.l.b16 %v509
        %v2677 = vunpack.c.h.b16 %v509
        %v2678 = vunpack.c.l.b16 %v510
        %v2679 = vunpack.c.h.b16 %v510
        %v2680 = vunpack.c.l.b16 %v511
        %v2681 = vunpack.c.h.b16 %v511
        %v2682 = vunpack.c.l.b16 %v512
        %v2683 = vunpack.c.h.b16 %v512
        %v2684 = vunpack.c.l.b16 %v513
        %v2685 = vunpack.c.h.b16 %v513
        %v2686 = vunpack.c.l.b16 %v514
        %v2687 = vunpack.c.h.b16 %v514
        %v2688 = vunpack.c.l.b16 %v515
        %v2689 = vunpack.c.h.b16 %v515
        %v2690 = vunpack.c.l.b16 %v516
        %v2691 = vunpack.c.h.b16 %v516
        %v2692 = vunpack.c.l.b16 %v517
        %v2693 = vunpack.c.h.b16 %v517
        %v2694 = vunpack.c.l.b16 %v518
        %v2695 = vunpack.c.h.b16 %v518
        %v2696 = vunpack.c.l.b16 %v519
        %v2697 = vunpack.c.h.b16 %v519
        %v2698 = vunpack.c.l.b16 %v520
        %v2699 = vunpack.c.h.b16 %v520
        %v2700 = vunpack.c.l.b16 %v521
        %v2701 = vunpack.c.h.b16 %v521
        %v2702 = vunpack.c.l.b16 %v522
        %v2703 = vunpack.c.h.b16 %v522
        %v2704 = vunpack.c.l.b16 %v523
        %v2705 = vunpack.c.h.b16 %v523
        %v2706 = vunpack.c.l.b16 %v524
        %v2707 = vunpack.c.h.b16 %v524
        %v2708 = vunpack.c.l.b16 %v525
        %v2709 = vunpack.c.h.b16 %v525
        %v2710 = vunpack.c.l.b16 %v526
        %v2711 = vunpack.c.h.b16 %v526
        %v2712 = vunpack.c.l.b16 %v527
        %v2713 = vunpack.c.h.b16 %v527
        %v2714 = vunpack.c.l.b16 %v528
        %v2715 = vunpack.c.h.b16 %v528
        %v2716 = vunpack.c.l.b16 %v529
        %v2717 = vunpack.c.h.b16 %v529
        %v2718 = vunpack.c.l.b16 %v530
        %v2719 = vunpack.c.h.b16 %v530
        %v2720 = vunpack.c.l.b16 %v531
        %v2721 = vunpack.c.h.b16 %v531
        %v2722 = vunpack.c.l.b16 %v532
        %v2723 = vunpack.c.h.b16 %v532
        %v2724 = vunpack.c.l.b16 %v533
        %v2725 = vunpack.c.h.b16 %v533
        %v2726 = vunpack.c.l.b16 %v534
        %v2727 = vunpack.c.h.b16 %v534
        %v2728 = vunpack.c.l.b16 %v535
        %v2729 = vunpack.c.h.b16 %v535
        %v2730 = vunpack.c.l.b16 %v536
        %v2731 = vunpack.c.h.b16 %v536
        %v2732 = vunpack.c.l.b16 %v537
        %v2733 = vunpack.c.h.b16 %v537
        %v2734 = vunpack.c.l.b16 %v538
        %v2735 = vunpack.c.h.b16 %v538
        %v2736 = vunpack.c.l.b16 %v539
        %v2737 = vunpack.c.h.b16 %v539
        %v2738 = vunpack.c.l.b16 %v540
        %v2739 = vunpack.c.h.b16 %v540
        %v2740 = vunpack.c.l.b16 %v541
        %v2741 = vunpack.c.h.b16 %v541
        %v2742 = vunpack.c.l.b16 %v542
        %v2743 = vunpack.c.h.b16 %v542
        %v2744 = vunpack.c.l.b16 %v543
        %v2745 = vunpack.c.h.b16 %v543
        %v2746 = vunpack.c.l.b16 %v544
        %v2747 = vunpack.c.h.b16 %v544
        %v2748 = vunpack.c.l.b16 %v545
        %v2749 = vunpack.c.h.b16 %v545
        %v2750 = vunpack.c.l.b16 %v546
        %v2751 = vunpack.c.h.b16 %v546
        %v2752 = vunpack.c.l.b16 %v547
        %v2753 = vunpack.c.h.b16 %v547
        %v2754 = vunpack.c.l.b16 %v548
        %v2755 = vunpack.c.h.b16 %v548
        %v2756 = vunpack.c.l.b16 %v549
        %v2757 = vunpack.c.h.b16 %v549
        %v2758 = vunpack.c.l.b16 %v550
        %v2759 = vunpack.c.h.b16 %v550
        %v2760 = vunpack.c.l.b16 %v551
        %v2761 = vunpack.c.h.b16 %v551
        %v2762 = vunpack.c.l.b16 %v552
        %v2763 = vunpack.c.h.b16 %v552
        %v2764 = vunpack.c.l.b16 %v553
        %v2765 = vunpack.c.h.b16 %v553
        %v2766 = vunpack.c.l.b16 %v554
        %v2767 = vunpack.c.h.b16 %v554
        %v2768 = vunpack.c.l.b16 %v555
        %v2769 = vunpack.c.h.b16 %v555
        %v2770 = vunpack.c.l.b16 %v556
        %v2771 = vunpack.c.h.b16 %v556
        %v2772 = vunpack.c.l.b16 %v557
        %v2773 = vunpack.c.h.b16 %v557
        %v2774 = vunpack.c.l.b16 %v558
        %v2775 = vunpack.c.h.b16 %v558
        %v2776 = vunpack.c.l.b16 %v559
        %v2777 = vunpack.c.h.b16 %v559
        %v2778 = vunpack.c.l.b16 %v560
        %v2779 = vunpack.c.h.b16 %v560
        %v2780 = vunpack.c.l.b16 %v561
        %v2781 = vunpack.c.h.b16 %v561
        %v2782 = vunpack.c.l.b16 %v562
        %v2783 = vunpack.c.h.b16 %v562
        %v2784 = vunpack.c.l.b16 %v563
        %v2785 = vunpack.c.h.b16 %v563
        %v2786 = vunpack.c.l.b16 %v564
        %v2787 = vunpack.c.h.b16 %v564
        %v2788 = vunpack.c.l.b16 %v565
        %v2789 = vunpack.c.h.b16 %v565
        %v2790 = vunpack.c.l.b16 %v566
        %v2791 = vunpack.c.h.b16 %v566
        %v2792 = vunpack.c.l.b16 %v567
        %v2793 = vunpack.c.h.b16 %v567
        %v2794 = vunpack.c.l.b16 %v568
        %v2795 = vunpack.c.h.b16 %v568
        %v2796 = vunpack.c.l.b16 %v569
        %v2797 = vunpack.c.h.b16 %v569
        %v2798 = vunpack.c.l.b16 %v570
        %v2799 = vunpack.c.h.b16 %v570
        %v2800 = vunpack.c.l.b16 %v571
        %v2801 = vunpack.c.h.b16 %v571
        %v2802 = vunpack.c.l.b16 %v572
        %v2803 = vunpack.c.h.b16 %v572
        %v2804 = vunpack.c.l.b16 %v573
        %v2805 = vunpack.c.h.b16 %v573
        %v2806 = vunpack.c.l.b16 %v574
        %v2807 = vunpack.c.h.b16 %v574
        %v2808 = vunpack.c.l.b16 %v575
        %v2809 = vunpack.c.h.b16 %v575
        %v2810 = vunpack.c.l.b16 %v576
        %v2811 = vunpack.c.h.b16 %v576
        %v2812 = vunpack.c.l.b16 %v577
        %v2813 = vunpack.c.h.b16 %v577
        %v2814 = vunpack.c.l.b16 %v578
        %v2815 = vunpack.c.h.b16 %v578
        %v2816 = vunpack.c.l.b16 %v579
        %v2817 = vunpack.c.h.b16 %v579
        %v2818 = vunpack.c.l.b16 %v580
        %v2819 = vunpack.c.h.b16 %v580
        %v2820 = vunpack.c.l.b16 %v581
        %v2821 = vunpack.c.h.b16 %v581
        %v2822 = vunpack.c.l.b16 %v582
        %v2823 = vunpack.c.h.b16 %v582
        %v2824 = vunpack.c.l.b16 %v583
        %v2825 = vunpack.c.h.b16 %v583
        %v2826 = vunpack.c.l.b16 %v584
        %v2827 = vunpack.c.h.b16 %v584
        %v2828 = vunpack.c.l.b16 %v585
        %v2829 = vunpack.c.h.b16 %v585
        %v2830 = vunpack.c.l.b16 %v586
        %v2831 = vunpack.c.h.b16 %v586
        %v2832 = vunpack.c.l.b16 %v587
        %v2833 = vunpack.c.h.b16 %v587
        %v2834 = vunpack.c.l.b16 %v588
        %v2835 = vunpack.c.h.b16 %v588
        %v2836 = vunpack.c.l.b16 %v589
        %v2837 = vunpack.c.h.b16 %v589
        %v2838 = vunpack.c.l.b16 %v590
        %v2839 = vunpack.c.h.b16 %v590
        %v2840 = vunpack.c.l.b16 %v591
        %v2841 = vunpack.c.h.b16 %v591
        %v2842 = vunpack.c.l.b16 %v592
        %v2843 = vunpack.c.h.b16 %v592
        %v2844 = vunpack.c.l.b16 %v593
        %v2845 = vunpack.c.h.b16 %v593
        %v2846 = vunpack.c.l.b16 %v594
        %v2847 = vunpack.c.h.b16 %v594
        %v2848 = vunpack.c.l.b16 %v595
        %v2849 = vunpack.c.h.b16 %v595
        %v2850 = vunpack.c.l.b16 %v596
        %v2851 = vunpack.c.h.b16 %v596
        %v2852 = vunpack.c.l.b16 %v597
        %v2853 = vunpack.c.h.b16 %v597
        %v2854 = vunpack.c.l.b16 %v598
        %v2855 = vunpack.c.h.b16 %v598
        %v2856 = vunpack.c.l.b16 %v599
        %v2857 = vunpack.c.h.b16 %v599
        %v2858 = vunpack.c.l.b16 %v600
        %v2859 = vunpack.c.h.b16 %v600
        %v2860 = vunpack.c.l.b16 %v601
        %v2861 = vunpack.c.h.b16 %v601
        %v2862 = vunpack.c.l.b16 %v602
        %v2863 = vunpack.c.h.b16 %v602
        %v2864 = vunpack.c.l.b16 %v603
        %v2865 = vunpack.c.h.b16 %v603
        %v2866 = vunpack.c.l.b16 %v604
        %v2867 = vunpack.c.h.b16 %v604
        %v2868 = vunpack.c.l.b16 %v605
        %v2869 = vunpack.c.h.b16 %v605
        %v2870 = vunpack.c.l.b16 %v606
        %v2871 = vunpack.c.h.b16 %v606
        %v2872 = vunpack.c.l.b16 %v607
        %v2873 = vunpack.c.h.b16 %v607
        %v2874 = vunpack.c.l.b16 %v608
        %v2875 = vunpack.c.h.b16 %v608
        %v2876 = vunpack.c.l.b16 %v609
        %v2877 = vunpack.c.h.b16 %v609
        %v2878 = vunpack.c.l.b16 %v610
        %v2879 = vunpack.c.h.b16 %v610
        %v2880 = vunpack.c.l.b16 %v611
        %v2881 = vunpack.c.h.b16 %v611
        %v2882 = vunpack.c.l.b16 %v612
        %v2883 = vunpack.c.h.b16 %v612
        %v2884 = vunpack.c.l.b16 %v613
        %v2885 = vunpack.c.h.b16 %v613
        %v2886 = vunpack.c.l.b16 %v614
        %v2887 = vunpack.c.h.b16 %v614
        %v2888 = vunpack.c.l.b16 %v615
        %v2889 = vunpack.c.h.b16 %v615
        %v2890 = vunpack.c.l.b16 %v616
        %v2891 = vunpack.c.h.b16 %v616
        %v2892 = vunpack.c.l.b16 %v617
        %v2893 = vunpack.c.h.b16 %v617
        %v2894 = vunpack.c.l.b16 %v618
        %v2895 = vunpack.c.h.b16 %v618
        %v2896 = vunpack.c.l.b16 %v619
        %v2897 = vunpack.c.h.b16 %v619
        %v2898 = vunpack.c.l.b16 %v620
        %v2899 = vunpack.c.h.b16 %v620
        %v2900 = vunpack.c.l.b16 %v621
        %v2901 = vunpack.c.h.b16 %v621
        %v2902 = vunpack.c.l.b16 %v622
        %v2903 = vunpack.c.h.b16 %v622
        %v2904 = vunpack.c.l.b16 %v623
        %v2905 = vunpack.c.h.b16 %v623
        %v2906 = vunpack.c.l.b16 %v624
        %v2907 = vunpack.c.h.b16 %v624
        %v2908 = vunpack.c.l.b16 %v625
        %v2909 = vunpack.c.h.b16 %v625
        %v2910 = vunpack.c.l.b16 %v626
        %v2911 = vunpack.c.h.b16 %v626
        %v2912 = vunpack.c.l.b16 %v627
        %v2913 = vunpack.c.h.b16 %v627
        %v2914 = vunpack.c.l.b16 %v628
        %v2915 = vunpack.c.h.b16 %v628
        %v2916 = vunpack.c.l.b16 %v629
        %v2917 = vunpack.c.h.b16 %v629
        %v2918 = vunpack.c.l.b16 %v630
        %v2919 = vunpack.c.h.b16 %v630
        %v2920 = vunpack.c.l.b16 %v631
        %v2921 = vunpack.c.h.b16 %v631
        %v2922 = vunpack.c.l.b16 %v632
        %v2923 = vunpack.c.h.b16 %v632
        %v2924 = vunpack.c.l.b16 %v633
        %v2925 = vunpack.c.h.b16 %v633
        %v2926 = vunpack.c.l.b16 %v634
        %v2927 = vunpack.c.h.b16 %v634
        %v2928 = vunpack.c.l.b16 %v635
        %v2929 = vunpack.c.h.b16 %v635
        %v2930 = vunpack.c.l.b16 %v636
        %v2931 = vunpack.c.h.b16 %v636
        %v2932 = vunpack.c.l.b16 %v637
        %v2933 = vunpack.c.h.b16 %v637
        %v2934 = vunpack.c.l.b16 %v638
        %v2935 = vunpack.c.h.b16 %v638
        %v2936 = vunpack.c.l.b16 %v639
        %v2937 = vunpack.c.h.b16 %v639
        %v2938 = vunpack.c.l.b16 %v640
        %v2939 = vunpack.c.h.b16 %v640
        %v2940 = vunpack.c.l.b16 %v641
        %v2941 = vunpack.c.h.b16 %v641
        %v2942 = vunpack.c.l.b16 %v642
        %v2943 = vunpack.c.h.b16 %v642
        %v2944 = vunpack.c.l.b16 %v643
        %v2945 = vunpack.c.h.b16 %v643
        %v2946 = vunpack.c.l.b16 %v644
        %v2947 = vunpack.c.h.b16 %v644
        %v2948 = vunpack.c.l.b16 %v645
        %v2949 = vunpack.c.h.b16 %v645
        %v2950 = vunpack.c.l.b16 %v646
        %v2951 = vunpack.c.h.b16 %v646
        %v2952 = vunpack.c.l.b16 %v647
        %v2953 = vunpack.c.h.b16 %v647
        %v2954 = vunpack.c.l.b16 %v648
        %v2955 = vunpack.c.h.b16 %v648
        %v2956 = vunpack.c.l.b16 %v649
        %v2957 = vunpack.c.h.b16 %v649
        %v2958 = vunpack.c.l.b16 %v650
        %v2959 = vunpack.c.h.b16 %v650
        %v2960 = vunpack.c.l.b16 %v651
        %v2961 = vunpack.c.h.b16 %v651
        %v2962 = vunpack.c.l.b16 %v652
        %v2963 = vunpack.c.h.b16 %v652
        %v2964 = vunpack.c.l.b16 %v653
        %v2965 = vunpack.c.h.b16 %v653
        %v2966 = vunpack.c.l.b16 %v654
        %v2967 = vunpack.c.h.b16 %v654
        %v2968 = vunpack.c.l.b16 %v655
        %v2969 = vunpack.c.h.b16 %v655
        %v2970 = vunpack.c.l.b16 %v656
        %v2971 = vunpack.c.h.b16 %v656
        %v2972 = vunpack.c.l.b16 %v657
        %v2973 = vunpack.c.h.b16 %v657
        %v2974 = vunpack.c.l.b16 %v658
        %v2975 = vunpack.c.h.b16 %v658
        %v2976 = vunpack.c.l.b16 %v659
        %v2977 = vunpack.c.h.b16 %v659
        %v2978 = vunpack.c.l.b16 %v660
        %v2979 = vunpack.c.h.b16 %v660
        %v2980 = vunpack.c.l.b16 %v661
        %v2981 = vunpack.c.h.b16 %v661
        %v2982 = vunpack.c.l.b16 %v662
        %v2983 = vunpack.c.h.b16 %v662
        %v2984 = vunpack.c.l.b16 %v663
        %v2985 = vunpack.c.h.b16 %v663
        %v2986 = vunpack.c.l.b16 %v664
        %v2987 = vunpack.c.h.b16 %v664
        %v2988 = vunpack.c.l.b16 %v665
        %v2989 = vunpack.c.h.b16 %v665
        %v2990 = vunpack.c.l.b16 %v666
        %v2991 = vunpack.c.h.b16 %v666
        %v2992 = vunpack.c.l.b16 %v667
        %v2993 = vunpack.c.h.b16 %v667
        %v2994 = vunpack.c.l.b16 %v668
        %v2995 = vunpack.c.h.b16 %v668
        %v2996 = vunpack.c.l.b16 %v669
        %v2997 = vunpack.c.h.b16 %v669
        %v2998 = vunpack.c.l.b16 %v670
        %v2999 = vunpack.c.h.b16 %v670
        %v3000 = vunpack.c.l.b16 %v671
        %v3001 = vunpack.c.h.b16 %v671
        %v3002 = vunpack.c.l.b16 %v672
        %v3003 = vunpack.c.h.b16 %v672
        %v3004 = vunpack.c.l.b16 %v673
        %v3005 = vunpack.c.h.b16 %v673
        %v3006 = vunpack.c.l.b16 %v674
        %v3007 = vunpack.c.h.b16 %v674
        %v3008 = vunpack.c.l.b16 %v675
        %v3009 = vunpack.c.h.b16 %v675
        %v3010 = vunpack.c.l.b16 %v676
        %v3011 = vunpack.c.h.b16 %v676
        %v3012 = vunpack.c.l.b16 %v677
        %v3013 = vunpack.c.h.b16 %v677
        %v3014 = vunpack.c.l.b16 %v678
        %v3015 = vunpack.c.h.b16 %v678
        %v3016 = vunpack.c.l.b16 %v679
        %v3017 = vunpack.c.h.b16 %v679
        %v3018 = vunpack.c.l.b16 %v680
        %v3019 = vunpack.c.h.b16 %v680
        %v3020 = vunpack.c.l.b16 %v681
        %v3021 = vunpack.c.h.b16 %v681
        %v3022 = vunpack.c.l.b16 %v682
        %v3023 = vunpack.c.h.b16 %v682
        %v3024 = vunpack.c.l.b16 %v683
        %v3025 = vunpack.c.h.b16 %v683
        %v3026 = vunpack.c.l.b16 %v684
        %v3027 = vunpack.c.h.b16 %v684
        %v3028 = vunpack.c.l.b16 %v685
        %v3029 = vunpack.c.h.b16 %v685
        %v3030 = vunpack.c.l.b16 %v686
        %v3031 = vunpack.c.h.b16 %v686
        %v3032 = vunpack.c.l.b16 %v687
        %v3033 = vunpack.c.h.b16 %v687
        %v3034 = vunpack.c.l.b16 %v688
        %v3035 = vunpack.c.h.b16 %v688
        %v3036 = vunpack.c.l.b16 %v689
        %v3037 = vunpack.c.h.b16 %v689
        %v3038 = vunpack.c.l.b16 %v690
        %v3039 = vunpack.c.h.b16 %v690
        %v3040 = vunpack.c.l.b16 %v691
        %v3041 = vunpack.c.h.b16 %v691
        %v3042 = vunpack.c.l.b16 %v692
        %v3043 = vunpack.c.h.b16 %v692
        %v3044 = vunpack.c.l.b16 %v693
        %v3045 = vunpack.c.h.b16 %v693
        %v3046 = vunpack.c.l.b16 %v694
        %v3047 = vunpack.c.h.b16 %v694
        %v3048 = vunpack.c.l.b16 %v695
        %v3049 = vunpack.c.h.b16 %v695
        %v3050 = vunpack.c.l.b16 %v696
        %v3051 = vunpack.c.h.b16 %v696
        %v3052 = vunpack.c.l.b16 %v697
        %v3053 = vunpack.c.h.b16 %v697
        %v3054 = vunpack.c.l.b16 %v698
        %v3055 = vunpack.c.h.b16 %v698
        %v3056 = vunpack.c.l.b16 %v699
        %v3057 = vunpack.c.h.b16 %v699
        %v3058 = vunpack.c.l.b16 %v700
        %v3059 = vunpack.c.h.b16 %v700
        %v3060 = vunpack.c.l.b16 %v701
        %v3061 = vunpack.c.h.b16 %v701
        %v3062 = vunpack.c.l.b16 %v702
        %v3063 = vunpack.c.h.b16 %v702
        %v3064 = vunpack.c.l.b16 %v703
        %v3065 = vunpack.c.h.b16 %v703
        %v3066 = vunpack.c.l.b16 %v704
        %v3067 = vunpack.c.h.b16 %v704
        %v3068 = vunpack.c.l.b16 %v705
        %v3069 = vunpack.c.h.b16 %v705
        %v3070 = vunpack.c.l.b16 %v706
        %v3071 = vunpack.c.h.b16 %v706
        %v3072 = vunpack.c.l.b16 %v707
        %v3073 = vunpack.c.h.b16 %v707
        %v3074 = vunpack.c.l.b16 %v708
        %v3075 = vunpack.c.h.b16 %v708
        %v3076 = vunpack.c.l.b16 %v709
        %v3077 = vunpack.c.h.b16 %v709
        %v3078 = vunpack.c.l.b16 %v710
        %v3079 = vunpack.c.h.b16 %v710
        %v3080 = vunpack.c.l.b16 %v711
        %v3081 = vunpack.c.h.b16 %v711
        %v3082 = vunpack.c.l.b16 %v712
        %v3083 = vunpack.c.h.b16 %v712
        %v3084 = vunpack.c.l.b16 %v713
        %v3085 = vunpack.c.h.b16 %v713
        %v3086 = vunpack.c.l.b16 %v714
        %v3087 = vunpack.c.h.b16 %v714
        %v3088 = vunpack.c.l.b16 %v715
        %v3089 = vunpack.c.h.b16 %v715
        %v3090 = vunpack.c.l.b16 %v716
        %v3091 = vunpack.c.h.b16 %v716
        %v3092 = vunpack.c.l.b16 %v717
        %v3093 = vunpack.c.h.b16 %v717
        %v3094 = vunpack.c.l.b16 %v718
        %v3095 = vunpack.c.h.b16 %v718
        %v3096 = vunpack.c.l.b16 %v719
        %v3097 = vunpack.c.h.b16 %v719
        %v3098 = vunpack.c.l.b16 %v720
        %v3099 = vunpack.c.h.b16 %v720
        %v3100 = vunpack.c.l.b16 %v721
        %v3101 = vunpack.c.h.b16 %v721
        %v3102 = vunpack.c.l.b16 %v722
        %v3103 = vunpack.c.h.b16 %v722
        %v3104 = vunpack.c.l.b16 %v723
        %v3105 = vunpack.c.h.b16 %v723
        %v3106 = vunpack.c.l.b16 %v724
        %v3107 = vunpack.c.h.b16 %v724
        %v3108 = vunpack.c.l.b16 %v725
        %v3109 = vunpack.c.h.b16 %v725
        %v3110 = vunpack.c.l.b16 %v726
        %v3111 = vunpack.c.h.b16 %v726
        %v3112 = vunpack.c.l.b16 %v727
        %v3113 = vunpack.c.h.b16 %v727
        %v3114 = vunpack.c.l.b16 %v728
        %v3115 = vunpack.c.h.b16 %v728
        %v3116 = vunpack.c.l.b16 %v729
        %v3117 = vunpack.c.h.b16 %v729
        %v3118 = vunpack.c.l.b16 %v730
        %v3119 = vunpack.c.h.b16 %v730
        %v3120 = vunpack.c.l.b16 %v731
        %v3121 = vunpack.c.h.b16 %v731
        %v3122 = vunpack.c.l.b16 %v732
        %v3123 = vunpack.c.h.b16 %v732
        %v3124 = vunpack.c.l.b16 %v733
        %v3125 = vunpack.c.h.b16 %v733
        %v3126 = vunpack.c.l.b16 %v734
        %v3127 = vunpack.c.h.b16 %v734
        %v3128 = vunpack.c.l.b16 %v735
        %v3129 = vunpack.c.h.b16 %v735
        %v3130 = vunpack.c.l.b16 %v736
        %v3131 = vunpack.c.h.b16 %v736
        %v3132 = vunpack.c.l.b16 %v737
        %v3133 = vunpack.c.h.b16 %v737
        %v3134 = vunpack.c.l.b16 %v738
        %v3135 = vunpack.c.h.b16 %v738
        %v3136 = vunpack.c.l.b16 %v739
        %v3137 = vunpack.c.h.b16 %v739
        %v3138 = vunpack.c.l.b16 %v740
        %v3139 = vunpack.c.h.b16 %v740
        %v3140 = vunpack.c.l.b16 %v741
        %v3141 = vunpack.c.h.b16 %v741
        %v3142 = vunpack.c.l.b16 %v742
        %v3143 = vunpack.c.h.b16 %v742
        %v3144 = vunpack.c.l.b16 %v743
        %v3145 = vunpack.c.h.b16 %v743
        %v3146 = vunpack.c.l.b16 %v744
        %v3147 = vunpack.c.h.b16 %v744
        %v3148 = vunpack.c.l.b16 %v745
        %v3149 = vunpack.c.h.b16 %v745
        %v3150 = vunpack.c.l.b16 %v746
        %v3151 = vunpack.c.h.b16 %v746
        %v3152 = vunpack.c.l.b16 %v747
        %v3153 = vunpack.c.h.b16 %v747
        %v3154 = vunpack.c.l.b16 %v748
        %v3155 = vunpack.c.h.b16 %v748
        %v3156 = vunpack.c.l.b16 %v749
        %v3157 = vunpack.c.h.b16 %v749
        %v3158 = vunpack.c.l.b16 %v750
        %v3159 = vunpack.c.h.b16 %v750
        %v3160 = vunpack.c.l.b16 %v751
        %v3161 = vunpack.c.h.b16 %v751
        %v3162 = vunpack.c.l.b16 %v752
        %v3163 = vunpack.c.h.b16 %v752
        %v3164 = vunpack.c.l.b16 %v753
        %v3165 = vunpack.c.h.b16 %v753
        %v3166 = vunpack.c.l.b16 %v754
        %v3167 = vunpack.c.h.b16 %v754
        %v3168 = vunpack.c.l.b16 %v755
        %v3169 = vunpack.c.h.b16 %v755
        %v3170 = vunpack.c.l.b16 %v756
        %v3171 = vunpack.c.h.b16 %v756
        %v3172 = vunpack.c.l.b16 %v757
        %v3173 = vunpack.c.h.b16 %v757
        %v3174 = vunpack.c.l.b16 %v758
        %v3175 = vunpack.c.h.b16 %v758
        %v3176 = vunpack.c.l.b16 %v759
        %v3177 = vunpack.c.h.b16 %v759
        %v3178 = vunpack.c.l.b16 %v760
        %v3179 = vunpack.c.h.b16 %v760
        %v3180 = vunpack.c.l.b16 %v761
        %v3181 = vunpack.c.h.b16 %v761
        %v3182 = vunpack.c.l.b16 %v762
        %v3183 = vunpack.c.h.b16 %v762
        %v3184 = vunpack.c.l.b16 %v763
        %v3185 = vunpack.c.h.b16 %v763
        %v3186 = vunpack.c.l.b16 %v764
        %v3187 = vunpack.c.h.b16 %v764
        %v3188 = vunpack.c.l.b16 %v765
        %v3189 = vunpack.c.h.b16 %v765
        %v3190 = vunpack.c.l.b16 %v766
        %v3191 = vunpack.c.h.b16 %v766
        %v3192 = vunpack.c.l.b16 %v767
        %v3193 = vunpack.c.h.b16 %v767
        %v3194 = vunpack.c.l.b16 %v768
        %v3195 = vunpack.c.h.b16 %v768
        %v3196 = vunpack.c.l.b16 %v769
        %v3197 = vunpack.c.h.b16 %v769
        %v3198 = vunpack.c.l.b16 %v770
        %v3199 = vunpack.c.h.b16 %v770
        %v3200 = vunpack.c.l.b16 %v771
        %v3201 = vunpack.c.h.b16 %v771
        %v3202 = vunpack.c.l.b16 %v772
        %v3203 = vunpack.c.h.b16 %v772
        %v3204 = vunpack.c.l.b16 %v773
        %v3205 = vunpack.c.h.b16 %v773
        %v3206 = vunpack.c.l.b16 %v774
        %v3207 = vunpack.c.h.b16 %v774
        %v3208 = vunpack.c.l.b16 %v775
        %v3209 = vunpack.c.h.b16 %v775
        %v3210 = vunpack.c.l.b16 %v776
        %v3211 = vunpack.c.h.b16 %v776
        %v3212 = vunpack.c.l.b16 %v777
        %v3213 = vunpack.c.h.b16 %v777
        %v3214 = vunpack.c.l.b16 %v778
        %v3215 = vunpack.c.h.b16 %v778
        %v3216 = vunpack.c.l.b16 %v779
        %v3217 = vunpack.c.h.b16 %v779
        %v3218 = vunpack.c.l.b16 %v780
        %v3219 = vunpack.c.h.b16 %v780
        %v3220 = vunpack.c.l.b16 %v781
        %v3221 = vunpack.c.h.b16 %v781
        %v3222 = vunpack.c.l.b16 %v782
        %v3223 = vunpack.c.h.b16 %v782
        %v3224 = vunpack.c.l.b16 %v783
        %v3225 = vunpack.c.h.b16 %v783
        %v3226 = vunpack.c.l.b16 %v784
        %v3227 = vunpack.c.h.b16 %v784
        %v3228 = vunpack.c.l.b16 %v785
        %v3229 = vunpack.c.h.b16 %v785
        %v3230 = vunpack.c.l.b16 %v786
        %v3231 = vunpack.c.h.b16 %v786
        %v3232 = vunpack.c.l.b16 %v787
        %v3233 = vunpack.c.h.b16 %v787
        %v3234 = vunpack.c.l.b16 %v788
        %v3235 = vunpack.c.h.b16 %v788
        %v3236 = vunpack.c.l.b16 %v789
        %v3237 = vunpack.c.h.b16 %v789
        %v3238 = vunpack.c.l.b16 %v790
        %v3239 = vunpack.c.h.b16 %v790
        %v3240 = vunpack.c.l.b16 %v791
        %v3241 = vunpack.c.h.b16 %v791
        %v3242 = vunpack.c.l.b16 %v792
        %v3243 = vunpack.c.h.b16 %v792
        %v3244 = vunpack.c.l.b16 %v793
        %v3245 = vunpack.c.h.b16 %v793
        %v3246 = vunpack.c.l.b16 %v794
        %v3247 = vunpack.c.h.b16 %v794
        %v3248 = vunpack.c.l.b16 %v795
        %v3249 = vunpack.c.h.b16 %v795
        %v3250 = vunpack.c.l.b16 %v796
        %v3251 = vunpack.c.h.b16 %v796
        %v3252 = vunpack.c.l.b16 %v797
        %v3253 = vunpack.c.h.b16 %v797
        %v3254 = vunpack.c.l.b16 %v798
        %v3255 = vunpack.c.h.b16 %v798
        %v3256 = vunpack.c.l.b16 %v799
        %v3257 = vunpack.c.h.b16 %v799
        %v3258 = vunpack.c.l.b16 %v800
        %v3259 = vunpack.c.h.b16 %v800
        %v3260 = vunpack.c.l.b16 %v801
        %v3261 = vunpack.c.h.b16 %v801
        %v3262 = vunpack.c.l.b16 %v802
        %v3263 = vunpack.c.h.b16 %v802
        %v3264 = vunpack.c.l.b16 %v803
        %v3265 = vunpack.c.h.b16 %v803
        %v3266 = vunpack.c.l.b16 %v804
        %v3267 = vunpack.c.h.b16 %v804
        %v3268 = vunpack.c.l.b16 %v805
        %v3269 = vunpack.c.h.b16 %v805
        %v3270 = vunpack.c.l.b16 %v806
        %v3271 = vunpack.c.h.b16 %v806
        %v3272 = vunpack.c.l.b16 %v807
        %v3273 = vunpack.c.h.b16 %v807
        %v3274 = vunpack.c.l.b16 %v808
        %v3275 = vunpack.c.h.b16 %v808
        %v3276 = vunpack.c.l.b16 %v809
        %v3277 = vunpack.c.h.b16 %v809
        %v3278 = vunpack.c.l.b16 %v810
        %v3279 = vunpack.c.h.b16 %v810
        %v3280 = vunpack.c.l.b16 %v811
        %v3281 = vunpack.c.h.b16 %v811
        %v3282 = vunpack.c.l.b16 %v812
        %v3283 = vunpack.c.h.b16 %v812
        %v3284 = vunpack.c.l.b16 %v813
        %v3285 = vunpack.c.h.b16 %v813
        %v3286 = vunpack.c.l.b16 %v814
        %v3287 = vunpack.c.h.b16 %v814
        %v3288 = vunpack.c.l.b16 %v815
        %v3289 = vunpack.c.h.b16 %v815
        %v3290 = vunpack.c.l.b16 %v816
        %v3291 = vunpack.c.h.b16 %v816
        %v3292 = vunpack.c.l.b16 %v817
        %v3293 = vunpack.c.h.b16 %v817
        %v3294 = vunpack.c.l.b16 %v818
        %v3295 = vunpack.c.h.b16 %v818
        %v3296 = vunpack.c.l.b16 %v819
        %v3297 = vunpack.c.h.b16 %v819
        %v3298 = vunpack.c.l.b16 %v820
        %v3299 = vunpack.c.h.b16 %v820
        %v3300 = vunpack.c.l.b16 %v821
        %v3301 = vunpack.c.h.b16 %v821
        %v3302 = vunpack.c.l.b16 %v822
        %v3303 = vunpack.c.h.b16 %v822
        %v3304 = vunpack.c.l.b16 %v823
        %v3305 = vunpack.c.h.b16 %v823
        %v3306 = vunpack.c.l.b16 %v824
        %v3307 = vunpack.c.h.b16 %v824
        %v3308 = vunpack.c.l.b16 %v825
        %v3309 = vunpack.c.h.b16 %v825
        %v3310 = vunpack.c.l.b16 %v826
        %v3311 = vunpack.c.h.b16 %v826
        %v3312 = vunpack.c.l.b16 %v827
        %v3313 = vunpack.c.h.b16 %v827
        %v3314 = vunpack.c.l.b16 %v828
        %v3315 = vunpack.c.h.b16 %v828
        %v3316 = vunpack.c.l.b16 %v829
        %v3317 = vunpack.c.h.b16 %v829
        %v3318 = vunpack.c.l.b16 %v830
        %v3319 = vunpack.c.h.b16 %v830
        %v3320 = vunpack.c.l.b16 %v831
        %v3321 = vunpack.c.h.b16 %v831
        %v3322 = vunpack.c.l.b16 %v832
        %v3323 = vunpack.c.h.b16 %v832
        %v3324 = vunpack.c.l.b16 %v833
        %v3325 = vunpack.c.h.b16 %v833
        %v3326 = vunpack.c.l.b16 %v834
        %v3327 = vunpack.c.h.b16 %v834
        %v3328 = vunpack.c.l.b16 %v835
        %v3329 = vunpack.c.h.b16 %v835
        %v3330 = vunpack.c.l.b16 %v836
        %v3331 = vunpack.c.h.b16 %v836
        %v3332 = vunpack.c.l.b16 %v837
        %v3333 = vunpack.c.h.b16 %v837
        %v3334 = vunpack.c.l.b16 %v838
        %v3335 = vunpack.c.h.b16 %v838
        %v3336 = vunpack.c.l.b16 %v839
        %v3337 = vunpack.c.h.b16 %v839
        %v3338 = vunpack.c.l.b16 %v840
        %v3339 = vunpack.c.h.b16 %v840
        %v3340 = vunpack.c.l.b16 %v841
        %v3341 = vunpack.c.h.b16 %v841
        %v3342 = vunpack.c.l.b16 %v842
        %v3343 = vunpack.c.h.b16 %v842
        %v3344 = vunpack.c.l.b16 %v843
        %v3345 = vunpack.c.h.b16 %v843
        %v3346 = vunpack.c.l.b16 %v844
        %v3347 = vunpack.c.h.b16 %v844
        %v3348 = vunpack.c.l.b16 %v845
        %v3349 = vunpack.c.h.b16 %v845
        %v3350 = vunpack.c.l.b16 %v846
        %v3351 = vunpack.c.h.b16 %v846
        %v3352 = vunpack.c.l.b16 %v847
        %v3353 = vunpack.c.h.b16 %v847
        %v3354 = vunpack.c.l.b16 %v848
        %v3355 = vunpack.c.h.b16 %v848
        %v3356 = vunpack.c.l.b16 %v849
        %v3357 = vunpack.c.h.b16 %v849
        %v3358 = vunpack.c.l.b16 %v850
        %v3359 = vunpack.c.h.b16 %v850
        %v3360 = vunpack.c.l.b16 %v851
        %v3361 = vunpack.c.h.b16 %v851
        %v3362 = vunpack.c.l.b16 %v852
        %v3363 = vunpack.c.h.b16 %v852
        %v3364 = vunpack.c.l.b16 %v853
        %v3365 = vunpack.c.h.b16 %v853
        %v3366 = vunpack.c.l.b16 %v854
        %v3367 = vunpack.c.h.b16 %v854
        %v3368 = vunpack.c.l.b16 %v855
        %v3369 = vunpack.c.h.b16 %v855
        %v3370 = vunpack.c.l.b16 %v856
        %v3371 = vunpack.c.h.b16 %v856
        %v3372 = vunpack.c.l.b16 %v857
        %v3373 = vunpack.c.h.b16 %v857
        %v3374 = vunpack.c.l.b16 %v858
        %v3375 = vunpack.c.h.b16 %v858
        %v3376 = vunpack.c.l.b16 %v859
        %v3377 = vunpack.c.h.b16 %v859
        %v3378 = vunpack.c.l.b16 %v860
        %v3379 = vunpack.c.h.b16 %v860
        %v3380 = vunpack.c.l.b16 %v861
        %v3381 = vunpack.c.h.b16 %v861
        %v3382 = vunpack.c.l.b16 %v862
        %v3383 = vunpack.c.h.b16 %v862
        %v3384 = vunpack.c.l.b16 %v863
        %v3385 = vunpack.c.h.b16 %v863
        %v3386 = vunpack.c.l.b16 %v864
        %v3387 = vunpack.c.h.b16 %v864
        %v3388 = vunpack.c.l.b16 %v865
        %v3389 = vunpack.c.h.b16 %v865
        %v3390 = vunpack.c.l.b16 %v866
        %v3391 = vunpack.c.h.b16 %v866
        %v3392 = vunpack.c.l.b16 %v867
        %v3393 = vunpack.c.h.b16 %v867
        %v3394 = vunpack.c.l.b16 %v868
        %v3395 = vunpack.c.h.b16 %v868
        %v3396 = vunpack.c.l.b16 %v869
        %v3397 = vunpack.c.h.b16 %v869
        %v3398 = vunpack.c.l.b16 %v870
        %v3399 = vunpack.c.h.b16 %v870
        %v3400 = vunpack.c.l.b16 %v871
        %v3401 = vunpack.c.h.b16 %v871
        %v3402 = vunpack.c.l.b16 %v872
        %v3403 = vunpack.c.h.b16 %v872
        %v3404 = vunpack.c.l.b16 %v873
        %v3405 = vunpack.c.h.b16 %v873
        %v3406 = vunpack.c.l.b16 %v874
        %v3407 = vunpack.c.h.b16 %v874
        %v3408 = vunpack.c.l.b16 %v875
        %v3409 = vunpack.c.h.b16 %v875
        %v3410 = vunpack.c.l.b16 %v876
        %v3411 = vunpack.c.h.b16 %v876
        %v3412 = vunpack.c.l.b16 %v877
        %v3413 = vunpack.c.h.b16 %v877
        %v3414 = vunpack.c.l.b16 %v878
        %v3415 = vunpack.c.h.b16 %v878
        %v3416 = vunpack.c.l.b16 %v879
        %v3417 = vunpack.c.h.b16 %v879
        %v3418 = vunpack.c.l.b16 %v880
        %v3419 = vunpack.c.h.b16 %v880
        %v3420 = vunpack.c.l.b16 %v881
        %v3421 = vunpack.c.h.b16 %v881
        %v3422 = vunpack.c.l.b16 %v882
        %v3423 = vunpack.c.h.b16 %v882
        %v3424 = vunpack.c.l.b16 %v883
        %v3425 = vunpack.c.h.b16 %v883
        %v3426 = vunpack.c.l.b16 %v884
        %v3427 = vunpack.c.h.b16 %v884
        %v3428 = vunpack.c.l.b16 %v885
        %v3429 = vunpack.c.h.b16 %v885
        %v3430 = vunpack.c.l.b16 %v886
        %v3431 = vunpack.c.h.b16 %v886
        %v3432 = vunpack.c.l.b16 %v887
        %v3433 = vunpack.c.h.b16 %v887
        %v3434 = vunpack.c.l.b16 %v888
        %v3435 = vunpack.c.h.b16 %v888
        %v3436 = vunpack.c.l.b16 %v889
        %v3437 = vunpack.c.h.b16 %v889
        %v3438 = vunpack.c.l.b16 %v890
        %v3439 = vunpack.c.h.b16 %v890
        %v3440 = vunpack.c.l.b16 %v891
        %v3441 = vunpack.c.h.b16 %v891
        %v3442 = vunpack.c.l.b16 %v892
        %v3443 = vunpack.c.h.b16 %v892
        %v3444 = vunpack.c.l.b16 %v893
        %v3445 = vunpack.c.h.b16 %v893
        %v3446 = vunpack.c.l.b16 %v894
        %v3447 = vunpack.c.h.b16 %v894
        %v3448 = vunpack.c.l.b16 %v895
        %v3449 = vunpack.c.h.b16 %v895
        %v3450 = vunpack.c.l.b16 %v896
        %v3451 = vunpack.c.h.b16 %v896
        %v3452 = vunpack.c.l.b16 %v897
        %v3453 = vunpack.c.h.b16 %v897
        %v3454 = vunpack.c.l.b16 %v898
        %v3455 = vunpack.c.h.b16 %v898
        %v3456 = vunpack.c.l.b16 %v899
        %v3457 = vunpack.c.h.b16 %v899
        %v3458 = vunpack.c.l.b16 %v900
        %v3459 = vunpack.c.h.b16 %v900
        %v3460 = vunpack.c.l.b16 %v901
        %v3461 = vunpack.c.h.b16 %v901
        %v3462 = vunpack.c.l.b16 %v902
        %v3463 = vunpack.c.h.b16 %v902
        %v3464 = vunpack.c.l.b16 %v903
        %v3465 = vunpack.c.h.b16 %v903
        %v3466 = vunpack.c.l.b16 %v904
        %v3467 = vunpack.c.h.b16 %v904
        %v3468 = vunpack.c.l.b16 %v905
        %v3469 = vunpack.c.h.b16 %v905
        %v3470 = vunpack.c.l.b16 %v906
        %v3471 = vunpack.c.h.b16 %v906
        %v3472 = vunpack.c.l.b16 %v907
        %v3473 = vunpack.c.h.b16 %v907
        %v3474 = vunpack.c.l.b16 %v908
        %v3475 = vunpack.c.h.b16 %v908
        %v3476 = vunpack.c.l.b16 %v909
        %v3477 = vunpack.c.h.b16 %v909
        %v3478 = vunpack.c.l.b16 %v910
        %v3479 = vunpack.c.h.b16 %v910
        %v3480 = vunpack.c.l.b16 %v911
        %v3481 = vunpack.c.h.b16 %v911
        %v3482 = vunpack.c.l.b16 %v912
        %v3483 = vunpack.c.h.b16 %v912
        %v3484 = vunpack.c.l.b16 %v913
        %v3485 = vunpack.c.h.b16 %v913
        %v3486 = vunpack.c.l.b16 %v914
        %v3487 = vunpack.c.h.b16 %v914
        %v3488 = vunpack.c.l.b16 %v915
        %v3489 = vunpack.c.h.b16 %v915
        %v3490 = vunpack.c.l.b16 %v916
        %v3491 = vunpack.c.h.b16 %v916
        %v3492 = vunpack.c.l.b16 %v917
        %v3493 = vunpack.c.h.b16 %v917
        %v3494 = vunpack.c.l.b16 %v918
        %v3495 = vunpack.c.h.b16 %v918
        %v3496 = vunpack.c.l.b16 %v919
        %v3497 = vunpack.c.h.b16 %v919
        %v3498 = vunpack.c.l.b16 %v920
        %v3499 = vunpack.c.h.b16 %v920
        %v3500 = vunpack.c.l.b16 %v921
        %v3501 = vunpack.c.h.b16 %v921
        %v3502 = vunpack.c.l.b16 %v922
        %v3503 = vunpack.c.h.b16 %v922
        %v3504 = vunpack.c.l.b16 %v923
        %v3505 = vunpack.c.h.b16 %v923
        %v3506 = vunpack.c.l.b16 %v924
        %v3507 = vunpack.c.h.b16 %v924
        %v3508 = vunpack.c.l.b16 %v925
        %v3509 = vunpack.c.h.b16 %v925
        %v3510 = vunpack.c.l.b16 %v926
        %v3511 = vunpack.c.h.b16 %v926
        %v3512 = vunpack.c.l.b16 %v927
        %v3513 = vunpack.c.h.b16 %v927
        %v3514 = vunpack.c.l.b16 %v928
        %v3515 = vunpack.c.h.b16 %v928
        %v3516 = vunpack.c.l.b16 %v929
        %v3517 = vunpack.c.h.b16 %v929
        %v3518 = vunpack.c.l.b16 %v930
        %v3519 = vunpack.c.h.b16 %v930
        %v3520 = vunpack.c.l.b16 %v931
        %v3521 = vunpack.c.h.b16 %v931
        %v3522 = vunpack.c.l.b16 %v932
        %v3523 = vunpack.c.h.b16 %v932
        %v3524 = vunpack.c.l.b16 %v933
        %v3525 = vunpack.c.h.b16 %v933
        %v3526 = vunpack.c.l.b16 %v934
        %v3527 = vunpack.c.h.b16 %v934
        %v3528 = vunpack.c.l.b16 %v935
        %v3529 = vunpack.c.h.b16 %v935
        %v3530 = vunpack.c.l.b16 %v936
        %v3531 = vunpack.c.h.b16 %v936
        %v3532 = vunpack.c.l.b16 %v937
        %v3533 = vunpack.c.h.b16 %v937
        %v3534 = vunpack.c.l.b16 %v938
        %v3535 = vunpack.c.h.b16 %v938
        %v3536 = vunpack.c.l.b16 %v939
        %v3537 = vunpack.c.h.b16 %v939
        %v3538 = vunpack.c.l.b16 %v940
        %v3539 = vunpack.c.h.b16 %v940
        %v3540 = vunpack.c.l.b16 %v941
        %v3541 = vunpack.c.h.b16 %v941
        %v3542 = vunpack.c.l.b16 %v942
        %v3543 = vunpack.c.h.b16 %v942
        %v3544 = vunpack.c.l.b16 %v943
        %v3545 = vunpack.c.h.b16 %v943
        %v3546 = vunpack.c.l.b16 %v944
        %v3547 = vunpack.c.h.b16 %v944
        %v3548 = vunpack.c.l.b16 %v945
        %v3549 = vunpack.c.h.b16 %v945
        %v3550 = vunpack.c.l.b16 %v946
        %v3551 = vunpack.c.h.b16 %v946
        %v3552 = vunpack.c.l.b16 %v947
        %v3553 = vunpack.c.h.b16 %v947
        %v3554 = vunpack.c.l.b16 %v948
        %v3555 = vunpack.c.h.b16 %v948
        %v3556 = vunpack.c.l.b16 %v949
        %v3557 = vunpack.c.h.b16 %v949
        %v3558 = vunpack.c.l.b16 %v950
        %v3559 = vunpack.c.h.b16 %v950
        %v3560 = vunpack.c.l.b16 %v951
        %v3561 = vunpack.c.h.b16 %v951
        %v3562 = vunpack.c.l.b16 %v952
        %v3563 = vunpack.c.h.b16 %v952
        %v3564 = vunpack.c.l.b16 %v953
        %v3565 = vunpack.c.h.b16 %v953
        %v3566 = vunpack.c.l.b16 %v954
        %v3567 = vunpack.c.h.b16 %v954
        %v3568 = vunpack.c.l.b16 %v955
        %v3569 = vunpack.c.h.b16 %v955
        %v3570 = vunpack.c.l.b16 %v956
        %v3571 = vunpack.c.h.b16 %v956
        %v3572 = vunpack.c.l.b16 %v957
        %v3573 = vunpack.c.h.b16 %v957
        %v3574 = vunpack.c.l.b16 %v958
        %v3575 = vunpack.c.h.b16 %v958
        %v3576 = vunpack.c.l.b16 %v959
        %v3577 = vunpack.c.h.b16 %v959
        %v3578 = vunpack.c.l.b16 %v960
        %v3579 = vunpack.c.h.b16 %v960
        %v3580 = vunpack.c.l.b16 %v961
        %v3581 = vunpack.c.h.b16 %v961
        %v3582 = vunpack.c.l.b16 %v962
        %v3583 = vunpack.c.h.b16 %v962
        %v3584 = vunpack.c.l.b16 %v963
        %v3585 = vunpack.c.h.b16 %v963
        %v3586 = vunpack.c.l.b16 %v964
        %v3587 = vunpack.c.h.b16 %v964
        %v3588 = vunpack.c.l.b16 %v965
        %v3589 = vunpack.c.h.b16 %v965
        %v3590 = vunpack.c.l.b16 %v966
        %v3591 = vunpack.c.h.b16 %v966
        %v3592 = vunpack.c.l.b16 %v967
        %v3593 = vunpack.c.h.b16 %v967
        %v3594 = vunpack.c.l.b16 %v968
        %v3595 = vunpack.c.h.b16 %v968
        %v3596 = vunpack.c.l.b16 %v969
        %v3597 = vunpack.c.h.b16 %v969
        %v3598 = vunpack.c.l.b16 %v970
        %v3599 = vunpack.c.h.b16 %v970
        %v3600 = vunpack.c.l.b16 %v971
        %v3601 = vunpack.c.h.b16 %v971
        %v3602 = vunpack.c.l.b16 %v972
        %v3603 = vunpack.c.h.b16 %v972
        %v3604 = vunpack.c.l.b16 %v973
        %v3605 = vunpack.c.h.b16 %v973
        %v3606 = vunpack.c.l.b16 %v974
        %v3607 = vunpack.c.h.b16 %v974
        %v3608 = vunpack.c.l.b16 %v975
        %v3609 = vunpack.c.h.b16 %v975
        %v3610 = vunpack.c.l.b16 %v976
        %v3611 = vunpack.c.h.b16 %v976
        %v3612 = vunpack.c.l.b16 %v977
        %v3613 = vunpack.c.h.b16 %v977
        %v3614 = vunpack.c.l.b16 %v978
        %v3615 = vunpack.c.h.b16 %v978
        %v3616 = vunpack.c.l.b16 %v979
        %v3617 = vunpack.c.h.b16 %v979
        %v3618 = vunpack.c.l.b16 %v980
        %v3619 = vunpack.c.h.b16 %v980
        %v3620 = vunpack.c.l.b16 %v981
        %v3621 = vunpack.c.h.b16 %v981
        %v3622 = vunpack.c.l.b16 %v982
        %v3623 = vunpack.c.h.b16 %v982
        %v3624 = vunpack.c.l.b16 %v983
        %v3625 = vunpack.c.h.b16 %v983
        %v3626 = vunpack.c.l.b16 %v984
        %v3627 = vunpack.c.h.b16 %v984
        %v3628 = vunpack.c.l.b16 %v985
        %v3629 = vunpack.c.h.b16 %v985
        %v3630 = vunpack.c.l.b16 %v986
        %v3631 = vunpack.c.h.b16 %v986
        %v3632 = vunpack.c.l.b16 %v987
        %v3633 = vunpack.c.h.b16 %v987
        %v3634 = vunpack.c.l.b16 %v988
        %v3635 = vunpack.c.h.b16 %v988
        %v3636 = vunpack.c.l.b16 %v989
        %v3637 = vunpack.c.h.b16 %v989
        %v3638 = vunpack.c.l.b16 %v990
        %v3639 = vunpack.c.h.b16 %v990
        %v3640 = vunpack.c.l.b16 %v991
        %v3641 = vunpack.c.h.b16 %v991
        %v3642 = vunpack.c.l.b16 %v992
        %v3643 = vunpack.c.h.b16 %v992
        %v3644 = vunpack.c.l.b16 %v993
        %v3645 = vunpack.c.h.b16 %v993
        %v3646 = vunpack.c.l.b16 %v994
        %v3647 = vunpack.c.h.b16 %v994
        %v3648 = vunpack.c.l.b16 %v995
        %v3649 = vunpack.c.h.b16 %v995
        %v3650 = vunpack.c.l.b16 %v996
        %v3651 = vunpack.c.h.b16 %v996
        %v3652 = vunpack.c.l.b16 %v997
        %v3653 = vunpack.c.h.b16 %v997
        %v3654 = vunpack.c.l.b16 %v998
        %v3655 = vunpack.c.h.b16 %v998
        %v3656 = vunpack.c.l.b16 %v999
        %v3657 = vunpack.c.h.b16 %v999
        %v3658 = vunpack.c.l.b16 %v1000
        %v3659 = vunpack.c.h.b16 %v1000
        %v3660 = vunpack.c.l.b16 %v1001
        %v3661 = vunpack.c.h.b16 %v1001
        %v3662 = vunpack.c.l.b16 %v1002
        %v3663 = vunpack.c.h.b16 %v1002
        %v3664 = vunpack.c.l.b16 %v1003
        %v3665 = vunpack.c.h.b16 %v1003
        %v3666 = vunpack.c.l.b16 %v1004
        %v3667 = vunpack.c.h.b16 %v1004
        %v3668 = vunpack.c.l.b16 %v1005
        %v3669 = vunpack.c.h.b16 %v1005
        %v3670 = vunpack.c.l.b16 %v1006
        %v3671 = vunpack.c.h.b16 %v1006
        %v3672 = vunpack.c.l.b16 %v1007
        %v3673 = vunpack.c.h.b16 %v1007
        %v3674 = vunpack.c.l.b16 %v1008
        %v3675 = vunpack.c.h.b16 %v1008
        %v3676 = vunpack.c.l.b16 %v1009
        %v3677 = vunpack.c.h.b16 %v1009
        %v3678 = vunpack.c.l.b16 %v1010
        %v3679 = vunpack.c.h.b16 %v1010
        %v3680 = vunpack.c.l.b16 %v1011
        %v3681 = vunpack.c.h.b16 %v1011
        %v3682 = vunpack.c.l.b16 %v1012
        %v3683 = vunpack.c.h.b16 %v1012
        %v3684 = vunpack.c.l.b16 %v1013
        %v3685 = vunpack.c.h.b16 %v1013
        %v3686 = vunpack.c.l.b16 %v1014
        %v3687 = vunpack.c.h.b16 %v1014
        %v3688 = vunpack.c.l.b16 %v1015
        %v3689 = vunpack.c.h.b16 %v1015
        %v3690 = vunpack.c.l.b16 %v1016
        %v3691 = vunpack.c.h.b16 %v1016
        %v3692 = vunpack.c.l.b16 %v1017
        %v3693 = vunpack.c.h.b16 %v1017
        %v3694 = vunpack.c.l.b16 %v1018
        %v3695 = vunpack.c.h.b16 %v1018
        %v3696 = vunpack.c.l.b16 %v1019
        %v3697 = vunpack.c.h.b16 %v1019
        %v3698 = vunpack.c.l.b16 %v1020
        %v3699 = vunpack.c.h.b16 %v1020
        %v3700 = vunpack.c.l.b16 %v1021
        %v3701 = vunpack.c.h.b16 %v1021
        %v3702 = vunpack.c.l.b16 %v1022
        %v3703 = vunpack.c.h.b16 %v1022
        %v3704 = vunpack.c.l.b16 %v1023
        %v3705 = vunpack.c.h.b16 %v1023
        %v3706 = vunpack.c.l.b16 %v1024
        %v3707 = vunpack.c.h.b16 %v1024
        %v3708 = vunpack.c.l.b16 %v1025
        %v3709 = vunpack.c.h.b16 %v1025
        %v3710 = vunpack.c.l.b16 %v1026
        %v3711 = vunpack.c.h.b16 %v1026
        %v3712 = vunpack.c.l.b16 %v1027
        %v3713 = vunpack.c.h.b16 %v1027
        %v3714 = vunpack.c.l.b16 %v1028
        %v3715 = vunpack.c.h.b16 %v1028
        %v3716 = vunpack.c.l.b16 %v1029
        %v3717 = vunpack.c.h.b16 %v1029
        %v3718 = vunpack.c.l.b16 %v1030
        %v3719 = vunpack.c.h.b16 %v1030
        %v3720 = vunpack.c.l.b16 %v1031
        %v3721 = vunpack.c.h.b16 %v1031
        %v3722 = vunpack.c.l.b16 %v1032
        %v3723 = vunpack.c.h.b16 %v1032
        %v3724 = vunpack.c.l.b16 %v1033
        %v3725 = vunpack.c.h.b16 %v1033
        %v3726 = vunpack.c.l.b16 %v1034
        %v3727 = vunpack.c.h.b16 %v1034
        %v3728 = vunpack.c.l.b16 %v1035
        %v3729 = vunpack.c.h.b16 %v1035
        %v3730 = vunpack.c.l.b16 %v1036
        %v3731 = vunpack.c.h.b16 %v1036
        %v3732 = vunpack.c.l.b16 %v1037
        %v3733 = vunpack.c.h.b16 %v1037
        %v3734 = vunpack.c.l.b16 %v1038
        %v3735 = vunpack.c.h.b16 %v1038
        %v3736 = vunpack.c.l.b16 %v1039
        %v3737 = vunpack.c.h.b16 %v1039
        %v3738 = vunpack.c.l.b16 %v1040
        %v3739 = vunpack.c.h.b16 %v1040
        %v3740 = vunpack.c.l.b16 %v1041
        %v3741 = vunpack.c.h.b16 %v1041
        %v3742 = vunpack.c.l.b16 %v1042
        %v3743 = vunpack.c.h.b16 %v1042
        %v3744 = vunpack.c.l.b16 %v1043
        %v3745 = vunpack.c.h.b16 %v1043
        %v3746 = vunpack.c.l.b16 %v1044
        %v3747 = vunpack.c.h.b16 %v1044
        %v3748 = vunpack.c.l.b16 %v1045
        %v3749 = vunpack.c.h.b16 %v1045
        %v3750 = vunpack.c.l.b16 %v1046
        %v3751 = vunpack.c.h.b16 %v1046
        %v3752 = vunpack.c.l.b16 %v1047
        %v3753 = vunpack.c.h.b16 %v1047
        %v3754 = vunpack.c.l.b16 %v1048
        %v3755 = vunpack.c.h.b16 %v1048
        %v3756 = vunpack.c.l.b16 %v1049
        %v3757 = vunpack.c.h.b16 %v1049
        %v3758 = vunpack.c.l.b16 %v1050
        %v3759 = vunpack.c.h.b16 %v1050
        %v3760 = vunpack.c.l.b16 %v1051
        %v3761 = vunpack.c.h.b16 %v1051
        %v3762 = vunpack.c.l.b16 %v1052
        %v3763 = vunpack.c.h.b16 %v1052
        %v3764 = vunpack.c.l.b16 %v1053
        %v3765 = vunpack.c.h.b16 %v1053
        %v3766 = vunpack.c.l.b16 %v1054
        %v3767 = vunpack.c.h.b16 %v1054
        %v3768 = vunpack.c.l.b16 %v1055
        %v3769 = vunpack.c.h.b16 %v1055
        %v3770 = vunpack.c.l.b16 %v1056
        %v3771 = vunpack.c.h.b16 %v1056
        %v3772 = vunpack.c.l.b16 %v1057
        %v3773 = vunpack.c.h.b16 %v1057
        %v3774 = vunpack.c.l.b16 %v1058
        %v3775 = vunpack.c.h.b16 %v1058
        %v3776 = vunpack.c.l.b16 %v1059
        %v3777 = vunpack.c.h.b16 %v1059
        %v3778 = vunpack.c.l.b16 %v1060
        %v3779 = vunpack.c.h.b16 %v1060
        %v3780 = vunpack.c.l.b16 %v1061
        %v3781 = vunpack.c.h.b16 %v1061
        %v3782 = vunpack.c.l.b16 %v1062
        %v3783 = vunpack.c.h.b16 %v1062
        %v3784 = vunpack.c.l.b16 %v1063
        %v3785 = vunpack.c.h.b16 %v1063
        %v3786 = vunpack.c.l.b16 %v1064
        %v3787 = vunpack.c.h.b16 %v1064
        %v3788 = vunpack.c.l.b16 %v1065
        %v3789 = vunpack.c.h.b16 %v1065
        %v3790 = vunpack.c.l.b16 %v1066
        %v3791 = vunpack.c.h.b16 %v1066
        %v3792 = vunpack.c.l.b16 %v1067
        %v3793 = vunpack.c.h.b16 %v1067
        %v3794 = vunpack.c.l.b16 %v1068
        %v3795 = vunpack.c.h.b16 %v1068
        %v3796 = vunpack.c.l.b16 %v1069
        %v3797 = vunpack.c.h.b16 %v1069
        %v3798 = vunpack.c.l.b16 %v1070
        %v3799 = vunpack.c.h.b16 %v1070
        %v3800 = vunpack.c.l.b16 %v1071
        %v3801 = vunpack.c.h.b16 %v1071
        %v3802 = vunpack.c.l.b16 %v1072
        %v3803 = vunpack.c.h.b16 %v1072
        %v3804 = vunpack.c.l.b16 %v1073
        %v3805 = vunpack.c.h.b16 %v1073
        %v3806 = vunpack.c.l.b16 %v1074
        %v3807 = vunpack.c.h.b16 %v1074
        %v3808 = vunpack.c.l.b16 %v1075
        %v3809 = vunpack.c.h.b16 %v1075
        %v3810 = vunpack.c.l.b16 %v1076
        %v3811 = vunpack.c.h.b16 %v1076
        %v3812 = vunpack.c.l.b16 %v1077
        %v3813 = vunpack.c.h.b16 %v1077
        %v3814 = vunpack.c.l.b16 %v1078
        %v3815 = vunpack.c.h.b16 %v1078
        %v3816 = vunpack.c.l.b16 %v1079
        %v3817 = vunpack.c.h.b16 %v1079
        %v3818 = vunpack.c.l.b16 %v1080
        %v3819 = vunpack.c.h.b16 %v1080
        %v3820 = vunpack.c.l.b16 %v1081
        %v3821 = vunpack.c.h.b16 %v1081
        %v3822 = vunpack.c.l.b16 %v1082
        %v3823 = vunpack.c.h.b16 %v1082
        %v3824 = vunpack.c.l.b16 %v1083
        %v3825 = vunpack.c.h.b16 %v1083
        %v3826 = vunpack.c.l.b16 %v1084
        %v3827 = vunpack.c.h.b16 %v1084
        %v3828 = vunpack.c.l.b16 %v1085
        %v3829 = vunpack.c.h.b16 %v1085
        %v3830 = vunpack.c.l.b16 %v1086
        %v3831 = vunpack.c.h.b16 %v1086
        %v3832 = vunpack.c.l.b16 %v1087
        %v3833 = vunpack.c.h.b16 %v1087
        %v3834 = vunpack.c.l.b16 %v1088
        %v3835 = vunpack.c.h.b16 %v1088
        %v3836 = vunpack.c.l.b16 %v1089
        %v3837 = vunpack.c.h.b16 %v1089
        %v3838 = vunpack.c.l.b16 %v1090
        %v3839 = vunpack.c.h.b16 %v1090
        %v3840 = vunpack.c.l.b16 %v1091
        %v3841 = vunpack.c.h.b16 %v1091
        %v3842 = vunpack.c.l.b16 %v1092
        %v3843 = vunpack.c.h.b16 %v1092
        %v3844 = vunpack.c.l.b16 %v1093
        %v3845 = vunpack.c.h.b16 %v1093
        %v3846 = vunpack.c.l.b16 %v1094
        %v3847 = vunpack.c.h.b16 %v1094
        %v3848 = vunpack.c.l.b16 %v1095
        %v3849 = vunpack.c.h.b16 %v1095
        %v3850 = vunpack.c.l.b16 %v1096
        %v3851 = vunpack.c.h.b16 %v1096
        %v3852 = vunpack.c.l.b16 %v1097
        %v3853 = vunpack.c.h.b16 %v1097
        %v3854 = vunpack.c.l.b16 %v1098
        %v3855 = vunpack.c.h.b16 %v1098
        %v3856 = vunpack.c.l.b16 %v1099
        %v3857 = vunpack.c.h.b16 %v1099
        %v3858 = vunpack.c.l.b16 %v1100
        %v3859 = vunpack.c.h.b16 %v1100
        %v3860 = vunpack.c.l.b16 %v1101
        %v3861 = vunpack.c.h.b16 %v1101
        %v3862 = vunpack.c.l.b16 %v1102
        %v3863 = vunpack.c.h.b16 %v1102
        %v3864 = vunpack.c.l.b16 %v1103
        %v3865 = vunpack.c.h.b16 %v1103
        %v3866 = vunpack.c.l.b16 %v1104
        %v3867 = vunpack.c.h.b16 %v1104
        %v3868 = vunpack.c.l.b16 %v1105
        %v3869 = vunpack.c.h.b16 %v1105
        %v3870 = vunpack.c.l.b16 %v1106
        %v3871 = vunpack.c.h.b16 %v1106
        %v3872 = vunpack.c.l.b16 %v1107
        %v3873 = vunpack.c.h.b16 %v1107
        %v3874 = vunpack.c.l.b16 %v1108
        %v3875 = vunpack.c.h.b16 %v1108
        %v3876 = vunpack.c.l.b16 %v1109
        %v3877 = vunpack.c.h.b16 %v1109
        %v3878 = vunpack.c.l.b16 %v1110
        %v3879 = vunpack.c.h.b16 %v1110
        %v3880 = vunpack.c.l.b16 %v1111
        %v3881 = vunpack.c.h.b16 %v1111
        %v3882 = vunpack.c.l.b16 %v1112
        %v3883 = vunpack.c.h.b16 %v1112
        %v3884 = vunpack.c.l.b16 %v1113
        %v3885 = vunpack.c.h.b16 %v1113
        %v3886 = vunpack.c.l.b16 %v1114
        %v3887 = vunpack.c.h.b16 %v1114
        %v3888 = vunpack.c.l.b16 %v1115
        %v3889 = vunpack.c.h.b16 %v1115
        %v3890 = vunpack.c.l.b16 %v1116
        %v3891 = vunpack.c.h.b16 %v1116
        %v3892 = vunpack.c.l.b16 %v1117
        %v3893 = vunpack.c.h.b16 %v1117
        %v3894 = vunpack.c.l.b16 %v1118
        %v3895 = vunpack.c.h.b16 %v1118
        %v3896 = vunpack.c.l.b16 %v1119
        %v3897 = vunpack.c.h.b16 %v1119
        %v3898 = vunpack.c.l.b16 %v1120
        %v3899 = vunpack.c.h.b16 %v1120
        %v3900 = vunpack.c.l.b16 %v1121
        %v3901 = vunpack.c.h.b16 %v1121
        %v3902 = vunpack.c.l.b16 %v1122
        %v3903 = vunpack.c.h.b16 %v1122
        %v3904 = vunpack.c.l.b16 %v1123
        %v3905 = vunpack.c.h.b16 %v1123
        %v3906 = vunpack.c.l.b16 %v1124
        %v3907 = vunpack.c.h.b16 %v1124
        %v3908 = vunpack.c.l.b16 %v1125
        %v3909 = vunpack.c.h.b16 %v1125
        %v3910 = vunpack.c.l.b16 %v1126
        %v3911 = vunpack.c.h.b16 %v1126
        %v3912 = vunpack.c.l.b16 %v1127
        %v3913 = vunpack.c.h.b16 %v1127
        %v3914 = vunpack.c.l.b16 %v1128
        %v3915 = vunpack.c.h.b16 %v1128
        %v3916 = vunpack.c.l.b16 %v1129
        %v3917 = vunpack.c.h.b16 %v1129
        %v3918 = vunpack.c.l.b16 %v1130
        %v3919 = vunpack.c.h.b16 %v1130
        %v3920 = vunpack.c.l.b16 %v1131
        %v3921 = vunpack.c.h.b16 %v1131
        %v3922 = vunpack.c.l.b16 %v1132
        %v3923 = vunpack.c.h.b16 %v1132
        %v3924 = vunpack.c.l.b16 %v1133
        %v3925 = vunpack.c.h.b16 %v1133
        %v3926 = vunpack.c.l.b16 %v1134
        %v3927 = vunpack.c.h.b16 %v1134
        %v3928 = vunpack.c.l.b16 %v1135
        %v3929 = vunpack.c.h.b16 %v1135
        %v3930 = vunpack.c.l.b16 %v1136
        %v3931 = vunpack.c.h.b16 %v1136
        %v3932 = vunpack.c.l.b16 %v1137
        %v3933 = vunpack.c.h.b16 %v1137
        %v3934 = vunpack.c.l.b16 %v1138
        %v3935 = vunpack.c.h.b16 %v1138
        %v3936 = vunpack.c.l.b16 %v1139
        %v3937 = vunpack.c.h.b16 %v1139
        %v3938 = vunpack.c.l.b16 %v1140
        %v3939 = vunpack.c.h.b16 %v1140
        %v3940 = vunpack.c.l.b16 %v1141
        %v3941 = vunpack.c.h.b16 %v1141
        %v3942 = vpack.c.b16 %v2158, %v2150
        %v3943 = vpack.c.b16 %v2159, %v2151
        %v3944 = vpack.c.b16 %v2160, %v2152
        %v3945 = vpack.c.b16 %v2161, %v2153
        %v3946 = vpack.c.b16 %v2162, %v2154
        %v3947 = vpack.c.b16 %v2163, %v2155
        %v3948 = vpack.c.b16 %v2164, %v2156
        %v3949 = vpack.c.b16 %v2165, %v2157
        %v3950 = vpack.c.b16 %v2174, %v2166
        %v3951 = vpack.c.b16 %v2175, %v2167
        %v3952 = vpack.c.b16 %v2176, %v2168
        %v3953 = vpack.c.b16 %v2177, %v2169
        %v3954 = vpack.c.b16 %v2178, %v2170
        %v3955 = vpack.c.b16 %v2179, %v2171
        %v3956 = vpack.c.b16 %v2180, %v2172
        %v3957 = vpack.c.b16 %v2181, %v2173
        %v3958 = vpack.c.b16 %v2190, %v2182
        %v3959 = vpack.c.b16 %v2191, %v2183
        %v3960 = vpack.c.b16 %v2192, %v2184
        %v3961 = vpack.c.b16 %v2193, %v2185
        %v3962 = vpack.c.b16 %v2194, %v2186
        %v3963 = vpack.c.b16 %v2195, %v2187
        %v3964 = vpack.c.b16 %v2196, %v2188
        %v3965 = vpack.c.b16 %v2197, %v2189
        %v3966 = vpack.c.b16 %v2206, %v2198
        %v3967 = vpack.c.b16 %v2207, %v2199
        %v3968 = vpack.c.b16 %v2208, %v2200
        %v3969 = vpack.c.b16 %v2209, %v2201
        %v3970 = vpack.c.b16 %v2210, %v2202
        %v3971 = vpack.c.b16 %v2211, %v2203
        %v3972 = vpack.c.b16 %v2212, %v2204
        %v3973 = vpack.c.b16 %v2213, %v2205
        %v3974 = vpack.c.b16 %v2222, %v2214
        %v3975 = vpack.c.b16 %v2223, %v2215
        %v3976 = vpack.c.b16 %v2224, %v2216
        %v3977 = vpack.c.b16 %v2225, %v2217
        %v3978 = vpack.c.b16 %v2226, %v2218
        %v3979 = vpack.c.b16 %v2227, %v2219
        %v3980 = vpack.c.b16 %v2228, %v2220
        %v3981 = vpack.c.b16 %v2229, %v2221
        %v3982 = vpack.c.b16 %v2238, %v2230
        %v3983 = vpack.c.b16 %v2239, %v2231
        %v3984 = vpack.c.b16 %v2240, %v2232
        %v3985 = vpack.c.b16 %v2241, %v2233
        %v3986 = vpack.c.b16 %v2242, %v2234
        %v3987 = vpack.c.b16 %v2243, %v2235
        %v3988 = vpack.c.b16 %v2244, %v2236
        %v3989 = vpack.c.b16 %v2245, %v2237
        %v3990 = vpack.c.b16 %v2254, %v2246
        %v3991 = vpack.c.b16 %v2255, %v2247
        %v3992 = vpack.c.b16 %v2256, %v2248
        %v3993 = vpack.c.b16 %v2257, %v2249
        %v3994 = vpack.c.b16 %v2258, %v2250
        %v3995 = vpack.c.b16 %v2259, %v2251
        %v3996 = vpack.c.b16 %v2260, %v2252
        %v3997 = vpack.c.b16 %v2261, %v2253
        %v3998 = vpack.c.b16 %v2270, %v2262
        %v3999 = vpack.c.b16 %v2271, %v2263
        %v4000 = vpack.c.b16 %v2272, %v2264
        %v4001 = vpack.c.b16 %v2273, %v2265
        %v4002 = vpack.c.b16 %v2274, %v2266
        %v4003 = vpack.c.b16 %v2275, %v2267
        %v4004 = vpack.c.b16 %v2276, %v2268
        %v4005 = vpack.c.b16 %v2277, %v2269
        %v4006 = vpack.c.b16 %v2286, %v2278
        %v4007 = vpack.c.b16 %v2287, %v2279
        %v4008 = vpack.c.b16 %v2288, %v2280
        %v4009 = vpack.c.b16 %v2289, %v2281
        %v4010 = vpack.c.b16 %v2290, %v2282
        %v4011 = vpack.c.b16 %v2291, %v2283
        %v4012 = vpack.c.b16 %v2292, %v2284
        %v4013 = vpack.c.b16 %v2293, %v2285
        %v4014 = vpack.c.b16 %v2302, %v2294
        %v4015 = vpack.c.b16 %v2303, %v2295
        %v4016 = vpack.c.b16 %v2304, %v2296
        %v4017 = vpack.c.b16 %v2305, %v2297
        %v4018 = vpack.c.b16 %v2306, %v2298
        %v4019 = vpack.c.b16 %v2307, %v2299
        %v4020 = vpack.c.b16 %v2308, %v2300
        %v4021 = vpack.c.b16 %v2309, %v2301
        %v4022 = vpack.c.b16 %v2318, %v2310
        %v4023 = vpack.c.b16 %v2319, %v2311
        %v4024 = vpack.c.b16 %v2320, %v2312
        %v4025 = vpack.c.b16 %v2321, %v2313
        %v4026 = vpack.c.b16 %v2322, %v2314
        %v4027 = vpack.c.b16 %v2323, %v2315
        %v4028 = vpack.c.b16 %v2324, %v2316
        %v4029 = vpack.c.b16 %v2325, %v2317
        %v4030 = vpack.c.b16 %v2334, %v2326
        %v4031 = vpack.c.b16 %v2335, %v2327
        %v4032 = vpack.c.b16 %v2336, %v2328
        %v4033 = vpack.c.b16 %v2337, %v2329
        %v4034 = vpack.c.b16 %v2338, %v2330
        %v4035 = vpack.c.b16 %v2339, %v2331
        %v4036 = vpack.c.b16 %v2340, %v2332
        %v4037 = vpack.c.b16 %v2341, %v2333
        %v4038 = vpack.c.b16 %v2350, %v2342
        %v4039 = vpack.c.b16 %v2351, %v2343
        %v4040 = vpack.c.b16 %v2352, %v2344
        %v4041 = vpack.c.b16 %v2353, %v2345
        %v4042 = vpack.c.b16 %v2354, %v2346
        %v4043 = vpack.c.b16 %v2355, %v2347
        %v4044 = vpack.c.b16 %v2356, %v2348
        %v4045 = vpack.c.b16 %v2357, %v2349
        %v4046 = vpack.c.b16 %v2366, %v2358
        %v4047 = vpack.c.b16 %v2367, %v2359
        %v4048 = vpack.c.b16 %v2368, %v2360
        %v4049 = vpack.c.b16 %v2369, %v2361
        %v4050 = vpack.c.b16 %v2370, %v2362
        %v4051 = vpack.c.b16 %v2371, %v2363
        %v4052 = vpack.c.b16 %v2372, %v2364
        %v4053 = vpack.c.b16 %v2373, %v2365
        %v4054 = vpack.c.b16 %v2382, %v2374
        %v4055 = vpack.c.b16 %v2383, %v2375
        %v4056 = vpack.c.b16 %v2384, %v2376
        %v4057 = vpack.c.b16 %v2385, %v2377
        %v4058 = vpack.c.b16 %v2386, %v2378
        %v4059 = vpack.c.b16 %v2387, %v2379
        %v4060 = vpack.c.b16 %v2388, %v2380
        %v4061 = vpack.c.b16 %v2389, %v2381
        %v4062 = vpack.c.b16 %v2398, %v2390
        %v4063 = vpack.c.b16 %v2399, %v2391
        %v4064 = vpack.c.b16 %v2400, %v2392
        %v4065 = vpack.c.b16 %v2401, %v2393
        %v4066 = vpack.c.b16 %v2402, %v2394
        %v4067 = vpack.c.b16 %v2403, %v2395
        %v4068 = vpack.c.b16 %v2404, %v2396
        %v4069 = vpack.c.b16 %v2405, %v2397
        %v4070 = vpack.c.b16 %v2414, %v2406
        %v4071 = vpack.c.b16 %v2415, %v2407
        %v4072 = vpack.c.b16 %v2416, %v2408
        %v4073 = vpack.c.b16 %v2417, %v2409
        %v4074 = vpack.c.b16 %v2418, %v2410
        %v4075 = vpack.c.b16 %v2419, %v2411
        %v4076 = vpack.c.b16 %v2420, %v2412
        %v4077 = vpack.c.b16 %v2421, %v2413
        %v4078 = vpack.c.b16 %v2430, %v2422
        %v4079 = vpack.c.b16 %v2431, %v2423
        %v4080 = vpack.c.b16 %v2432, %v2424
        %v4081 = vpack.c.b16 %v2433, %v2425
        %v4082 = vpack.c.b16 %v2434, %v2426
        %v4083 = vpack.c.b16 %v2435, %v2427
        %v4084 = vpack.c.b16 %v2436, %v2428
        %v4085 = vpack.c.b16 %v2437, %v2429
        %v4086 = vpack.c.b16 %v2446, %v2438
        %v4087 = vpack.c.b16 %v2447, %v2439
        %v4088 = vpack.c.b16 %v2448, %v2440
        %v4089 = vpack.c.b16 %v2449, %v2441
        %v4090 = vpack.c.b16 %v2450, %v2442
        %v4091 = vpack.c.b16 %v2451, %v2443
        %v4092 = vpack.c.b16 %v2452, %v2444
        %v4093 = vpack.c.b16 %v2453, %v2445
        %v4094 = vpack.c.b16 %v2462, %v2454
        %v4095 = vpack.c.b16 %v2463, %v2455
        %v4096 = vpack.c.b16 %v2464, %v2456
        %v4097 = vpack.c.b16 %v2465, %v2457
        %v4098 = vpack.c.b16 %v2466, %v2458
        %v4099 = vpack.c.b16 %v2467, %v2459
        %v4100 = vpack.c.b16 %v2468, %v2460
        %v4101 = vpack.c.b16 %v2469, %v2461
        %v4102 = vpack.c.b16 %v2478, %v2470
        %v4103 = vpack.c.b16 %v2479, %v2471
        %v4104 = vpack.c.b16 %v2480, %v2472
        %v4105 = vpack.c.b16 %v2481, %v2473
        %v4106 = vpack.c.b16 %v2482, %v2474
        %v4107 = vpack.c.b16 %v2483, %v2475
        %v4108 = vpack.c.b16 %v2484, %v2476
        %v4109 = vpack.c.b16 %v2485, %v2477
        %v4110 = vpack.c.b16 %v2494, %v2486
        %v4111 = vpack.c.b16 %v2495, %v2487
        %v4112 = vpack.c.b16 %v2496, %v2488
        %v4113 = vpack.c.b16 %v2497, %v2489
        %v4114 = vpack.c.b16 %v2498, %v2490
        %v4115 = vpack.c.b16 %v2499, %v2491
        %v4116 = vpack.c.b16 %v2500, %v2492
        %v4117 = vpack.c.b16 %v2501, %v2493
        %v4118 = vpack.c.b16 %v2510, %v2502
        %v4119 = vpack.c.b16 %v2511, %v2503
        %v4120 = vpack.c.b16 %v2512, %v2504
        %v4121 = vpack.c.b16 %v2513, %v2505
        %v4122 = vpack.c.b16 %v2514, %v2506
        %v4123 = vpack.c.b16 %v2515, %v2507
        %v4124 = vpack.c.b16 %v2516, %v2508
        %v4125 = vpack.c.b16 %v2517, %v2509
        %v4126 = vpack.c.b16 %v2526, %v2518
        %v4127 = vpack.c.b16 %v2527, %v2519
        %v4128 = vpack.c.b16 %v2528, %v2520
        %v4129 = vpack.c.b16 %v2529, %v2521
        %v4130 = vpack.c.b16 %v2530, %v2522
        %v4131 = vpack.c.b16 %v2531, %v2523
        %v4132 = vpack.c.b16 %v2532, %v2524
        %v4133 = vpack.c.b16 %v2533, %v2525
        %v4134 = vpack.c.b16 %v2542, %v2534
        %v4135 = vpack.c.b16 %v2543, %v2535
        %v4136 = vpack.c.b16 %v2544, %v2536
        %v4137 = vpack.c.b16 %v2545, %v2537
        %v4138 = vpack.c.b16 %v2546, %v2538
        %v4139 = vpack.c.b16 %v2547, %v2539
        %v4140 = vpack.c.b16 %v2548, %v2540
        %v4141 = vpack.c.b16 %v2549, %v2541
        %v4142 = vpack.c.b16 %v2558, %v2550
        %v4143 = vpack.c.b16 %v2559, %v2551
        %v4144 = vpack.c.b16 %v2560, %v2552
        %v4145 = vpack.c.b16 %v2561, %v2553
        %v4146 = vpack.c.b16 %v2562, %v2554
        %v4147 = vpack.c.b16 %v2563, %v2555
        %v4148 = vpack.c.b16 %v2564, %v2556
        %v4149 = vpack.c.b16 %v2565, %v2557
        %v4150 = vpack.c.b16 %v2574, %v2566
        %v4151 = vpack.c.b16 %v2575, %v2567
        %v4152 = vpack.c.b16 %v2576, %v2568
        %v4153 = vpack.c.b16 %v2577, %v2569
        %v4154 = vpack.c.b16 %v2578, %v2570
        %v4155 = vpack.c.b16 %v2579, %v2571
        %v4156 = vpack.c.b16 %v2580, %v2572
        %v4157 = vpack.c.b16 %v2581, %v2573
        %v4158 = vpack.c.b16 %v2590, %v2582
        %v4159 = vpack.c.b16 %v2591, %v2583
        %v4160 = vpack.c.b16 %v2592, %v2584
        %v4161 = vpack.c.b16 %v2593, %v2585
        %v4162 = vpack.c.b16 %v2594, %v2586
        %v4163 = vpack.c.b16 %v2595, %v2587
        %v4164 = vpack.c.b16 %v2596, %v2588
        %v4165 = vpack.c.b16 %v2597, %v2589
        %v4166 = vpack.c.b16 %v2606, %v2598
        %v4167 = vpack.c.b16 %v2607, %v2599
        %v4168 = vpack.c.b16 %v2608, %v2600
        %v4169 = vpack.c.b16 %v2609, %v2601
        %v4170 = vpack.c.b16 %v2610, %v2602
        %v4171 = vpack.c.b16 %v2611, %v2603
        %v4172 = vpack.c.b16 %v2612, %v2604
        %v4173 = vpack.c.b16 %v2613, %v2605
        %v4174 = vpack.c.b16 %v2622, %v2614
        %v4175 = vpack.c.b16 %v2623, %v2615
        %v4176 = vpack.c.b16 %v2624, %v2616
        %v4177 = vpack.c.b16 %v2625, %v2617
        %v4178 = vpack.c.b16 %v2626, %v2618
        %v4179 = vpack.c.b16 %v2627, %v2619
        %v4180 = vpack.c.b16 %v2628, %v2620
        %v4181 = vpack.c.b16 %v2629, %v2621
        %v4182 = vpack.c.b16 %v2638, %v2630
        %v4183 = vpack.c.b16 %v2639, %v2631
        %v4184 = vpack.c.b16 %v2640, %v2632
        %v4185 = vpack.c.b16 %v2641, %v2633
        %v4186 = vpack.c.b16 %v2642, %v2634
        %v4187 = vpack.c.b16 %v2643, %v2635
        %v4188 = vpack.c.b16 %v2644, %v2636
        %v4189 = vpack.c.b16 %v2645, %v2637
        %v4190 = vpack.c.b16 %v2654, %v2646
        %v4191 = vpack.c.b16 %v2655, %v2647
        %v4192 = vpack.c.b16 %v2656, %v2648
        %v4193 = vpack.c.b16 %v2657, %v2649
        %v4194 = vpack.c.b16 %v2658, %v2650
        %v4195 = vpack.c.b16 %v2659, %v2651
        %v4196 = vpack.c.b16 %v2660, %v2652
        %v4197 = vpack.c.b16 %v2661, %v2653
        %v4198 = vpack.c.b16 %v2670, %v2662
        %v4199 = vpack.c.b16 %v2671, %v2663
        %v4200 = vpack.c.b16 %v2672, %v2664
        %v4201 = vpack.c.b16 %v2673, %v2665
        %v4202 = vpack.c.b16 %v2674, %v2666
        %v4203 = vpack.c.b16 %v2675, %v2667
        %v4204 = vpack.c.b16 %v2676, %v2668
        %v4205 = vpack.c.b16 %v2677, %v2669
        %v4206 = vpack.c.b16 %v2686, %v2678
        %v4207 = vpack.c.b16 %v2687, %v2679
        %v4208 = vpack.c.b16 %v2688, %v2680
        %v4209 = vpack.c.b16 %v2689, %v2681
        %v4210 = vpack.c.b16 %v2690, %v2682
        %v4211 = vpack.c.b16 %v2691, %v2683
        %v4212 = vpack.c.b16 %v2692, %v2684
        %v4213 = vpack.c.b16 %v2693, %v2685
        %v4214 = vpack.c.b16 %v2702, %v2694
        %v4215 = vpack.c.b16 %v2703, %v2695
        %v4216 = vpack.c.b16 %v2704, %v2696
        %v4217 = vpack.c.b16 %v2705, %v2697
        %v4218 = vpack.c.b16 %v2706, %v2698
        %v4219 = vpack.c.b16 %v2707, %v2699
        %v4220 = vpack.c.b16 %v2708, %v2700
        %v4221 = vpack.c.b16 %v2709, %v2701
        %v4222 = vpack.c.b16 %v2718, %v2710
        %v4223 = vpack.c.b16 %v2719, %v2711
        %v4224 = vpack.c.b16 %v2720, %v2712
        %v4225 = vpack.c.b16 %v2721, %v2713
        %v4226 = vpack.c.b16 %v2722, %v2714
        %v4227 = vpack.c.b16 %v2723, %v2715
        %v4228 = vpack.c.b16 %v2724, %v2716
        %v4229 = vpack.c.b16 %v2725, %v2717
        %v4230 = vpack.c.b16 %v2734, %v2726
        %v4231 = vpack.c.b16 %v2735, %v2727
        %v4232 = vpack.c.b16 %v2736, %v2728
        %v4233 = vpack.c.b16 %v2737, %v2729
        %v4234 = vpack.c.b16 %v2738, %v2730
        %v4235 = vpack.c.b16 %v2739, %v2731
        %v4236 = vpack.c.b16 %v2740, %v2732
        %v4237 = vpack.c.b16 %v2741, %v2733
        %v4238 = vpack.c.b16 %v2750, %v2742
        %v4239 = vpack.c.b16 %v2751, %v2743
        %v4240 = vpack.c.b16 %v2752, %v2744
        %v4241 = vpack.c.b16 %v2753, %v2745
        %v4242 = vpack.c.b16 %v2754, %v2746
        %v4243 = vpack.c.b16 %v2755, %v2747
        %v4244 = vpack.c.b16 %v2756, %v2748
        %v4245 = vpack.c.b16 %v2757, %v2749
        %v4246 = vpack.c.b16 %v2766, %v2758
        %v4247 = vpack.c.b16 %v2767, %v2759
        %v4248 = vpack.c.b16 %v2768, %v2760
        %v4249 = vpack.c.b16 %v2769, %v2761
        %v4250 = vpack.c.b16 %v2770, %v2762
        %v4251 = vpack.c.b16 %v2771, %v2763
        %v4252 = vpack.c.b16 %v2772, %v2764
        %v4253 = vpack.c.b16 %v2773, %v2765
        %v4254 = vpack.c.b16 %v2782, %v2774
        %v4255 = vpack.c.b16 %v2783, %v2775
        %v4256 = vpack.c.b16 %v2784, %v2776
        %v4257 = vpack.c.b16 %v2785, %v2777
        %v4258 = vpack.c.b16 %v2786, %v2778
        %v4259 = vpack.c.b16 %v2787, %v2779
        %v4260 = vpack.c.b16 %v2788, %v2780
        %v4261 = vpack.c.b16 %v2789, %v2781
        %v4262 = vpack.c.b16 %v2798, %v2790
        %v4263 = vpack.c.b16 %v2799, %v2791
        %v4264 = vpack.c.b16 %v2800, %v2792
        %v4265 = vpack.c.b16 %v2801, %v2793
        %v4266 = vpack.c.b16 %v2802, %v2794
        %v4267 = vpack.c.b16 %v2803, %v2795
        %v4268 = vpack.c.b16 %v2804, %v2796
        %v4269 = vpack.c.b16 %v2805, %v2797
        %v4270 = vpack.c.b16 %v2814, %v2806
        %v4271 = vpack.c.b16 %v2815, %v2807
        %v4272 = vpack.c.b16 %v2816, %v2808
        %v4273 = vpack.c.b16 %v2817, %v2809
        %v4274 = vpack.c.b16 %v2818, %v2810
        %v4275 = vpack.c.b16 %v2819, %v2811
        %v4276 = vpack.c.b16 %v2820, %v2812
        %v4277 = vpack.c.b16 %v2821, %v2813
        %v4278 = vpack.c.b16 %v2830, %v2822
        %v4279 = vpack.c.b16 %v2831, %v2823
        %v4280 = vpack.c.b16 %v2832, %v2824
        %v4281 = vpack.c.b16 %v2833, %v2825
        %v4282 = vpack.c.b16 %v2834, %v2826
        %v4283 = vpack.c.b16 %v2835, %v2827
        %v4284 = vpack.c.b16 %v2836, %v2828
        %v4285 = vpack.c.b16 %v2837, %v2829
        %v4286 = vpack.c.b16 %v2846, %v2838
        %v4287 = vpack.c.b16 %v2847, %v2839
        %v4288 = vpack.c.b16 %v2848, %v2840
        %v4289 = vpack.c.b16 %v2849, %v2841
        %v4290 = vpack.c.b16 %v2850, %v2842
        %v4291 = vpack.c.b16 %v2851, %v2843
        %v4292 = vpack.c.b16 %v2852, %v2844
        %v4293 = vpack.c.b16 %v2853, %v2845
        %v4294 = vpack.c.b16 %v2862, %v2854
        %v4295 = vpack.c.b16 %v2863, %v2855
        %v4296 = vpack.c.b16 %v2864, %v2856
        %v4297 = vpack.c.b16 %v2865, %v2857
        %v4298 = vpack.c.b16 %v2866, %v2858
        %v4299 = vpack.c.b16 %v2867, %v2859
        %v4300 = vpack.c.b16 %v2868, %v2860
        %v4301 = vpack.c.b16 %v2869, %v2861
        %v4302 = vpack.c.b16 %v2878, %v2870
        %v4303 = vpack.c.b16 %v2879, %v2871
        %v4304 = vpack.c.b16 %v2880, %v2872
        %v4305 = vpack.c.b16 %v2881, %v2873
        %v4306 = vpack.c.b16 %v2882, %v2874
        %v4307 = vpack.c.b16 %v2883, %v2875
        %v4308 = vpack.c.b16 %v2884, %v2876
        %v4309 = vpack.c.b16 %v2885, %v2877
        %v4310 = vpack.c.b16 %v2894, %v2886
        %v4311 = vpack.c.b16 %v2895, %v2887
        %v4312 = vpack.c.b16 %v2896, %v2888
        %v4313 = vpack.c.b16 %v2897, %v2889
        %v4314 = vpack.c.b16 %v2898, %v2890
        %v4315 = vpack.c.b16 %v2899, %v2891
        %v4316 = vpack.c.b16 %v2900, %v2892
        %v4317 = vpack.c.b16 %v2901, %v2893
        %v4318 = vpack.c.b16 %v2910, %v2902
        %v4319 = vpack.c.b16 %v2911, %v2903
        %v4320 = vpack.c.b16 %v2912, %v2904
        %v4321 = vpack.c.b16 %v2913, %v2905
        %v4322 = vpack.c.b16 %v2914, %v2906
        %v4323 = vpack.c.b16 %v2915, %v2907
        %v4324 = vpack.c.b16 %v2916, %v2908
        %v4325 = vpack.c.b16 %v2917, %v2909
        %v4326 = vpack.c.b16 %v2926, %v2918
        %v4327 = vpack.c.b16 %v2927, %v2919
        %v4328 = vpack.c.b16 %v2928, %v2920
        %v4329 = vpack.c.b16 %v2929, %v2921
        %v4330 = vpack.c.b16 %v2930, %v2922
        %v4331 = vpack.c.b16 %v2931, %v2923
        %v4332 = vpack.c.b16 %v2932, %v2924
        %v4333 = vpack.c.b16 %v2933, %v2925
        %v4334 = vpack.c.b16 %v2942, %v2934
        %v4335 = vpack.c.b16 %v2943, %v2935
        %v4336 = vpack.c.b16 %v2944, %v2936
        %v4337 = vpack.c.b16 %v2945, %v2937
        %v4338 = vpack.c.b16 %v2946, %v2938
        %v4339 = vpack.c.b16 %v2947, %v2939
        %v4340 = vpack.c.b16 %v2948, %v2940
        %v4341 = vpack.c.b16 %v2949, %v2941
        %v4342 = vpack.c.b16 %v2958, %v2950
        %v4343 = vpack.c.b16 %v2959, %v2951
        %v4344 = vpack.c.b16 %v2960, %v2952
        %v4345 = vpack.c.b16 %v2961, %v2953
        %v4346 = vpack.c.b16 %v2962, %v2954
        %v4347 = vpack.c.b16 %v2963, %v2955
        %v4348 = vpack.c.b16 %v2964, %v2956
        %v4349 = vpack.c.b16 %v2965, %v2957
        %v4350 = vpack.c.b16 %v2974, %v2966
        %v4351 = vpack.c.b16 %v2975, %v2967
        %v4352 = vpack.c.b16 %v2976, %v2968
        %v4353 = vpack.c.b16 %v2977, %v2969
        %v4354 = vpack.c.b16 %v2978, %v2970
        %v4355 = vpack.c.b16 %v2979, %v2971
        %v4356 = vpack.c.b16 %v2980, %v2972
        %v4357 = vpack.c.b16 %v2981, %v2973
        %v4358 = vpack.c.b16 %v2990, %v2982
        %v4359 = vpack.c.b16 %v2991, %v2983
        %v4360 = vpack.c.b16 %v2992, %v2984
        %v4361 = vpack.c.b16 %v2993, %v2985
        %v4362 = vpack.c.b16 %v2994, %v2986
        %v4363 = vpack.c.b16 %v2995, %v2987
        %v4364 = vpack.c.b16 %v2996, %v2988
        %v4365 = vpack.c.b16 %v2997, %v2989
        %v4366 = vpack.c.b16 %v3006, %v2998
        %v4367 = vpack.c.b16 %v3007, %v2999
        %v4368 = vpack.c.b16 %v3008, %v3000
        %v4369 = vpack.c.b16 %v3009, %v3001
        %v4370 = vpack.c.b16 %v3010, %v3002
        %v4371 = vpack.c.b16 %v3011, %v3003
        %v4372 = vpack.c.b16 %v3012, %v3004
        %v4373 = vpack.c.b16 %v3013, %v3005
        %v4374 = vpack.c.b16 %v3022, %v3014
        %v4375 = vpack.c.b16 %v3023, %v3015
        %v4376 = vpack.c.b16 %v3024, %v3016
        %v4377 = vpack.c.b16 %v3025, %v3017
        %v4378 = vpack.c.b16 %v3026, %v3018
        %v4379 = vpack.c.b16 %v3027, %v3019
        %v4380 = vpack.c.b16 %v3028, %v3020
        %v4381 = vpack.c.b16 %v3029, %v3021
        %v4382 = vpack.c.b16 %v3038, %v3030
        %v4383 = vpack.c.b16 %v3039, %v3031
        %v4384 = vpack.c.b16 %v3040, %v3032
        %v4385 = vpack.c.b16 %v3041, %v3033
        %v4386 = vpack.c.b16 %v3042, %v3034
        %v4387 = vpack.c.b16 %v3043, %v3035
        %v4388 = vpack.c.b16 %v3044, %v3036
        %v4389 = vpack.c.b16 %v3045, %v3037
        %v4390 = vpack.c.b16 %v3054, %v3046
        %v4391 = vpack.c.b16 %v3055, %v3047
        %v4392 = vpack.c.b16 %v3056, %v3048
        %v4393 = vpack.c.b16 %v3057, %v3049
        %v4394 = vpack.c.b16 %v3058, %v3050
        %v4395 = vpack.c.b16 %v3059, %v3051
        %v4396 = vpack.c.b16 %v3060, %v3052
        %v4397 = vpack.c.b16 %v3061, %v3053
        %v4398 = vpack.c.b16 %v3070, %v3062
        %v4399 = vpack.c.b16 %v3071, %v3063
        %v4400 = vpack.c.b16 %v3072, %v3064
        %v4401 = vpack.c.b16 %v3073, %v3065
        %v4402 = vpack.c.b16 %v3074, %v3066
        %v4403 = vpack.c.b16 %v3075, %v3067
        %v4404 = vpack.c.b16 %v3076, %v3068
        %v4405 = vpack.c.b16 %v3077, %v3069
        %v4406 = vpack.c.b16 %v3086, %v3078
        %v4407 = vpack.c.b16 %v3087, %v3079
        %v4408 = vpack.c.b16 %v3088, %v3080
        %v4409 = vpack.c.b16 %v3089, %v3081
        %v4410 = vpack.c.b16 %v3090, %v3082
        %v4411 = vpack.c.b16 %v3091, %v3083
        %v4412 = vpack.c.b16 %v3092, %v3084
        %v4413 = vpack.c.b16 %v3093, %v3085
        %v4414 = vpack.c.b16 %v3102, %v3094
        %v4415 = vpack.c.b16 %v3103, %v3095
        %v4416 = vpack.c.b16 %v3104, %v3096
        %v4417 = vpack.c.b16 %v3105, %v3097
        %v4418 = vpack.c.b16 %v3106, %v3098
        %v4419 = vpack.c.b16 %v3107, %v3099
        %v4420 = vpack.c.b16 %v3108, %v3100
        %v4421 = vpack.c.b16 %v3109, %v3101
        %v4422 = vpack.c.b16 %v3118, %v3110
        %v4423 = vpack.c.b16 %v3119, %v3111
        %v4424 = vpack.c.b16 %v3120, %v3112
        %v4425 = vpack.c.b16 %v3121, %v3113
        %v4426 = vpack.c.b16 %v3122, %v3114
        %v4427 = vpack.c.b16 %v3123, %v3115
        %v4428 = vpack.c.b16 %v3124, %v3116
        %v4429 = vpack.c.b16 %v3125, %v3117
        %v4430 = vpack.c.b16 %v3134, %v3126
        %v4431 = vpack.c.b16 %v3135, %v3127
        %v4432 = vpack.c.b16 %v3136, %v3128
        %v4433 = vpack.c.b16 %v3137, %v3129
        %v4434 = vpack.c.b16 %v3138, %v3130
        %v4435 = vpack.c.b16 %v3139, %v3131
        %v4436 = vpack.c.b16 %v3140, %v3132
        %v4437 = vpack.c.b16 %v3141, %v3133
        %v4438 = vpack.c.b16 %v3150, %v3142
        %v4439 = vpack.c.b16 %v3151, %v3143
        %v4440 = vpack.c.b16 %v3152, %v3144
        %v4441 = vpack.c.b16 %v3153, %v3145
        %v4442 = vpack.c.b16 %v3154, %v3146
        %v4443 = vpack.c.b16 %v3155, %v3147
        %v4444 = vpack.c.b16 %v3156, %v3148
        %v4445 = vpack.c.b16 %v3157, %v3149
        %v4446 = vpack.c.b16 %v3166, %v3158
        %v4447 = vpack.c.b16 %v3167, %v3159
        %v4448 = vpack.c.b16 %v3168, %v3160
        %v4449 = vpack.c.b16 %v3169, %v3161
        %v4450 = vpack.c.b16 %v3170, %v3162
        %v4451 = vpack.c.b16 %v3171, %v3163
        %v4452 = vpack.c.b16 %v3172, %v3164
        %v4453 = vpack.c.b16 %v3173, %v3165
        %v4454 = vpack.c.b16 %v3182, %v3174
        %v4455 = vpack.c.b16 %v3183, %v3175
        %v4456 = vpack.c.b16 %v3184, %v3176
        %v4457 = vpack.c.b16 %v3185, %v3177
        %v4458 = vpack.c.b16 %v3186, %v3178
        %v4459 = vpack.c.b16 %v3187, %v3179
        %v4460 = vpack.c.b16 %v3188, %v3180
        %v4461 = vpack.c.b16 %v3189, %v3181
        %v4462 = vpack.c.b16 %v3198, %v3190
        %v4463 = vpack.c.b16 %v3199, %v3191
        %v4464 = vpack.c.b16 %v3200, %v3192
        %v4465 = vpack.c.b16 %v3201, %v3193
        %v4466 = vpack.c.b16 %v3202, %v3194
        %v4467 = vpack.c.b16 %v3203, %v3195
        %v4468 = vpack.c.b16 %v3204, %v3196
        %v4469 = vpack.c.b16 %v3205, %v3197
        %v4470 = vpack.c.b16 %v3214, %v3206
        %v4471 = vpack.c.b16 %v3215, %v3207
        %v4472 = vpack.c.b16 %v3216, %v3208
        %v4473 = vpack.c.b16 %v3217, %v3209
        %v4474 = vpack.c.b16 %v3218, %v3210
        %v4475 = vpack.c.b16 %v3219, %v3211
        %v4476 = vpack.c.b16 %v3220, %v3212
        %v4477 = vpack.c.b16 %v3221, %v3213
        %v4478 = vpack.c.b16 %v3230, %v3222
        %v4479 = vpack.c.b16 %v3231, %v3223
        %v4480 = vpack.c.b16 %v3232, %v3224
        %v4481 = vpack.c.b16 %v3233, %v3225
        %v4482 = vpack.c.b16 %v3234, %v3226
        %v4483 = vpack.c.b16 %v3235, %v3227
        %v4484 = vpack.c.b16 %v3236, %v3228
        %v4485 = vpack.c.b16 %v3237, %v3229
        %v4486 = vpack.c.b16 %v3246, %v3238
        %v4487 = vpack.c.b16 %v3247, %v3239
        %v4488 = vpack.c.b16 %v3248, %v3240
        %v4489 = vpack.c.b16 %v3249, %v3241
        %v4490 = vpack.c.b16 %v3250, %v3242
        %v4491 = vpack.c.b16 %v3251, %v3243
        %v4492 = vpack.c.b16 %v3252, %v3244
        %v4493 = vpack.c.b16 %v3253, %v3245
        %v4494 = vpack.c.b16 %v3262, %v3254
        %v4495 = vpack.c.b16 %v3263, %v3255
        %v4496 = vpack.c.b16 %v3264, %v3256
        %v4497 = vpack.c.b16 %v3265, %v3257
        %v4498 = vpack.c.b16 %v3266, %v3258
        %v4499 = vpack.c.b16 %v3267, %v3259
        %v4500 = vpack.c.b16 %v3268, %v3260
        %v4501 = vpack.c.b16 %v3269, %v3261
        %v4502 = vpack.c.b16 %v3278, %v3270
        %v4503 = vpack.c.b16 %v3279, %v3271
        %v4504 = vpack.c.b16 %v3280, %v3272
        %v4505 = vpack.c.b16 %v3281, %v3273
        %v4506 = vpack.c.b16 %v3282, %v3274
        %v4507 = vpack.c.b16 %v3283, %v3275
        %v4508 = vpack.c.b16 %v3284, %v3276
        %v4509 = vpack.c.b16 %v3285, %v3277
        %v4510 = vpack.c.b16 %v3294, %v3286
        %v4511 = vpack.c.b16 %v3295, %v3287
        %v4512 = vpack.c.b16 %v3296, %v3288
        %v4513 = vpack.c.b16 %v3297, %v3289
        %v4514 = vpack.c.b16 %v3298, %v3290
        %v4515 = vpack.c.b16 %v3299, %v3291
        %v4516 = vpack.c.b16 %v3300, %v3292
        %v4517 = vpack.c.b16 %v3301, %v3293
        %v4518 = vpack.c.b16 %v3310, %v3302
        %v4519 = vpack.c.b16 %v3311, %v3303
        %v4520 = vpack.c.b16 %v3312, %v3304
        %v4521 = vpack.c.b16 %v3313, %v3305
        %v4522 = vpack.c.b16 %v3314, %v3306
        %v4523 = vpack.c.b16 %v3315, %v3307
        %v4524 = vpack.c.b16 %v3316, %v3308
        %v4525 = vpack.c.b16 %v3317, %v3309
        %v4526 = vpack.c.b16 %v3326, %v3318
        %v4527 = vpack.c.b16 %v3327, %v3319
        %v4528 = vpack.c.b16 %v3328, %v3320
        %v4529 = vpack.c.b16 %v3329, %v3321
        %v4530 = vpack.c.b16 %v3330, %v3322
        %v4531 = vpack.c.b16 %v3331, %v3323
        %v4532 = vpack.c.b16 %v3332, %v3324
        %v4533 = vpack.c.b16 %v3333, %v3325
        %v4534 = vpack.c.b16 %v3342, %v3334
        %v4535 = vpack.c.b16 %v3343, %v3335
        %v4536 = vpack.c.b16 %v3344, %v3336
        %v4537 = vpack.c.b16 %v3345, %v3337
        %v4538 = vpack.c.b16 %v3346, %v3338
        %v4539 = vpack.c.b16 %v3347, %v3339
        %v4540 = vpack.c.b16 %v3348, %v3340
        %v4541 = vpack.c.b16 %v3349, %v3341
        %v4542 = vpack.c.b16 %v3358, %v3350
        %v4543 = vpack.c.b16 %v3359, %v3351
        %v4544 = vpack.c.b16 %v3360, %v3352
        %v4545 = vpack.c.b16 %v3361, %v3353
        %v4546 = vpack.c.b16 %v3362, %v3354
        %v4547 = vpack.c.b16 %v3363, %v3355
        %v4548 = vpack.c.b16 %v3364, %v3356
        %v4549 = vpack.c.b16 %v3365, %v3357
        %v4550 = vpack.c.b16 %v3374, %v3366
        %v4551 = vpack.c.b16 %v3375, %v3367
        %v4552 = vpack.c.b16 %v3376, %v3368
        %v4553 = vpack.c.b16 %v3377, %v3369
        %v4554 = vpack.c.b16 %v3378, %v3370
        %v4555 = vpack.c.b16 %v3379, %v3371
        %v4556 = vpack.c.b16 %v3380, %v3372
        %v4557 = vpack.c.b16 %v3381, %v3373
        %v4558 = vpack.c.b16 %v3390, %v3382
        %v4559 = vpack.c.b16 %v3391, %v3383
        %v4560 = vpack.c.b16 %v3392, %v3384
        %v4561 = vpack.c.b16 %v3393, %v3385
        %v4562 = vpack.c.b16 %v3394, %v3386
        %v4563 = vpack.c.b16 %v3395, %v3387
        %v4564 = vpack.c.b16 %v3396, %v3388
        %v4565 = vpack.c.b16 %v3397, %v3389
        %v4566 = vpack.c.b16 %v3406, %v3398
        %v4567 = vpack.c.b16 %v3407, %v3399
        %v4568 = vpack.c.b16 %v3408, %v3400
        %v4569 = vpack.c.b16 %v3409, %v3401
        %v4570 = vpack.c.b16 %v3410, %v3402
        %v4571 = vpack.c.b16 %v3411, %v3403
        %v4572 = vpack.c.b16 %v3412, %v3404
        %v4573 = vpack.c.b16 %v3413, %v3405
        %v4574 = vpack.c.b16 %v3422, %v3414
        %v4575 = vpack.c.b16 %v3423, %v3415
        %v4576 = vpack.c.b16 %v3424, %v3416
        %v4577 = vpack.c.b16 %v3425, %v3417
        %v4578 = vpack.c.b16 %v3426, %v3418
        %v4579 = vpack.c.b16 %v3427, %v3419
        %v4580 = vpack.c.b16 %v3428, %v3420
        %v4581 = vpack.c.b16 %v3429, %v3421
        %v4582 = vpack.c.b16 %v3438, %v3430
        %v4583 = vpack.c.b16 %v3439, %v3431
        %v4584 = vpack.c.b16 %v3440, %v3432
        %v4585 = vpack.c.b16 %v3441, %v3433
        %v4586 = vpack.c.b16 %v3442, %v3434
        %v4587 = vpack.c.b16 %v3443, %v3435
        %v4588 = vpack.c.b16 %v3444, %v3436
        %v4589 = vpack.c.b16 %v3445, %v3437
        %v4590 = vpack.c.b16 %v3454, %v3446
        %v4591 = vpack.c.b16 %v3455, %v3447
        %v4592 = vpack.c.b16 %v3456, %v3448
        %v4593 = vpack.c.b16 %v3457, %v3449
        %v4594 = vpack.c.b16 %v3458, %v3450
        %v4595 = vpack.c.b16 %v3459, %v3451
        %v4596 = vpack.c.b16 %v3460, %v3452
        %v4597 = vpack.c.b16 %v3461, %v3453
        %v4598 = vpack.c.b16 %v3470, %v3462
        %v4599 = vpack.c.b16 %v3471, %v3463
        %v4600 = vpack.c.b16 %v3472, %v3464
        %v4601 = vpack.c.b16 %v3473, %v3465
        %v4602 = vpack.c.b16 %v3474, %v3466
        %v4603 = vpack.c.b16 %v3475, %v3467
        %v4604 = vpack.c.b16 %v3476, %v3468
        %v4605 = vpack.c.b16 %v3477, %v3469
        %v4606 = vpack.c.b16 %v3486, %v3478
        %v4607 = vpack.c.b16 %v3487, %v3479
        %v4608 = vpack.c.b16 %v3488, %v3480
        %v4609 = vpack.c.b16 %v3489, %v3481
        %v4610 = vpack.c.b16 %v3490, %v3482
        %v4611 = vpack.c.b16 %v3491, %v3483
        %v4612 = vpack.c.b16 %v3492, %v3484
        %v4613 = vpack.c.b16 %v3493, %v3485
        %v4614 = vpack.c.b16 %v3502, %v3494
        %v4615 = vpack.c.b16 %v3503, %v3495
        %v4616 = vpack.c.b16 %v3504, %v3496
        %v4617 = vpack.c.b16 %v3505, %v3497
        %v4618 = vpack.c.b16 %v3506, %v3498
        %v4619 = vpack.c.b16 %v3507, %v3499
        %v4620 = vpack.c.b16 %v3508, %v3500
        %v4621 = vpack.c.b16 %v3509, %v3501
        %v4622 = vpack.c.b16 %v3518, %v3510
        %v4623 = vpack.c.b16 %v3519, %v3511
        %v4624 = vpack.c.b16 %v3520, %v3512
        %v4625 = vpack.c.b16 %v3521, %v3513
        %v4626 = vpack.c.b16 %v3522, %v3514
        %v4627 = vpack.c.b16 %v3523, %v3515
        %v4628 = vpack.c.b16 %v3524, %v3516
        %v4629 = vpack.c.b16 %v3525, %v3517
        %v4630 = vpack.c.b16 %v3534, %v3526
        %v4631 = vpack.c.b16 %v3535, %v3527
        %v4632 = vpack.c.b16 %v3536, %v3528
        %v4633 = vpack.c.b16 %v3537, %v3529
        %v4634 = vpack.c.b16 %v3538, %v3530
        %v4635 = vpack.c.b16 %v3539, %v3531
        %v4636 = vpack.c.b16 %v3540, %v3532
        %v4637 = vpack.c.b16 %v3541, %v3533
        %v4638 = vpack.c.b16 %v3550, %v3542
        %v4639 = vpack.c.b16 %v3551, %v3543
        %v4640 = vpack.c.b16 %v3552, %v3544
        %v4641 = vpack.c.b16 %v3553, %v3545
        %v4642 = vpack.c.b16 %v3554, %v3546
        %v4643 = vpack.c.b16 %v3555, %v3547
        %v4644 = vpack.c.b16 %v3556, %v3548
        %v4645 = vpack.c.b16 %v3557, %v3549
        %v4646 = vpack.c.b16 %v3566, %v3558
        %v4647 = vpack.c.b16 %v3567, %v3559
        %v4648 = vpack.c.b16 %v3568, %v3560
        %v4649 = vpack.c.b16 %v3569, %v3561
        %v4650 = vpack.c.b16 %v3570, %v3562
        %v4651 = vpack.c.b16 %v3571, %v3563
        %v4652 = vpack.c.b16 %v3572, %v3564
        %v4653 = vpack.c.b16 %v3573, %v3565
        %v4654 = vpack.c.b16 %v3582, %v3574
        %v4655 = vpack.c.b16 %v3583, %v3575
        %v4656 = vpack.c.b16 %v3584, %v3576
        %v4657 = vpack.c.b16 %v3585, %v3577
        %v4658 = vpack.c.b16 %v3586, %v3578
        %v4659 = vpack.c.b16 %v3587, %v3579
        %v4660 = vpack.c.b16 %v3588, %v3580
        %v4661 = vpack.c.b16 %v3589, %v3581
        %v4662 = vpack.c.b16 %v3598, %v3590
        %v4663 = vpack.c.b16 %v3599, %v3591
        %v4664 = vpack.c.b16 %v3600, %v3592
        %v4665 = vpack.c.b16 %v3601, %v3593
        %v4666 = vpack.c.b16 %v3602, %v3594
        %v4667 = vpack.c.b16 %v3603, %v3595
        %v4668 = vpack.c.b16 %v3604, %v3596
        %v4669 = vpack.c.b16 %v3605, %v3597
        %v4670 = vpack.c.b16 %v3614, %v3606
        %v4671 = vpack.c.b16 %v3615, %v3607
        %v4672 = vpack.c.b16 %v3616, %v3608
        %v4673 = vpack.c.b16 %v3617, %v3609
        %v4674 = vpack.c.b16 %v3618, %v3610
        %v4675 = vpack.c.b16 %v3619, %v3611
        %v4676 = vpack.c.b16 %v3620, %v3612
        %v4677 = vpack.c.b16 %v3621, %v3613
        %v4678 = vpack.c.b16 %v3630, %v3622
        %v4679 = vpack.c.b16 %v3631, %v3623
        %v4680 = vpack.c.b16 %v3632, %v3624
        %v4681 = vpack.c.b16 %v3633, %v3625
        %v4682 = vpack.c.b16 %v3634, %v3626
        %v4683 = vpack.c.b16 %v3635, %v3627
        %v4684 = vpack.c.b16 %v3636, %v3628
        %v4685 = vpack.c.b16 %v3637, %v3629
        %v4686 = vpack.c.b16 %v3646, %v3638
        %v4687 = vpack.c.b16 %v3647, %v3639
        %v4688 = vpack.c.b16 %v3648, %v3640
        %v4689 = vpack.c.b16 %v3649, %v3641
        %v4690 = vpack.c.b16 %v3650, %v3642
        %v4691 = vpack.c.b16 %v3651, %v3643
        %v4692 = vpack.c.b16 %v3652, %v3644
        %v4693 = vpack.c.b16 %v3653, %v3645
        %v4694 = vpack.c.b16 %v3662, %v3654
        %v4695 = vpack.c.b16 %v3663, %v3655
        %v4696 = vpack.c.b16 %v3664, %v3656
        %v4697 = vpack.c.b16 %v3665, %v3657
        %v4698 = vpack.c.b16 %v3666, %v3658
        %v4699 = vpack.c.b16 %v3667, %v3659
        %v4700 = vpack.c.b16 %v3668, %v3660
        %v4701 = vpack.c.b16 %v3669, %v3661
        %v4702 = vpack.c.b16 %v3678, %v3670
        %v4703 = vpack.c.b16 %v3679, %v3671
        %v4704 = vpack.c.b16 %v3680, %v3672
        %v4705 = vpack.c.b16 %v3681, %v3673
        %v4706 = vpack.c.b16 %v3682, %v3674
        %v4707 = vpack.c.b16 %v3683, %v3675
        %v4708 = vpack.c.b16 %v3684, %v3676
        %v4709 = vpack.c.b16 %v3685, %v3677
        %v4710 = vpack.c.b16 %v3694, %v3686
        %v4711 = vpack.c.b16 %v3695, %v3687
        %v4712 = vpack.c.b16 %v3696, %v3688
        %v4713 = vpack.c.b16 %v3697, %v3689
        %v4714 = vpack.c.b16 %v3698, %v3690
        %v4715 = vpack.c.b16 %v3699, %v3691
        %v4716 = vpack.c.b16 %v3700, %v3692
        %v4717 = vpack.c.b16 %v3701, %v3693
        %v4718 = vpack.c.b16 %v3710, %v3702
        %v4719 = vpack.c.b16 %v3711, %v3703
        %v4720 = vpack.c.b16 %v3712, %v3704
        %v4721 = vpack.c.b16 %v3713, %v3705
        %v4722 = vpack.c.b16 %v3714, %v3706
        %v4723 = vpack.c.b16 %v3715, %v3707
        %v4724 = vpack.c.b16 %v3716, %v3708
        %v4725 = vpack.c.b16 %v3717, %v3709
        %v4726 = vpack.c.b16 %v3726, %v3718
        %v4727 = vpack.c.b16 %v3727, %v3719
        %v4728 = vpack.c.b16 %v3728, %v3720
        %v4729 = vpack.c.b16 %v3729, %v3721
        %v4730 = vpack.c.b16 %v3730, %v3722
        %v4731 = vpack.c.b16 %v3731, %v3723
        %v4732 = vpack.c.b16 %v3732, %v3724
        %v4733 = vpack.c.b16 %v3733, %v3725
        %v4734 = vpack.c.b16 %v3742, %v3734
        %v4735 = vpack.c.b16 %v3743, %v3735
        %v4736 = vpack.c.b16 %v3744, %v3736
        %v4737 = vpack.c.b16 %v3745, %v3737
        %v4738 = vpack.c.b16 %v3746, %v3738
        %v4739 = vpack.c.b16 %v3747, %v3739
        %v4740 = vpack.c.b16 %v3748, %v3740
        %v4741 = vpack.c.b16 %v3749, %v3741
        %v4742 = vpack.c.b16 %v3758, %v3750
        %v4743 = vpack.c.b16 %v3759, %v3751
        %v4744 = vpack.c.b16 %v3760, %v3752
        %v4745 = vpack.c.b16 %v3761, %v3753
        %v4746 = vpack.c.b16 %v3762, %v3754
        %v4747 = vpack.c.b16 %v3763, %v3755
        %v4748 = vpack.c.b16 %v3764, %v3756
        %v4749 = vpack.c.b16 %v3765, %v3757
        %v4750 = vpack.c.b16 %v3774, %v3766
        %v4751 = vpack.c.b16 %v3775, %v3767
        %v4752 = vpack.c.b16 %v3776, %v3768
        %v4753 = vpack.c.b16 %v3777, %v3769
        %v4754 = vpack.c.b16 %v3778, %v3770
        %v4755 = vpack.c.b16 %v3779, %v3771
        %v4756 = vpack.c.b16 %v3780, %v3772
        %v4757 = vpack.c.b16 %v3781, %v3773
        %v4758 = vpack.c.b16 %v3790, %v3782
        %v4759 = vpack.c.b16 %v3791, %v3783
        %v4760 = vpack.c.b16 %v3792, %v3784
        %v4761 = vpack.c.b16 %v3793, %v3785
        %v4762 = vpack.c.b16 %v3794, %v3786
        %v4763 = vpack.c.b16 %v3795, %v3787
        %v4764 = vpack.c.b16 %v3796, %v3788
        %v4765 = vpack.c.b16 %v3797, %v3789
        %v4766 = vpack.c.b16 %v3806, %v3798
        %v4767 = vpack.c.b16 %v3807, %v3799
        %v4768 = vpack.c.b16 %v3808, %v3800
        %v4769 = vpack.c.b16 %v3809, %v3801
        %v4770 = vpack.c.b16 %v3810, %v3802
        %v4771 = vpack.c.b16 %v3811, %v3803
        %v4772 = vpack.c.b16 %v3812, %v3804
        %v4773 = vpack.c.b16 %v3813, %v3805
        %v4774 = vpack.c.b16 %v3822, %v3814
        %v4775 = vpack.c.b16 %v3823, %v3815
        %v4776 = vpack.c.b16 %v3824, %v3816
        %v4777 = vpack.c.b16 %v3825, %v3817
        %v4778 = vpack.c.b16 %v3826, %v3818
        %v4779 = vpack.c.b16 %v3827, %v3819
        %v4780 = vpack.c.b16 %v3828, %v3820
        %v4781 = vpack.c.b16 %v3829, %v3821
        %v4782 = vpack.c.b16 %v3838, %v3830
        %v4783 = vpack.c.b16 %v3839, %v3831
        %v4784 = vpack.c.b16 %v3840, %v3832
        %v4785 = vpack.c.b16 %v3841, %v3833
        %v4786 = vpack.c.b16 %v3842, %v3834
        %v4787 = vpack.c.b16 %v3843, %v3835
        %v4788 = vpack.c.b16 %v3844, %v3836
        %v4789 = vpack.c.b16 %v3845, %v3837
        %v4790 = vpack.c.b16 %v3854, %v3846
        %v4791 = vpack.c.b16 %v3855, %v3847
        %v4792 = vpack.c.b16 %v3856, %v3848
        %v4793 = vpack.c.b16 %v3857, %v3849
        %v4794 = vpack.c.b16 %v3858, %v3850
        %v4795 = vpack.c.b16 %v3859, %v3851
        %v4796 = vpack.c.b16 %v3860, %v3852
        %v4797 = vpack.c.b16 %v3861, %v3853
        %v4798 = vpack.c.b16 %v3870, %v3862
        %v4799 = vpack.c.b16 %v3871, %v3863
        %v4800 = vpack.c.b16 %v3872, %v3864
        %v4801 = vpack.c.b16 %v3873, %v3865
        %v4802 = vpack.c.b16 %v3874, %v3866
        %v4803 = vpack.c.b16 %v3875, %v3867
        %v4804 = vpack.c.b16 %v3876, %v3868
        %v4805 = vpack.c.b16 %v3877, %v3869
        %v4806 = vpack.c.b16 %v3886, %v3878
        %v4807 = vpack.c.b16 %v3887, %v3879
        %v4808 = vpack.c.b16 %v3888, %v3880
        %v4809 = vpack.c.b16 %v3889, %v3881
        %v4810 = vpack.c.b16 %v3890, %v3882
        %v4811 = vpack.c.b16 %v3891, %v3883
        %v4812 = vpack.c.b16 %v3892, %v3884
        %v4813 = vpack.c.b16 %v3893, %v3885
        %v4814 = vpack.c.b16 %v3902, %v3894
        %v4815 = vpack.c.b16 %v3903, %v3895
        %v4816 = vpack.c.b16 %v3904, %v3896
        %v4817 = vpack.c.b16 %v3905, %v3897
        %v4818 = vpack.c.b16 %v3906, %v3898
        %v4819 = vpack.c.b16 %v3907, %v3899
        %v4820 = vpack.c.b16 %v3908, %v3900
        %v4821 = vpack.c.b16 %v3909, %v3901
        %v4822 = vpack.c.b16 %v3918, %v3910
        %v4823 = vpack.c.b16 %v3919, %v3911
        %v4824 = vpack.c.b16 %v3920, %v3912
        %v4825 = vpack.c.b16 %v3921, %v3913
        %v4826 = vpack.c.b16 %v3922, %v3914
        %v4827 = vpack.c.b16 %v3923, %v3915
        %v4828 = vpack.c.b16 %v3924, %v3916
        %v4829 = vpack.c.b16 %v3925, %v3917
        %v4830 = vpack.c.b16 %v3934, %v3926
        %v4831 = vpack.c.b16 %v3935, %v3927
        %v4832 = vpack.c.b16 %v3936, %v3928
        %v4833 = vpack.c.b16 %v3937, %v3929
        %v4834 = vpack.c.b16 %v3938, %v3930
        %v4835 = vpack.c.b16 %v3939, %v3931
        %v4836 = vpack.c.b16 %v3940, %v3932
        %v4837 = vpack.c.b16 %v3941, %v3933
        %5734 = vmatprep.subr.bf16.mxu0 %v3999
        %5735 = vmatpush1.bf16.msra.mxu0 %v3998
        %5736 = vmatprep.subr.bf16.mxu0 %v3991
        %5737 = vmatpush1.bf16.msra.mxu0 %v3990
        %5738 = vmatprep.subr.bf16.mxu0 %v3983
        %5739 = vmatpush1.bf16.msra.mxu0 %v3982
        %5740 = vmatprep.subr.bf16.mxu0 %v3975
        %5741 = vmatpush1.bf16.msra.mxu0 %v3974
        %5742 = vmatprep.subr.bf16.mxu0 %v3967
        %5743 = vmatpush1.bf16.msra.mxu0 %v3966
        %5744 = vmatprep.subr.bf16.mxu0 %v3959
        %5745 = vmatpush1.bf16.msra.mxu0 %v3958
        %5746 = vmatprep.subr.bf16.mxu0 %v3951
        %5747 = vmatpush1.bf16.msra.mxu0 %v3950
        %5748 = vmatprep.subr.bf16.mxu0 %v3943
        %5749 = vmatpush1.bf16.msra.mxu0 %v3942
        %5750 = vmatprep.subr.bf16.mxu0 %v4063
        %5751 = vmatpush2.bf16.msra.mxu0 %v4062
        %5752 = vmatprep.subr.bf16.mxu0 %v4055
        %5753 = vmatpush2.bf16.msra.mxu0 %v4054
        %5754 = vmatprep.subr.bf16.mxu0 %v4047
        %5755 = vmatpush2.bf16.msra.mxu0 %v4046
        %5756 = vmatprep.subr.bf16.mxu0 %v4039
        %5757 = vmatpush2.bf16.msra.mxu0 %v4038
        %5758 = vmatprep.subr.bf16.mxu0 %v4031
        %5759 = vmatpush2.bf16.msra.mxu0 %v4030
        %5760 = vmatprep.subr.bf16.mxu0 %v4023
        %5761 = vmatpush2.bf16.msra.mxu0 %v4022
        %5762 = vmatprep.subr.bf16.mxu0 %v4015
        %5763 = vmatpush2.bf16.msra.mxu0 %v4014
        %5764 = vmatprep.subr.bf16.mxu0 %v4007
        %5765 = vmatpush2.bf16.msra.mxu0 %v4006
        %5766 = vmatprep.mubr.bf16.mxu0 %v1181
        %5767 = vmatmul.mubr.bf16.gmra.mxu0 %v1167
        %v5768 = vpop.f32.mrf.mxu0
        %v5769 = vadd.f32 0.0, %v5768
        %v5770 = vpop.f32.mrf.mxu0
        %v5771 = vadd.f32 0.0, %v5770
        %v5772 = vpop.f32.mrf.mxu0
        %v5773 = vpop.f32.mrf.mxu0
        %5774 = vdwg.mxu0
        %5775 = vmatprep.subr.bf16.mxu0 %v4127
        %5776 = vmatpush1.bf16.msra.mxu0 %v4126
        %5777 = vmatprep.subr.bf16.mxu0 %v4119
        %5778 = vmatpush1.bf16.msra.mxu0 %v4118
        %5779 = vmatprep.subr.bf16.mxu0 %v4111
        %5780 = vmatpush1.bf16.msra.mxu0 %v4110
        %5781 = vmatprep.subr.bf16.mxu0 %v4103
        %5782 = vmatpush1.bf16.msra.mxu0 %v4102
        %5783 = vmatprep.subr.bf16.mxu0 %v4095
        %5784 = vmatpush1.bf16.msra.mxu0 %v4094
        %5785 = vmatprep.subr.bf16.mxu0 %v4087
        %5786 = vmatpush1.bf16.msra.mxu0 %v4086
        %5787 = vmatprep.subr.bf16.mxu0 %v4079
        %5788 = vmatpush1.bf16.msra.mxu0 %v4078
        %5789 = vmatprep.subr.bf16.mxu0 %v4071
        %5790 = vmatpush1.bf16.msra.mxu0 %v4070
        %5791 = vmatprep.subr.bf16.mxu0 %v4191
        %5792 = vmatpush2.bf16.msra.mxu0 %v4190
        %5793 = vmatprep.subr.bf16.mxu0 %v4183
        %5794 = vmatpush2.bf16.msra.mxu0 %v4182
        %5795 = vmatprep.subr.bf16.mxu0 %v4175
        %5796 = vmatpush2.bf16.msra.mxu0 %v4174
        %5797 = vmatprep.subr.bf16.mxu0 %v4167
        %5798 = vmatpush2.bf16.msra.mxu0 %v4166
        %5799 = vmatprep.subr.bf16.mxu0 %v4159
        %5800 = vmatpush2.bf16.msra.mxu0 %v4158
        %5801 = vmatprep.subr.bf16.mxu0 %v4151
        %5802 = vmatpush2.bf16.msra.mxu0 %v4150
        %5803 = vmatprep.subr.bf16.mxu0 %v4143
        %5804 = vmatpush2.bf16.msra.mxu0 %v4142
        %5805 = vmatprep.subr.bf16.mxu0 %v4135
        %5806 = vmatpush2.bf16.msra.mxu0 %v4134
        %5807 = vmatprep.mubr.bf16.mxu0 %v1191
        %5808 = vmatmul.mubr.bf16.gmra.mxu0 %v1189
        %v5809 = vpop.f32.mrf.mxu0
        %v5810 = vadd.f32 %v5769, %v5809
        %v5811 = vpop.f32.mrf.mxu0
        %v5812 = vadd.f32 %v5771, %v5811
        %v5813 = vpop.f32.mrf.mxu0
        %v5814 = vpop.f32.mrf.mxu0
        %5815 = vdwg.mxu0
        %5816 = vmatprep.subr.bf16.mxu0 %v4255
        %5817 = vmatpush1.bf16.msra.mxu0 %v4254
        %5818 = vmatprep.subr.bf16.mxu0 %v4247
        %5819 = vmatpush1.bf16.msra.mxu0 %v4246
        %5820 = vmatprep.subr.bf16.mxu0 %v4239
        %5821 = vmatpush1.bf16.msra.mxu0 %v4238
        %5822 = vmatprep.subr.bf16.mxu0 %v4231
        %5823 = vmatpush1.bf16.msra.mxu0 %v4230
        %5824 = vmatprep.subr.bf16.mxu0 %v4223
        %5825 = vmatpush1.bf16.msra.mxu0 %v4222
        %5826 = vmatprep.subr.bf16.mxu0 %v4215
        %5827 = vmatpush1.bf16.msra.mxu0 %v4214
        %5828 = vmatprep.subr.bf16.mxu0 %v4207
        %5829 = vmatpush1.bf16.msra.mxu0 %v4206
        %5830 = vmatprep.subr.bf16.mxu0 %v4199
        %5831 = vmatpush1.bf16.msra.mxu0 %v4198
        %5832 = vmatprep.subr.bf16.mxu0 %v4319
        %5833 = vmatpush2.bf16.msra.mxu0 %v4318
        %5834 = vmatprep.subr.bf16.mxu0 %v4311
        %5835 = vmatpush2.bf16.msra.mxu0 %v4310
        %5836 = vmatprep.subr.bf16.mxu0 %v4303
        %5837 = vmatpush2.bf16.msra.mxu0 %v4302
        %5838 = vmatprep.subr.bf16.mxu0 %v4295
        %5839 = vmatpush2.bf16.msra.mxu0 %v4294
        %5840 = vmatprep.subr.bf16.mxu0 %v4287
        %5841 = vmatpush2.bf16.msra.mxu0 %v4286
        %5842 = vmatprep.subr.bf16.mxu0 %v4279
        %5843 = vmatpush2.bf16.msra.mxu0 %v4278
        %5844 = vmatprep.subr.bf16.mxu0 %v4271
        %5845 = vmatpush2.bf16.msra.mxu0 %v4270
        %5846 = vmatprep.subr.bf16.mxu0 %v4263
        %5847 = vmatpush2.bf16.msra.mxu0 %v4262
        %5848 = vmatprep.mubr.bf16.mxu0 %v1188
        %5849 = vmatmul.mubr.bf16.gmra.mxu0 %v1174
        %v5850 = vpop.f32.mrf.mxu0
        %v5851 = vadd.f32 %v5810, %v5850
        %v5852 = vpop.f32.mrf.mxu0
        %v5853 = vadd.f32 %v5812, %v5852
        %v5854 = vpop.f32.mrf.mxu0
        %v5855 = vpop.f32.mrf.mxu0
        %5856 = vdwg.mxu0
        %5857 = vmatprep.subr.bf16.mxu0 %v4383
        %5858 = vmatpush1.bf16.msra.mxu0 %v4382
        %5859 = vmatprep.subr.bf16.mxu0 %v4375
        %5860 = vmatpush1.bf16.msra.mxu0 %v4374
        %5861 = vmatprep.subr.bf16.mxu0 %v4367
        %5862 = vmatpush1.bf16.msra.mxu0 %v4366
        %5863 = vmatprep.subr.bf16.mxu0 %v4359
        %5864 = vmatpush1.bf16.msra.mxu0 %v4358
        %5865 = vmatprep.subr.bf16.mxu0 %v4351
        %5866 = vmatpush1.bf16.msra.mxu0 %v4350
        %5867 = vmatprep.subr.bf16.mxu0 %v4343
        %5868 = vmatpush1.bf16.msra.mxu0 %v4342
        %5869 = vmatprep.subr.bf16.mxu0 %v4335
        %5870 = vmatpush1.bf16.msra.mxu0 %v4334
        %5871 = vmatprep.subr.bf16.mxu0 %v4327
        %5872 = vmatpush1.bf16.msra.mxu0 %v4326
        %5873 = vmatprep.subr.bf16.mxu0 %v4447
        %5874 = vmatpush2.bf16.msra.mxu0 %v4446
        %5875 = vmatprep.subr.bf16.mxu0 %v4439
        %5876 = vmatpush2.bf16.msra.mxu0 %v4438
        %5877 = vmatprep.subr.bf16.mxu0 %v4431
        %5878 = vmatpush2.bf16.msra.mxu0 %v4430
        %5879 = vmatprep.subr.bf16.mxu0 %v4423
        %5880 = vmatpush2.bf16.msra.mxu0 %v4422
        %5881 = vmatprep.subr.bf16.mxu0 %v4415
        %5882 = vmatpush2.bf16.msra.mxu0 %v4414
        %5883 = vmatprep.subr.bf16.mxu0 %v4407
        %5884 = vmatpush2.bf16.msra.mxu0 %v4406
        %5885 = vmatprep.subr.bf16.mxu0 %v4399
        %5886 = vmatpush2.bf16.msra.mxu0 %v4398
        %5887 = vmatprep.subr.bf16.mxu0 %v4391
        %5888 = vmatpush2.bf16.msra.mxu0 %v4390
        %5889 = vmatprep.mubr.bf16.mxu0 %v1192
        %5890 = vmatmul.mubr.bf16.gmra.mxu0 %v1190
        %v5891 = vpop.f32.mrf.mxu0
        %v5892 = vadd.f32 %v5851, %v5891
        %v5893 = vpop.f32.mrf.mxu0
        %v5894 = vadd.f32 %v5853, %v5893
        %v5895 = vpop.f32.mrf.mxu0
        %v5896 = vpop.f32.mrf.mxu0
        %5897 = vdwg.mxu0
        %5898 = vmatprep.subr.bf16.mxu0 %v4511
        %5899 = vmatpush1.bf16.msra.mxu0 %v4510
        %5900 = vmatprep.subr.bf16.mxu0 %v4503
        %5901 = vmatpush1.bf16.msra.mxu0 %v4502
        %5902 = vmatprep.subr.bf16.mxu0 %v4495
        %5903 = vmatpush1.bf16.msra.mxu0 %v4494
        %5904 = vmatprep.subr.bf16.mxu0 %v4487
        %5905 = vmatpush1.bf16.msra.mxu0 %v4486
        %5906 = vmatprep.subr.bf16.mxu0 %v4479
        %5907 = vmatpush1.bf16.msra.mxu0 %v4478
        %5908 = vmatprep.subr.bf16.mxu0 %v4471
        %5909 = vmatpush1.bf16.msra.mxu0 %v4470
        %5910 = vmatprep.subr.bf16.mxu0 %v4463
        %5911 = vmatpush1.bf16.msra.mxu0 %v4462
        %5912 = vmatprep.subr.bf16.mxu0 %v4455
        %5913 = vmatpush1.bf16.msra.mxu0 %v4454
        %5914 = vmatprep.subr.bf16.mxu0 %v4575
        %5915 = vmatpush2.bf16.msra.mxu0 %v4574
        %5916 = vmatprep.subr.bf16.mxu0 %v4567
        %5917 = vmatpush2.bf16.msra.mxu0 %v4566
        %5918 = vmatprep.subr.bf16.mxu0 %v4559
        %5919 = vmatpush2.bf16.msra.mxu0 %v4558
        %5920 = vmatprep.subr.bf16.mxu0 %v4551
        %5921 = vmatpush2.bf16.msra.mxu0 %v4550
        %5922 = vmatprep.subr.bf16.mxu0 %v4543
        %5923 = vmatpush2.bf16.msra.mxu0 %v4542
        %5924 = vmatprep.subr.bf16.mxu0 %v4535
        %5925 = vmatpush2.bf16.msra.mxu0 %v4534
        %5926 = vmatprep.subr.bf16.mxu0 %v4527
        %5927 = vmatpush2.bf16.msra.mxu0 %v4526
        %5928 = vmatprep.subr.bf16.mxu0 %v4519
        %5929 = vmatpush2.bf16.msra.mxu0 %v4518
        %5930 = vmatprep.mubr.bf16.mxu0 %v1230
        %5931 = vmatmul.mubr.bf16.gmra.mxu0 %v1216
        %v5932 = vpop.f32.mrf.mxu0
        %v5933 = vadd.f32 %v5892, %v5932
        %v5934 = vpop.f32.mrf.mxu0
        %v5935 = vadd.f32 %v5894, %v5934
        %v5936 = vpop.f32.mrf.mxu0
        %v5937 = vpop.f32.mrf.mxu0
        %5938 = vdwg.mxu0
        %5939 = vmatprep.subr.bf16.mxu0 %v4639
        %5940 = vmatpush1.bf16.msra.mxu0 %v4638
        %5941 = vmatprep.subr.bf16.mxu0 %v4631
        %5942 = vmatpush1.bf16.msra.mxu0 %v4630
        %5943 = vmatprep.subr.bf16.mxu0 %v4623
        %5944 = vmatpush1.bf16.msra.mxu0 %v4622
        %5945 = vmatprep.subr.bf16.mxu0 %v4615
        %5946 = vmatpush1.bf16.msra.mxu0 %v4614
        %5947 = vmatprep.subr.bf16.mxu0 %v4607
        %5948 = vmatpush1.bf16.msra.mxu0 %v4606
        %5949 = vmatprep.subr.bf16.mxu0 %v4599
        %5950 = vmatpush1.bf16.msra.mxu0 %v4598
        %5951 = vmatprep.subr.bf16.mxu0 %v4591
        %5952 = vmatpush1.bf16.msra.mxu0 %v4590
        %5953 = vmatprep.subr.bf16.mxu0 %v4583
        %5954 = vmatpush1.bf16.msra.mxu0 %v4582
        %5955 = vmatprep.subr.bf16.mxu0 %v4703
        %5956 = vmatpush2.bf16.msra.mxu0 %v4702
        %5957 = vmatprep.subr.bf16.mxu0 %v4695
        %5958 = vmatpush2.bf16.msra.mxu0 %v4694
        %5959 = vmatprep.subr.bf16.mxu0 %v4687
        %5960 = vmatpush2.bf16.msra.mxu0 %v4686
        %5961 = vmatprep.subr.bf16.mxu0 %v4679
        %5962 = vmatpush2.bf16.msra.mxu0 %v4678
        %5963 = vmatprep.subr.bf16.mxu0 %v4671
        %5964 = vmatpush2.bf16.msra.mxu0 %v4670
        %5965 = vmatprep.subr.bf16.mxu0 %v4663
        %5966 = vmatpush2.bf16.msra.mxu0 %v4662
        %5967 = vmatprep.subr.bf16.mxu0 %v4655
        %5968 = vmatpush2.bf16.msra.mxu0 %v4654
        %5969 = vmatprep.subr.bf16.mxu0 %v4647
        %5970 = vmatpush2.bf16.msra.mxu0 %v4646
        %5971 = vmatprep.mubr.bf16.mxu0 %v1239
        %5972 = vmatmul.mubr.bf16.gmra.mxu0 %v1238
        %v5973 = vpop.f32.mrf.mxu0
        %v5974 = vadd.f32 %v5933, %v5973
        %v5975 = vpop.f32.mrf.mxu0
        %v5976 = vadd.f32 %v5935, %v5975
        %v5977 = vpop.f32.mrf.mxu0
        %v5978 = vpop.f32.mrf.mxu0
        %5979 = vdwg.mxu0
        %5980 = vmatprep.subr.bf16.mxu0 %v4767
        %5981 = vmatpush1.bf16.msra.mxu0 %v4766
        %5982 = vmatprep.subr.bf16.mxu0 %v4759
        %5983 = vmatpush1.bf16.msra.mxu0 %v4758
        %5984 = vmatprep.subr.bf16.mxu0 %v4751
        %5985 = vmatpush1.bf16.msra.mxu0 %v4750
        %5986 = vmatprep.subr.bf16.mxu0 %v4743
        %5987 = vmatpush1.bf16.msra.mxu0 %v4742
        %5988 = vmatprep.subr.bf16.mxu0 %v4735
        %5989 = vmatpush1.bf16.msra.mxu0 %v4734
        %5990 = vmatprep.subr.bf16.mxu0 %v4727
        %5991 = vmatpush1.bf16.msra.mxu0 %v4726
        %5992 = vmatprep.subr.bf16.mxu0 %v4719
        %5993 = vmatpush1.bf16.msra.mxu0 %v4718
        %5994 = vmatprep.subr.bf16.mxu0 %v4711
        %5995 = vmatpush1.bf16.msra.mxu0 %v4710
        %5996 = vmatprep.subr.bf16.mxu0 %v4831
        %5997 = vmatpush2.bf16.msra.mxu0 %v4830
        %5998 = vmatprep.subr.bf16.mxu0 %v4823
        %5999 = vmatpush2.bf16.msra.mxu0 %v4822
        %6000 = vmatprep.subr.bf16.mxu0 %v4815
        %6001 = vmatpush2.bf16.msra.mxu0 %v4814
        %6002 = vmatprep.subr.bf16.mxu0 %v4807
        %6003 = vmatpush2.bf16.msra.mxu0 %v4806
        %6004 = vmatprep.subr.bf16.mxu0 %v4799
        %6005 = vmatpush2.bf16.msra.mxu0 %v4798
        %6006 = vmatprep.subr.bf16.mxu0 %v4791
        %6007 = vmatpush2.bf16.msra.mxu0 %v4790
        %6008 = vmatprep.subr.bf16.mxu0 %v4783
        %6009 = vmatpush2.bf16.msra.mxu0 %v4782
        %6010 = vmatprep.subr.bf16.mxu0 %v4775
        %6011 = vmatpush2.bf16.msra.mxu0 %v4774
        %6012 = vmatprep.mubr.bf16.mxu0 %v1237
        %6013 = vmatmul.mubr.bf16.gmra.mxu0 %v1223
        %v6014 = vpop.f32.mrf.mxu0
        %v6015 = vadd.f32 %v5974, %v6014
        %v6016 = vpop.f32.mrf.mxu0
        %v6017 = vadd.f32 %v5976, %v6016
        %v6018 = vpop.f32.mrf.mxu0
        %v6019 = vpop.f32.mrf.mxu0
        %6020 = vdwg.mxu0
        %6021 = vmatprep.subr.bf16.mxu0 %v4001
        %6022 = vmatpush1.bf16.msra.mxu0 %v4000
        %6023 = vmatprep.subr.bf16.mxu0 %v3993
        %6024 = vmatpush1.bf16.msra.mxu0 %v3992
        %6025 = vmatprep.subr.bf16.mxu0 %v3985
        %6026 = vmatpush1.bf16.msra.mxu0 %v3984
        %6027 = vmatprep.subr.bf16.mxu0 %v3977
        %6028 = vmatpush1.bf16.msra.mxu0 %v3976
        %6029 = vmatprep.subr.bf16.mxu0 %v3969
        %6030 = vmatpush1.bf16.msra.mxu0 %v3968
        %6031 = vmatprep.subr.bf16.mxu0 %v3961
        %6032 = vmatpush1.bf16.msra.mxu0 %v3960
        %6033 = vmatprep.subr.bf16.mxu0 %v3953
        %6034 = vmatpush1.bf16.msra.mxu0 %v3952
        %6035 = vmatprep.subr.bf16.mxu0 %v3945
        %6036 = vmatpush1.bf16.msra.mxu0 %v3944
        %6037 = vmatprep.subr.bf16.mxu0 %v4065
        %6038 = vmatpush2.bf16.msra.mxu0 %v4064
        %6039 = vmatprep.subr.bf16.mxu0 %v4057
        %6040 = vmatpush2.bf16.msra.mxu0 %v4056
        %6041 = vmatprep.subr.bf16.mxu0 %v4049
        %6042 = vmatpush2.bf16.msra.mxu0 %v4048
        %6043 = vmatprep.subr.bf16.mxu0 %v4041
        %6044 = vmatpush2.bf16.msra.mxu0 %v4040
        %6045 = vmatprep.subr.bf16.mxu0 %v4033
        %6046 = vmatpush2.bf16.msra.mxu0 %v4032
        %6047 = vmatprep.subr.bf16.mxu0 %v4025
        %6048 = vmatpush2.bf16.msra.mxu0 %v4024
        %6049 = vmatprep.subr.bf16.mxu0 %v4017
        %6050 = vmatpush2.bf16.msra.mxu0 %v4016
        %6051 = vmatprep.subr.bf16.mxu0 %v4009
        %6052 = vmatpush2.bf16.msra.mxu0 %v4008
        %6053 = vmatprep.mubr.bf16.mxu0 %v1181
        %6054 = vmatmul.mubr.bf16.gmra.mxu0 %v1167
        %v6055 = vpop.f32.mrf.mxu0
        %v6056 = vadd.f32 0.0, %v6055
        %v6057 = vpop.f32.mrf.mxu0
        %v6058 = vadd.f32 0.0, %v6057
        %v6059 = vpop.f32.mrf.mxu0
        %v6060 = vpop.f32.mrf.mxu0
        %6061 = vdwg.mxu0
        %6062 = vmatprep.subr.bf16.mxu0 %v4129
        %6063 = vmatpush1.bf16.msra.mxu0 %v4128
        %6064 = vmatprep.subr.bf16.mxu0 %v4121
        %6065 = vmatpush1.bf16.msra.mxu0 %v4120
        %6066 = vmatprep.subr.bf16.mxu0 %v4113
        %6067 = vmatpush1.bf16.msra.mxu0 %v4112
        %6068 = vmatprep.subr.bf16.mxu0 %v4105
        %6069 = vmatpush1.bf16.msra.mxu0 %v4104
        %6070 = vmatprep.subr.bf16.mxu0 %v4097
        %6071 = vmatpush1.bf16.msra.mxu0 %v4096
        %6072 = vmatprep.subr.bf16.mxu0 %v4089
        %6073 = vmatpush1.bf16.msra.mxu0 %v4088
        %6074 = vmatprep.subr.bf16.mxu0 %v4081
        %6075 = vmatpush1.bf16.msra.mxu0 %v4080
        %6076 = vmatprep.subr.bf16.mxu0 %v4073
        %6077 = vmatpush1.bf16.msra.mxu0 %v4072
        %6078 = vmatprep.subr.bf16.mxu0 %v4193
        %6079 = vmatpush2.bf16.msra.mxu0 %v4192
        %6080 = vmatprep.subr.bf16.mxu0 %v4185
        %6081 = vmatpush2.bf16.msra.mxu0 %v4184
        %6082 = vmatprep.subr.bf16.mxu0 %v4177
        %6083 = vmatpush2.bf16.msra.mxu0 %v4176
        %6084 = vmatprep.subr.bf16.mxu0 %v4169
        %6085 = vmatpush2.bf16.msra.mxu0 %v4168
        %6086 = vmatprep.subr.bf16.mxu0 %v4161
        %6087 = vmatpush2.bf16.msra.mxu0 %v4160
        %6088 = vmatprep.subr.bf16.mxu0 %v4153
        %6089 = vmatpush2.bf16.msra.mxu0 %v4152
        %6090 = vmatprep.subr.bf16.mxu0 %v4145
        %6091 = vmatpush2.bf16.msra.mxu0 %v4144
        %6092 = vmatprep.subr.bf16.mxu0 %v4137
        %6093 = vmatpush2.bf16.msra.mxu0 %v4136
        %6094 = vmatprep.mubr.bf16.mxu0 %v1191
        %6095 = vmatmul.mubr.bf16.gmra.mxu0 %v1189
        %v6096 = vpop.f32.mrf.mxu0
        %v6097 = vadd.f32 %v6056, %v6096
        %v6098 = vpop.f32.mrf.mxu0
        %v6099 = vadd.f32 %v6058, %v6098
        %v6100 = vpop.f32.mrf.mxu0
        %v6101 = vpop.f32.mrf.mxu0
        %6102 = vdwg.mxu0
        %6103 = vmatprep.subr.bf16.mxu0 %v4257
        %6104 = vmatpush1.bf16.msra.mxu0 %v4256
        %6105 = vmatprep.subr.bf16.mxu0 %v4249
        %6106 = vmatpush1.bf16.msra.mxu0 %v4248
        %6107 = vmatprep.subr.bf16.mxu0 %v4241
        %6108 = vmatpush1.bf16.msra.mxu0 %v4240
        %6109 = vmatprep.subr.bf16.mxu0 %v4233
        %6110 = vmatpush1.bf16.msra.mxu0 %v4232
        %6111 = vmatprep.subr.bf16.mxu0 %v4225
        %6112 = vmatpush1.bf16.msra.mxu0 %v4224
        %6113 = vmatprep.subr.bf16.mxu0 %v4217
        %6114 = vmatpush1.bf16.msra.mxu0 %v4216
        %6115 = vmatprep.subr.bf16.mxu0 %v4209
        %6116 = vmatpush1.bf16.msra.mxu0 %v4208
        %6117 = vmatprep.subr.bf16.mxu0 %v4201
        %6118 = vmatpush1.bf16.msra.mxu0 %v4200
        %6119 = vmatprep.subr.bf16.mxu0 %v4321
        %6120 = vmatpush2.bf16.msra.mxu0 %v4320
        %6121 = vmatprep.subr.bf16.mxu0 %v4313
        %6122 = vmatpush2.bf16.msra.mxu0 %v4312
        %6123 = vmatprep.subr.bf16.mxu0 %v4305
        %6124 = vmatpush2.bf16.msra.mxu0 %v4304
        %6125 = vmatprep.subr.bf16.mxu0 %v4297
        %6126 = vmatpush2.bf16.msra.mxu0 %v4296
        %6127 = vmatprep.subr.bf16.mxu0 %v4289
        %6128 = vmatpush2.bf16.msra.mxu0 %v4288
        %6129 = vmatprep.subr.bf16.mxu0 %v4281
        %6130 = vmatpush2.bf16.msra.mxu0 %v4280
        %6131 = vmatprep.subr.bf16.mxu0 %v4273
        %6132 = vmatpush2.bf16.msra.mxu0 %v4272
        %6133 = vmatprep.subr.bf16.mxu0 %v4265
        %6134 = vmatpush2.bf16.msra.mxu0 %v4264
        %6135 = vmatprep.mubr.bf16.mxu0 %v1188
        %6136 = vmatmul.mubr.bf16.gmra.mxu0 %v1174
        %v6137 = vpop.f32.mrf.mxu0
        %v6138 = vadd.f32 %v6097, %v6137
        %v6139 = vpop.f32.mrf.mxu0
        %v6140 = vadd.f32 %v6099, %v6139
        %v6141 = vpop.f32.mrf.mxu0
        %v6142 = vpop.f32.mrf.mxu0
        %6143 = vdwg.mxu0
        %6144 = vmatprep.subr.bf16.mxu0 %v4385
        %6145 = vmatpush1.bf16.msra.mxu0 %v4384
        %6146 = vmatprep.subr.bf16.mxu0 %v4377
        %6147 = vmatpush1.bf16.msra.mxu0 %v4376
        %6148 = vmatprep.subr.bf16.mxu0 %v4369
        %6149 = vmatpush1.bf16.msra.mxu0 %v4368
        %6150 = vmatprep.subr.bf16.mxu0 %v4361
        %6151 = vmatpush1.bf16.msra.mxu0 %v4360
        %6152 = vmatprep.subr.bf16.mxu0 %v4353
        %6153 = vmatpush1.bf16.msra.mxu0 %v4352
        %6154 = vmatprep.subr.bf16.mxu0 %v4345
        %6155 = vmatpush1.bf16.msra.mxu0 %v4344
        %6156 = vmatprep.subr.bf16.mxu0 %v4337
        %6157 = vmatpush1.bf16.msra.mxu0 %v4336
        %6158 = vmatprep.subr.bf16.mxu0 %v4329
        %6159 = vmatpush1.bf16.msra.mxu0 %v4328
        %6160 = vmatprep.subr.bf16.mxu0 %v4449
        %6161 = vmatpush2.bf16.msra.mxu0 %v4448
        %6162 = vmatprep.subr.bf16.mxu0 %v4441
        %6163 = vmatpush2.bf16.msra.mxu0 %v4440
        %6164 = vmatprep.subr.bf16.mxu0 %v4433
        %6165 = vmatpush2.bf16.msra.mxu0 %v4432
        %6166 = vmatprep.subr.bf16.mxu0 %v4425
        %6167 = vmatpush2.bf16.msra.mxu0 %v4424
        %6168 = vmatprep.subr.bf16.mxu0 %v4417
        %6169 = vmatpush2.bf16.msra.mxu0 %v4416
        %6170 = vmatprep.subr.bf16.mxu0 %v4409
        %6171 = vmatpush2.bf16.msra.mxu0 %v4408
        %6172 = vmatprep.subr.bf16.mxu0 %v4401
        %6173 = vmatpush2.bf16.msra.mxu0 %v4400
        %6174 = vmatprep.subr.bf16.mxu0 %v4393
        %6175 = vmatpush2.bf16.msra.mxu0 %v4392
        %6176 = vmatprep.mubr.bf16.mxu0 %v1192
        %6177 = vmatmul.mubr.bf16.gmra.mxu0 %v1190
        %v6178 = vpop.f32.mrf.mxu0
        %v6179 = vadd.f32 %v6138, %v6178
        %v6180 = vpop.f32.mrf.mxu0
        %v6181 = vadd.f32 %v6140, %v6180
        %v6182 = vpop.f32.mrf.mxu0
        %v6183 = vpop.f32.mrf.mxu0
        %6184 = vdwg.mxu0
        %6185 = vmatprep.subr.bf16.mxu0 %v4513
        %6186 = vmatpush1.bf16.msra.mxu0 %v4512
        %6187 = vmatprep.subr.bf16.mxu0 %v4505
        %6188 = vmatpush1.bf16.msra.mxu0 %v4504
        %6189 = vmatprep.subr.bf16.mxu0 %v4497
        %6190 = vmatpush1.bf16.msra.mxu0 %v4496
        %6191 = vmatprep.subr.bf16.mxu0 %v4489
        %6192 = vmatpush1.bf16.msra.mxu0 %v4488
        %6193 = vmatprep.subr.bf16.mxu0 %v4481
        %6194 = vmatpush1.bf16.msra.mxu0 %v4480
        %6195 = vmatprep.subr.bf16.mxu0 %v4473
        %6196 = vmatpush1.bf16.msra.mxu0 %v4472
        %6197 = vmatprep.subr.bf16.mxu0 %v4465
        %6198 = vmatpush1.bf16.msra.mxu0 %v4464
        %6199 = vmatprep.subr.bf16.mxu0 %v4457
        %6200 = vmatpush1.bf16.msra.mxu0 %v4456
        %6201 = vmatprep.subr.bf16.mxu0 %v4577
        %6202 = vmatpush2.bf16.msra.mxu0 %v4576
        %6203 = vmatprep.subr.bf16.mxu0 %v4569
        %6204 = vmatpush2.bf16.msra.mxu0 %v4568
        %6205 = vmatprep.subr.bf16.mxu0 %v4561
        %6206 = vmatpush2.bf16.msra.mxu0 %v4560
        %6207 = vmatprep.subr.bf16.mxu0 %v4553
        %6208 = vmatpush2.bf16.msra.mxu0 %v4552
        %6209 = vmatprep.subr.bf16.mxu0 %v4545
        %6210 = vmatpush2.bf16.msra.mxu0 %v4544
        %6211 = vmatprep.subr.bf16.mxu0 %v4537
        %6212 = vmatpush2.bf16.msra.mxu0 %v4536
        %6213 = vmatprep.subr.bf16.mxu0 %v4529
        %6214 = vmatpush2.bf16.msra.mxu0 %v4528
        %6215 = vmatprep.subr.bf16.mxu0 %v4521
        %6216 = vmatpush2.bf16.msra.mxu0 %v4520
        %6217 = vmatprep.mubr.bf16.mxu0 %v1230
        %6218 = vmatmul.mubr.bf16.gmra.mxu0 %v1216
        %v6219 = vpop.f32.mrf.mxu0
        %v6220 = vadd.f32 %v6179, %v6219
        %v6221 = vpop.f32.mrf.mxu0
        %v6222 = vadd.f32 %v6181, %v6221
        %v6223 = vpop.f32.mrf.mxu0
        %v6224 = vpop.f32.mrf.mxu0
        %6225 = vdwg.mxu0
        %6226 = vmatprep.subr.bf16.mxu0 %v4641
        %6227 = vmatpush1.bf16.msra.mxu0 %v4640
        %6228 = vmatprep.subr.bf16.mxu0 %v4633
        %6229 = vmatpush1.bf16.msra.mxu0 %v4632
        %6230 = vmatprep.subr.bf16.mxu0 %v4625
        %6231 = vmatpush1.bf16.msra.mxu0 %v4624
        %6232 = vmatprep.subr.bf16.mxu0 %v4617
        %6233 = vmatpush1.bf16.msra.mxu0 %v4616
        %6234 = vmatprep.subr.bf16.mxu0 %v4609
        %6235 = vmatpush1.bf16.msra.mxu0 %v4608
        %6236 = vmatprep.subr.bf16.mxu0 %v4601
        %6237 = vmatpush1.bf16.msra.mxu0 %v4600
        %6238 = vmatprep.subr.bf16.mxu0 %v4593
        %6239 = vmatpush1.bf16.msra.mxu0 %v4592
        %6240 = vmatprep.subr.bf16.mxu0 %v4585
        %6241 = vmatpush1.bf16.msra.mxu0 %v4584
        %6242 = vmatprep.subr.bf16.mxu0 %v4705
        %6243 = vmatpush2.bf16.msra.mxu0 %v4704
        %6244 = vmatprep.subr.bf16.mxu0 %v4697
        %6245 = vmatpush2.bf16.msra.mxu0 %v4696
        %6246 = vmatprep.subr.bf16.mxu0 %v4689
        %6247 = vmatpush2.bf16.msra.mxu0 %v4688
        %6248 = vmatprep.subr.bf16.mxu0 %v4681
        %6249 = vmatpush2.bf16.msra.mxu0 %v4680
        %6250 = vmatprep.subr.bf16.mxu0 %v4673
        %6251 = vmatpush2.bf16.msra.mxu0 %v4672
        %6252 = vmatprep.subr.bf16.mxu0 %v4665
        %6253 = vmatpush2.bf16.msra.mxu0 %v4664
        %6254 = vmatprep.subr.bf16.mxu0 %v4657
        %6255 = vmatpush2.bf16.msra.mxu0 %v4656
        %6256 = vmatprep.subr.bf16.mxu0 %v4649
        %6257 = vmatpush2.bf16.msra.mxu0 %v4648
        %6258 = vmatprep.mubr.bf16.mxu0 %v1239
        %6259 = vmatmul.mubr.bf16.gmra.mxu0 %v1238
        %v6260 = vpop.f32.mrf.mxu0
        %v6261 = vadd.f32 %v6220, %v6260
        %v6262 = vpop.f32.mrf.mxu0
        %v6263 = vadd.f32 %v6222, %v6262
        %v6264 = vpop.f32.mrf.mxu0
        %v6265 = vpop.f32.mrf.mxu0
        %6266 = vdwg.mxu0
        %6267 = vmatprep.subr.bf16.mxu0 %v4769
        %6268 = vmatpush1.bf16.msra.mxu0 %v4768
        %6269 = vmatprep.subr.bf16.mxu0 %v4761
        %6270 = vmatpush1.bf16.msra.mxu0 %v4760
        %6271 = vmatprep.subr.bf16.mxu0 %v4753
        %6272 = vmatpush1.bf16.msra.mxu0 %v4752
        %6273 = vmatprep.subr.bf16.mxu0 %v4745
        %6274 = vmatpush1.bf16.msra.mxu0 %v4744
        %6275 = vmatprep.subr.bf16.mxu0 %v4737
        %6276 = vmatpush1.bf16.msra.mxu0 %v4736
        %6277 = vmatprep.subr.bf16.mxu0 %v4729
        %6278 = vmatpush1.bf16.msra.mxu0 %v4728
        %6279 = vmatprep.subr.bf16.mxu0 %v4721
        %6280 = vmatpush1.bf16.msra.mxu0 %v4720
        %6281 = vmatprep.subr.bf16.mxu0 %v4713
        %6282 = vmatpush1.bf16.msra.mxu0 %v4712
        %6283 = vmatprep.subr.bf16.mxu0 %v4833
        %6284 = vmatpush2.bf16.msra.mxu0 %v4832
        %6285 = vmatprep.subr.bf16.mxu0 %v4825
        %6286 = vmatpush2.bf16.msra.mxu0 %v4824
        %6287 = vmatprep.subr.bf16.mxu0 %v4817
        %6288 = vmatpush2.bf16.msra.mxu0 %v4816
        %6289 = vmatprep.subr.bf16.mxu0 %v4809
        %6290 = vmatpush2.bf16.msra.mxu0 %v4808
        %6291 = vmatprep.subr.bf16.mxu0 %v4801
        %6292 = vmatpush2.bf16.msra.mxu0 %v4800
        %6293 = vmatprep.subr.bf16.mxu0 %v4793
        %6294 = vmatpush2.bf16.msra.mxu0 %v4792
        %6295 = vmatprep.subr.bf16.mxu0 %v4785
        %6296 = vmatpush2.bf16.msra.mxu0 %v4784
        %6297 = vmatprep.subr.bf16.mxu0 %v4777
        %6298 = vmatpush2.bf16.msra.mxu0 %v4776
        %6299 = vmatprep.mubr.bf16.mxu0 %v1237
        %6300 = vmatmul.mubr.bf16.gmra.mxu0 %v1223
        %v6301 = vpop.f32.mrf.mxu0
        %v6302 = vadd.f32 %v6261, %v6301
        %v6303 = vpop.f32.mrf.mxu0
        %v6304 = vadd.f32 %v6263, %v6303
        %v6305 = vpop.f32.mrf.mxu0
        %v6306 = vpop.f32.mrf.mxu0
        %6307 = vdwg.mxu0
        %6308 = vmatprep.subr.bf16.mxu0 %v4003
        %6309 = vmatpush1.bf16.msra.mxu0 %v4002
        %6310 = vmatprep.subr.bf16.mxu0 %v3995
        %6311 = vmatpush1.bf16.msra.mxu0 %v3994
        %6312 = vmatprep.subr.bf16.mxu0 %v3987
        %6313 = vmatpush1.bf16.msra.mxu0 %v3986
        %6314 = vmatprep.subr.bf16.mxu0 %v3979
        %6315 = vmatpush1.bf16.msra.mxu0 %v3978
        %6316 = vmatprep.subr.bf16.mxu0 %v3971
        %6317 = vmatpush1.bf16.msra.mxu0 %v3970
        %6318 = vmatprep.subr.bf16.mxu0 %v3963
        %6319 = vmatpush1.bf16.msra.mxu0 %v3962
        %6320 = vmatprep.subr.bf16.mxu0 %v3955
        %6321 = vmatpush1.bf16.msra.mxu0 %v3954
        %6322 = vmatprep.subr.bf16.mxu0 %v3947
        %6323 = vmatpush1.bf16.msra.mxu0 %v3946
        %6324 = vmatprep.subr.bf16.mxu0 %v4067
        %6325 = vmatpush2.bf16.msra.mxu0 %v4066
        %6326 = vmatprep.subr.bf16.mxu0 %v4059
        %6327 = vmatpush2.bf16.msra.mxu0 %v4058
        %6328 = vmatprep.subr.bf16.mxu0 %v4051
        %6329 = vmatpush2.bf16.msra.mxu0 %v4050
        %6330 = vmatprep.subr.bf16.mxu0 %v4043
        %6331 = vmatpush2.bf16.msra.mxu0 %v4042
        %6332 = vmatprep.subr.bf16.mxu0 %v4035
        %6333 = vmatpush2.bf16.msra.mxu0 %v4034
        %6334 = vmatprep.subr.bf16.mxu0 %v4027
        %6335 = vmatpush2.bf16.msra.mxu0 %v4026
        %6336 = vmatprep.subr.bf16.mxu0 %v4019
        %6337 = vmatpush2.bf16.msra.mxu0 %v4018
        %6338 = vmatprep.subr.bf16.mxu0 %v4011
        %6339 = vmatpush2.bf16.msra.mxu0 %v4010
        %6340 = vmatprep.mubr.bf16.mxu0 %v1181
        %6341 = vmatmul.mubr.bf16.gmra.mxu0 %v1167
        %v6342 = vpop.f32.mrf.mxu0
        %v6343 = vadd.f32 0.0, %v6342
        %v6344 = vpop.f32.mrf.mxu0
        %v6345 = vadd.f32 0.0, %v6344
        %v6346 = vpop.f32.mrf.mxu0
        %v6347 = vpop.f32.mrf.mxu0
        %6348 = vdwg.mxu0
        %6349 = vmatprep.subr.bf16.mxu0 %v4131
        %6350 = vmatpush1.bf16.msra.mxu0 %v4130
        %6351 = vmatprep.subr.bf16.mxu0 %v4123
        %6352 = vmatpush1.bf16.msra.mxu0 %v4122
        %6353 = vmatprep.subr.bf16.mxu0 %v4115
        %6354 = vmatpush1.bf16.msra.mxu0 %v4114
        %6355 = vmatprep.subr.bf16.mxu0 %v4107
        %6356 = vmatpush1.bf16.msra.mxu0 %v4106
        %6357 = vmatprep.subr.bf16.mxu0 %v4099
        %6358 = vmatpush1.bf16.msra.mxu0 %v4098
        %6359 = vmatprep.subr.bf16.mxu0 %v4091
        %6360 = vmatpush1.bf16.msra.mxu0 %v4090
        %6361 = vmatprep.subr.bf16.mxu0 %v4083
        %6362 = vmatpush1.bf16.msra.mxu0 %v4082
        %6363 = vmatprep.subr.bf16.mxu0 %v4075
        %6364 = vmatpush1.bf16.msra.mxu0 %v4074
        %6365 = vmatprep.subr.bf16.mxu0 %v4195
        %6366 = vmatpush2.bf16.msra.mxu0 %v4194
        %6367 = vmatprep.subr.bf16.mxu0 %v4187
        %6368 = vmatpush2.bf16.msra.mxu0 %v4186
        %6369 = vmatprep.subr.bf16.mxu0 %v4179
        %6370 = vmatpush2.bf16.msra.mxu0 %v4178
        %6371 = vmatprep.subr.bf16.mxu0 %v4171
        %6372 = vmatpush2.bf16.msra.mxu0 %v4170
        %6373 = vmatprep.subr.bf16.mxu0 %v4163
        %6374 = vmatpush2.bf16.msra.mxu0 %v4162
        %6375 = vmatprep.subr.bf16.mxu0 %v4155
        %6376 = vmatpush2.bf16.msra.mxu0 %v4154
        %6377 = vmatprep.subr.bf16.mxu0 %v4147
        %6378 = vmatpush2.bf16.msra.mxu0 %v4146
        %6379 = vmatprep.subr.bf16.mxu0 %v4139
        %6380 = vmatpush2.bf16.msra.mxu0 %v4138
        %6381 = vmatprep.mubr.bf16.mxu0 %v1191
        %6382 = vmatmul.mubr.bf16.gmra.mxu0 %v1189
        %v6383 = vpop.f32.mrf.mxu0
        %v6384 = vadd.f32 %v6343, %v6383
        %v6385 = vpop.f32.mrf.mxu0
        %v6386 = vadd.f32 %v6345, %v6385
        %v6387 = vpop.f32.mrf.mxu0
        %v6388 = vpop.f32.mrf.mxu0
        %6389 = vdwg.mxu0
        %6390 = vmatprep.subr.bf16.mxu0 %v4259
        %6391 = vmatpush1.bf16.msra.mxu0 %v4258
        %6392 = vmatprep.subr.bf16.mxu0 %v4251
        %6393 = vmatpush1.bf16.msra.mxu0 %v4250
        %6394 = vmatprep.subr.bf16.mxu0 %v4243
        %6395 = vmatpush1.bf16.msra.mxu0 %v4242
        %6396 = vmatprep.subr.bf16.mxu0 %v4235
        %6397 = vmatpush1.bf16.msra.mxu0 %v4234
        %6398 = vmatprep.subr.bf16.mxu0 %v4227
        %6399 = vmatpush1.bf16.msra.mxu0 %v4226
        %6400 = vmatprep.subr.bf16.mxu0 %v4219
        %6401 = vmatpush1.bf16.msra.mxu0 %v4218
        %6402 = vmatprep.subr.bf16.mxu0 %v4211
        %6403 = vmatpush1.bf16.msra.mxu0 %v4210
        %6404 = vmatprep.subr.bf16.mxu0 %v4203
        %6405 = vmatpush1.bf16.msra.mxu0 %v4202
        %6406 = vmatprep.subr.bf16.mxu0 %v4323
        %6407 = vmatpush2.bf16.msra.mxu0 %v4322
        %6408 = vmatprep.subr.bf16.mxu0 %v4315
        %6409 = vmatpush2.bf16.msra.mxu0 %v4314
        %6410 = vmatprep.subr.bf16.mxu0 %v4307
        %6411 = vmatpush2.bf16.msra.mxu0 %v4306
        %6412 = vmatprep.subr.bf16.mxu0 %v4299
        %6413 = vmatpush2.bf16.msra.mxu0 %v4298
        %6414 = vmatprep.subr.bf16.mxu0 %v4291
        %6415 = vmatpush2.bf16.msra.mxu0 %v4290
        %6416 = vmatprep.subr.bf16.mxu0 %v4283
        %6417 = vmatpush2.bf16.msra.mxu0 %v4282
        %6418 = vmatprep.subr.bf16.mxu0 %v4275
        %6419 = vmatpush2.bf16.msra.mxu0 %v4274
        %6420 = vmatprep.subr.bf16.mxu0 %v4267
        %6421 = vmatpush2.bf16.msra.mxu0 %v4266
        %6422 = vmatprep.mubr.bf16.mxu0 %v1188
        %6423 = vmatmul.mubr.bf16.gmra.mxu0 %v1174
        %v6424 = vpop.f32.mrf.mxu0
        %v6425 = vadd.f32 %v6384, %v6424
        %v6426 = vpop.f32.mrf.mxu0
        %v6427 = vadd.f32 %v6386, %v6426
        %v6428 = vpop.f32.mrf.mxu0
        %v6429 = vpop.f32.mrf.mxu0
        %6430 = vdwg.mxu0
        %6431 = vmatprep.subr.bf16.mxu0 %v4387
        %6432 = vmatpush1.bf16.msra.mxu0 %v4386
        %6433 = vmatprep.subr.bf16.mxu0 %v4379
        %6434 = vmatpush1.bf16.msra.mxu0 %v4378
        %6435 = vmatprep.subr.bf16.mxu0 %v4371
        %6436 = vmatpush1.bf16.msra.mxu0 %v4370
        %6437 = vmatprep.subr.bf16.mxu0 %v4363
        %6438 = vmatpush1.bf16.msra.mxu0 %v4362
        %6439 = vmatprep.subr.bf16.mxu0 %v4355
        %6440 = vmatpush1.bf16.msra.mxu0 %v4354
        %6441 = vmatprep.subr.bf16.mxu0 %v4347
        %6442 = vmatpush1.bf16.msra.mxu0 %v4346
        %6443 = vmatprep.subr.bf16.mxu0 %v4339
        %6444 = vmatpush1.bf16.msra.mxu0 %v4338
        %6445 = vmatprep.subr.bf16.mxu0 %v4331
        %6446 = vmatpush1.bf16.msra.mxu0 %v4330
        %6447 = vmatprep.subr.bf16.mxu0 %v4451
        %6448 = vmatpush2.bf16.msra.mxu0 %v4450
        %6449 = vmatprep.subr.bf16.mxu0 %v4443
        %6450 = vmatpush2.bf16.msra.mxu0 %v4442
        %6451 = vmatprep.subr.bf16.mxu0 %v4435
        %6452 = vmatpush2.bf16.msra.mxu0 %v4434
        %6453 = vmatprep.subr.bf16.mxu0 %v4427
        %6454 = vmatpush2.bf16.msra.mxu0 %v4426
        %6455 = vmatprep.subr.bf16.mxu0 %v4419
        %6456 = vmatpush2.bf16.msra.mxu0 %v4418
        %6457 = vmatprep.subr.bf16.mxu0 %v4411
        %6458 = vmatpush2.bf16.msra.mxu0 %v4410
        %6459 = vmatprep.subr.bf16.mxu0 %v4403
        %6460 = vmatpush2.bf16.msra.mxu0 %v4402
        %6461 = vmatprep.subr.bf16.mxu0 %v4395
        %6462 = vmatpush2.bf16.msra.mxu0 %v4394
        %6463 = vmatprep.mubr.bf16.mxu0 %v1192
        %6464 = vmatmul.mubr.bf16.gmra.mxu0 %v1190
        %v6465 = vpop.f32.mrf.mxu0
        %v6466 = vadd.f32 %v6425, %v6465
        %v6467 = vpop.f32.mrf.mxu0
        %v6468 = vadd.f32 %v6427, %v6467
        %v6469 = vpop.f32.mrf.mxu0
        %v6470 = vpop.f32.mrf.mxu0
        %6471 = vdwg.mxu0
        %6472 = vmatprep.subr.bf16.mxu0 %v4515
        %6473 = vmatpush1.bf16.msra.mxu0 %v4514
        %6474 = vmatprep.subr.bf16.mxu0 %v4507
        %6475 = vmatpush1.bf16.msra.mxu0 %v4506
        %6476 = vmatprep.subr.bf16.mxu0 %v4499
        %6477 = vmatpush1.bf16.msra.mxu0 %v4498
        %6478 = vmatprep.subr.bf16.mxu0 %v4491
        %6479 = vmatpush1.bf16.msra.mxu0 %v4490
        %6480 = vmatprep.subr.bf16.mxu0 %v4483
        %6481 = vmatpush1.bf16.msra.mxu0 %v4482
        %6482 = vmatprep.subr.bf16.mxu0 %v4475
        %6483 = vmatpush1.bf16.msra.mxu0 %v4474
        %6484 = vmatprep.subr.bf16.mxu0 %v4467
        %6485 = vmatpush1.bf16.msra.mxu0 %v4466
        %6486 = vmatprep.subr.bf16.mxu0 %v4459
        %6487 = vmatpush1.bf16.msra.mxu0 %v4458
        %6488 = vmatprep.subr.bf16.mxu0 %v4579
        %6489 = vmatpush2.bf16.msra.mxu0 %v4578
        %6490 = vmatprep.subr.bf16.mxu0 %v4571
        %6491 = vmatpush2.bf16.msra.mxu0 %v4570
        %6492 = vmatprep.subr.bf16.mxu0 %v4563
        %6493 = vmatpush2.bf16.msra.mxu0 %v4562
        %6494 = vmatprep.subr.bf16.mxu0 %v4555
        %6495 = vmatpush2.bf16.msra.mxu0 %v4554
        %6496 = vmatprep.subr.bf16.mxu0 %v4547
        %6497 = vmatpush2.bf16.msra.mxu0 %v4546
        %6498 = vmatprep.subr.bf16.mxu0 %v4539
        %6499 = vmatpush2.bf16.msra.mxu0 %v4538
        %6500 = vmatprep.subr.bf16.mxu0 %v4531
        %6501 = vmatpush2.bf16.msra.mxu0 %v4530
        %6502 = vmatprep.subr.bf16.mxu0 %v4523
        %6503 = vmatpush2.bf16.msra.mxu0 %v4522
        %6504 = vmatprep.mubr.bf16.mxu0 %v1230
        %6505 = vmatmul.mubr.bf16.gmra.mxu0 %v1216
        %v6506 = vpop.f32.mrf.mxu0
        %v6507 = vadd.f32 %v6466, %v6506
        %v6508 = vpop.f32.mrf.mxu0
        %v6509 = vadd.f32 %v6468, %v6508
        %v6510 = vpop.f32.mrf.mxu0
        %v6511 = vpop.f32.mrf.mxu0
        %6512 = vdwg.mxu0
        %6513 = vmatprep.subr.bf16.mxu0 %v4643
        %6514 = vmatpush1.bf16.msra.mxu0 %v4642
        %6515 = vmatprep.subr.bf16.mxu0 %v4635
        %6516 = vmatpush1.bf16.msra.mxu0 %v4634
        %6517 = vmatprep.subr.bf16.mxu0 %v4627
        %6518 = vmatpush1.bf16.msra.mxu0 %v4626
        %6519 = vmatprep.subr.bf16.mxu0 %v4619
        %6520 = vmatpush1.bf16.msra.mxu0 %v4618
        %6521 = vmatprep.subr.bf16.mxu0 %v4611
        %6522 = vmatpush1.bf16.msra.mxu0 %v4610
        %6523 = vmatprep.subr.bf16.mxu0 %v4603
        %6524 = vmatpush1.bf16.msra.mxu0 %v4602
        %6525 = vmatprep.subr.bf16.mxu0 %v4595
        %6526 = vmatpush1.bf16.msra.mxu0 %v4594
        %6527 = vmatprep.subr.bf16.mxu0 %v4587
        %6528 = vmatpush1.bf16.msra.mxu0 %v4586
        %6529 = vmatprep.subr.bf16.mxu0 %v4707
        %6530 = vmatpush2.bf16.msra.mxu0 %v4706
        %6531 = vmatprep.subr.bf16.mxu0 %v4699
        %6532 = vmatpush2.bf16.msra.mxu0 %v4698
        %6533 = vmatprep.subr.bf16.mxu0 %v4691
        %6534 = vmatpush2.bf16.msra.mxu0 %v4690
        %6535 = vmatprep.subr.bf16.mxu0 %v4683
        %6536 = vmatpush2.bf16.msra.mxu0 %v4682
        %6537 = vmatprep.subr.bf16.mxu0 %v4675
        %6538 = vmatpush2.bf16.msra.mxu0 %v4674
        %6539 = vmatprep.subr.bf16.mxu0 %v4667
        %6540 = vmatpush2.bf16.msra.mxu0 %v4666
        %6541 = vmatprep.subr.bf16.mxu0 %v4659
        %6542 = vmatpush2.bf16.msra.mxu0 %v4658
        %6543 = vmatprep.subr.bf16.mxu0 %v4651
        %6544 = vmatpush2.bf16.msra.mxu0 %v4650
        %6545 = vmatprep.mubr.bf16.mxu0 %v1239
        %6546 = vmatmul.mubr.bf16.gmra.mxu0 %v1238
        %v6547 = vpop.f32.mrf.mxu0
        %v6548 = vadd.f32 %v6507, %v6547
        %v6549 = vpop.f32.mrf.mxu0
        %v6550 = vadd.f32 %v6509, %v6549
        %v6551 = vpop.f32.mrf.mxu0
        %v6552 = vpop.f32.mrf.mxu0
        %6553 = vdwg.mxu0
        %6554 = vmatprep.subr.bf16.mxu0 %v4771
        %6555 = vmatpush1.bf16.msra.mxu0 %v4770
        %6556 = vmatprep.subr.bf16.mxu0 %v4763
        %6557 = vmatpush1.bf16.msra.mxu0 %v4762
        %6558 = vmatprep.subr.bf16.mxu0 %v4755
        %6559 = vmatpush1.bf16.msra.mxu0 %v4754
        %6560 = vmatprep.subr.bf16.mxu0 %v4747
        %6561 = vmatpush1.bf16.msra.mxu0 %v4746
        %6562 = vmatprep.subr.bf16.mxu0 %v4739
        %6563 = vmatpush1.bf16.msra.mxu0 %v4738
        %6564 = vmatprep.subr.bf16.mxu0 %v4731
        %6565 = vmatpush1.bf16.msra.mxu0 %v4730
        %6566 = vmatprep.subr.bf16.mxu0 %v4723
        %6567 = vmatpush1.bf16.msra.mxu0 %v4722
        %6568 = vmatprep.subr.bf16.mxu0 %v4715
        %6569 = vmatpush1.bf16.msra.mxu0 %v4714
        %6570 = vmatprep.subr.bf16.mxu0 %v4835
        %6571 = vmatpush2.bf16.msra.mxu0 %v4834
        %6572 = vmatprep.subr.bf16.mxu0 %v4827
        %6573 = vmatpush2.bf16.msra.mxu0 %v4826
        %6574 = vmatprep.subr.bf16.mxu0 %v4819
        %6575 = vmatpush2.bf16.msra.mxu0 %v4818
        %6576 = vmatprep.subr.bf16.mxu0 %v4811
        %6577 = vmatpush2.bf16.msra.mxu0 %v4810
        %6578 = vmatprep.subr.bf16.mxu0 %v4803
        %6579 = vmatpush2.bf16.msra.mxu0 %v4802
        %6580 = vmatprep.subr.bf16.mxu0 %v4795
        %6581 = vmatpush2.bf16.msra.mxu0 %v4794
        %6582 = vmatprep.subr.bf16.mxu0 %v4787
        %6583 = vmatpush2.bf16.msra.mxu0 %v4786
        %6584 = vmatprep.subr.bf16.mxu0 %v4779
        %6585 = vmatpush2.bf16.msra.mxu0 %v4778
        %6586 = vmatprep.mubr.bf16.mxu0 %v1237
        %6587 = vmatmul.mubr.bf16.gmra.mxu0 %v1223
        %v6588 = vpop.f32.mrf.mxu0
        %v6589 = vadd.f32 %v6548, %v6588
        %v6590 = vpop.f32.mrf.mxu0
        %v6591 = vadd.f32 %v6550, %v6590
        %v6592 = vpop.f32.mrf.mxu0
        %v6593 = vpop.f32.mrf.mxu0
        %6594 = vdwg.mxu0
        %6595 = vmatprep.subr.bf16.mxu0 %v4005
        %6596 = vmatpush1.bf16.msra.mxu0 %v4004
        %6597 = vmatprep.subr.bf16.mxu0 %v3997
        %6598 = vmatpush1.bf16.msra.mxu0 %v3996
        %6599 = vmatprep.subr.bf16.mxu0 %v3989
        %6600 = vmatpush1.bf16.msra.mxu0 %v3988
        %6601 = vmatprep.subr.bf16.mxu0 %v3981
        %6602 = vmatpush1.bf16.msra.mxu0 %v3980
        %6603 = vmatprep.subr.bf16.mxu0 %v3973
        %6604 = vmatpush1.bf16.msra.mxu0 %v3972
        %6605 = vmatprep.subr.bf16.mxu0 %v3965
        %6606 = vmatpush1.bf16.msra.mxu0 %v3964
        %6607 = vmatprep.subr.bf16.mxu0 %v3957
        %6608 = vmatpush1.bf16.msra.mxu0 %v3956
        %6609 = vmatprep.subr.bf16.mxu0 %v3949
        %6610 = vmatpush1.bf16.msra.mxu0 %v3948
        %6611 = vmatprep.subr.bf16.mxu0 %v4069
        %6612 = vmatpush2.bf16.msra.mxu0 %v4068
        %6613 = vmatprep.subr.bf16.mxu0 %v4061
        %6614 = vmatpush2.bf16.msra.mxu0 %v4060
        %6615 = vmatprep.subr.bf16.mxu0 %v4053
        %6616 = vmatpush2.bf16.msra.mxu0 %v4052
        %6617 = vmatprep.subr.bf16.mxu0 %v4045
        %6618 = vmatpush2.bf16.msra.mxu0 %v4044
        %6619 = vmatprep.subr.bf16.mxu0 %v4037
        %6620 = vmatpush2.bf16.msra.mxu0 %v4036
        %6621 = vmatprep.subr.bf16.mxu0 %v4029
        %6622 = vmatpush2.bf16.msra.mxu0 %v4028
        %6623 = vmatprep.subr.bf16.mxu0 %v4021
        %6624 = vmatpush2.bf16.msra.mxu0 %v4020
        %6625 = vmatprep.subr.bf16.mxu0 %v4013
        %6626 = vmatpush2.bf16.msra.mxu0 %v4012
        %6627 = vmatprep.mubr.bf16.mxu0 %v1181
        %6628 = vmatmul.mubr.bf16.gmra.mxu0 %v1167
        %v6629 = vpop.f32.mrf.mxu0
        %v6630 = vadd.f32 0.0, %v6629
        %v6631 = vpop.f32.mrf.mxu0
        %v6632 = vadd.f32 0.0, %v6631
        %v6633 = vpop.f32.mrf.mxu0
        %v6634 = vpop.f32.mrf.mxu0
        %6635 = vdwg.mxu0
        %6636 = vmatprep.subr.bf16.mxu0 %v4133
        %6637 = vmatpush1.bf16.msra.mxu0 %v4132
        %6638 = vmatprep.subr.bf16.mxu0 %v4125
        %6639 = vmatpush1.bf16.msra.mxu0 %v4124
        %6640 = vmatprep.subr.bf16.mxu0 %v4117
        %6641 = vmatpush1.bf16.msra.mxu0 %v4116
        %6642 = vmatprep.subr.bf16.mxu0 %v4109
        %6643 = vmatpush1.bf16.msra.mxu0 %v4108
        %6644 = vmatprep.subr.bf16.mxu0 %v4101
        %6645 = vmatpush1.bf16.msra.mxu0 %v4100
        %6646 = vmatprep.subr.bf16.mxu0 %v4093
        %6647 = vmatpush1.bf16.msra.mxu0 %v4092
        %6648 = vmatprep.subr.bf16.mxu0 %v4085
        %6649 = vmatpush1.bf16.msra.mxu0 %v4084
        %6650 = vmatprep.subr.bf16.mxu0 %v4077
        %6651 = vmatpush1.bf16.msra.mxu0 %v4076
        %6652 = vmatprep.subr.bf16.mxu0 %v4197
        %6653 = vmatpush2.bf16.msra.mxu0 %v4196
        %6654 = vmatprep.subr.bf16.mxu0 %v4189
        %6655 = vmatpush2.bf16.msra.mxu0 %v4188
        %6656 = vmatprep.subr.bf16.mxu0 %v4181
        %6657 = vmatpush2.bf16.msra.mxu0 %v4180
        %6658 = vmatprep.subr.bf16.mxu0 %v4173
        %6659 = vmatpush2.bf16.msra.mxu0 %v4172
        %6660 = vmatprep.subr.bf16.mxu0 %v4165
        %6661 = vmatpush2.bf16.msra.mxu0 %v4164
        %6662 = vmatprep.subr.bf16.mxu0 %v4157
        %6663 = vmatpush2.bf16.msra.mxu0 %v4156
        %6664 = vmatprep.subr.bf16.mxu0 %v4149
        %6665 = vmatpush2.bf16.msra.mxu0 %v4148
        %6666 = vmatprep.subr.bf16.mxu0 %v4141
        %6667 = vmatpush2.bf16.msra.mxu0 %v4140
        %6668 = vmatprep.mubr.bf16.mxu0 %v1191
        %6669 = vmatmul.mubr.bf16.gmra.mxu0 %v1189
        %v6670 = vpop.f32.mrf.mxu0
        %v6671 = vadd.f32 %v6630, %v6670
        %v6672 = vpop.f32.mrf.mxu0
        %v6673 = vadd.f32 %v6632, %v6672
        %v6674 = vpop.f32.mrf.mxu0
        %v6675 = vpop.f32.mrf.mxu0
        %6676 = vdwg.mxu0
        %6677 = vmatprep.subr.bf16.mxu0 %v4261
        %6678 = vmatpush1.bf16.msra.mxu0 %v4260
        %6679 = vmatprep.subr.bf16.mxu0 %v4253
        %6680 = vmatpush1.bf16.msra.mxu0 %v4252
        %6681 = vmatprep.subr.bf16.mxu0 %v4245
        %6682 = vmatpush1.bf16.msra.mxu0 %v4244
        %6683 = vmatprep.subr.bf16.mxu0 %v4237
        %6684 = vmatpush1.bf16.msra.mxu0 %v4236
        %6685 = vmatprep.subr.bf16.mxu0 %v4229
        %6686 = vmatpush1.bf16.msra.mxu0 %v4228
        %6687 = vmatprep.subr.bf16.mxu0 %v4221
        %6688 = vmatpush1.bf16.msra.mxu0 %v4220
        %6689 = vmatprep.subr.bf16.mxu0 %v4213
        %6690 = vmatpush1.bf16.msra.mxu0 %v4212
        %6691 = vmatprep.subr.bf16.mxu0 %v4205
        %6692 = vmatpush1.bf16.msra.mxu0 %v4204
        %6693 = vmatprep.subr.bf16.mxu0 %v4325
        %6694 = vmatpush2.bf16.msra.mxu0 %v4324
        %6695 = vmatprep.subr.bf16.mxu0 %v4317
        %6696 = vmatpush2.bf16.msra.mxu0 %v4316
        %6697 = vmatprep.subr.bf16.mxu0 %v4309
        %6698 = vmatpush2.bf16.msra.mxu0 %v4308
        %6699 = vmatprep.subr.bf16.mxu0 %v4301
        %6700 = vmatpush2.bf16.msra.mxu0 %v4300
        %6701 = vmatprep.subr.bf16.mxu0 %v4293
        %6702 = vmatpush2.bf16.msra.mxu0 %v4292
        %6703 = vmatprep.subr.bf16.mxu0 %v4285
        %6704 = vmatpush2.bf16.msra.mxu0 %v4284
        %6705 = vmatprep.subr.bf16.mxu0 %v4277
        %6706 = vmatpush2.bf16.msra.mxu0 %v4276
        %6707 = vmatprep.subr.bf16.mxu0 %v4269
        %6708 = vmatpush2.bf16.msra.mxu0 %v4268
        %6709 = vmatprep.mubr.bf16.mxu0 %v1188
        %6710 = vmatmul.mubr.bf16.gmra.mxu0 %v1174
        %v6711 = vpop.f32.mrf.mxu0
        %v6712 = vadd.f32 %v6671, %v6711
        %v6713 = vpop.f32.mrf.mxu0
        %v6714 = vadd.f32 %v6673, %v6713
        %v6715 = vpop.f32.mrf.mxu0
        %v6716 = vpop.f32.mrf.mxu0
        %6717 = vdwg.mxu0
        %6718 = vmatprep.subr.bf16.mxu0 %v4389
        %6719 = vmatpush1.bf16.msra.mxu0 %v4388
        %6720 = vmatprep.subr.bf16.mxu0 %v4381
        %6721 = vmatpush1.bf16.msra.mxu0 %v4380
        %6722 = vmatprep.subr.bf16.mxu0 %v4373
        %6723 = vmatpush1.bf16.msra.mxu0 %v4372
        %6724 = vmatprep.subr.bf16.mxu0 %v4365
        %6725 = vmatpush1.bf16.msra.mxu0 %v4364
        %6726 = vmatprep.subr.bf16.mxu0 %v4357
        %6727 = vmatpush1.bf16.msra.mxu0 %v4356
        %6728 = vmatprep.subr.bf16.mxu0 %v4349
        %6729 = vmatpush1.bf16.msra.mxu0 %v4348
        %6730 = vmatprep.subr.bf16.mxu0 %v4341
        %6731 = vmatpush1.bf16.msra.mxu0 %v4340
        %6732 = vmatprep.subr.bf16.mxu0 %v4333
        %6733 = vmatpush1.bf16.msra.mxu0 %v4332
        %6734 = vmatprep.subr.bf16.mxu0 %v4453
        %6735 = vmatpush2.bf16.msra.mxu0 %v4452
        %6736 = vmatprep.subr.bf16.mxu0 %v4445
        %6737 = vmatpush2.bf16.msra.mxu0 %v4444
        %6738 = vmatprep.subr.bf16.mxu0 %v4437
        %6739 = vmatpush2.bf16.msra.mxu0 %v4436
        %6740 = vmatprep.subr.bf16.mxu0 %v4429
        %6741 = vmatpush2.bf16.msra.mxu0 %v4428
        %6742 = vmatprep.subr.bf16.mxu0 %v4421
        %6743 = vmatpush2.bf16.msra.mxu0 %v4420
        %6744 = vmatprep.subr.bf16.mxu0 %v4413
        %6745 = vmatpush2.bf16.msra.mxu0 %v4412
        %6746 = vmatprep.subr.bf16.mxu0 %v4405
        %6747 = vmatpush2.bf16.msra.mxu0 %v4404
        %6748 = vmatprep.subr.bf16.mxu0 %v4397
        %6749 = vmatpush2.bf16.msra.mxu0 %v4396
        %6750 = vmatprep.mubr.bf16.mxu0 %v1192
        %6751 = vmatmul.mubr.bf16.gmra.mxu0 %v1190
        %v6752 = vpop.f32.mrf.mxu0
        %v6753 = vadd.f32 %v6712, %v6752
        %v6754 = vpop.f32.mrf.mxu0
        %v6755 = vadd.f32 %v6714, %v6754
        %v6756 = vpop.f32.mrf.mxu0
        %v6757 = vpop.f32.mrf.mxu0
        %6758 = vdwg.mxu0
        %6759 = vmatprep.subr.bf16.mxu0 %v4517
        %6760 = vmatpush1.bf16.msra.mxu0 %v4516
        %6761 = vmatprep.subr.bf16.mxu0 %v4509
        %6762 = vmatpush1.bf16.msra.mxu0 %v4508
        %6763 = vmatprep.subr.bf16.mxu0 %v4501
        %6764 = vmatpush1.bf16.msra.mxu0 %v4500
        %6765 = vmatprep.subr.bf16.mxu0 %v4493
        %6766 = vmatpush1.bf16.msra.mxu0 %v4492
        %6767 = vmatprep.subr.bf16.mxu0 %v4485
        %6768 = vmatpush1.bf16.msra.mxu0 %v4484
        %6769 = vmatprep.subr.bf16.mxu0 %v4477
        %6770 = vmatpush1.bf16.msra.mxu0 %v4476
        %6771 = vmatprep.subr.bf16.mxu0 %v4469
        %6772 = vmatpush1.bf16.msra.mxu0 %v4468
        %6773 = vmatprep.subr.bf16.mxu0 %v4461
        %6774 = vmatpush1.bf16.msra.mxu0 %v4460
        %6775 = vmatprep.subr.bf16.mxu0 %v4581
        %6776 = vmatpush2.bf16.msra.mxu0 %v4580
        %6777 = vmatprep.subr.bf16.mxu0 %v4573
        %6778 = vmatpush2.bf16.msra.mxu0 %v4572
        %6779 = vmatprep.subr.bf16.mxu0 %v4565
        %6780 = vmatpush2.bf16.msra.mxu0 %v4564
        %6781 = vmatprep.subr.bf16.mxu0 %v4557
        %6782 = vmatpush2.bf16.msra.mxu0 %v4556
        %6783 = vmatprep.subr.bf16.mxu0 %v4549
        %6784 = vmatpush2.bf16.msra.mxu0 %v4548
        %6785 = vmatprep.subr.bf16.mxu0 %v4541
        %6786 = vmatpush2.bf16.msra.mxu0 %v4540
        %6787 = vmatprep.subr.bf16.mxu0 %v4533
        %6788 = vmatpush2.bf16.msra.mxu0 %v4532
        %6789 = vmatprep.subr.bf16.mxu0 %v4525
        %6790 = vmatpush2.bf16.msra.mxu0 %v4524
        %6791 = vmatprep.mubr.bf16.mxu0 %v1230
        %6792 = vmatmul.mubr.bf16.gmra.mxu0 %v1216
        %v6793 = vpop.f32.mrf.mxu0
        %v6794 = vadd.f32 %v6753, %v6793
        %v6795 = vpop.f32.mrf.mxu0
        %v6796 = vadd.f32 %v6755, %v6795
        %v6797 = vpop.f32.mrf.mxu0
        %v6798 = vpop.f32.mrf.mxu0
        %6799 = vdwg.mxu0
        %6800 = vmatprep.subr.bf16.mxu0 %v4645
        %6801 = vmatpush1.bf16.msra.mxu0 %v4644
        %6802 = vmatprep.subr.bf16.mxu0 %v4637
        %6803 = vmatpush1.bf16.msra.mxu0 %v4636
        %6804 = vmatprep.subr.bf16.mxu0 %v4629
        %6805 = vmatpush1.bf16.msra.mxu0 %v4628
        %6806 = vmatprep.subr.bf16.mxu0 %v4621
        %6807 = vmatpush1.bf16.msra.mxu0 %v4620
        %6808 = vmatprep.subr.bf16.mxu0 %v4613
        %6809 = vmatpush1.bf16.msra.mxu0 %v4612
        %6810 = vmatprep.subr.bf16.mxu0 %v4605
        %6811 = vmatpush1.bf16.msra.mxu0 %v4604
        %6812 = vmatprep.subr.bf16.mxu0 %v4597
        %6813 = vmatpush1.bf16.msra.mxu0 %v4596
        %6814 = vmatprep.subr.bf16.mxu0 %v4589
        %6815 = vmatpush1.bf16.msra.mxu0 %v4588
        %6816 = vmatprep.subr.bf16.mxu0 %v4709
        %6817 = vmatpush2.bf16.msra.mxu0 %v4708
        %6818 = vmatprep.subr.bf16.mxu0 %v4701
        %6819 = vmatpush2.bf16.msra.mxu0 %v4700
        %6820 = vmatprep.subr.bf16.mxu0 %v4693
        %6821 = vmatpush2.bf16.msra.mxu0 %v4692
        %6822 = vmatprep.subr.bf16.mxu0 %v4685
        %6823 = vmatpush2.bf16.msra.mxu0 %v4684
        %6824 = vmatprep.subr.bf16.mxu0 %v4677
        %6825 = vmatpush2.bf16.msra.mxu0 %v4676
        %6826 = vmatprep.subr.bf16.mxu0 %v4669
        %6827 = vmatpush2.bf16.msra.mxu0 %v4668
        %6828 = vmatprep.subr.bf16.mxu0 %v4661
        %6829 = vmatpush2.bf16.msra.mxu0 %v4660
        %6830 = vmatprep.subr.bf16.mxu0 %v4653
        %6831 = vmatpush2.bf16.msra.mxu0 %v4652
        %6832 = vmatprep.mubr.bf16.mxu0 %v1239
        %6833 = vmatmul.mubr.bf16.gmra.mxu0 %v1238
        %v6834 = vpop.f32.mrf.mxu0
        %v6835 = vadd.f32 %v6794, %v6834
        %v6836 = vpop.f32.mrf.mxu0
        %v6837 = vadd.f32 %v6796, %v6836
        %v6838 = vpop.f32.mrf.mxu0
        %v6839 = vpop.f32.mrf.mxu0
        %6840 = vdwg.mxu0
        %6841 = vmatprep.subr.bf16.mxu0 %v4773
        %6842 = vmatpush1.bf16.msra.mxu0 %v4772
        %6843 = vmatprep.subr.bf16.mxu0 %v4765
        %6844 = vmatpush1.bf16.msra.mxu0 %v4764
        %6845 = vmatprep.subr.bf16.mxu0 %v4757
        %6846 = vmatpush1.bf16.msra.mxu0 %v4756
        %6847 = vmatprep.subr.bf16.mxu0 %v4749
        %6848 = vmatpush1.bf16.msra.mxu0 %v4748
        %6849 = vmatprep.subr.bf16.mxu0 %v4741
        %6850 = vmatpush1.bf16.msra.mxu0 %v4740
        %6851 = vmatprep.subr.bf16.mxu0 %v4733
        %6852 = vmatpush1.bf16.msra.mxu0 %v4732
        %6853 = vmatprep.subr.bf16.mxu0 %v4725
        %6854 = vmatpush1.bf16.msra.mxu0 %v4724
        %6855 = vmatprep.subr.bf16.mxu0 %v4717
        %6856 = vmatpush1.bf16.msra.mxu0 %v4716
        %6857 = vmatprep.subr.bf16.mxu0 %v4837
        %6858 = vmatpush2.bf16.msra.mxu0 %v4836
        %6859 = vmatprep.subr.bf16.mxu0 %v4829
        %6860 = vmatpush2.bf16.msra.mxu0 %v4828
        %6861 = vmatprep.subr.bf16.mxu0 %v4821
        %6862 = vmatpush2.bf16.msra.mxu0 %v4820
        %6863 = vmatprep.subr.bf16.mxu0 %v4813
        %6864 = vmatpush2.bf16.msra.mxu0 %v4812
        %6865 = vmatprep.subr.bf16.mxu0 %v4805
        %6866 = vmatpush2.bf16.msra.mxu0 %v4804
        %6867 = vmatprep.subr.bf16.mxu0 %v4797
        %6868 = vmatpush2.bf16.msra.mxu0 %v4796
        %6869 = vmatprep.subr.bf16.mxu0 %v4789
        %6870 = vmatpush2.bf16.msra.mxu0 %v4788
        %6871 = vmatprep.subr.bf16.mxu0 %v4781
        %6872 = vmatpush2.bf16.msra.mxu0 %v4780
        %6873 = vmatprep.mubr.bf16.mxu0 %v1237
        %6874 = vmatmul.mubr.bf16.gmra.mxu0 %v1223
        %v6875 = vpop.f32.mrf.mxu0
        %v6876 = vadd.f32 %v6835, %v6875
        %v6877 = vpop.f32.mrf.mxu0
        %v6878 = vadd.f32 %v6837, %v6877
        %v6879 = vpop.f32.mrf.mxu0
        %v6880 = vpop.f32.mrf.mxu0
        %6881 = vdwg.mxu0
        %v6890 = vcombine.low %v6015, %v6017
        %v6891 = vcombine.low %v6302, %v6304
        %v6893 = vunpack.c.l.s4 1983009808
        %v6894 = vunpack.c.0.s8 %v6893
        %v6895 = vlaneseq
        %v6896 = vshrl.u32 %v6895, 7
        %v6897 = vsub.s32 %v6894, %v6896
        %v6898 = vrot.slane %v6890, %v6897
        %v6900 = vunpack.c.l.s4 1983009808
        %v6901 = vunpack.c.0.s8 %v6900
        %v6902 = vlaneseq
        %v6903 = vshrl.u32 %v6902, 7
        %v6904 = vsub.s32 %v6901, %v6903
        %v6905 = vrot.slane %v6891, %v6904
        %v6906 = vcombine.low %v6898, %v6905
        %v6907 = vcombine.low %v6589, %v6591
        %v6908 = vcombine.low %v6876, %v6878
        %v6910 = vunpack.c.l.s4 1983009808
        %v6911 = vunpack.c.0.s8 %v6910
        %v6912 = vlaneseq
        %v6913 = vshrl.u32 %v6912, 7
        %v6914 = vsub.s32 %v6911, %v6913
        %v6915 = vrot.slane %v6907, %v6914
        %v6917 = vunpack.c.l.s4 1983009808
        %v6918 = vunpack.c.0.s8 %v6917
        %v6919 = vlaneseq
        %v6920 = vshrl.u32 %v6919, 7
        %v6921 = vsub.s32 %v6918, %v6920
        %v6922 = vrot.slane %v6908, %v6921
        %v6923 = vcombine.low %v6915, %v6922
        %v6926 = vadd.f32 %v242, %v6906
        %v6927 = vadd.f32 %v243, %v6923
        %6928 = vst [vmem:[#allocation2] sm:$0xff] %v6926
        %6929 = vst [vmem:[#allocation2 + $0x8] sm:$0xff] %v6927
        %p6930 = scmp.eq.s32.totalorder %s17, 1
        // Predicated region
        $region45: #{lenet_forward.5} parent=39 // pred_check
          %p6931 = pneg %p6930
        $region46: #{lenet_forward.5} parent=39 // pred_check_branch
          %6933 = sbr.rel (%p6931) target = $region48
        $region47: #{lenet_forward.5} parent=39 // pred_region
          %v6934 = vld [vmem:[#allocation2] sm:$0xff]
          %v6935 = vld [vmem:[#allocation2 + $0x8] sm:$0xff]
          %v6936 = vld [vmem:[%s2] sm:$0xff]
          %v6938 = vlaneseq
          %v6939 = vshrl.u32 %v6938, 7
          %v6940 = vsub.s32 0, %v6939
          %v6941 = vrot.slane %v6936, %v6940
          %v6942 = vlaneseq
          %v6943 = vshrl.u32 %v6942, 7
          %v6944 = vsub.s32 1, %v6943
          %v6945 = vrot.slane %v6936, %v6944
          %v6946 = vlaneseq
          %v6947 = vshrl.u32 %v6946, 7
          %v6948 = vsub.s32 2, %v6947
          %v6949 = vrot.slane %v6936, %v6948
          %v6950 = vlaneseq
          %v6951 = vshrl.u32 %v6950, 7
          %v6952 = vsub.s32 3, %v6951
          %v6953 = vrot.slane %v6936, %v6952
          %v6954 = vlaneseq
          %v6955 = vshrl.u32 %v6954, 7
          %v6956 = vsub.s32 4, %v6955
          %v6957 = vrot.slane %v6936, %v6956
          %v6958 = vlaneseq
          %v6959 = vshrl.u32 %v6958, 7
          %v6960 = vsub.s32 5, %v6959
          %v6961 = vrot.slane %v6936, %v6960
          %v6962 = vlaneseq
          %v6963 = vshrl.u32 %v6962, 7
          %v6964 = vsub.s32 6, %v6963
          %v6965 = vrot.slane %v6936, %v6964
          %v6966 = vlaneseq
          %v6967 = vshrl.u32 %v6966, 7
          %v6968 = vsub.s32 7, %v6967
          %v6969 = vrot.slane %v6936, %v6968
          %v6970 = vcombine.low %v6941, %v6945
          %v6971 = vcombine.low %v6949, %v6953
          %v6973 = vunpack.c.l.s4 1983009808
          %v6974 = vunpack.c.0.s8 %v6973
          %v6975 = vlaneseq
          %v6976 = vshrl.u32 %v6975, 7
          %v6977 = vsub.s32 %v6974, %v6976
          %v6978 = vrot.slane %v6970, %v6977
          %v6980 = vunpack.c.l.s4 1983009808
          %v6981 = vunpack.c.0.s8 %v6980
          %v6982 = vlaneseq
          %v6983 = vshrl.u32 %v6982, 7
          %v6984 = vsub.s32 %v6981, %v6983
          %v6985 = vrot.slane %v6971, %v6984
          %v6986 = vcombine.low %v6978, %v6985
          %v6987 = vcombine.low %v6957, %v6961
          %v6988 = vcombine.low %v6965, %v6969
          %v6990 = vunpack.c.l.s4 1983009808
          %v6991 = vunpack.c.0.s8 %v6990
          %v6992 = vlaneseq
          %v6993 = vshrl.u32 %v6992, 7
          %v6994 = vsub.s32 %v6991, %v6993
          %v6995 = vrot.slane %v6987, %v6994
          %v6997 = vunpack.c.l.s4 1983009808
          %v6998 = vunpack.c.0.s8 %v6997
          %v6999 = vlaneseq
          %v7000 = vshrl.u32 %v6999, 7
          %v7001 = vsub.s32 %v6998, %v7000
          %v7002 = vrot.slane %v6988, %v7001
          %v7003 = vcombine.low %v6995, %v7002
          %v7006 = vadd.f32 %v6934, %v6986
          %v7007 = vadd.f32 %v6935, %v7003
          %v7008 = vmax.f32 %v7006, 0.0
          %v7009 = vmax.f32 %v7007, 0.0
          %v7012 = vcombine.high %v7008, %v7008
          %v7014 = vunpack.c.l.s4 1983009808
          %v7015 = vunpack.c.0.s8 %v7014
          %v7016 = vlaneseq
          %v7017 = vshrl.u32 %v7016, 7
          %v7018 = vsub.s32 %v7015, %v7017
          %v7019 = vrot.slane %v7008, %v7018
          %v7021 = vunpack.c.l.s4 1983009808
          %v7022 = vunpack.c.0.s8 %v7021
          %v7023 = vlaneseq
          %v7024 = vshrl.u32 %v7023, 7
          %v7025 = vsub.s32 %v7022, %v7024
          %v7026 = vrot.slane %v7012, %v7025
          %v7027 = vcombine.high %v7019, %v7019
          %v7028 = vcombine.high %v7026, %v7026
          %v7029 = vcombine.high %v7009, %v7009
          %v7031 = vunpack.c.l.s4 1983009808
          %v7032 = vunpack.c.0.s8 %v7031
          %v7033 = vlaneseq
          %v7034 = vshrl.u32 %v7033, 7
          %v7035 = vsub.s32 %v7032, %v7034
          %v7036 = vrot.slane %v7009, %v7035
          %v7038 = vunpack.c.l.s4 1983009808
          %v7039 = vunpack.c.0.s8 %v7038
          %v7040 = vlaneseq
          %v7041 = vshrl.u32 %v7040, 7
          %v7042 = vsub.s32 %v7039, %v7041
          %v7043 = vrot.slane %v7029, %v7042
          %v7044 = vcombine.high %v7036, %v7036
          %v7045 = vcombine.high %v7043, %v7043
          %v7054 = vpack.c.bf16 %v7019, %v7019
          %v7055 = vpack.c.bf16 %v7027, %v7027
          %v7056 = vpack.c.bf16 %v7026, %v7026
          %v7057 = vpack.c.bf16 %v7028, %v7028
          %v7058 = vpack.c.bf16 %v7036, %v7036
          %v7059 = vpack.c.bf16 %v7044, %v7044
          %v7060 = vpack.c.bf16 %v7043, %v7043
          %v7061 = vpack.c.bf16 %v7045, %v7045
          %v7062 = vld [vmem:[%s3] sm:$0xf]
          %v7063 = vld [vmem:[%s3 + $0x4] sm:$0xf]
          %v7064 = vld [vmem:[%s3 + $0x8] sm:$0xf]
          %v7065 = vld [vmem:[%s3 + $0xc] sm:$0xf]
          %v7066 = vld [vmem:[%s3 + $0x10] sm:$0xf]
          %v7067 = vld [vmem:[%s3 + $0x14] sm:$0xf]
          %v7068 = vld [vmem:[%s3 + $0x18] sm:$0xf]
          %v7069 = vld [vmem:[%s3 + $0x1c] sm:$0xf]
          %v7070 = vld [vmem:[%s3 + $0x20] sm:$0xf]
          %v7071 = vld [vmem:[%s3 + $0x24] sm:$0xf]
          %v7072 = vld [vmem:[%s3 + $0x28] sm:$0xf]
          %v7073 = vld [vmem:[%s3 + $0x2c] sm:$0xf]
          %v7074 = vld [vmem:[%s3 + $0x30] sm:$0xf]
          %v7075 = vld [vmem:[%s3 + $0x34] sm:$0xf]
          %v7076 = vld [vmem:[%s3 + $0x38] sm:$0xf]
          %v7077 = vld [vmem:[%s3 + $0x3c] sm:$0xf]
          %v7078 = vld [vmem:[%s3 + $0x40] sm:$0xf]
          %v7079 = vld [vmem:[%s3 + $0x44] sm:$0xf]
          %v7080 = vld [vmem:[%s3 + $0x48] sm:$0xf]
          %v7081 = vld [vmem:[%s3 + $0x4c] sm:$0xf]
          %v7082 = vld [vmem:[%s3 + $0x50] sm:$0xf]
          %v7083 = vld [vmem:[%s3 + $0x54] sm:$0xf]
          %v7084 = vld [vmem:[%s3 + $0x58] sm:$0xf]
          %v7085 = vld [vmem:[%s3 + $0x5c] sm:$0xf]
          %v7086 = vld [vmem:[%s3 + $0x60] sm:$0xf]
          %v7087 = vld [vmem:[%s3 + $0x64] sm:$0xf]
          %v7088 = vld [vmem:[%s3 + $0x68] sm:$0xf]
          %v7089 = vld [vmem:[%s3 + $0x6c] sm:$0xf]
          %v7090 = vld [vmem:[%s3 + $0x70] sm:$0xf]
          %v7091 = vld [vmem:[%s3 + $0x74] sm:$0xf]
          %v7092 = vld [vmem:[%s3 + $0x78] sm:$0xf]
          %v7093 = vld [vmem:[%s3 + $0x7c] sm:$0xf]
          %v7094 = vld [vmem:[%s3 + $0x80] sm:$0xf]
          %v7095 = vld [vmem:[%s3 + $0x84] sm:$0xf]
          %v7096 = vld [vmem:[%s3 + $0x88] sm:$0xf]
          %v7097 = vld [vmem:[%s3 + $0x8c] sm:$0xf]
          %v7098 = vld [vmem:[%s3 + $0x90] sm:$0xf]
          %v7099 = vld [vmem:[%s3 + $0x94] sm:$0xf]
          %v7100 = vld [vmem:[%s3 + $0x98] sm:$0xf]
          %v7101 = vld [vmem:[%s3 + $0x9c] sm:$0xf]
          %v7102 = vld [vmem:[%s3 + $0xa0] sm:$0xf]
          %v7103 = vld [vmem:[%s3 + $0xa4] sm:$0xf]
          %v7104 = vld [vmem:[%s3 + $0xa8] sm:$0xf]
          %v7105 = vld [vmem:[%s3 + $0xac] sm:$0xf]
          %v7106 = vld [vmem:[%s3 + $0xb0] sm:$0xf]
          %v7107 = vld [vmem:[%s3 + $0xb4] sm:$0xf]
          %v7108 = vld [vmem:[%s3 + $0xb8] sm:$0xf]
          %v7109 = vld [vmem:[%s3 + $0xbc] sm:$0xf]
          %v7110 = vld [vmem:[%s3 + $0xc0] sm:$0xf]
          %v7111 = vld [vmem:[%s3 + $0xc4] sm:$0xf]
          %v7112 = vld [vmem:[%s3 + $0xc8] sm:$0xf]
          %v7113 = vld [vmem:[%s3 + $0xcc] sm:$0xf]
          %v7114 = vld [vmem:[%s3 + $0xd0] sm:$0xf]
          %v7115 = vld [vmem:[%s3 + $0xd4] sm:$0xf]
          %v7116 = vld [vmem:[%s3 + $0xd8] sm:$0xf]
          %v7117 = vld [vmem:[%s3 + $0xdc] sm:$0xf]
          %v7118 = vld [vmem:[%s3 + $0xe0] sm:$0xf]
          %v7119 = vld [vmem:[%s3 + $0xe4] sm:$0xf]
          %v7120 = vld [vmem:[%s3 + $0xe8] sm:$0xf]
          %v7121 = vld [vmem:[%s3 + $0xec] sm:$0xf]
          %v7122 = vld [vmem:[%s3 + $0xf0] sm:$0xf]
          %v7123 = vld [vmem:[%s3 + $0xf4] sm:$0xf]
          %v7124 = vld [vmem:[%s3 + $0xf8] sm:$0xf]
          %v7125 = vld [vmem:[%s3 + $0xfc] sm:$0xf]
          %v7126 = vld [vmem:[%s3 + $0x100] sm:$0xf]
          %v7127 = vld [vmem:[%s3 + $0x104] sm:$0xf]
          %v7128 = vld [vmem:[%s3 + $0x108] sm:$0xf]
          %v7129 = vld [vmem:[%s3 + $0x10c] sm:$0xf]
          %v7130 = vld [vmem:[%s3 + $0x110] sm:$0xf]
          %v7131 = vld [vmem:[%s3 + $0x114] sm:$0xf]
          %v7132 = vld [vmem:[%s3 + $0x118] sm:$0xf]
          %v7133 = vld [vmem:[%s3 + $0x11c] sm:$0xf]
          %v7134 = vld [vmem:[%s3 + $0x120] sm:$0xf]
          %v7135 = vld [vmem:[%s3 + $0x124] sm:$0xf]
          %v7136 = vld [vmem:[%s3 + $0x128] sm:$0xf]
          %v7137 = vld [vmem:[%s3 + $0x12c] sm:$0xf]
          %v7138 = vld [vmem:[%s3 + $0x130] sm:$0xf]
          %v7139 = vld [vmem:[%s3 + $0x134] sm:$0xf]
          %v7140 = vld [vmem:[%s3 + $0x138] sm:$0xf]
          %v7141 = vld [vmem:[%s3 + $0x13c] sm:$0xf]
          %v7142 = vld [vmem:[%s3 + $0x140] sm:$0xf]
          %v7143 = vld [vmem:[%s3 + $0x144] sm:$0xf]
          %v7144 = vld [vmem:[%s3 + $0x148] sm:$0xf]
          %v7145 = vld [vmem:[%s3 + $0x14c] sm:$0xf]
          %v7146 = vld [vmem:[%s3 + $0x150] sm:$0xf]
          %v7147 = vld [vmem:[%s3 + $0x154] sm:$0xf]
          %v7148 = vld [vmem:[%s3 + $0x158] sm:$0xf]
          %v7149 = vld [vmem:[%s3 + $0x15c] sm:$0xf]
          %v7150 = vld [vmem:[%s3 + $0x160] sm:$0xf]
          %v7151 = vld [vmem:[%s3 + $0x164] sm:$0xf]
          %v7152 = vld [vmem:[%s3 + $0x168] sm:$0xf]
          %v7153 = vld [vmem:[%s3 + $0x16c] sm:$0xf]
          %v7154 = vld [vmem:[%s3 + $0x170] sm:$0xf]
          %v7155 = vld [vmem:[%s3 + $0x174] sm:$0xf]
          %v7156 = vld [vmem:[%s3 + $0x178] sm:$0xf]
          %v7157 = vld [vmem:[%s3 + $0x17c] sm:$0xf]
          %v7158 = vld [vmem:[%s3 + $0x180] sm:$0xf]
          %v7159 = vld [vmem:[%s3 + $0x184] sm:$0xf]
          %v7160 = vld [vmem:[%s3 + $0x188] sm:$0xf]
          %v7161 = vld [vmem:[%s3 + $0x18c] sm:$0xf]
          %v7162 = vld [vmem:[%s3 + $0x190] sm:$0xf]
          %v7163 = vld [vmem:[%s3 + $0x194] sm:$0xf]
          %v7164 = vld [vmem:[%s3 + $0x198] sm:$0xf]
          %v7165 = vld [vmem:[%s3 + $0x19c] sm:$0xf]
          %v7166 = vld [vmem:[%s3 + $0x1a0] sm:$0xf]
          %v7167 = vld [vmem:[%s3 + $0x1a4] sm:$0xf]
          %v7168 = vld [vmem:[%s3 + $0x1a8] sm:$0xf]
          %v7169 = vld [vmem:[%s3 + $0x1ac] sm:$0xf]
          %v7170 = vld [vmem:[%s3 + $0x1b0] sm:$0xf]
          %v7171 = vld [vmem:[%s3 + $0x1b4] sm:$0xf]
          %v7172 = vld [vmem:[%s3 + $0x1b8] sm:$0xf]
          %v7173 = vld [vmem:[%s3 + $0x1bc] sm:$0xf]
          %v7174 = vld [vmem:[%s3 + $0x1c0] sm:$0xf]
          %v7175 = vld [vmem:[%s3 + $0x1c4] sm:$0xf]
          %v7176 = vld [vmem:[%s3 + $0x1c8] sm:$0xf]
          %v7177 = vld [vmem:[%s3 + $0x1cc] sm:$0xf]
          %v7178 = vld [vmem:[%s3 + $0x1d0] sm:$0xf]
          %v7179 = vld [vmem:[%s3 + $0x1d4] sm:$0xf]
          %v7180 = vld [vmem:[%s3 + $0x1d8] sm:$0xf]
          %v7181 = vld [vmem:[%s3 + $0x1dc] sm:$0xf]
          %v7182 = vld [vmem:[%s3 + $0x1e0] sm:$0xf]
          %v7183 = vld [vmem:[%s3 + $0x1e4] sm:$0xf]
          %v7184 = vld [vmem:[%s3 + $0x1e8] sm:$0xf]
          %v7185 = vld [vmem:[%s3 + $0x1ec] sm:$0xf]
          %v7186 = vld [vmem:[%s3 + $0x1f0] sm:$0xf]
          %v7187 = vld [vmem:[%s3 + $0x1f4] sm:$0xf]
          %v7188 = vld [vmem:[%s3 + $0x1f8] sm:$0xf]
          %v7189 = vld [vmem:[%s3 + $0x1fc] sm:$0xf]
          %v7190 = vld [vmem:[%s4] sm:$0x1]
          %v7192 = vlaneseq
          %v7193 = vshrl.u32 %v7192, 7
          %v7194 = vsub.s32 0, %v7193
          %v7195 = vrot.slane %v7190, %v7194
          %v7325 = vunpack.c.l.b16 %v7062
          %v7326 = vunpack.c.l.b16 %v7063
          %v7327 = vunpack.c.l.b16 %v7064
          %v7328 = vunpack.c.l.b16 %v7065
          %v7329 = vunpack.c.l.b16 %v7066
          %v7330 = vunpack.c.l.b16 %v7067
          %v7331 = vunpack.c.l.b16 %v7068
          %v7332 = vunpack.c.l.b16 %v7069
          %v7333 = vunpack.c.l.b16 %v7070
          %v7334 = vunpack.c.l.b16 %v7071
          %v7335 = vunpack.c.l.b16 %v7072
          %v7336 = vunpack.c.l.b16 %v7073
          %v7337 = vunpack.c.l.b16 %v7074
          %v7338 = vunpack.c.l.b16 %v7075
          %v7339 = vunpack.c.l.b16 %v7076
          %v7340 = vunpack.c.l.b16 %v7077
          %v7341 = vunpack.c.l.b16 %v7078
          %v7342 = vunpack.c.l.b16 %v7079
          %v7343 = vunpack.c.l.b16 %v7080
          %v7344 = vunpack.c.l.b16 %v7081
          %v7345 = vunpack.c.l.b16 %v7082
          %v7346 = vunpack.c.l.b16 %v7083
          %v7347 = vunpack.c.l.b16 %v7084
          %v7348 = vunpack.c.l.b16 %v7085
          %v7349 = vunpack.c.l.b16 %v7086
          %v7350 = vunpack.c.l.b16 %v7087
          %v7351 = vunpack.c.l.b16 %v7088
          %v7352 = vunpack.c.l.b16 %v7089
          %v7353 = vunpack.c.l.b16 %v7090
          %v7354 = vunpack.c.l.b16 %v7091
          %v7355 = vunpack.c.l.b16 %v7092
          %v7356 = vunpack.c.l.b16 %v7093
          %v7357 = vunpack.c.l.b16 %v7094
          %v7358 = vunpack.c.l.b16 %v7095
          %v7359 = vunpack.c.l.b16 %v7096
          %v7360 = vunpack.c.l.b16 %v7097
          %v7361 = vunpack.c.l.b16 %v7098
          %v7362 = vunpack.c.l.b16 %v7099
          %v7363 = vunpack.c.l.b16 %v7100
          %v7364 = vunpack.c.l.b16 %v7101
          %v7365 = vunpack.c.l.b16 %v7102
          %v7366 = vunpack.c.l.b16 %v7103
          %v7367 = vunpack.c.l.b16 %v7104
          %v7368 = vunpack.c.l.b16 %v7105
          %v7369 = vunpack.c.l.b16 %v7106
          %v7370 = vunpack.c.l.b16 %v7107
          %v7371 = vunpack.c.l.b16 %v7108
          %v7372 = vunpack.c.l.b16 %v7109
          %v7373 = vunpack.c.l.b16 %v7110
          %v7374 = vunpack.c.l.b16 %v7111
          %v7375 = vunpack.c.l.b16 %v7112
          %v7376 = vunpack.c.l.b16 %v7113
          %v7377 = vunpack.c.l.b16 %v7114
          %v7378 = vunpack.c.l.b16 %v7115
          %v7379 = vunpack.c.l.b16 %v7116
          %v7380 = vunpack.c.l.b16 %v7117
          %v7381 = vunpack.c.l.b16 %v7118
          %v7382 = vunpack.c.l.b16 %v7119
          %v7383 = vunpack.c.l.b16 %v7120
          %v7384 = vunpack.c.l.b16 %v7121
          %v7385 = vunpack.c.l.b16 %v7122
          %v7386 = vunpack.c.l.b16 %v7123
          %v7387 = vunpack.c.l.b16 %v7124
          %v7388 = vunpack.c.l.b16 %v7125
          %v7389 = vunpack.c.l.b16 %v7126
          %v7390 = vunpack.c.l.b16 %v7127
          %v7391 = vunpack.c.l.b16 %v7128
          %v7392 = vunpack.c.l.b16 %v7129
          %v7393 = vunpack.c.l.b16 %v7130
          %v7394 = vunpack.c.l.b16 %v7131
          %v7395 = vunpack.c.l.b16 %v7132
          %v7396 = vunpack.c.l.b16 %v7133
          %v7397 = vunpack.c.l.b16 %v7134
          %v7398 = vunpack.c.l.b16 %v7135
          %v7399 = vunpack.c.l.b16 %v7136
          %v7400 = vunpack.c.l.b16 %v7137
          %v7401 = vunpack.c.l.b16 %v7138
          %v7402 = vunpack.c.l.b16 %v7139
          %v7403 = vunpack.c.l.b16 %v7140
          %v7404 = vunpack.c.l.b16 %v7141
          %v7405 = vunpack.c.l.b16 %v7142
          %v7406 = vunpack.c.l.b16 %v7143
          %v7407 = vunpack.c.l.b16 %v7144
          %v7408 = vunpack.c.l.b16 %v7145
          %v7409 = vunpack.c.l.b16 %v7146
          %v7410 = vunpack.c.l.b16 %v7147
          %v7411 = vunpack.c.l.b16 %v7148
          %v7412 = vunpack.c.l.b16 %v7149
          %v7413 = vunpack.c.l.b16 %v7150
          %v7414 = vunpack.c.l.b16 %v7151
          %v7415 = vunpack.c.l.b16 %v7152
          %v7416 = vunpack.c.l.b16 %v7153
          %v7417 = vunpack.c.l.b16 %v7154
          %v7418 = vunpack.c.l.b16 %v7155
          %v7419 = vunpack.c.l.b16 %v7156
          %v7420 = vunpack.c.l.b16 %v7157
          %v7421 = vunpack.c.l.b16 %v7158
          %v7422 = vunpack.c.l.b16 %v7159
          %v7423 = vunpack.c.l.b16 %v7160
          %v7424 = vunpack.c.l.b16 %v7161
          %v7425 = vunpack.c.l.b16 %v7162
          %v7426 = vunpack.c.l.b16 %v7163
          %v7427 = vunpack.c.l.b16 %v7164
          %v7428 = vunpack.c.l.b16 %v7165
          %v7429 = vunpack.c.l.b16 %v7166
          %v7430 = vunpack.c.l.b16 %v7167
          %v7431 = vunpack.c.l.b16 %v7168
          %v7432 = vunpack.c.l.b16 %v7169
          %v7433 = vunpack.c.l.b16 %v7170
          %v7434 = vunpack.c.l.b16 %v7171
          %v7435 = vunpack.c.l.b16 %v7172
          %v7436 = vunpack.c.l.b16 %v7173
          %v7437 = vunpack.c.l.b16 %v7174
          %v7438 = vunpack.c.l.b16 %v7175
          %v7439 = vunpack.c.l.b16 %v7176
          %v7440 = vunpack.c.l.b16 %v7177
          %v7441 = vunpack.c.l.b16 %v7178
          %v7442 = vunpack.c.l.b16 %v7179
          %v7443 = vunpack.c.l.b16 %v7180
          %v7444 = vunpack.c.l.b16 %v7181
          %v7445 = vunpack.c.l.b16 %v7182
          %v7446 = vunpack.c.l.b16 %v7183
          %v7447 = vunpack.c.l.b16 %v7184
          %v7448 = vunpack.c.l.b16 %v7185
          %v7449 = vunpack.c.l.b16 %v7186
          %v7450 = vunpack.c.l.b16 %v7187
          %v7451 = vunpack.c.l.b16 %v7188
          %v7452 = vunpack.c.l.b16 %v7189
          %v7453 = vpack.c.b16 %v7326, %v7325
          %v7454 = vpack.c.b16 %v7328, %v7327
          %v7455 = vpack.c.b16 %v7330, %v7329
          %v7456 = vpack.c.b16 %v7332, %v7331
          %v7457 = vpack.c.b16 %v7334, %v7333
          %v7458 = vpack.c.b16 %v7336, %v7335
          %v7459 = vpack.c.b16 %v7338, %v7337
          %v7460 = vpack.c.b16 %v7340, %v7339
          %v7461 = vpack.c.b16 %v7342, %v7341
          %v7462 = vpack.c.b16 %v7344, %v7343
          %v7463 = vpack.c.b16 %v7346, %v7345
          %v7464 = vpack.c.b16 %v7348, %v7347
          %v7465 = vpack.c.b16 %v7350, %v7349
          %v7466 = vpack.c.b16 %v7352, %v7351
          %v7467 = vpack.c.b16 %v7354, %v7353
          %v7468 = vpack.c.b16 %v7356, %v7355
          %v7469 = vpack.c.b16 %v7358, %v7357
          %v7470 = vpack.c.b16 %v7360, %v7359
          %v7471 = vpack.c.b16 %v7362, %v7361
          %v7472 = vpack.c.b16 %v7364, %v7363
          %v7473 = vpack.c.b16 %v7366, %v7365
          %v7474 = vpack.c.b16 %v7368, %v7367
          %v7475 = vpack.c.b16 %v7370, %v7369
          %v7476 = vpack.c.b16 %v7372, %v7371
          %v7477 = vpack.c.b16 %v7374, %v7373
          %v7478 = vpack.c.b16 %v7376, %v7375
          %v7479 = vpack.c.b16 %v7378, %v7377
          %v7480 = vpack.c.b16 %v7380, %v7379
          %v7481 = vpack.c.b16 %v7382, %v7381
          %v7482 = vpack.c.b16 %v7384, %v7383
          %v7483 = vpack.c.b16 %v7386, %v7385
          %v7484 = vpack.c.b16 %v7388, %v7387
          %v7485 = vpack.c.b16 %v7390, %v7389
          %v7486 = vpack.c.b16 %v7392, %v7391
          %v7487 = vpack.c.b16 %v7394, %v7393
          %v7488 = vpack.c.b16 %v7396, %v7395
          %v7489 = vpack.c.b16 %v7398, %v7397
          %v7490 = vpack.c.b16 %v7400, %v7399
          %v7491 = vpack.c.b16 %v7402, %v7401
          %v7492 = vpack.c.b16 %v7404, %v7403
          %v7493 = vpack.c.b16 %v7406, %v7405
          %v7494 = vpack.c.b16 %v7408, %v7407
          %v7495 = vpack.c.b16 %v7410, %v7409
          %v7496 = vpack.c.b16 %v7412, %v7411
          %v7497 = vpack.c.b16 %v7414, %v7413
          %v7498 = vpack.c.b16 %v7416, %v7415
          %v7499 = vpack.c.b16 %v7418, %v7417
          %v7500 = vpack.c.b16 %v7420, %v7419
          %v7501 = vpack.c.b16 %v7422, %v7421
          %v7502 = vpack.c.b16 %v7424, %v7423
          %v7503 = vpack.c.b16 %v7426, %v7425
          %v7504 = vpack.c.b16 %v7428, %v7427
          %v7505 = vpack.c.b16 %v7430, %v7429
          %v7506 = vpack.c.b16 %v7432, %v7431
          %v7507 = vpack.c.b16 %v7434, %v7433
          %v7508 = vpack.c.b16 %v7436, %v7435
          %v7509 = vpack.c.b16 %v7438, %v7437
          %v7510 = vpack.c.b16 %v7440, %v7439
          %v7511 = vpack.c.b16 %v7442, %v7441
          %v7512 = vpack.c.b16 %v7444, %v7443
          %v7513 = vpack.c.b16 %v7446, %v7445
          %v7514 = vpack.c.b16 %v7448, %v7447
          %v7515 = vpack.c.b16 %v7450, %v7449
          %v7516 = vpack.c.b16 %v7452, %v7451
          %7581 = vmatprep.subr.bf16.mxu0 0
          %7582 = vmatpush1.bf16.msra.mxu0 %v7460
          %7583 = vmatprep.subr.bf16.mxu0 0
          %7584 = vmatpush1.bf16.msra.mxu0 %v7459
          %7585 = vmatprep.subr.bf16.mxu0 0
          %7586 = vmatpush1.bf16.msra.mxu0 %v7458
          %7587 = vmatprep.subr.bf16.mxu0 0
          %7588 = vmatpush1.bf16.msra.mxu0 %v7457
          %7589 = vmatprep.subr.bf16.mxu0 0
          %7590 = vmatpush1.bf16.msra.mxu0 %v7456
          %7591 = vmatprep.subr.bf16.mxu0 0
          %7592 = vmatpush1.bf16.msra.mxu0 %v7455
          %7593 = vmatprep.subr.bf16.mxu0 0
          %7594 = vmatpush1.bf16.msra.mxu0 %v7454
          %7595 = vmatprep.subr.bf16.mxu0 0
          %7596 = vmatpush1.bf16.msra.mxu0 %v7453
          %7597 = vmatprep.subr.bf16.mxu0 0
          %7598 = vmatpush2.bf16.msra.mxu0 %v7468
          %7599 = vmatprep.subr.bf16.mxu0 0
          %7600 = vmatpush2.bf16.msra.mxu0 %v7467
          %7601 = vmatprep.subr.bf16.mxu0 0
          %7602 = vmatpush2.bf16.msra.mxu0 %v7466
          %7603 = vmatprep.subr.bf16.mxu0 0
          %7604 = vmatpush2.bf16.msra.mxu0 %v7465
          %7605 = vmatprep.subr.bf16.mxu0 0
          %7606 = vmatpush2.bf16.msra.mxu0 %v7464
          %7607 = vmatprep.subr.bf16.mxu0 0
          %7608 = vmatpush2.bf16.msra.mxu0 %v7463
          %7609 = vmatprep.subr.bf16.mxu0 0
          %7610 = vmatpush2.bf16.msra.mxu0 %v7462
          %7611 = vmatprep.subr.bf16.mxu0 0
          %7612 = vmatpush2.bf16.msra.mxu0 %v7461
          %7613 = vmatprep.mubr.bf16.mxu0 %v7055
          %7614 = vmatmul.mubr.bf16.gmra.mxu0 %v7054
          %v7615 = vpop.f32.mrf.mxu0
          %v7616 = vadd.f32 %v7195, %v7615
          %v7617 = vpop.f32.mrf.mxu0
          %v7618 = vpop.f32.mrf.mxu0
          %v7619 = vpop.f32.mrf.mxu0
          %7620 = vdwg.mxu0
          %7621 = vmatprep.subr.bf16.mxu0 0
          %7622 = vmatpush1.bf16.msra.mxu0 %v7476
          %7623 = vmatprep.subr.bf16.mxu0 0
          %7624 = vmatpush1.bf16.msra.mxu0 %v7475
          %7625 = vmatprep.subr.bf16.mxu0 0
          %7626 = vmatpush1.bf16.msra.mxu0 %v7474
          %7627 = vmatprep.subr.bf16.mxu0 0
          %7628 = vmatpush1.bf16.msra.mxu0 %v7473
          %7629 = vmatprep.subr.bf16.mxu0 0
          %7630 = vmatpush1.bf16.msra.mxu0 %v7472
          %7631 = vmatprep.subr.bf16.mxu0 0
          %7632 = vmatpush1.bf16.msra.mxu0 %v7471
          %7633 = vmatprep.subr.bf16.mxu0 0
          %7634 = vmatpush1.bf16.msra.mxu0 %v7470
          %7635 = vmatprep.subr.bf16.mxu0 0
          %7636 = vmatpush1.bf16.msra.mxu0 %v7469
          %7637 = vmatprep.subr.bf16.mxu0 0
          %7638 = vmatpush2.bf16.msra.mxu0 %v7484
          %7639 = vmatprep.subr.bf16.mxu0 0
          %7640 = vmatpush2.bf16.msra.mxu0 %v7483
          %7641 = vmatprep.subr.bf16.mxu0 0
          %7642 = vmatpush2.bf16.msra.mxu0 %v7482
          %7643 = vmatprep.subr.bf16.mxu0 0
          %7644 = vmatpush2.bf16.msra.mxu0 %v7481
          %7645 = vmatprep.subr.bf16.mxu0 0
          %7646 = vmatpush2.bf16.msra.mxu0 %v7480
          %7647 = vmatprep.subr.bf16.mxu0 0
          %7648 = vmatpush2.bf16.msra.mxu0 %v7479
          %7649 = vmatprep.subr.bf16.mxu0 0
          %7650 = vmatpush2.bf16.msra.mxu0 %v7478
          %7651 = vmatprep.subr.bf16.mxu0 0
          %7652 = vmatpush2.bf16.msra.mxu0 %v7477
          %7653 = vmatprep.mubr.bf16.mxu0 %v7057
          %7654 = vmatmul.mubr.bf16.gmra.mxu0 %v7056
          %v7655 = vpop.f32.mrf.mxu0
          %v7656 = vadd.f32 %v7616, %v7655
          %v7657 = vpop.f32.mrf.mxu0
          %v7658 = vpop.f32.mrf.mxu0
          %v7659 = vpop.f32.mrf.mxu0
          %7660 = vdwg.mxu0
          %7661 = vmatprep.subr.bf16.mxu0 0
          %7662 = vmatpush1.bf16.msra.mxu0 %v7492
          %7663 = vmatprep.subr.bf16.mxu0 0
          %7664 = vmatpush1.bf16.msra.mxu0 %v7491
          %7665 = vmatprep.subr.bf16.mxu0 0
          %7666 = vmatpush1.bf16.msra.mxu0 %v7490
          %7667 = vmatprep.subr.bf16.mxu0 0
          %7668 = vmatpush1.bf16.msra.mxu0 %v7489
          %7669 = vmatprep.subr.bf16.mxu0 0
          %7670 = vmatpush1.bf16.msra.mxu0 %v7488
          %7671 = vmatprep.subr.bf16.mxu0 0
          %7672 = vmatpush1.bf16.msra.mxu0 %v7487
          %7673 = vmatprep.subr.bf16.mxu0 0
          %7674 = vmatpush1.bf16.msra.mxu0 %v7486
          %7675 = vmatprep.subr.bf16.mxu0 0
          %7676 = vmatpush1.bf16.msra.mxu0 %v7485
          %7677 = vmatprep.subr.bf16.mxu0 0
          %7678 = vmatpush2.bf16.msra.mxu0 %v7500
          %7679 = vmatprep.subr.bf16.mxu0 0
          %7680 = vmatpush2.bf16.msra.mxu0 %v7499
          %7681 = vmatprep.subr.bf16.mxu0 0
          %7682 = vmatpush2.bf16.msra.mxu0 %v7498
          %7683 = vmatprep.subr.bf16.mxu0 0
          %7684 = vmatpush2.bf16.msra.mxu0 %v7497
          %7685 = vmatprep.subr.bf16.mxu0 0
          %7686 = vmatpush2.bf16.msra.mxu0 %v7496
          %7687 = vmatprep.subr.bf16.mxu0 0
          %7688 = vmatpush2.bf16.msra.mxu0 %v7495
          %7689 = vmatprep.subr.bf16.mxu0 0
          %7690 = vmatpush2.bf16.msra.mxu0 %v7494
          %7691 = vmatprep.subr.bf16.mxu0 0
          %7692 = vmatpush2.bf16.msra.mxu0 %v7493
          %7693 = vmatprep.mubr.bf16.mxu0 %v7059
          %7694 = vmatmul.mubr.bf16.gmra.mxu0 %v7058
          %v7695 = vpop.f32.mrf.mxu0
          %v7696 = vadd.f32 %v7656, %v7695
          %v7697 = vpop.f32.mrf.mxu0
          %v7698 = vpop.f32.mrf.mxu0
          %v7699 = vpop.f32.mrf.mxu0
          %7700 = vdwg.mxu0
          %7701 = vmatprep.subr.bf16.mxu0 0
          %7702 = vmatpush1.bf16.msra.mxu0 %v7508
          %7703 = vmatprep.subr.bf16.mxu0 0
          %7704 = vmatpush1.bf16.msra.mxu0 %v7507
          %7705 = vmatprep.subr.bf16.mxu0 0
          %7706 = vmatpush1.bf16.msra.mxu0 %v7506
          %7707 = vmatprep.subr.bf16.mxu0 0
          %7708 = vmatpush1.bf16.msra.mxu0 %v7505
          %7709 = vmatprep.subr.bf16.mxu0 0
          %7710 = vmatpush1.bf16.msra.mxu0 %v7504
          %7711 = vmatprep.subr.bf16.mxu0 0
          %7712 = vmatpush1.bf16.msra.mxu0 %v7503
          %7713 = vmatprep.subr.bf16.mxu0 0
          %7714 = vmatpush1.bf16.msra.mxu0 %v7502
          %7715 = vmatprep.subr.bf16.mxu0 0
          %7716 = vmatpush1.bf16.msra.mxu0 %v7501
          %7717 = vmatprep.subr.bf16.mxu0 0
          %7718 = vmatpush2.bf16.msra.mxu0 %v7516
          %7719 = vmatprep.subr.bf16.mxu0 0
          %7720 = vmatpush2.bf16.msra.mxu0 %v7515
          %7721 = vmatprep.subr.bf16.mxu0 0
          %7722 = vmatpush2.bf16.msra.mxu0 %v7514
          %7723 = vmatprep.subr.bf16.mxu0 0
          %7724 = vmatpush2.bf16.msra.mxu0 %v7513
          %7725 = vmatprep.subr.bf16.mxu0 0
          %7726 = vmatpush2.bf16.msra.mxu0 %v7512
          %7727 = vmatprep.subr.bf16.mxu0 0
          %7728 = vmatpush2.bf16.msra.mxu0 %v7511
          %7729 = vmatprep.subr.bf16.mxu0 0
          %7730 = vmatpush2.bf16.msra.mxu0 %v7510
          %7731 = vmatprep.subr.bf16.mxu0 0
          %7732 = vmatpush2.bf16.msra.mxu0 %v7509
          %7733 = vmatprep.mubr.bf16.mxu0 %v7061
          %7734 = vmatmul.mubr.bf16.gmra.mxu0 %v7060
          %v7735 = vpop.f32.mrf.mxu0
          %v7736 = vadd.f32 %v7696, %v7735
          %v7737 = vpop.f32.mrf.mxu0
          %v7738 = vpop.f32.mrf.mxu0
          %v7739 = vpop.f32.mrf.mxu0
          %7740 = vdwg.mxu0
          %7741 = vst [vmem:[#allocation3] sm:$0x3] %v7736
        $region48: #{lenet_forward.5} parent=39 // pred_fallthru
          _
        // Predicated region
        $region49: #{lenet_forward.5} parent=39 // pred_check
          %p7742 = pneg %p145
        $region50: #{lenet_forward.5} parent=39 // pred_check_branch
          %7744 = sbr.rel (%p7742) target = $region52
        $region51: #{lenet_forward.5} parent=39 // pred_region
          %s7746 = ssub.s32 32, 32
          %7747 = vsyncadd [#allocation4], %s7746
          %s7749 = sshll.u32 [#allocation3], 4
          %s7750 = int_to_ptr.vmem [resolvable:$true] %s7749
          %7752 = dma.vmem_to_hbm [thread:$0]  %s7750, 32, %s5, [#allocation4]
        $region52: #{lenet_forward.5} parent=39 // pred_fallthru
          _
        // Predicated region
        $region53: #{lenet_forward.5} parent=39 // pred_check
          %p7753 = pneg %p145
        $region54: #{lenet_forward.5} parent=39 // pred_check_branch
          %7755 = sbr.rel (%p7753) target = $region56
        $region55: #{lenet_forward.5} parent=39 // pred_region
          %7756 = dma.done [#allocation4], 32
        $region56: #{lenet_forward.5} parent=39 // pred_fallthru
          _
      $region40: #{lenet_forward.5} parent=5 // pred_fallthru
        _
      %p7757 = scmp.le.s32.totalorder 2, %s12
      // Predicated region
      $region57: #{lenet_forward.5} parent=5 // pred_check
        %p7758 = pneg %p7757
      $region58: #{lenet_forward.5} parent=5 // pred_check_branch
        %7760 = sbr.rel (%p7758) target = $region60
      $region59: #{lenet_forward.5} parent=5 // pred_region
        %s7761 = ssub.s32 %s12, 2
      $region60: #{lenet_forward.5} parent=5 // pred_fallthru
        _
    $region6: #{lenet_forward.5} parent=1 // loop_footer
      %s16 = sadd.s32 1, %s12
    $region7: #{lenet_forward.5} parent=1 // loop_footer_branch
      %11 = sbr.rel target = $region3
    $region8: #{lenet_forward.5} parent=1 // loop_exit
      _
    %7762 = vsyncpa [#allocation4], 1
    %s7763 = scalar_lea.sflag [#allocation4], 1
    %7764 = vsyncpa %s7763, 1

</llo_original>
